<compile_context>
chip_gen: v5e
topology: v5e:2x2
jax: 0.10.0
libtpu: 0.0.40
codegen_flags: <defaults>
</compile_context>

<pallas_src>
import functools

import jax
import jax.numpy as jnp
from jax.experimental import pallas as pl
from jax.experimental.pallas import tpu as pltpu

HIDDEN = 32            # synthetic NeRF MLP hidden width
D_EMBED = 8            # embedding channels regressed per point
D_OUT = 4 + D_EMBED    # rgb(3) + sigma(1) + embed(D_EMBED)
PIX_ROWS = 16          # fused per-pixel slab: rgb(3) + depth(1) + embed(8) + alpha(1) + pad(3)


# ----------------------------------------------------------------------------- kernel
def _render_kernel(rays_ref, z_ref, w1_ref, b1_ref, w2_ref, b2_ref,
                   wts_ref, pix_ref, hv_ref, *, white_bkgd, compute_dtype):
    """Lane-major NeRF composite for one block of rays.

    rays_ref : VMEM (8, tile)          z_ref  : VMEM (K, tile)
    w1_ref   : SMEM (6, HIDDEN)        b1_ref : SMEM (1, HIDDEN)
    w2_ref   : SMEM (HIDDEN, D_OUT)    b2_ref : SMEM (1, D_OUT)
    wts_ref  : VMEM (K, tile)          pix_ref: VMEM (PIX_ROWS, tile)
    hv_ref   : VMEM (HIDDEN, K, tile)  scratch cache of layer-1 activations
    """
    K, tile = z_ref.shape
    cdt = compute_dtype

    z = z_ref[...]                                     # (K, tile) f32
    far = rays_ref[7:8, :]                             # (1, tile)

    # deltas between consecutive samples; last interval runs to `far`
    deltas = jnp.concatenate([z[1:, :], far], axis=0) - z            # (K, tile)

    # hoisted per-ray rows (lane-dense, constant over K), cast once to compute dtype
    o = [rays_ref[c:c + 1, :].astype(cdt) for c in range(3)]         # (1, tile)
    d = [rays_ref[3 + c:4 + c, :].astype(cdt) for c in range(3)]     # (1, tile)
    zc = z.astype(cdt)
    p = [o[c] + zc * d[c] for c in range(3)]                         # (K, tile)

    # ---- layer 1 + nonlinear heads (rgb, sigma) -- unrolled scalar-weight VPU FMAs -----
    # Only 4 live (K,tile) accumulators; hv cached to VMEM scratch for the embed head.
    acc = [None] * 4
    for h in range(HIDDEN):
        hb = (d[0] * w1_ref[3, h].astype(cdt) + d[1] * w1_ref[4, h].astype(cdt)
              + d[2] * w1_ref[5, h].astype(cdt) + b1_ref[0, h].astype(cdt))   # (1, tile)
        hv = (p[0] * w1_ref[0, h].astype(cdt) + p[1] * w1_ref[1, h].astype(cdt)
              + p[2] * w1_ref[2, h].astype(cdt) + hb)                         # (K, tile)
        hv = jnp.maximum(hv, 0.0)
        hv_ref[h] = hv
        for oc in range(4):                          # rgb(3) + sigma(1) only
            contrib = hv * w2_ref[h, oc].astype(cdt)
            acc[oc] = contrib if acc[oc] is None else acc[oc] + contrib

    rgb_pts = [acc[c].astype(jnp.float32) + b2_ref[0, c] for c in range(3)]   # (K, tile)
    sigma = jnp.maximum(acc[3].astype(jnp.float32) + b2_ref[0, 3], 0.0)       # (K, tile)

    # ---- transmittance: weights = alpha_k * exp(-sum_{j<k} delta_j*sigma_j) -----------
    # (exact rewrite of the exclusive cumprod of (1-alpha); drops the 1e-10 floor)
    tau = deltas * sigma                                               # (K, tile) f32
    alphas = 1.0 - jnp.exp(-tau)
    rows = []
    run = jnp.zeros((1, tile), jnp.float32)                            # exclusive prefix sum
    for k in range(K):
        rows.append(run)
        run = run + tau[k:k + 1, :]
    excl = jnp.concatenate(rows, axis=0)                               # (K, tile)
    weights = alphas * jnp.exp(-excl)                                  # kept in vregs
    wts_ref[...] = weights                                             # single dense store

    wsum = jnp.sum(weights, axis=0, keepdims=True)                     # pixel alpha (1, tile)

    # ---- embed head factored through the composite weights (linear head) --------------
    emb = [jnp.zeros((1, tile), jnp.float32) for _ in range(D_EMBED)]
    for h in range(HIDDEN):
        wh = jnp.sum(weights * hv_ref[h].astype(jnp.float32),
                     axis=0, keepdims=True)                            # (1, tile)
        for c in range(D_EMBED):
            emb[c] = emb[c] + wh * w2_ref[h, 4 + c]
    emb = [emb[c] + b2_ref[0, 4 + c] * wsum for c in range(D_EMBED)]

    # ---- weighted per-pixel reductions -> one lane-dense slab --------------------------
    out_rows = []
    for c in range(3):                                                 # rgb (sigmoid head)
        r = jnp.sum(weights * jax.nn.sigmoid(rgb_pts[c]), axis=0, keepdims=True)
        if white_bkgd:
            r = r + (1.0 - wsum)
        out_rows.append(r)
    out_rows.append(jnp.sum(weights * z, axis=0, keepdims=True))       # depth
    out_rows.extend(emb)                                               # embed
    out_rows.append(wsum)                                              # pixel alpha
    zeros_row = jnp.zeros((1, tile), jnp.float32)
    out_rows.extend([zeros_row] * (PIX_ROWS - len(out_rows)))          # pad to 16 rows
    pix_ref[...] = jnp.concatenate(out_rows, axis=0)                   # one unmasked store


def _mlp_compute_dtype():
    """bf16 MLP math only where the VPU/EUP are bf16-capable (v6e / v7x)."""
    try:
        kind = jax.devices()[0].device_kind.lower()
    except Exception:
        return jnp.float32
    if 'v6' in kind or 'v7' in kind:
        return jnp.bfloat16
    return jnp.float32


def _pick_tile(n, compute_dtype):
    # Match tile to the vreg budget (4 live accumulators + 3 point rows) and keep
    # >=2 "parallel" grid steps when possible so both v7x TensorCores get work.
    cap = 512 if compute_dtype == jnp.bfloat16 else 256
    npad = max(pl.cdiv(n, 128) * 128, 128)
    if npad < 256:
        return 128
    half = max(128, ((npad // 2) // 128) * 128)
    return int(min(cap, half))


def composite_pallas(rays_lm, z_lm, params, *, white_bkgd, compute_dtype):
    """rays_lm (8,N), z_lm (K,N) -> weights (K,N), rgb (N,3), embed (N,D), depth (N,)."""
    K, N = z_lm.shape
    tile = _pick_tile(N, compute_dtype)
    Np = pl.cdiv(N, tile) * tile

    rays_p = rays_lm.astype(jnp.float32)
    z_p = z_lm.astype(jnp.float32)
    if Np != N:                                    # edge-pad with valid rays
        pad = Np - N
        rays_p = jnp.pad(rays_p, ((0, 0), (0, pad)), mode='edge')
        z_p = jnp.pad(z_p, ((0, 0), (0, pad)), mode='edge')

    kernel = functools.partial(_render_kernel, white_bkgd=white_bkgd,
                               compute_dtype=compute_dtype)

    smem_spec = pl.BlockSpec(memory_space=pltpu.MemorySpace.SMEM)
    wts, pix = pl.pallas_call(
        kernel,
        grid=(Np // tile,),
        in_specs=[
            pl.BlockSpec((8, tile), lambda i: (0, i)),          # rays
            pl.BlockSpec((K, tile), lambda i: (0, i)),          # z samples
            smem_spec,                                          # w1 (6, HIDDEN)
            smem_spec,                                          # b1 (1, HIDDEN)
            smem_spec,                                          # w2 (HIDDEN, D_OUT)
            smem_spec,                                          # b2 (1, D_OUT)
        ],
        out_specs=(
            pl.BlockSpec((K, tile), lambda i: (0, i)),          # weights
            pl.BlockSpec((PIX_ROWS, tile), lambda i: (0, i)),   # fused per-pixel slab
        ),
        out_shape=(
            jax.ShapeDtypeStruct((K, Np), jnp.float32),
            jax.ShapeDtypeStruct((PIX_ROWS, Np), jnp.float32),
        ),
        scratch_shapes=[pltpu.VMEM((HIDDEN, K, tile), compute_dtype)],
        compiler_params=pltpu.CompilerParams(
            dimension_semantics=("parallel",)),
    )(rays_p, z_p, params['w1'], params['b1'], params['w2'], params['b2'])

    wts = wts[:, :N]                      # (K, N) lane-major weights (reused by sample_fine)
    pix = pix[:, :N]
    rgb = pix[0:3, :].T                   # (N, 3)
    depth = pix[3, :]                     # (N,)
    embed = pix[4:4 + D_EMBED, :].T       # (N, D_EMBED)
    return wts, rgb, embed, depth


# ----------------------------------------------------------------------------- glue
def psnr_jax(img1, img2, max_val=1.0):
    mse = jnp.mean((img1 - img2) ** 2)
    return jnp.where(mse == 0, 100.0, 20.0 * jnp.log10(max_val / jnp.sqrt(mse)))


def gen_rays(poses, width, height, focal, z_near, z_far, c=None):
    """poses (B,4,4) cam-to-world -> rays (B,H,W,8)."""
    ys = jnp.arange(height, dtype=jnp.float32) + 0.5
    xs = jnp.arange(width, dtype=jnp.float32) + 0.5
    yy, xx = jnp.meshgrid(ys, xs, indexing='ij')
    if c is None:
        cx, cy = width * 0.5, height * 0.5
    else:
        cx, cy = c
    cam_dirs = jnp.stack([(xx - cx) / focal,
                          -(yy - cy) / focal,
                          -jnp.ones_like(xx)], axis=-1)                   # (H, W, 3)
    rays_d = jnp.einsum('bij,hwj->bhwi', poses[:, :3, :3], cam_dirs)      # (B, H, W, 3)
    rays_o = jnp.broadcast_to(poses[:, None, None, :3, 3], rays_d.shape)
    near = jnp.full(rays_d.shape[:-1] + (1,), z_near, jnp.float32)
    far = jnp.full(rays_d.shape[:-1] + (1,), z_far, jnp.float32)
    return jnp.concatenate([rays_o, rays_d, near, far], axis=-1)


class NeuralRendererPallas:
    """JAX/Pallas port of NeuralRenderer.forward (== compute_rendering_loss)."""

    def __init__(self, cfg, key):
        self.cfg = cfg
        self.W = cfg['image_width']
        self.H = cfg['image_height']
        self.z_near = cfg['z_near']
        self.z_far = cfg['z_far']
        self.n_coarse = cfg['n_coarse']
        self.n_fine = cfg['n_fine']
        self.n_fine_depth = cfg['n_fine_depth']
        self.lindisp = cfg['lindisp']
        self.using_fine = self.n_fine > 0
        self.white_bkgd = cfg['white_bkgd']
        self.depth_std = cfg['depth_std']
        self.lambda_embed = cfg['lambda_embed']
        self.lambda_rgb = 1.0 if cfg['lambda_rgb'] is None else cfg['lambda_rgb']
        self.model_name = cfg['foundation_model_name']
        self.compute_dtype = _mlp_compute_dtype()

        # deterministic synthetic NeRF-MLP parameters (stand-in for GeneralizableNeRFEmbedNet)
        # w1 rows 0..2: point-coordinate weights, rows 3..5: view-direction weights.
        ks = jax.random.split(key, 4)
        self.params = {
            'w1': jax.random.normal(ks[0], (6, HIDDEN), jnp.float32) * 0.5,
            'b1': jax.random.normal(ks[1], (1, HIDDEN), jnp.float32) * 0.1,
            'w2': jax.random.normal(ks[2], (HIDDEN, D_OUT), jnp.float32) / jnp.sqrt(HIDDEN),
            'b2': jax.random.normal(ks[3], (1, D_OUT), jnp.float32) * 0.1,
        }

    # ---------------- encode (voxel features) ----------------
    def encode(self, **kwargs):
        # TODO(synk): voxel-feature encoder of GeneralizableNeRFEmbedNet is an external
        # module (trilinear voxel lookups); the synthetic field ignores voxel conditioning.
        pass

    # ---------------- sampling (lane-major: returns (K, N)) ----------------
    def sample_coarse(self, rays_lm, key):
        near, far = rays_lm[6:7, :], rays_lm[7:8, :]                  # (1, N)
        N = rays_lm.shape[1]
        step = 1.0 / self.n_coarse
        z_steps = jnp.linspace(0.0, 1.0 - step, self.n_coarse,
                               dtype=jnp.float32)[:, None]            # (Kc, 1)
        z_steps = z_steps + jax.random.uniform(key, (self.n_coarse, N)) * step
        if not self.lindisp:
            return near * (1.0 - z_steps) + far * z_steps             # (Kc, N)
        return 1.0 / (1.0 / near * (1.0 - z_steps) + 1.0 / far * z_steps)

    def sample_fine(self, rays_lm, weights_kn, key):
        N = rays_lm.shape[1]
        weights = jax.lax.stop_gradient(weights_kn) + 1e-5            # (Kc, N)
        pdf = weights / jnp.sum(weights, axis=0, keepdims=True)
        cdf = jnp.cumsum(pdf, axis=0)
        cdf = jnp.concatenate([jnp.zeros_like(cdf[:1]), cdf], axis=0)  # (Kc+1, N)
        Kf = self.n_fine - self.n_fine_depth
        k1, k2 = jax.random.split(key)
        u = jax.random.uniform(k1, (Kf, N), jnp.float32)
        # searchsorted(cdf, u, side='right') along K == count of cdf entries <= u
        inds = jnp.sum((cdf[None, :, :] <= u[:, None, :]).astype(jnp.float32), axis=1) - 1.0
        inds = jnp.maximum(inds, 0.0)
        z_steps = (inds + jax.random.uniform(k2, inds.shape)) / self.n_coarse
        near, far = rays_lm[6:7, :], rays_lm[7:8, :]
        if not self.lindisp:
            return near * (1.0 - z_steps) + far * z_steps             # (Kf, N)
        return 1.0 / (1.0 / near * (1.0 - z_steps) + 1.0 / far * z_steps)

    def sample_fine_depth(self, rays_lm, depth, key):
        z_samp = jnp.broadcast_to(depth[None, :], (self.n_fine_depth, depth.shape[0]))
        z_samp = z_samp + jax.random.normal(key, z_samp.shape) * self.depth_std
        z_samp = jnp.maximum(jnp.minimum(z_samp, rays_lm[7:8, :]), rays_lm[6:7, :])
        return z_samp                                                  # (Kfd, N)

    # ---------------- composite (Pallas hot path) ----------------
    def composite(self, rays_lm, z_samp_kn):
        return composite_pallas(rays_lm, z_samp_kn, self.params,
                                white_bkgd=self.white_bkgd,
                                compute_dtype=self.compute_dtype)

    def _format_outputs(self, rendered, superbatch_size):
        weights_kn, rgb, embed, depth = rendered
        rgb = rgb.reshape(superbatch_size, -1, 3)
        embed = embed.reshape(superbatch_size, -1, embed.shape[-1])
        depth = depth.reshape(superbatch_size, -1)
        weights = weights_kn.T.reshape(superbatch_size, -1, weights_kn.shape[0])
        return dict(rgb=rgb, embed=embed, depth=depth, weights=weights)

    def forward_nerf(self, rays, key):
        assert rays.ndim == 3
        superbatch_size = rays.shape[0]
        # single layout change per forward: (SB*R, 8) -> lane-major (8, N), reused by
        # both composites and by all sampling functions (no per-composite transposes).
        rays_lm = rays.reshape(-1, 8).T.astype(jnp.float32)
        k_c, k_f, k_fd = jax.random.split(key, 3)
        z_coarse = self.sample_coarse(rays_lm, k_c)                    # (Kc, N)
        coarse_composite = self.composite(rays_lm, z_coarse)
        outputs = dict(coarse=self._format_outputs(coarse_composite, superbatch_size))
        if self.using_fine:
            all_samps = [z_coarse]
            if self.n_fine - self.n_fine_depth > 0:
                all_samps.append(self.sample_fine(rays_lm, coarse_composite[0], k_f))
            if self.n_fine_depth > 0:
                all_samps.append(self.sample_fine_depth(rays_lm, coarse_composite[-1], k_fd))
            z_combine = jnp.concatenate(all_samps, axis=0)             # (K_total, N)
            z_combine_sorted = jnp.sort(z_combine, axis=0)
            fine_composite = self.composite(rays_lm, z_combine_sorted)
            outputs['fine'] = self._format_outputs(fine_composite, superbatch_size)
        return outputs

    # ---------------- loss (== torch forward) ----------------
    def compute_rendering_loss(self, multi_scale_voxel_list, voxel_density, language,
                               voxel_feat, voxel_poses, focal, gt_rgb, gt_depth, gt_pose,
                               c=None, lang_goal=None, key=None):
        key = jax.random.PRNGKey(0) if key is None else key
        rays = gen_rays(gt_pose, self.W, self.H, focal, self.z_near, self.z_far, c=c)
        self.encode(multi_scale_voxel_list=multi_scale_voxel_list,
                    voxel_density=voxel_density, lang=language,
                    voxel_feat=voxel_feat, poses=voxel_poses, focal=focal, c=c)
        B, H, W, DimRay = rays.shape
        rays = rays.reshape(B, H * W, DimRay)
        chunk_size = self.cfg['ray_chunk_size']
        k_idx, k_nerf = jax.random.split(key)
        sampled_rays_idx = jax.random.randint(k_idx, (chunk_size,), 0, H * W)
        sampled_rays = rays[:, sampled_rays_idx, :]
        outputs = self.forward_nerf(sampled_rays, k_nerf)

        # foundation-model branch: model_name != 'diffusion'  ->  gt_embed = None
        # TODO(synk): ODISE/LDM diffusion feature extractor not translatable to Pallas.
        gt_embed = None

        gt_rgb = gt_rgb.reshape(B, H * W, 3)[:, sampled_rays_idx, :]
        lambda_rgb = self.lambda_rgb
        loss_rgb_coarse = lambda_rgb * jnp.mean((outputs['coarse']['rgb'] - gt_rgb) ** 2)
        loss_rgb_fine = lambda_rgb * jnp.mean((outputs['fine']['rgb'] - gt_rgb) ** 2)
        loss = loss_rgb_coarse + loss_rgb_fine
        psnr = psnr_jax(outputs['fine']['rgb'], gt_rgb)

        loss_embed_coarse = jnp.asarray(0.0, jnp.float32)
        loss_embed_fine = jnp.asarray(0.0, jnp.float32)

        return {
            'loss': loss,
            'loss_rgb_coarse': float(loss_rgb_coarse),
            'loss_rgb_fine': float(loss_rgb_fine),
            'loss_rgb': float(loss_rgb_coarse) + float(loss_rgb_fine),
            'loss_embed_coarse': float(loss_embed_coarse),
            'loss_embed_fine': float(loss_embed_fine),
            'loss_embed': float(loss_embed_coarse) + float(loss_embed_fine),
            'psnr': float(psnr),
        }

    def forward(self, multi_scale_voxel_list, voxel_density, language, voxel_feat,
                voxel_poses, focal, gt_rgb, gt_depth, gt_pose, c=None, lang_goal=None,
                key=None):
        return self.compute_rendering_loss(multi_scale_voxel_list, voxel_density, language,
                                           voxel_feat, voxel_poses, focal, gt_rgb, gt_depth,
                                           gt_pose, c, lang_goal, key=key)


# ----------------------------------------------------------------------------- main
if __name__ == "__main__":
    key = jax.random.PRNGKey(0)
    k_model, k_rgb, k_pose, k_fwd = jax.random.split(key, 4)

    B, H, W = 2, 16, 16
    cfg = dict(
        coordinate_bounds=[-0.3, -0.5, 0.6, 0.7, 0.5, 1.6],
        image_width=W, image_height=H,
        z_near=0.1, z_far=2.0,
        regress_coord=False, regress_attention=False,
        n_coarse=8, n_fine=8, n_fine_depth=0,
        lindisp=False, eval_batch_size=4096,
        ret_last_feat=False, noise_std=0.0, white_bkgd=False, depth_std=0.01,
        foundation_model_name='none',
        lambda_embed=0.01, lambda_rgb=1.0,
        ray_chunk_size=128,
    )

    renderer = NeuralRendererPallas(cfg, k_model)

    # deterministic inputs
    gt_rgb = jax.random.uniform(k_rgb, (B, H, W, 3), jnp.float32)
    gt_depth = jnp.zeros((B, H, W), jnp.float32)
    gt_pose = jnp.tile(jnp.eye(4, dtype=jnp.float32)[None], (B, 1, 1))
    gt_pose = gt_pose.at[:, 2, 3].set(1.5)          # camera 1.5m along +z
    focal = 20.0

    # unused voxel / language conditioning placeholders (encoder is external, see TODO)
    multi_scale_voxel_list = [jnp.zeros((B, 4, 8, 8, 8), jnp.float32)]
    voxel_density = jnp.zeros((B, 1, 8, 8, 8), jnp.float32)
    language = jnp.zeros((B, 8), jnp.float32)
    voxel_feat = jnp.zeros((B, 4, 8, 8, 8), jnp.float32)
    voxel_poses = gt_pose

    out = renderer.forward(multi_scale_voxel_list, voxel_density, language, voxel_feat,
                           voxel_poses, focal, gt_rgb, gt_depth, gt_pose, key=k_fwd)
    jax.block_until_ready(out['loss'])
    print("KERNEL_OK")
</pallas_src>

<mosaic_0001>
module attributes {stable_mosaic.version = 11 : i64} {
  func.func @_render_kernel(%arg0: i32, %arg1: memref<8x128xf32, #tpu.memory_space<vmem>>, %arg2: memref<8x128xf32, #tpu.memory_space<vmem>>, %arg3: memref<6x32xf32, #tpu.memory_space<smem>>, %arg4: memref<1x32xf32, #tpu.memory_space<smem>>, %arg5: memref<32x12xf32, #tpu.memory_space<smem>>, %arg6: memref<1x12xf32, #tpu.memory_space<smem>>, %arg7: memref<8x128xf32, #tpu.memory_space<vmem>>, %arg8: memref<16x128xf32, #tpu.memory_space<vmem>>, %arg9: memref<32x8x128xf32, #tpu.memory_space<vmem>>) attributes {dimension_semantics = [#tpu.dimension_semantics<parallel>], iteration_bounds = array<i64: 2>, scalar_prefetch = 0 : i64, scratch_operands = 1 : i64, tpu.core_type = #tpu.core_type<tc>, window_params = [{transform_indices = @transform_0, window_bounds = array<i64: 8, 128>}, {transform_indices = @transform_1, window_bounds = array<i64: 8, 128>}, {transform_indices = @transform_2, window_bounds = array<i64: 6, 32>}, {transform_indices = @transform_3, window_bounds = array<i64: 1, 32>}, {transform_indices = @transform_4, window_bounds = array<i64: 32, 12>}, {transform_indices = @transform_5, window_bounds = array<i64: 1, 12>}, {transform_indices = @transform_6, window_bounds = array<i64: 8, 128>}, {transform_indices = @transform_7, window_bounds = array<i64: 16, 128>}]} {
    %c0 = arith.constant 0 : index
    %c0_0 = arith.constant 0 : index
    %0 = vector.load %arg2[%c0, %c0_0] : memref<8x128xf32, #tpu.memory_space<vmem>>, vector<8x128xf32>
    %c7 = arith.constant 7 : index
    %c0_1 = arith.constant 0 : index
    %1 = vector.load %arg1[%c7, %c0_1] : memref<8x128xf32, #tpu.memory_space<vmem>>, vector<1x128xf32>
    %2 = vector.extract_strided_slice %0 {offsets = [1, 0], sizes = [7, 128], strides = [1, 1]} : vector<8x128xf32> to vector<7x128xf32>
    %3 = tpu.concatenate %2, %1 in 0 : vector<7x128xf32>, vector<1x128xf32> -> vector<8x128xf32>
    %4 = arith.subf %3, %0 : vector<8x128xf32>
    %c0_2 = arith.constant 0 : index
    %c0_3 = arith.constant 0 : index
    %5 = vector.load %arg1[%c0_2, %c0_3] : memref<8x128xf32, #tpu.memory_space<vmem>>, vector<1x128xf32>
    %c1 = arith.constant 1 : index
    %c0_4 = arith.constant 0 : index
    %6 = vector.load %arg1[%c1, %c0_4] : memref<8x128xf32, #tpu.memory_space<vmem>>, vector<1x128xf32>
    %c2 = arith.constant 2 : index
    %c0_5 = arith.constant 0 : index
    %7 = vector.load %arg1[%c2, %c0_5] : memref<8x128xf32, #tpu.memory_space<vmem>>, vector<1x128xf32>
    %c3 = arith.constant 3 : index
    %c0_6 = arith.constant 0 : index
    %8 = vector.load %arg1[%c3, %c0_6] : memref<8x128xf32, #tpu.memory_space<vmem>>, vector<1x128xf32>
    %c4 = arith.constant 4 : index
    %c0_7 = arith.constant 0 : index
    %9 = vector.load %arg1[%c4, %c0_7] : memref<8x128xf32, #tpu.memory_space<vmem>>, vector<1x128xf32>
    %c5 = arith.constant 5 : index
    %c0_8 = arith.constant 0 : index
    %10 = vector.load %arg1[%c5, %c0_8] : memref<8x128xf32, #tpu.memory_space<vmem>>, vector<1x128xf32>
    %11 = vector.broadcast %8 : vector<1x128xf32> to vector<8x128xf32>
    %12 = arith.mulf %0, %11 : vector<8x128xf32>
    %13 = vector.broadcast %5 : vector<1x128xf32> to vector<8x128xf32>
    %14 = arith.addf %13, %12 : vector<8x128xf32>
    %15 = vector.broadcast %9 : vector<1x128xf32> to vector<8x128xf32>
    %16 = arith.mulf %0, %15 : vector<8x128xf32>
    %17 = vector.broadcast %6 : vector<1x128xf32> to vector<8x128xf32>
    %18 = arith.addf %17, %16 : vector<8x128xf32>
    %19 = vector.broadcast %10 : vector<1x128xf32> to vector<8x128xf32>
    %20 = arith.mulf %0, %19 : vector<8x128xf32>
    %21 = vector.broadcast %7 : vector<1x128xf32> to vector<8x128xf32>
    %22 = arith.addf %21, %20 : vector<8x128xf32>
    %c3_9 = arith.constant 3 : index
    %c0_10 = arith.constant 0 : index
    %23 = memref.load %arg3[%c3_9, %c0_10] : memref<6x32xf32, #tpu.memory_space<smem>>
    %24 = vector.broadcast %23 : f32 to vector<1x128xf32>
    %25 = arith.mulf %8, %24 : vector<1x128xf32>
    %c4_11 = arith.constant 4 : index
    %c0_12 = arith.constant 0 : index
    %26 = memref.load %arg3[%c4_11, %c0_12] : memref<6x32xf32, #tpu.memory_space<smem>>
    %27 = vector.broadcast %26 : f32 to vector<1x128xf32>
    %28 = arith.mulf %9, %27 : vector<1x128xf32>
    %29 = arith.addf %25, %28 : vector<1x128xf32>
    %c5_13 = arith.constant 5 : index
    %c0_14 = arith.constant 0 : index
    %30 = memref.load %arg3[%c5_13, %c0_14] : memref<6x32xf32, #tpu.memory_space<smem>>
    %31 = vector.broadcast %30 : f32 to vector<1x128xf32>
    %32 = arith.mulf %10, %31 : vector<1x128xf32>
    %33 = arith.addf %29, %32 : vector<1x128xf32>
    %c0_15 = arith.constant 0 : index
    %c0_16 = arith.constant 0 : index
    %34 = memref.load %arg4[%c0_15, %c0_16] : memref<1x32xf32, #tpu.memory_space<smem>>
    %35 = vector.broadcast %34 : f32 to vector<1x128xf32>
    %36 = arith.addf %33, %35 : vector<1x128xf32>
    %c0_17 = arith.constant 0 : index
    %c0_18 = arith.constant 0 : index
    %37 = memref.load %arg3[%c0_17, %c0_18] : memref<6x32xf32, #tpu.memory_space<smem>>
    %38 = vector.broadcast %37 : f32 to vector<8x128xf32>
    %39 = arith.mulf %14, %38 : vector<8x128xf32>
    %c1_19 = arith.constant 1 : index
    %c0_20 = arith.constant 0 : index
    %40 = memref.load %arg3[%c1_19, %c0_20] : memref<6x32xf32, #tpu.memory_space<smem>>
    %41 = vector.broadcast %40 : f32 to vector<8x128xf32>
    %42 = arith.mulf %18, %41 : vector<8x128xf32>
    %43 = arith.addf %39, %42 : vector<8x128xf32>
    %c2_21 = arith.constant 2 : index
    %c0_22 = arith.constant 0 : index
    %44 = memref.load %arg3[%c2_21, %c0_22] : memref<6x32xf32, #tpu.memory_space<smem>>
    %45 = vector.broadcast %44 : f32 to vector<8x128xf32>
    %46 = arith.mulf %22, %45 : vector<8x128xf32>
    %47 = arith.addf %43, %46 : vector<8x128xf32>
    %48 = vector.broadcast %36 : vector<1x128xf32> to vector<8x128xf32>
    %49 = arith.addf %47, %48 : vector<8x128xf32>
    %cst = arith.constant 0.000000e+00 : f32
    %50 = vector.broadcast %cst : f32 to vector<8x128xf32>
    %51 = arith.maximumf %49, %50 : vector<8x128xf32>
    %c0_23 = arith.constant 0 : index
    %c0_24 = arith.constant 0 : index
    %c0_25 = arith.constant 0 : index
    %52 = vector.load %arg9[%c0_23, %c0_24, %c0_25] : memref<32x8x128xf32, #tpu.memory_space<vmem>>, vector<1x8x128xf32>
    %53 = vector.shape_cast %52 : vector<1x8x128xf32> to vector<8x128xf32>
    %54 = vector.shape_cast %51 : vector<8x128xf32> to vector<1x8x128xf32>
    tpu.vector_store %arg9[%c0_23, %c0_24, %c0_25], %54 {strides = array<i32>} : memref<32x8x128xf32, #tpu.memory_space<vmem>>, vector<1x8x128xf32>,
    %c0_26 = arith.constant 0 : index
    %c0_27 = arith.constant 0 : index
    %55 = memref.load %arg5[%c0_26, %c0_27] : memref<32x12xf32, #tpu.memory_space<smem>>
    %56 = vector.broadcast %55 : f32 to vector<8x128xf32>
    %57 = arith.mulf %51, %56 : vector<8x128xf32>
    %c0_28 = arith.constant 0 : index
    %c1_29 = arith.constant 1 : index
    %58 = memref.load %arg5[%c0_28, %c1_29] : memref<32x12xf32, #tpu.memory_space<smem>>
    %59 = vector.broadcast %58 : f32 to vector<8x128xf32>
    %60 = arith.mulf %51, %59 : vector<8x128xf32>
    %c0_30 = arith.constant 0 : index
    %c2_31 = arith.constant 2 : index
    %61 = memref.load %arg5[%c0_30, %c2_31] : memref<32x12xf32, #tpu.memory_space<smem>>
    %62 = vector.broadcast %61 : f32 to vector<8x128xf32>
    %63 = arith.mulf %51, %62 : vector<8x128xf32>
    %c0_32 = arith.constant 0 : index
    %c3_33 = arith.constant 3 : index
    %64 = memref.load %arg5[%c0_32, %c3_33] : memref<32x12xf32, #tpu.memory_space<smem>>
    %65 = vector.broadcast %64 : f32 to vector<8x128xf32>
    %66 = arith.mulf %51, %65 : vector<8x128xf32>
    %c3_34 = arith.constant 3 : index
    %c1_35 = arith.constant 1 : index
    %67 = memref.load %arg3[%c3_34, %c1_35] : memref<6x32xf32, #tpu.memory_space<smem>>
    %68 = vector.broadcast %67 : f32 to vector<1x128xf32>
    %69 = arith.mulf %8, %68 : vector<1x128xf32>
    %c4_36 = arith.constant 4 : index
    %c1_37 = arith.constant 1 : index
    %70 = memref.load %arg3[%c4_36, %c1_37] : memref<6x32xf32, #tpu.memory_space<smem>>
    %71 = vector.broadcast %70 : f32 to vector<1x128xf32>
    %72 = arith.mulf %9, %71 : vector<1x128xf32>
    %73 = arith.addf %69, %72 : vector<1x128xf32>
    %c5_38 = arith.constant 5 : index
    %c1_39 = arith.constant 1 : index
    %74 = memref.load %arg3[%c5_38, %c1_39] : memref<6x32xf32, #tpu.memory_space<smem>>
    %75 = vector.broadcast %74 : f32 to vector<1x128xf32>
    %76 = arith.mulf %10, %75 : vector<1x128xf32>
    %77 = arith.addf %73, %76 : vector<1x128xf32>
    %c0_40 = arith.constant 0 : index
    %c1_41 = arith.constant 1 : index
    %78 = memref.load %arg4[%c0_40, %c1_41] : memref<1x32xf32, #tpu.memory_space<smem>>
    %79 = vector.broadcast %78 : f32 to vector<1x128xf32>
    %80 = arith.addf %77, %79 : vector<1x128xf32>
    %c0_42 = arith.constant 0 : index
    %c1_43 = arith.constant 1 : index
    %81 = memref.load %arg3[%c0_42, %c1_43] : memref<6x32xf32, #tpu.memory_space<smem>>
    %82 = vector.broadcast %81 : f32 to vector<8x128xf32>
    %83 = arith.mulf %14, %82 : vector<8x128xf32>
    %c1_44 = arith.constant 1 : index
    %c1_45 = arith.constant 1 : index
    %84 = memref.load %arg3[%c1_44, %c1_45] : memref<6x32xf32, #tpu.memory_space<smem>>
    %85 = vector.broadcast %84 : f32 to vector<8x128xf32>
    %86 = arith.mulf %18, %85 : vector<8x128xf32>
    %87 = arith.addf %83, %86 : vector<8x128xf32>
    %c2_46 = arith.constant 2 : index
    %c1_47 = arith.constant 1 : index
    %88 = memref.load %arg3[%c2_46, %c1_47] : memref<6x32xf32, #tpu.memory_space<smem>>
    %89 = vector.broadcast %88 : f32 to vector<8x128xf32>
    %90 = arith.mulf %22, %89 : vector<8x128xf32>
    %91 = arith.addf %87, %90 : vector<8x128xf32>
    %92 = vector.broadcast %80 : vector<1x128xf32> to vector<8x128xf32>
    %93 = arith.addf %91, %92 : vector<8x128xf32>
    %cst_48 = arith.constant 0.000000e+00 : f32
    %94 = vector.broadcast %cst_48 : f32 to vector<8x128xf32>
    %95 = arith.maximumf %93, %94 : vector<8x128xf32>
    %c1_49 = arith.constant 1 : index
    %c0_50 = arith.constant 0 : index
    %c0_51 = arith.constant 0 : index
    %96 = vector.load %arg9[%c1_49, %c0_50, %c0_51] : memref<32x8x128xf32, #tpu.memory_space<vmem>>, vector<1x8x128xf32>
    %97 = vector.shape_cast %96 : vector<1x8x128xf32> to vector<8x128xf32>
    %98 = vector.shape_cast %95 : vector<8x128xf32> to vector<1x8x128xf32>
    tpu.vector_store %arg9[%c1_49, %c0_50, %c0_51], %98 {strides = array<i32>} : memref<32x8x128xf32, #tpu.memory_space<vmem>>, vector<1x8x128xf32>,
    %c1_52 = arith.constant 1 : index
    %c0_53 = arith.constant 0 : index
    %99 = memref.load %arg5[%c1_52, %c0_53] : memref<32x12xf32, #tpu.memory_space<smem>>
    %100 = vector.broadcast %99 : f32 to vector<8x128xf32>
    %101 = arith.mulf %95, %100 : vector<8x128xf32>
    %102 = arith.addf %57, %101 : vector<8x128xf32>
    %c1_54 = arith.constant 1 : index
    %c1_55 = arith.constant 1 : index
    %103 = memref.load %arg5[%c1_54, %c1_55] : memref<32x12xf32, #tpu.memory_space<smem>>
    %104 = vector.broadcast %103 : f32 to vector<8x128xf32>
    %105 = arith.mulf %95, %104 : vector<8x128xf32>
    %106 = arith.addf %60, %105 : vector<8x128xf32>
    %c1_56 = arith.constant 1 : index
    %c2_57 = arith.constant 2 : index
    %107 = memref.load %arg5[%c1_56, %c2_57] : memref<32x12xf32, #tpu.memory_space<smem>>
    %108 = vector.broadcast %107 : f32 to vector<8x128xf32>
    %109 = arith.mulf %95, %108 : vector<8x128xf32>
    %110 = arith.addf %63, %109 : vector<8x128xf32>
    %c1_58 = arith.constant 1 : index
    %c3_59 = arith.constant 3 : index
    %111 = memref.load %arg5[%c1_58, %c3_59] : memref<32x12xf32, #tpu.memory_space<smem>>
    %112 = vector.broadcast %111 : f32 to vector<8x128xf32>
    %113 = arith.mulf %95, %112 : vector<8x128xf32>
    %114 = arith.addf %66, %113 : vector<8x128xf32>
    %c3_60 = arith.constant 3 : index
    %c2_61 = arith.constant 2 : index
    %115 = memref.load %arg3[%c3_60, %c2_61] : memref<6x32xf32, #tpu.memory_space<smem>>
    %116 = vector.broadcast %115 : f32 to vector<1x128xf32>
    %117 = arith.mulf %8, %116 : vector<1x128xf32>
    %c4_62 = arith.constant 4 : index
    %c2_63 = arith.constant 2 : index
    %118 = memref.load %arg3[%c4_62, %c2_63] : memref<6x32xf32, #tpu.memory_space<smem>>
    %119 = vector.broadcast %118 : f32 to vector<1x128xf32>
    %120 = arith.mulf %9, %119 : vector<1x128xf32>
    %121 = arith.addf %117, %120 : vector<1x128xf32>
    %c5_64 = arith.constant 5 : index
    %c2_65 = arith.constant 2 : index
    %122 = memref.load %arg3[%c5_64, %c2_65] : memref<6x32xf32, #tpu.memory_space<smem>>
    %123 = vector.broadcast %122 : f32 to vector<1x128xf32>
    %124 = arith.mulf %10, %123 : vector<1x128xf32>
    %125 = arith.addf %121, %124 : vector<1x128xf32>
    %c0_66 = arith.constant 0 : index
    %c2_67 = arith.constant 2 : index
    %126 = memref.load %arg4[%c0_66, %c2_67] : memref<1x32xf32, #tpu.memory_space<smem>>
    %127 = vector.broadcast %126 : f32 to vector<1x128xf32>
    %128 = arith.addf %125, %127 : vector<1x128xf32>
    %c0_68 = arith.constant 0 : index
    %c2_69 = arith.constant 2 : index
    %129 = memref.load %arg3[%c0_68, %c2_69] : memref<6x32xf32, #tpu.memory_space<smem>>
    %130 = vector.broadcast %129 : f32 to vector<8x128xf32>
    %131 = arith.mulf %14, %130 : vector<8x128xf32>
    %c1_70 = arith.constant 1 : index
    %c2_71 = arith.constant 2 : index
    %132 = memref.load %arg3[%c1_70, %c2_71] : memref<6x32xf32, #tpu.memory_space<smem>>
    %133 = vector.broadcast %132 : f32 to vector<8x128xf32>
    %134 = arith.mulf %18, %133 : vector<8x128xf32>
    %135 = arith.addf %131, %134 : vector<8x128xf32>
    %c2_72 = arith.constant 2 : index
    %c2_73 = arith.constant 2 : index
    %136 = memref.load %arg3[%c2_72, %c2_73] : memref<6x32xf32, #tpu.memory_space<smem>>
    %137 = vector.broadcast %136 : f32 to vector<8x128xf32>
    %138 = arith.mulf %22, %137 : vector<8x128xf32>
    %139 = arith.addf %135, %138 : vector<8x128xf32>
    %140 = vector.broadcast %128 : vector<1x128xf32> to vector<8x128xf32>
    %141 = arith.addf %139, %140 : vector<8x128xf32>
    %cst_74 = arith.constant 0.000000e+00 : f32
    %142 = vector.broadcast %cst_74 : f32 to vector<8x128xf32>
    %143 = arith.maximumf %141, %142 : vector<8x128xf32>
    %c2_75 = arith.constant 2 : index
    %c0_76 = arith.constant 0 : index
    %c0_77 = arith.constant 0 : index
    %144 = vector.load %arg9[%c2_75, %c0_76, %c0_77] : memref<32x8x128xf32, #tpu.memory_space<vmem>>, vector<1x8x128xf32>
    %145 = vector.shape_cast %144 : vector<1x8x128xf32> to vector<8x128xf32>
    %146 = vector.shape_cast %143 : vector<8x128xf32> to vector<1x8x128xf32>
    tpu.vector_store %arg9[%c2_75, %c0_76, %c0_77], %146 {strides = array<i32>} : memref<32x8x128xf32, #tpu.memory_space<vmem>>, vector<1x8x128xf32>,
    %c2_78 = arith.constant 2 : index
    %c0_79 = arith.constant 0 : index
    %147 = memref.load %arg5[%c2_78, %c0_79] : memref<32x12xf32, #tpu.memory_space<smem>>
    %148 = vector.broadcast %147 : f32 to vector<8x128xf32>
    %149 = arith.mulf %143, %148 : vector<8x128xf32>
    %150 = arith.addf %102, %149 : vector<8x128xf32>
    %c2_80 = arith.constant 2 : index
    %c1_81 = arith.constant 1 : index
    %151 = memref.load %arg5[%c2_80, %c1_81] : memref<32x12xf32, #tpu.memory_space<smem>>
    %152 = vector.broadcast %151 : f32 to vector<8x128xf32>
    %153 = arith.mulf %143, %152 : vector<8x128xf32>
    %154 = arith.addf %106, %153 : vector<8x128xf32>
    %c2_82 = arith.constant 2 : index
    %c2_83 = arith.constant 2 : index
    %155 = memref.load %arg5[%c2_82, %c2_83] : memref<32x12xf32, #tpu.memory_space<smem>>
    %156 = vector.broadcast %155 : f32 to vector<8x128xf32>
    %157 = arith.mulf %143, %156 : vector<8x128xf32>
    %158 = arith.addf %110, %157 : vector<8x128xf32>
    %c2_84 = arith.constant 2 : index
    %c3_85 = arith.constant 3 : index
    %159 = memref.load %arg5[%c2_84, %c3_85] : memref<32x12xf32, #tpu.memory_space<smem>>
    %160 = vector.broadcast %159 : f32 to vector<8x128xf32>
    %161 = arith.mulf %143, %160 : vector<8x128xf32>
    %162 = arith.addf %114, %161 : vector<8x128xf32>
    %c3_86 = arith.constant 3 : index
    %c3_87 = arith.constant 3 : index
    %163 = memref.load %arg3[%c3_86, %c3_87] : memref<6x32xf32, #tpu.memory_space<smem>>
    %164 = vector.broadcast %163 : f32 to vector<1x128xf32>
    %165 = arith.mulf %8, %164 : vector<1x128xf32>
    %c4_88 = arith.constant 4 : index
    %c3_89 = arith.constant 3 : index
    %166 = memref.load %arg3[%c4_88, %c3_89] : memref<6x32xf32, #tpu.memory_space<smem>>
    %167 = vector.broadcast %166 : f32 to vector<1x128xf32>
    %168 = arith.mulf %9, %167 : vector<1x128xf32>
    %169 = arith.addf %165, %168 : vector<1x128xf32>
    %c5_90 = arith.constant 5 : index
    %c3_91 = arith.constant 3 : index
    %170 = memref.load %arg3[%c5_90, %c3_91] : memref<6x32xf32, #tpu.memory_space<smem>>
    %171 = vector.broadcast %170 : f32 to vector<1x128xf32>
    %172 = arith.mulf %10, %171 : vector<1x128xf32>
    %173 = arith.addf %169, %172 : vector<1x128xf32>
    %c0_92 = arith.constant 0 : index
    %c3_93 = arith.constant 3 : index
    %174 = memref.load %arg4[%c0_92, %c3_93] : memref<1x32xf32, #tpu.memory_space<smem>>
    %175 = vector.broadcast %174 : f32 to vector<1x128xf32>
    %176 = arith.addf %173, %175 : vector<1x128xf32>
    %c0_94 = arith.constant 0 : index
    %c3_95 = arith.constant 3 : index
    %177 = memref.load %arg3[%c0_94, %c3_95] : memref<6x32xf32, #tpu.memory_space<smem>>
    %178 = vector.broadcast %177 : f32 to vector<8x128xf32>
    %179 = arith.mulf %14, %178 : vector<8x128xf32>
    %c1_96 = arith.constant 1 : index
    %c3_97 = arith.constant 3 : index
    %180 = memref.load %arg3[%c1_96, %c3_97] : memref<6x32xf32, #tpu.memory_space<smem>>
    %181 = vector.broadcast %180 : f32 to vector<8x128xf32>
    %182 = arith.mulf %18, %181 : vector<8x128xf32>
    %183 = arith.addf %179, %182 : vector<8x128xf32>
    %c2_98 = arith.constant 2 : index
    %c3_99 = arith.constant 3 : index
    %184 = memref.load %arg3[%c2_98, %c3_99] : memref<6x32xf32, #tpu.memory_space<smem>>
    %185 = vector.broadcast %184 : f32 to vector<8x128xf32>
    %186 = arith.mulf %22, %185 : vector<8x128xf32>
    %187 = arith.addf %183, %186 : vector<8x128xf32>
    %188 = vector.broadcast %176 : vector<1x128xf32> to vector<8x128xf32>
    %189 = arith.addf %187, %188 : vector<8x128xf32>
    %cst_100 = arith.constant 0.000000e+00 : f32
    %190 = vector.broadcast %cst_100 : f32 to vector<8x128xf32>
    %191 = arith.maximumf %189, %190 : vector<8x128xf32>
    %c3_101 = arith.constant 3 : index
    %c0_102 = arith.constant 0 : index
    %c0_103 = arith.constant 0 : index
    %192 = vector.load %arg9[%c3_101, %c0_102, %c0_103] : memref<32x8x128xf32, #tpu.memory_space<vmem>>, vector<1x8x128xf32>
    %193 = vector.shape_cast %192 : vector<1x8x128xf32> to vector<8x128xf32>
    %194 = vector.shape_cast %191 : vector<8x128xf32> to vector<1x8x128xf32>
    tpu.vector_store %arg9[%c3_101, %c0_102, %c0_103], %194 {strides = array<i32>} : memref<32x8x128xf32, #tpu.memory_space<vmem>>, vector<1x8x128xf32>,
    %c3_104 = arith.constant 3 : index
    %c0_105 = arith.constant 0 : index
    %195 = memref.load %arg5[%c3_104, %c0_105] : memref<32x12xf32, #tpu.memory_space<smem>>
    %196 = vector.broadcast %195 : f32 to vector<8x128xf32>
    %197 = arith.mulf %191, %196 : vector<8x128xf32>
    %198 = arith.addf %150, %197 : vector<8x128xf32>
    %c3_106 = arith.constant 3 : index
    %c1_107 = arith.constant 1 : index
    %199 = memref.load %arg5[%c3_106, %c1_107] : memref<32x12xf32, #tpu.memory_space<smem>>
    %200 = vector.broadcast %199 : f32 to vector<8x128xf32>
    %201 = arith.mulf %191, %200 : vector<8x128xf32>
    %202 = arith.addf %154, %201 : vector<8x128xf32>
    %c3_108 = arith.constant 3 : index
    %c2_109 = arith.constant 2 : index
    %203 = memref.load %arg5[%c3_108, %c2_109] : memref<32x12xf32, #tpu.memory_space<smem>>
    %204 = vector.broadcast %203 : f32 to vector<8x128xf32>
    %205 = arith.mulf %191, %204 : vector<8x128xf32>
    %206 = arith.addf %158, %205 : vector<8x128xf32>
    %c3_110 = arith.constant 3 : index
    %c3_111 = arith.constant 3 : index
    %207 = memref.load %arg5[%c3_110, %c3_111] : memref<32x12xf32, #tpu.memory_space<smem>>
    %208 = vector.broadcast %207 : f32 to vector<8x128xf32>
    %209 = arith.mulf %191, %208 : vector<8x128xf32>
    %210 = arith.addf %162, %209 : vector<8x128xf32>
    %c3_112 = arith.constant 3 : index
    %c4_113 = arith.constant 4 : index
    %211 = memref.load %arg3[%c3_112, %c4_113] : memref<6x32xf32, #tpu.memory_space<smem>>
    %212 = vector.broadcast %211 : f32 to vector<1x128xf32>
    %213 = arith.mulf %8, %212 : vector<1x128xf32>
    %c4_114 = arith.constant 4 : index
    %c4_115 = arith.constant 4 : index
    %214 = memref.load %arg3[%c4_114, %c4_115] : memref<6x32xf32, #tpu.memory_space<smem>>
    %215 = vector.broadcast %214 : f32 to vector<1x128xf32>
    %216 = arith.mulf %9, %215 : vector<1x128xf32>
    %217 = arith.addf %213, %216 : vector<1x128xf32>
    %c5_116 = arith.constant 5 : index
    %c4_117 = arith.constant 4 : index
    %218 = memref.load %arg3[%c5_116, %c4_117] : memref<6x32xf32, #tpu.memory_space<smem>>
    %219 = vector.broadcast %218 : f32 to vector<1x128xf32>
    %220 = arith.mulf %10, %219 : vector<1x128xf32>
    %221 = arith.addf %217, %220 : vector<1x128xf32>
    %c0_118 = arith.constant 0 : index
    %c4_119 = arith.constant 4 : index
    %222 = memref.load %arg4[%c0_118, %c4_119] : memref<1x32xf32, #tpu.memory_space<smem>>
    %223 = vector.broadcast %222 : f32 to vector<1x128xf32>
    %224 = arith.addf %221, %223 : vector<1x128xf32>
    %c0_120 = arith.constant 0 : index
    %c4_121 = arith.constant 4 : index
    %225 = memref.load %arg3[%c0_120, %c4_121] : memref<6x32xf32, #tpu.memory_space<smem>>
    %226 = vector.broadcast %225 : f32 to vector<8x128xf32>
    %227 = arith.mulf %14, %226 : vector<8x128xf32>
    %c1_122 = arith.constant 1 : index
    %c4_123 = arith.constant 4 : index
    %228 = memref.load %arg3[%c1_122, %c4_123] : memref<6x32xf32, #tpu.memory_space<smem>>
    %229 = vector.broadcast %228 : f32 to vector<8x128xf32>
    %230 = arith.mulf %18, %229 : vector<8x128xf32>
    %231 = arith.addf %227, %230 : vector<8x128xf32>
    %c2_124 = arith.constant 2 : index
    %c4_125 = arith.constant 4 : index
    %232 = memref.load %arg3[%c2_124, %c4_125] : memref<6x32xf32, #tpu.memory_space<smem>>
    %233 = vector.broadcast %232 : f32 to vector<8x128xf32>
    %234 = arith.mulf %22, %233 : vector<8x128xf32>
    %235 = arith.addf %231, %234 : vector<8x128xf32>
    %236 = vector.broadcast %224 : vector<1x128xf32> to vector<8x128xf32>
    %237 = arith.addf %235, %236 : vector<8x128xf32>
    %cst_126 = arith.constant 0.000000e+00 : f32
    %238 = vector.broadcast %cst_126 : f32 to vector<8x128xf32>
    %239 = arith.maximumf %237, %238 : vector<8x128xf32>
    %c4_127 = arith.constant 4 : index
    %c0_128 = arith.constant 0 : index
    %c0_129 = arith.constant 0 : index
    %240 = vector.load %arg9[%c4_127, %c0_128, %c0_129] : memref<32x8x128xf32, #tpu.memory_space<vmem>>, vector<1x8x128xf32>
    %241 = vector.shape_cast %240 : vector<1x8x128xf32> to vector<8x128xf32>
    %242 = vector.shape_cast %239 : vector<8x128xf32> to vector<1x8x128xf32>
    tpu.vector_store %arg9[%c4_127, %c0_128, %c0_129], %242 {strides = array<i32>} : memref<32x8x128xf32, #tpu.memory_space<vmem>>, vector<1x8x128xf32>,
    %c4_130 = arith.constant 4 : index
    %c0_131 = arith.constant 0 : index
    %243 = memref.load %arg5[%c4_130, %c0_131] : memref<32x12xf32, #tpu.memory_space<smem>>
    %244 = vector.broadcast %243 : f32 to vector<8x128xf32>
    %245 = arith.mulf %239, %244 : vector<8x128xf32>
    %246 = arith.addf %198, %245 : vector<8x128xf32>
    %c4_132 = arith.constant 4 : index
    %c1_133 = arith.constant 1 : index
    %247 = memref.load %arg5[%c4_132, %c1_133] : memref<32x12xf32, #tpu.memory_space<smem>>
    %248 = vector.broadcast %247 : f32 to vector<8x128xf32>
    %249 = arith.mulf %239, %248 : vector<8x128xf32>
    %250 = arith.addf %202, %249 : vector<8x128xf32>
    %c4_134 = arith.constant 4 : index
    %c2_135 = arith.constant 2 : index
    %251 = memref.load %arg5[%c4_134, %c2_135] : memref<32x12xf32, #tpu.memory_space<smem>>
    %252 = vector.broadcast %251 : f32 to vector<8x128xf32>
    %253 = arith.mulf %239, %252 : vector<8x128xf32>
    %254 = arith.addf %206, %253 : vector<8x128xf32>
    %c4_136 = arith.constant 4 : index
    %c3_137 = arith.constant 3 : index
    %255 = memref.load %arg5[%c4_136, %c3_137] : memref<32x12xf32, #tpu.memory_space<smem>>
    %256 = vector.broadcast %255 : f32 to vector<8x128xf32>
    %257 = arith.mulf %239, %256 : vector<8x128xf32>
    %258 = arith.addf %210, %257 : vector<8x128xf32>
    %c3_138 = arith.constant 3 : index
    %c5_139 = arith.constant 5 : index
    %259 = memref.load %arg3[%c3_138, %c5_139] : memref<6x32xf32, #tpu.memory_space<smem>>
    %260 = vector.broadcast %259 : f32 to vector<1x128xf32>
    %261 = arith.mulf %8, %260 : vector<1x128xf32>
    %c4_140 = arith.constant 4 : index
    %c5_141 = arith.constant 5 : index
    %262 = memref.load %arg3[%c4_140, %c5_141] : memref<6x32xf32, #tpu.memory_space<smem>>
    %263 = vector.broadcast %262 : f32 to vector<1x128xf32>
    %264 = arith.mulf %9, %263 : vector<1x128xf32>
    %265 = arith.addf %261, %264 : vector<1x128xf32>
    %c5_142 = arith.constant 5 : index
    %c5_143 = arith.constant 5 : index
    %266 = memref.load %arg3[%c5_142, %c5_143] : memref<6x32xf32, #tpu.memory_space<smem>>
    %267 = vector.broadcast %266 : f32 to vector<1x128xf32>
    %268 = arith.mulf %10, %267 : vector<1x128xf32>
    %269 = arith.addf %265, %268 : vector<1x128xf32>
    %c0_144 = arith.constant 0 : index
    %c5_145 = arith.constant 5 : index
    %270 = memref.load %arg4[%c0_144, %c5_145] : memref<1x32xf32, #tpu.memory_space<smem>>
    %271 = vector.broadcast %270 : f32 to vector<1x128xf32>
    %272 = arith.addf %269, %271 : vector<1x128xf32>
    %c0_146 = arith.constant 0 : index
    %c5_147 = arith.constant 5 : index
    %273 = memref.load %arg3[%c0_146, %c5_147] : memref<6x32xf32, #tpu.memory_space<smem>>
    %274 = vector.broadcast %273 : f32 to vector<8x128xf32>
    %275 = arith.mulf %14, %274 : vector<8x128xf32>
    %c1_148 = arith.constant 1 : index
    %c5_149 = arith.constant 5 : index
    %276 = memref.load %arg3[%c1_148, %c5_149] : memref<6x32xf32, #tpu.memory_space<smem>>
    %277 = vector.broadcast %276 : f32 to vector<8x128xf32>
    %278 = arith.mulf %18, %277 : vector<8x128xf32>
    %279 = arith.addf %275, %278 : vector<8x128xf32>
    %c2_150 = arith.constant 2 : index
    %c5_151 = arith.constant 5 : index
    %280 = memref.load %arg3[%c2_150, %c5_151] : memref<6x32xf32, #tpu.memory_space<smem>>
    %281 = vector.broadcast %280 : f32 to vector<8x128xf32>
    %282 = arith.mulf %22, %281 : vector<8x128xf32>
    %283 = arith.addf %279, %282 : vector<8x128xf32>
    %284 = vector.broadcast %272 : vector<1x128xf32> to vector<8x128xf32>
    %285 = arith.addf %283, %284 : vector<8x128xf32>
    %cst_152 = arith.constant 0.000000e+00 : f32
    %286 = vector.broadcast %cst_152 : f32 to vector<8x128xf32>
    %287 = arith.maximumf %285, %286 : vector<8x128xf32>
    %c5_153 = arith.constant 5 : index
    %c0_154 = arith.constant 0 : index
    %c0_155 = arith.constant 0 : index
    %288 = vector.load %arg9[%c5_153, %c0_154, %c0_155] : memref<32x8x128xf32, #tpu.memory_space<vmem>>, vector<1x8x128xf32>
    %289 = vector.shape_cast %288 : vector<1x8x128xf32> to vector<8x128xf32>
    %290 = vector.shape_cast %287 : vector<8x128xf32> to vector<1x8x128xf32>
    tpu.vector_store %arg9[%c5_153, %c0_154, %c0_155], %290 {strides = array<i32>} : memref<32x8x128xf32, #tpu.memory_space<vmem>>, vector<1x8x128xf32>,
    %c5_156 = arith.constant 5 : index
    %c0_157 = arith.constant 0 : index
    %291 = memref.load %arg5[%c5_156, %c0_157] : memref<32x12xf32, #tpu.memory_space<smem>>
    %292 = vector.broadcast %291 : f32 to vector<8x128xf32>
    %293 = arith.mulf %287, %292 : vector<8x128xf32>
    %294 = arith.addf %246, %293 : vector<8x128xf32>
    %c5_158 = arith.constant 5 : index
    %c1_159 = arith.constant 1 : index
    %295 = memref.load %arg5[%c5_158, %c1_159] : memref<32x12xf32, #tpu.memory_space<smem>>
    %296 = vector.broadcast %295 : f32 to vector<8x128xf32>
    %297 = arith.mulf %287, %296 : vector<8x128xf32>
    %298 = arith.addf %250, %297 : vector<8x128xf32>
    %c5_160 = arith.constant 5 : index
    %c2_161 = arith.constant 2 : index
    %299 = memref.load %arg5[%c5_160, %c2_161] : memref<32x12xf32, #tpu.memory_space<smem>>
    %300 = vector.broadcast %299 : f32 to vector<8x128xf32>
    %301 = arith.mulf %287, %300 : vector<8x128xf32>
    %302 = arith.addf %254, %301 : vector<8x128xf32>
    %c5_162 = arith.constant 5 : index
    %c3_163 = arith.constant 3 : index
    %303 = memref.load %arg5[%c5_162, %c3_163] : memref<32x12xf32, #tpu.memory_space<smem>>
    %304 = vector.broadcast %303 : f32 to vector<8x128xf32>
    %305 = arith.mulf %287, %304 : vector<8x128xf32>
    %306 = arith.addf %258, %305 : vector<8x128xf32>
    %c3_164 = arith.constant 3 : index
    %c6 = arith.constant 6 : index
    %307 = memref.load %arg3[%c3_164, %c6] : memref<6x32xf32, #tpu.memory_space<smem>>
    %308 = vector.broadcast %307 : f32 to vector<1x128xf32>
    %309 = arith.mulf %8, %308 : vector<1x128xf32>
    %c4_165 = arith.constant 4 : index
    %c6_166 = arith.constant 6 : index
    %310 = memref.load %arg3[%c4_165, %c6_166] : memref<6x32xf32, #tpu.memory_space<smem>>
    %311 = vector.broadcast %310 : f32 to vector<1x128xf32>
    %312 = arith.mulf %9, %311 : vector<1x128xf32>
    %313 = arith.addf %309, %312 : vector<1x128xf32>
    %c5_167 = arith.constant 5 : index
    %c6_168 = arith.constant 6 : index
    %314 = memref.load %arg3[%c5_167, %c6_168] : memref<6x32xf32, #tpu.memory_space<smem>>
    %315 = vector.broadcast %314 : f32 to vector<1x128xf32>
    %316 = arith.mulf %10, %315 : vector<1x128xf32>
    %317 = arith.addf %313, %316 : vector<1x128xf32>
    %c0_169 = arith.constant 0 : index
    %c6_170 = arith.constant 6 : index
    %318 = memref.load %arg4[%c0_169, %c6_170] : memref<1x32xf32, #tpu.memory_space<smem>>
    %319 = vector.broadcast %318 : f32 to vector<1x128xf32>
    %320 = arith.addf %317, %319 : vector<1x128xf32>
    %c0_171 = arith.constant 0 : index
    %c6_172 = arith.constant 6 : index
    %321 = memref.load %arg3[%c0_171, %c6_172] : memref<6x32xf32, #tpu.memory_space<smem>>
    %322 = vector.broadcast %321 : f32 to vector<8x128xf32>
    %323 = arith.mulf %14, %322 : vector<8x128xf32>
    %c1_173 = arith.constant 1 : index
    %c6_174 = arith.constant 6 : index
    %324 = memref.load %arg3[%c1_173, %c6_174] : memref<6x32xf32, #tpu.memory_space<smem>>
    %325 = vector.broadcast %324 : f32 to vector<8x128xf32>
    %326 = arith.mulf %18, %325 : vector<8x128xf32>
    %327 = arith.addf %323, %326 : vector<8x128xf32>
    %c2_175 = arith.constant 2 : index
    %c6_176 = arith.constant 6 : index
    %328 = memref.load %arg3[%c2_175, %c6_176] : memref<6x32xf32, #tpu.memory_space<smem>>
    %329 = vector.broadcast %328 : f32 to vector<8x128xf32>
    %330 = arith.mulf %22, %329 : vector<8x128xf32>
    %331 = arith.addf %327, %330 : vector<8x128xf32>
    %332 = vector.broadcast %320 : vector<1x128xf32> to vector<8x128xf32>
    %333 = arith.addf %331, %332 : vector<8x128xf32>
    %cst_177 = arith.constant 0.000000e+00 : f32
    %334 = vector.broadcast %cst_177 : f32 to vector<8x128xf32>
    %335 = arith.maximumf %333, %334 : vector<8x128xf32>
    %c6_178 = arith.constant 6 : index
    %c0_179 = arith.constant 0 : index
    %c0_180 = arith.constant 0 : index
    %336 = vector.load %arg9[%c6_178, %c0_179, %c0_180] : memref<32x8x128xf32, #tpu.memory_space<vmem>>, vector<1x8x128xf32>
    %337 = vector.shape_cast %336 : vector<1x8x128xf32> to vector<8x128xf32>
    %338 = vector.shape_cast %335 : vector<8x128xf32> to vector<1x8x128xf32>
    tpu.vector_store %arg9[%c6_178, %c0_179, %c0_180], %338 {strides = array<i32>} : memref<32x8x128xf32, #tpu.memory_space<vmem>>, vector<1x8x128xf32>,
    %c6_181 = arith.constant 6 : index
    %c0_182 = arith.constant 0 : index
    %339 = memref.load %arg5[%c6_181, %c0_182] : memref<32x12xf32, #tpu.memory_space<smem>>
    %340 = vector.broadcast %339 : f32 to vector<8x128xf32>
    %341 = arith.mulf %335, %340 : vector<8x128xf32>
    %342 = arith.addf %294, %341 : vector<8x128xf32>
    %c6_183 = arith.constant 6 : index
    %c1_184 = arith.constant 1 : index
    %343 = memref.load %arg5[%c6_183, %c1_184] : memref<32x12xf32, #tpu.memory_space<smem>>
    %344 = vector.broadcast %343 : f32 to vector<8x128xf32>
    %345 = arith.mulf %335, %344 : vector<8x128xf32>
    %346 = arith.addf %298, %345 : vector<8x128xf32>
    %c6_185 = arith.constant 6 : index
    %c2_186 = arith.constant 2 : index
    %347 = memref.load %arg5[%c6_185, %c2_186] : memref<32x12xf32, #tpu.memory_space<smem>>
    %348 = vector.broadcast %347 : f32 to vector<8x128xf32>
    %349 = arith.mulf %335, %348 : vector<8x128xf32>
    %350 = arith.addf %302, %349 : vector<8x128xf32>
    %c6_187 = arith.constant 6 : index
    %c3_188 = arith.constant 3 : index
    %351 = memref.load %arg5[%c6_187, %c3_188] : memref<32x12xf32, #tpu.memory_space<smem>>
    %352 = vector.broadcast %351 : f32 to vector<8x128xf32>
    %353 = arith.mulf %335, %352 : vector<8x128xf32>
    %354 = arith.addf %306, %353 : vector<8x128xf32>
    %c3_189 = arith.constant 3 : index
    %c7_190 = arith.constant 7 : index
    %355 = memref.load %arg3[%c3_189, %c7_190] : memref<6x32xf32, #tpu.memory_space<smem>>
    %356 = vector.broadcast %355 : f32 to vector<1x128xf32>
    %357 = arith.mulf %8, %356 : vector<1x128xf32>
    %c4_191 = arith.constant 4 : index
    %c7_192 = arith.constant 7 : index
    %358 = memref.load %arg3[%c4_191, %c7_192] : memref<6x32xf32, #tpu.memory_space<smem>>
    %359 = vector.broadcast %358 : f32 to vector<1x128xf32>
    %360 = arith.mulf %9, %359 : vector<1x128xf32>
    %361 = arith.addf %357, %360 : vector<1x128xf32>
    %c5_193 = arith.constant 5 : index
    %c7_194 = arith.constant 7 : index
    %362 = memref.load %arg3[%c5_193, %c7_194] : memref<6x32xf32, #tpu.memory_space<smem>>
    %363 = vector.broadcast %362 : f32 to vector<1x128xf32>
    %364 = arith.mulf %10, %363 : vector<1x128xf32>
    %365 = arith.addf %361, %364 : vector<1x128xf32>
    %c0_195 = arith.constant 0 : index
    %c7_196 = arith.constant 7 : index
    %366 = memref.load %arg4[%c0_195, %c7_196] : memref<1x32xf32, #tpu.memory_space<smem>>
    %367 = vector.broadcast %366 : f32 to vector<1x128xf32>
    %368 = arith.addf %365, %367 : vector<1x128xf32>
    %c0_197 = arith.constant 0 : index
    %c7_198 = arith.constant 7 : index
    %369 = memref.load %arg3[%c0_197, %c7_198] : memref<6x32xf32, #tpu.memory_space<smem>>
    %370 = vector.broadcast %369 : f32 to vector<8x128xf32>
    %371 = arith.mulf %14, %370 : vector<8x128xf32>
    %c1_199 = arith.constant 1 : index
    %c7_200 = arith.constant 7 : index
    %372 = memref.load %arg3[%c1_199, %c7_200] : memref<6x32xf32, #tpu.memory_space<smem>>
    %373 = vector.broadcast %372 : f32 to vector<8x128xf32>
    %374 = arith.mulf %18, %373 : vector<8x128xf32>
    %375 = arith.addf %371, %374 : vector<8x128xf32>
    %c2_201 = arith.constant 2 : index
    %c7_202 = arith.constant 7 : index
    %376 = memref.load %arg3[%c2_201, %c7_202] : memref<6x32xf32, #tpu.memory_space<smem>>
    %377 = vector.broadcast %376 : f32 to vector<8x128xf32>
    %378 = arith.mulf %22, %377 : vector<8x128xf32>
    %379 = arith.addf %375, %378 : vector<8x128xf32>
    %380 = vector.broadcast %368 : vector<1x128xf32> to vector<8x128xf32>
    %381 = arith.addf %379, %380 : vector<8x128xf32>
    %cst_203 = arith.constant 0.000000e+00 : f32
    %382 = vector.broadcast %cst_203 : f32 to vector<8x128xf32>
    %383 = arith.maximumf %381, %382 : vector<8x128xf32>
    %c7_204 = arith.constant 7 : index
    %c0_205 = arith.constant 0 : index
    %c0_206 = arith.constant 0 : index
    %384 = vector.load %arg9[%c7_204, %c0_205, %c0_206] : memref<32x8x128xf32, #tpu.memory_space<vmem>>, vector<1x8x128xf32>
    %385 = vector.shape_cast %384 : vector<1x8x128xf32> to vector<8x128xf32>
    %386 = vector.shape_cast %383 : vector<8x128xf32> to vector<1x8x128xf32>
    tpu.vector_store %arg9[%c7_204, %c0_205, %c0_206], %386 {strides = array<i32>} : memref<32x8x128xf32, #tpu.memory_space<vmem>>, vector<1x8x128xf32>,
    %c7_207 = arith.constant 7 : index
    %c0_208 = arith.constant 0 : index
    %387 = memref.load %arg5[%c7_207, %c0_208] : memref<32x12xf32, #tpu.memory_space<smem>>
    %388 = vector.broadcast %387 : f32 to vector<8x128xf32>
    %389 = arith.mulf %383, %388 : vector<8x128xf32>
    %390 = arith.addf %342, %389 : vector<8x128xf32>
    %c7_209 = arith.constant 7 : index
    %c1_210 = arith.constant 1 : index
    %391 = memref.load %arg5[%c7_209, %c1_210] : memref<32x12xf32, #tpu.memory_space<smem>>
    %392 = vector.broadcast %391 : f32 to vector<8x128xf32>
    %393 = arith.mulf %383, %392 : vector<8x128xf32>
    %394 = arith.addf %346, %393 : vector<8x128xf32>
    %c7_211 = arith.constant 7 : index
    %c2_212 = arith.constant 2 : index
    %395 = memref.load %arg5[%c7_211, %c2_212] : memref<32x12xf32, #tpu.memory_space<smem>>
    %396 = vector.broadcast %395 : f32 to vector<8x128xf32>
    %397 = arith.mulf %383, %396 : vector<8x128xf32>
    %398 = arith.addf %350, %397 : vector<8x128xf32>
    %c7_213 = arith.constant 7 : index
    %c3_214 = arith.constant 3 : index
    %399 = memref.load %arg5[%c7_213, %c3_214] : memref<32x12xf32, #tpu.memory_space<smem>>
    %400 = vector.broadcast %399 : f32 to vector<8x128xf32>
    %401 = arith.mulf %383, %400 : vector<8x128xf32>
    %402 = arith.addf %354, %401 : vector<8x128xf32>
    %c3_215 = arith.constant 3 : index
    %c8 = arith.constant 8 : index
    %403 = memref.load %arg3[%c3_215, %c8] : memref<6x32xf32, #tpu.memory_space<smem>>
    %404 = vector.broadcast %403 : f32 to vector<1x128xf32>
    %405 = arith.mulf %8, %404 : vector<1x128xf32>
    %c4_216 = arith.constant 4 : index
    %c8_217 = arith.constant 8 : index
    %406 = memref.load %arg3[%c4_216, %c8_217] : memref<6x32xf32, #tpu.memory_space<smem>>
    %407 = vector.broadcast %406 : f32 to vector<1x128xf32>
    %408 = arith.mulf %9, %407 : vector<1x128xf32>
    %409 = arith.addf %405, %408 : vector<1x128xf32>
    %c5_218 = arith.constant 5 : index
    %c8_219 = arith.constant 8 : index
    %410 = memref.load %arg3[%c5_218, %c8_219] : memref<6x32xf32, #tpu.memory_space<smem>>
    %411 = vector.broadcast %410 : f32 to vector<1x128xf32>
    %412 = arith.mulf %10, %411 : vector<1x128xf32>
    %413 = arith.addf %409, %412 : vector<1x128xf32>
    %c0_220 = arith.constant 0 : index
    %c8_221 = arith.constant 8 : index
    %414 = memref.load %arg4[%c0_220, %c8_221] : memref<1x32xf32, #tpu.memory_space<smem>>
    %415 = vector.broadcast %414 : f32 to vector<1x128xf32>
    %416 = arith.addf %413, %415 : vector<1x128xf32>
    %c0_222 = arith.constant 0 : index
    %c8_223 = arith.constant 8 : index
    %417 = memref.load %arg3[%c0_222, %c8_223] : memref<6x32xf32, #tpu.memory_space<smem>>
    %418 = vector.broadcast %417 : f32 to vector<8x128xf32>
    %419 = arith.mulf %14, %418 : vector<8x128xf32>
    %c1_224 = arith.constant 1 : index
    %c8_225 = arith.constant 8 : index
    %420 = memref.load %arg3[%c1_224, %c8_225] : memref<6x32xf32, #tpu.memory_space<smem>>
    %421 = vector.broadcast %420 : f32 to vector<8x128xf32>
    %422 = arith.mulf %18, %421 : vector<8x128xf32>
    %423 = arith.addf %419, %422 : vector<8x128xf32>
    %c2_226 = arith.constant 2 : index
    %c8_227 = arith.constant 8 : index
    %424 = memref.load %arg3[%c2_226, %c8_227] : memref<6x32xf32, #tpu.memory_space<smem>>
    %425 = vector.broadcast %424 : f32 to vector<8x128xf32>
    %426 = arith.mulf %22, %425 : vector<8x128xf32>
    %427 = arith.addf %423, %426 : vector<8x128xf32>
    %428 = vector.broadcast %416 : vector<1x128xf32> to vector<8x128xf32>
    %429 = arith.addf %427, %428 : vector<8x128xf32>
    %cst_228 = arith.constant 0.000000e+00 : f32
    %430 = vector.broadcast %cst_228 : f32 to vector<8x128xf32>
    %431 = arith.maximumf %429, %430 : vector<8x128xf32>
    %c8_229 = arith.constant 8 : index
    %c0_230 = arith.constant 0 : index
    %c0_231 = arith.constant 0 : index
    %432 = vector.load %arg9[%c8_229, %c0_230, %c0_231] : memref<32x8x128xf32, #tpu.memory_space<vmem>>, vector<1x8x128xf32>
    %433 = vector.shape_cast %432 : vector<1x8x128xf32> to vector<8x128xf32>
    %434 = vector.shape_cast %431 : vector<8x128xf32> to vector<1x8x128xf32>
    tpu.vector_store %arg9[%c8_229, %c0_230, %c0_231], %434 {strides = array<i32>} : memref<32x8x128xf32, #tpu.memory_space<vmem>>, vector<1x8x128xf32>,
    %c8_232 = arith.constant 8 : index
    %c0_233 = arith.constant 0 : index
    %435 = memref.load %arg5[%c8_232, %c0_233] : memref<32x12xf32, #tpu.memory_space<smem>>
    %436 = vector.broadcast %435 : f32 to vector<8x128xf32>
    %437 = arith.mulf %431, %436 : vector<8x128xf32>
    %438 = arith.addf %390, %437 : vector<8x128xf32>
    %c8_234 = arith.constant 8 : index
    %c1_235 = arith.constant 1 : index
    %439 = memref.load %arg5[%c8_234, %c1_235] : memref<32x12xf32, #tpu.memory_space<smem>>
    %440 = vector.broadcast %439 : f32 to vector<8x128xf32>
    %441 = arith.mulf %431, %440 : vector<8x128xf32>
    %442 = arith.addf %394, %441 : vector<8x128xf32>
    %c8_236 = arith.constant 8 : index
    %c2_237 = arith.constant 2 : index
    %443 = memref.load %arg5[%c8_236, %c2_237] : memref<32x12xf32, #tpu.memory_space<smem>>
    %444 = vector.broadcast %443 : f32 to vector<8x128xf32>
    %445 = arith.mulf %431, %444 : vector<8x128xf32>
    %446 = arith.addf %398, %445 : vector<8x128xf32>
    %c8_238 = arith.constant 8 : index
    %c3_239 = arith.constant 3 : index
    %447 = memref.load %arg5[%c8_238, %c3_239] : memref<32x12xf32, #tpu.memory_space<smem>>
    %448 = vector.broadcast %447 : f32 to vector<8x128xf32>
    %449 = arith.mulf %431, %448 : vector<8x128xf32>
    %450 = arith.addf %402, %449 : vector<8x128xf32>
    %c3_240 = arith.constant 3 : index
    %c9 = arith.constant 9 : index
    %451 = memref.load %arg3[%c3_240, %c9] : memref<6x32xf32, #tpu.memory_space<smem>>
    %452 = vector.broadcast %451 : f32 to vector<1x128xf32>
    %453 = arith.mulf %8, %452 : vector<1x128xf32>
    %c4_241 = arith.constant 4 : index
    %c9_242 = arith.constant 9 : index
    %454 = memref.load %arg3[%c4_241, %c9_242] : memref<6x32xf32, #tpu.memory_space<smem>>
    %455 = vector.broadcast %454 : f32 to vector<1x128xf32>
    %456 = arith.mulf %9, %455 : vector<1x128xf32>
    %457 = arith.addf %453, %456 : vector<1x128xf32>
    %c5_243 = arith.constant 5 : index
    %c9_244 = arith.constant 9 : index
    %458 = memref.load %arg3[%c5_243, %c9_244] : memref<6x32xf32, #tpu.memory_space<smem>>
    %459 = vector.broadcast %458 : f32 to vector<1x128xf32>
    %460 = arith.mulf %10, %459 : vector<1x128xf32>
    %461 = arith.addf %457, %460 : vector<1x128xf32>
    %c0_245 = arith.constant 0 : index
    %c9_246 = arith.constant 9 : index
    %462 = memref.load %arg4[%c0_245, %c9_246] : memref<1x32xf32, #tpu.memory_space<smem>>
    %463 = vector.broadcast %462 : f32 to vector<1x128xf32>
    %464 = arith.addf %461, %463 : vector<1x128xf32>
    %c0_247 = arith.constant 0 : index
    %c9_248 = arith.constant 9 : index
    %465 = memref.load %arg3[%c0_247, %c9_248] : memref<6x32xf32, #tpu.memory_space<smem>>
    %466 = vector.broadcast %465 : f32 to vector<8x128xf32>
    %467 = arith.mulf %14, %466 : vector<8x128xf32>
    %c1_249 = arith.constant 1 : index
    %c9_250 = arith.constant 9 : index
    %468 = memref.load %arg3[%c1_249, %c9_250] : memref<6x32xf32, #tpu.memory_space<smem>>
    %469 = vector.broadcast %468 : f32 to vector<8x128xf32>
    %470 = arith.mulf %18, %469 : vector<8x128xf32>
    %471 = arith.addf %467, %470 : vector<8x128xf32>
    %c2_251 = arith.constant 2 : index
    %c9_252 = arith.constant 9 : index
    %472 = memref.load %arg3[%c2_251, %c9_252] : memref<6x32xf32, #tpu.memory_space<smem>>
    %473 = vector.broadcast %472 : f32 to vector<8x128xf32>
    %474 = arith.mulf %22, %473 : vector<8x128xf32>
    %475 = arith.addf %471, %474 : vector<8x128xf32>
    %476 = vector.broadcast %464 : vector<1x128xf32> to vector<8x128xf32>
    %477 = arith.addf %475, %476 : vector<8x128xf32>
    %cst_253 = arith.constant 0.000000e+00 : f32
    %478 = vector.broadcast %cst_253 : f32 to vector<8x128xf32>
    %479 = arith.maximumf %477, %478 : vector<8x128xf32>
    %c9_254 = arith.constant 9 : index
    %c0_255 = arith.constant 0 : index
    %c0_256 = arith.constant 0 : index
    %480 = vector.load %arg9[%c9_254, %c0_255, %c0_256] : memref<32x8x128xf32, #tpu.memory_space<vmem>>, vector<1x8x128xf32>
    %481 = vector.shape_cast %480 : vector<1x8x128xf32> to vector<8x128xf32>
    %482 = vector.shape_cast %479 : vector<8x128xf32> to vector<1x8x128xf32>
    tpu.vector_store %arg9[%c9_254, %c0_255, %c0_256], %482 {strides = array<i32>} : memref<32x8x128xf32, #tpu.memory_space<vmem>>, vector<1x8x128xf32>,
    %c9_257 = arith.constant 9 : index
    %c0_258 = arith.constant 0 : index
    %483 = memref.load %arg5[%c9_257, %c0_258] : memref<32x12xf32, #tpu.memory_space<smem>>
    %484 = vector.broadcast %483 : f32 to vector<8x128xf32>
    %485 = arith.mulf %479, %484 : vector<8x128xf32>
    %486 = arith.addf %438, %485 : vector<8x128xf32>
    %c9_259 = arith.constant 9 : index
    %c1_260 = arith.constant 1 : index
    %487 = memref.load %arg5[%c9_259, %c1_260] : memref<32x12xf32, #tpu.memory_space<smem>>
    %488 = vector.broadcast %487 : f32 to vector<8x128xf32>
    %489 = arith.mulf %479, %488 : vector<8x128xf32>
    %490 = arith.addf %442, %489 : vector<8x128xf32>
    %c9_261 = arith.constant 9 : index
    %c2_262 = arith.constant 2 : index
    %491 = memref.load %arg5[%c9_261, %c2_262] : memref<32x12xf32, #tpu.memory_space<smem>>
    %492 = vector.broadcast %491 : f32 to vector<8x128xf32>
    %493 = arith.mulf %479, %492 : vector<8x128xf32>
    %494 = arith.addf %446, %493 : vector<8x128xf32>
    %c9_263 = arith.constant 9 : index
    %c3_264 = arith.constant 3 : index
    %495 = memref.load %arg5[%c9_263, %c3_264] : memref<32x12xf32, #tpu.memory_space<smem>>
    %496 = vector.broadcast %495 : f32 to vector<8x128xf32>
    %497 = arith.mulf %479, %496 : vector<8x128xf32>
    %498 = arith.addf %450, %497 : vector<8x128xf32>
    %c3_265 = arith.constant 3 : index
    %c10 = arith.constant 10 : index
    %499 = memref.load %arg3[%c3_265, %c10] : memref<6x32xf32, #tpu.memory_space<smem>>
    %500 = vector.broadcast %499 : f32 to vector<1x128xf32>
    %501 = arith.mulf %8, %500 : vector<1x128xf32>
    %c4_266 = arith.constant 4 : index
    %c10_267 = arith.constant 10 : index
    %502 = memref.load %arg3[%c4_266, %c10_267] : memref<6x32xf32, #tpu.memory_space<smem>>
    %503 = vector.broadcast %502 : f32 to vector<1x128xf32>
    %504 = arith.mulf %9, %503 : vector<1x128xf32>
    %505 = arith.addf %501, %504 : vector<1x128xf32>
    %c5_268 = arith.constant 5 : index
    %c10_269 = arith.constant 10 : index
    %506 = memref.load %arg3[%c5_268, %c10_269] : memref<6x32xf32, #tpu.memory_space<smem>>
    %507 = vector.broadcast %506 : f32 to vector<1x128xf32>
    %508 = arith.mulf %10, %507 : vector<1x128xf32>
    %509 = arith.addf %505, %508 : vector<1x128xf32>
    %c0_270 = arith.constant 0 : index
    %c10_271 = arith.constant 10 : index
    %510 = memref.load %arg4[%c0_270, %c10_271] : memref<1x32xf32, #tpu.memory_space<smem>>
    %511 = vector.broadcast %510 : f32 to vector<1x128xf32>
    %512 = arith.addf %509, %511 : vector<1x128xf32>
    %c0_272 = arith.constant 0 : index
    %c10_273 = arith.constant 10 : index
    %513 = memref.load %arg3[%c0_272, %c10_273] : memref<6x32xf32, #tpu.memory_space<smem>>
    %514 = vector.broadcast %513 : f32 to vector<8x128xf32>
    %515 = arith.mulf %14, %514 : vector<8x128xf32>
    %c1_274 = arith.constant 1 : index
    %c10_275 = arith.constant 10 : index
    %516 = memref.load %arg3[%c1_274, %c10_275] : memref<6x32xf32, #tpu.memory_space<smem>>
    %517 = vector.broadcast %516 : f32 to vector<8x128xf32>
    %518 = arith.mulf %18, %517 : vector<8x128xf32>
    %519 = arith.addf %515, %518 : vector<8x128xf32>
    %c2_276 = arith.constant 2 : index
    %c10_277 = arith.constant 10 : index
    %520 = memref.load %arg3[%c2_276, %c10_277] : memref<6x32xf32, #tpu.memory_space<smem>>
    %521 = vector.broadcast %520 : f32 to vector<8x128xf32>
    %522 = arith.mulf %22, %521 : vector<8x128xf32>
    %523 = arith.addf %519, %522 : vector<8x128xf32>
    %524 = vector.broadcast %512 : vector<1x128xf32> to vector<8x128xf32>
    %525 = arith.addf %523, %524 : vector<8x128xf32>
    %cst_278 = arith.constant 0.000000e+00 : f32
    %526 = vector.broadcast %cst_278 : f32 to vector<8x128xf32>
    %527 = arith.maximumf %525, %526 : vector<8x128xf32>
    %c10_279 = arith.constant 10 : index
    %c0_280 = arith.constant 0 : index
    %c0_281 = arith.constant 0 : index
    %528 = vector.load %arg9[%c10_279, %c0_280, %c0_281] : memref<32x8x128xf32, #tpu.memory_space<vmem>>, vector<1x8x128xf32>
    %529 = vector.shape_cast %528 : vector<1x8x128xf32> to vector<8x128xf32>
    %530 = vector.shape_cast %527 : vector<8x128xf32> to vector<1x8x128xf32>
    tpu.vector_store %arg9[%c10_279, %c0_280, %c0_281], %530 {strides = array<i32>} : memref<32x8x128xf32, #tpu.memory_space<vmem>>, vector<1x8x128xf32>,
    %c10_282 = arith.constant 10 : index
    %c0_283 = arith.constant 0 : index
    %531 = memref.load %arg5[%c10_282, %c0_283] : memref<32x12xf32, #tpu.memory_space<smem>>
    %532 = vector.broadcast %531 : f32 to vector<8x128xf32>
    %533 = arith.mulf %527, %532 : vector<8x128xf32>
    %534 = arith.addf %486, %533 : vector<8x128xf32>
    %c10_284 = arith.constant 10 : index
    %c1_285 = arith.constant 1 : index
    %535 = memref.load %arg5[%c10_284, %c1_285] : memref<32x12xf32, #tpu.memory_space<smem>>
    %536 = vector.broadcast %535 : f32 to vector<8x128xf32>
    %537 = arith.mulf %527, %536 : vector<8x128xf32>
    %538 = arith.addf %490, %537 : vector<8x128xf32>
    %c10_286 = arith.constant 10 : index
    %c2_287 = arith.constant 2 : index
    %539 = memref.load %arg5[%c10_286, %c2_287] : memref<32x12xf32, #tpu.memory_space<smem>>
    %540 = vector.broadcast %539 : f32 to vector<8x128xf32>
    %541 = arith.mulf %527, %540 : vector<8x128xf32>
    %542 = arith.addf %494, %541 : vector<8x128xf32>
    %c10_288 = arith.constant 10 : index
    %c3_289 = arith.constant 3 : index
    %543 = memref.load %arg5[%c10_288, %c3_289] : memref<32x12xf32, #tpu.memory_space<smem>>
    %544 = vector.broadcast %543 : f32 to vector<8x128xf32>
    %545 = arith.mulf %527, %544 : vector<8x128xf32>
    %546 = arith.addf %498, %545 : vector<8x128xf32>
    %c3_290 = arith.constant 3 : index
    %c11 = arith.constant 11 : index
    %547 = memref.load %arg3[%c3_290, %c11] : memref<6x32xf32, #tpu.memory_space<smem>>
    %548 = vector.broadcast %547 : f32 to vector<1x128xf32>
    %549 = arith.mulf %8, %548 : vector<1x128xf32>
    %c4_291 = arith.constant 4 : index
    %c11_292 = arith.constant 11 : index
    %550 = memref.load %arg3[%c4_291, %c11_292] : memref<6x32xf32, #tpu.memory_space<smem>>
    %551 = vector.broadcast %550 : f32 to vector<1x128xf32>
    %552 = arith.mulf %9, %551 : vector<1x128xf32>
    %553 = arith.addf %549, %552 : vector<1x128xf32>
    %c5_293 = arith.constant 5 : index
    %c11_294 = arith.constant 11 : index
    %554 = memref.load %arg3[%c5_293, %c11_294] : memref<6x32xf32, #tpu.memory_space<smem>>
    %555 = vector.broadcast %554 : f32 to vector<1x128xf32>
    %556 = arith.mulf %10, %555 : vector<1x128xf32>
    %557 = arith.addf %553, %556 : vector<1x128xf32>
    %c0_295 = arith.constant 0 : index
    %c11_296 = arith.constant 11 : index
    %558 = memref.load %arg4[%c0_295, %c11_296] : memref<1x32xf32, #tpu.memory_space<smem>>
    %559 = vector.broadcast %558 : f32 to vector<1x128xf32>
    %560 = arith.addf %557, %559 : vector<1x128xf32>
    %c0_297 = arith.constant 0 : index
    %c11_298 = arith.constant 11 : index
    %561 = memref.load %arg3[%c0_297, %c11_298] : memref<6x32xf32, #tpu.memory_space<smem>>
    %562 = vector.broadcast %561 : f32 to vector<8x128xf32>
    %563 = arith.mulf %14, %562 : vector<8x128xf32>
    %c1_299 = arith.constant 1 : index
    %c11_300 = arith.constant 11 : index
    %564 = memref.load %arg3[%c1_299, %c11_300] : memref<6x32xf32, #tpu.memory_space<smem>>
    %565 = vector.broadcast %564 : f32 to vector<8x128xf32>
    %566 = arith.mulf %18, %565 : vector<8x128xf32>
    %567 = arith.addf %563, %566 : vector<8x128xf32>
    %c2_301 = arith.constant 2 : index
    %c11_302 = arith.constant 11 : index
    %568 = memref.load %arg3[%c2_301, %c11_302] : memref<6x32xf32, #tpu.memory_space<smem>>
    %569 = vector.broadcast %568 : f32 to vector<8x128xf32>
    %570 = arith.mulf %22, %569 : vector<8x128xf32>
    %571 = arith.addf %567, %570 : vector<8x128xf32>
    %572 = vector.broadcast %560 : vector<1x128xf32> to vector<8x128xf32>
    %573 = arith.addf %571, %572 : vector<8x128xf32>
    %cst_303 = arith.constant 0.000000e+00 : f32
    %574 = vector.broadcast %cst_303 : f32 to vector<8x128xf32>
    %575 = arith.maximumf %573, %574 : vector<8x128xf32>
    %c11_304 = arith.constant 11 : index
    %c0_305 = arith.constant 0 : index
    %c0_306 = arith.constant 0 : index
    %576 = vector.load %arg9[%c11_304, %c0_305, %c0_306] : memref<32x8x128xf32, #tpu.memory_space<vmem>>, vector<1x8x128xf32>
    %577 = vector.shape_cast %576 : vector<1x8x128xf32> to vector<8x128xf32>
    %578 = vector.shape_cast %575 : vector<8x128xf32> to vector<1x8x128xf32>
    tpu.vector_store %arg9[%c11_304, %c0_305, %c0_306], %578 {strides = array<i32>} : memref<32x8x128xf32, #tpu.memory_space<vmem>>, vector<1x8x128xf32>,
    %c11_307 = arith.constant 11 : index
    %c0_308 = arith.constant 0 : index
    %579 = memref.load %arg5[%c11_307, %c0_308] : memref<32x12xf32, #tpu.memory_space<smem>>
    %580 = vector.broadcast %579 : f32 to vector<8x128xf32>
    %581 = arith.mulf %575, %580 : vector<8x128xf32>
    %582 = arith.addf %534, %581 : vector<8x128xf32>
    %c11_309 = arith.constant 11 : index
    %c1_310 = arith.constant 1 : index
    %583 = memref.load %arg5[%c11_309, %c1_310] : memref<32x12xf32, #tpu.memory_space<smem>>
    %584 = vector.broadcast %583 : f32 to vector<8x128xf32>
    %585 = arith.mulf %575, %584 : vector<8x128xf32>
    %586 = arith.addf %538, %585 : vector<8x128xf32>
    %c11_311 = arith.constant 11 : index
    %c2_312 = arith.constant 2 : index
    %587 = memref.load %arg5[%c11_311, %c2_312] : memref<32x12xf32, #tpu.memory_space<smem>>
    %588 = vector.broadcast %587 : f32 to vector<8x128xf32>
    %589 = arith.mulf %575, %588 : vector<8x128xf32>
    %590 = arith.addf %542, %589 : vector<8x128xf32>
    %c11_313 = arith.constant 11 : index
    %c3_314 = arith.constant 3 : index
    %591 = memref.load %arg5[%c11_313, %c3_314] : memref<32x12xf32, #tpu.memory_space<smem>>
    %592 = vector.broadcast %591 : f32 to vector<8x128xf32>
    %593 = arith.mulf %575, %592 : vector<8x128xf32>
    %594 = arith.addf %546, %593 : vector<8x128xf32>
    %c3_315 = arith.constant 3 : index
    %c12 = arith.constant 12 : index
    %595 = memref.load %arg3[%c3_315, %c12] : memref<6x32xf32, #tpu.memory_space<smem>>
    %596 = vector.broadcast %595 : f32 to vector<1x128xf32>
    %597 = arith.mulf %8, %596 : vector<1x128xf32>
    %c4_316 = arith.constant 4 : index
    %c12_317 = arith.constant 12 : index
    %598 = memref.load %arg3[%c4_316, %c12_317] : memref<6x32xf32, #tpu.memory_space<smem>>
    %599 = vector.broadcast %598 : f32 to vector<1x128xf32>
    %600 = arith.mulf %9, %599 : vector<1x128xf32>
    %601 = arith.addf %597, %600 : vector<1x128xf32>
    %c5_318 = arith.constant 5 : index
    %c12_319 = arith.constant 12 : index
    %602 = memref.load %arg3[%c5_318, %c12_319] : memref<6x32xf32, #tpu.memory_space<smem>>
    %603 = vector.broadcast %602 : f32 to vector<1x128xf32>
    %604 = arith.mulf %10, %603 : vector<1x128xf32>
    %605 = arith.addf %601, %604 : vector<1x128xf32>
    %c0_320 = arith.constant 0 : index
    %c12_321 = arith.constant 12 : index
    %606 = memref.load %arg4[%c0_320, %c12_321] : memref<1x32xf32, #tpu.memory_space<smem>>
    %607 = vector.broadcast %606 : f32 to vector<1x128xf32>
    %608 = arith.addf %605, %607 : vector<1x128xf32>
    %c0_322 = arith.constant 0 : index
    %c12_323 = arith.constant 12 : index
    %609 = memref.load %arg3[%c0_322, %c12_323] : memref<6x32xf32, #tpu.memory_space<smem>>
    %610 = vector.broadcast %609 : f32 to vector<8x128xf32>
    %611 = arith.mulf %14, %610 : vector<8x128xf32>
    %c1_324 = arith.constant 1 : index
    %c12_325 = arith.constant 12 : index
    %612 = memref.load %arg3[%c1_324, %c12_325] : memref<6x32xf32, #tpu.memory_space<smem>>
    %613 = vector.broadcast %612 : f32 to vector<8x128xf32>
    %614 = arith.mulf %18, %613 : vector<8x128xf32>
    %615 = arith.addf %611, %614 : vector<8x128xf32>
    %c2_326 = arith.constant 2 : index
    %c12_327 = arith.constant 12 : index
    %616 = memref.load %arg3[%c2_326, %c12_327] : memref<6x32xf32, #tpu.memory_space<smem>>
    %617 = vector.broadcast %616 : f32 to vector<8x128xf32>
    %618 = arith.mulf %22, %617 : vector<8x128xf32>
    %619 = arith.addf %615, %618 : vector<8x128xf32>
    %620 = vector.broadcast %608 : vector<1x128xf32> to vector<8x128xf32>
    %621 = arith.addf %619, %620 : vector<8x128xf32>
    %cst_328 = arith.constant 0.000000e+00 : f32
    %622 = vector.broadcast %cst_328 : f32 to vector<8x128xf32>
    %623 = arith.maximumf %621, %622 : vector<8x128xf32>
    %c12_329 = arith.constant 12 : index
    %c0_330 = arith.constant 0 : index
    %c0_331 = arith.constant 0 : index
    %624 = vector.load %arg9[%c12_329, %c0_330, %c0_331] : memref<32x8x128xf32, #tpu.memory_space<vmem>>, vector<1x8x128xf32>
    %625 = vector.shape_cast %624 : vector<1x8x128xf32> to vector<8x128xf32>
    %626 = vector.shape_cast %623 : vector<8x128xf32> to vector<1x8x128xf32>
    tpu.vector_store %arg9[%c12_329, %c0_330, %c0_331], %626 {strides = array<i32>} : memref<32x8x128xf32, #tpu.memory_space<vmem>>, vector<1x8x128xf32>,
    %c12_332 = arith.constant 12 : index
    %c0_333 = arith.constant 0 : index
    %627 = memref.load %arg5[%c12_332, %c0_333] : memref<32x12xf32, #tpu.memory_space<smem>>
    %628 = vector.broadcast %627 : f32 to vector<8x128xf32>
    %629 = arith.mulf %623, %628 : vector<8x128xf32>
    %630 = arith.addf %582, %629 : vector<8x128xf32>
    %c12_334 = arith.constant 12 : index
    %c1_335 = arith.constant 1 : index
    %631 = memref.load %arg5[%c12_334, %c1_335] : memref<32x12xf32, #tpu.memory_space<smem>>
    %632 = vector.broadcast %631 : f32 to vector<8x128xf32>
    %633 = arith.mulf %623, %632 : vector<8x128xf32>
    %634 = arith.addf %586, %633 : vector<8x128xf32>
    %c12_336 = arith.constant 12 : index
    %c2_337 = arith.constant 2 : index
    %635 = memref.load %arg5[%c12_336, %c2_337] : memref<32x12xf32, #tpu.memory_space<smem>>
    %636 = vector.broadcast %635 : f32 to vector<8x128xf32>
    %637 = arith.mulf %623, %636 : vector<8x128xf32>
    %638 = arith.addf %590, %637 : vector<8x128xf32>
    %c12_338 = arith.constant 12 : index
    %c3_339 = arith.constant 3 : index
    %639 = memref.load %arg5[%c12_338, %c3_339] : memref<32x12xf32, #tpu.memory_space<smem>>
    %640 = vector.broadcast %639 : f32 to vector<8x128xf32>
    %641 = arith.mulf %623, %640 : vector<8x128xf32>
    %642 = arith.addf %594, %641 : vector<8x128xf32>
    %c3_340 = arith.constant 3 : index
    %c13 = arith.constant 13 : index
    %643 = memref.load %arg3[%c3_340, %c13] : memref<6x32xf32, #tpu.memory_space<smem>>
    %644 = vector.broadcast %643 : f32 to vector<1x128xf32>
    %645 = arith.mulf %8, %644 : vector<1x128xf32>
    %c4_341 = arith.constant 4 : index
    %c13_342 = arith.constant 13 : index
    %646 = memref.load %arg3[%c4_341, %c13_342] : memref<6x32xf32, #tpu.memory_space<smem>>
    %647 = vector.broadcast %646 : f32 to vector<1x128xf32>
    %648 = arith.mulf %9, %647 : vector<1x128xf32>
    %649 = arith.addf %645, %648 : vector<1x128xf32>
    %c5_343 = arith.constant 5 : index
    %c13_344 = arith.constant 13 : index
    %650 = memref.load %arg3[%c5_343, %c13_344] : memref<6x32xf32, #tpu.memory_space<smem>>
    %651 = vector.broadcast %650 : f32 to vector<1x128xf32>
    %652 = arith.mulf %10, %651 : vector<1x128xf32>
    %653 = arith.addf %649, %652 : vector<1x128xf32>
    %c0_345 = arith.constant 0 : index
    %c13_346 = arith.constant 13 : index
    %654 = memref.load %arg4[%c0_345, %c13_346] : memref<1x32xf32, #tpu.memory_space<smem>>
    %655 = vector.broadcast %654 : f32 to vector<1x128xf32>
    %656 = arith.addf %653, %655 : vector<1x128xf32>
    %c0_347 = arith.constant 0 : index
    %c13_348 = arith.constant 13 : index
    %657 = memref.load %arg3[%c0_347, %c13_348] : memref<6x32xf32, #tpu.memory_space<smem>>
    %658 = vector.broadcast %657 : f32 to vector<8x128xf32>
    %659 = arith.mulf %14, %658 : vector<8x128xf32>
    %c1_349 = arith.constant 1 : index
    %c13_350 = arith.constant 13 : index
    %660 = memref.load %arg3[%c1_349, %c13_350] : memref<6x32xf32, #tpu.memory_space<smem>>
    %661 = vector.broadcast %660 : f32 to vector<8x128xf32>
    %662 = arith.mulf %18, %661 : vector<8x128xf32>
    %663 = arith.addf %659, %662 : vector<8x128xf32>
    %c2_351 = arith.constant 2 : index
    %c13_352 = arith.constant 13 : index
    %664 = memref.load %arg3[%c2_351, %c13_352] : memref<6x32xf32, #tpu.memory_space<smem>>
    %665 = vector.broadcast %664 : f32 to vector<8x128xf32>
    %666 = arith.mulf %22, %665 : vector<8x128xf32>
    %667 = arith.addf %663, %666 : vector<8x128xf32>
    %668 = vector.broadcast %656 : vector<1x128xf32> to vector<8x128xf32>
    %669 = arith.addf %667, %668 : vector<8x128xf32>
    %cst_353 = arith.constant 0.000000e+00 : f32
    %670 = vector.broadcast %cst_353 : f32 to vector<8x128xf32>
    %671 = arith.maximumf %669, %670 : vector<8x128xf32>
    %c13_354 = arith.constant 13 : index
    %c0_355 = arith.constant 0 : index
    %c0_356 = arith.constant 0 : index
    %672 = vector.load %arg9[%c13_354, %c0_355, %c0_356] : memref<32x8x128xf32, #tpu.memory_space<vmem>>, vector<1x8x128xf32>
    %673 = vector.shape_cast %672 : vector<1x8x128xf32> to vector<8x128xf32>
    %674 = vector.shape_cast %671 : vector<8x128xf32> to vector<1x8x128xf32>
    tpu.vector_store %arg9[%c13_354, %c0_355, %c0_356], %674 {strides = array<i32>} : memref<32x8x128xf32, #tpu.memory_space<vmem>>, vector<1x8x128xf32>,
    %c13_357 = arith.constant 13 : index
    %c0_358 = arith.constant 0 : index
    %675 = memref.load %arg5[%c13_357, %c0_358] : memref<32x12xf32, #tpu.memory_space<smem>>
    %676 = vector.broadcast %675 : f32 to vector<8x128xf32>
    %677 = arith.mulf %671, %676 : vector<8x128xf32>
    %678 = arith.addf %630, %677 : vector<8x128xf32>
    %c13_359 = arith.constant 13 : index
    %c1_360 = arith.constant 1 : index
    %679 = memref.load %arg5[%c13_359, %c1_360] : memref<32x12xf32, #tpu.memory_space<smem>>
    %680 = vector.broadcast %679 : f32 to vector<8x128xf32>
    %681 = arith.mulf %671, %680 : vector<8x128xf32>
    %682 = arith.addf %634, %681 : vector<8x128xf32>
    %c13_361 = arith.constant 13 : index
    %c2_362 = arith.constant 2 : index
    %683 = memref.load %arg5[%c13_361, %c2_362] : memref<32x12xf32, #tpu.memory_space<smem>>
    %684 = vector.broadcast %683 : f32 to vector<8x128xf32>
    %685 = arith.mulf %671, %684 : vector<8x128xf32>
    %686 = arith.addf %638, %685 : vector<8x128xf32>
    %c13_363 = arith.constant 13 : index
    %c3_364 = arith.constant 3 : index
    %687 = memref.load %arg5[%c13_363, %c3_364] : memref<32x12xf32, #tpu.memory_space<smem>>
    %688 = vector.broadcast %687 : f32 to vector<8x128xf32>
    %689 = arith.mulf %671, %688 : vector<8x128xf32>
    %690 = arith.addf %642, %689 : vector<8x128xf32>
    %c3_365 = arith.constant 3 : index
    %c14 = arith.constant 14 : index
    %691 = memref.load %arg3[%c3_365, %c14] : memref<6x32xf32, #tpu.memory_space<smem>>
    %692 = vector.broadcast %691 : f32 to vector<1x128xf32>
    %693 = arith.mulf %8, %692 : vector<1x128xf32>
    %c4_366 = arith.constant 4 : index
    %c14_367 = arith.constant 14 : index
    %694 = memref.load %arg3[%c4_366, %c14_367] : memref<6x32xf32, #tpu.memory_space<smem>>
    %695 = vector.broadcast %694 : f32 to vector<1x128xf32>
    %696 = arith.mulf %9, %695 : vector<1x128xf32>
    %697 = arith.addf %693, %696 : vector<1x128xf32>
    %c5_368 = arith.constant 5 : index
    %c14_369 = arith.constant 14 : index
    %698 = memref.load %arg3[%c5_368, %c14_369] : memref<6x32xf32, #tpu.memory_space<smem>>
    %699 = vector.broadcast %698 : f32 to vector<1x128xf32>
    %700 = arith.mulf %10, %699 : vector<1x128xf32>
    %701 = arith.addf %697, %700 : vector<1x128xf32>
    %c0_370 = arith.constant 0 : index
    %c14_371 = arith.constant 14 : index
    %702 = memref.load %arg4[%c0_370, %c14_371] : memref<1x32xf32, #tpu.memory_space<smem>>
    %703 = vector.broadcast %702 : f32 to vector<1x128xf32>
    %704 = arith.addf %701, %703 : vector<1x128xf32>
    %c0_372 = arith.constant 0 : index
    %c14_373 = arith.constant 14 : index
    %705 = memref.load %arg3[%c0_372, %c14_373] : memref<6x32xf32, #tpu.memory_space<smem>>
    %706 = vector.broadcast %705 : f32 to vector<8x128xf32>
    %707 = arith.mulf %14, %706 : vector<8x128xf32>
    %c1_374 = arith.constant 1 : index
    %c14_375 = arith.constant 14 : index
    %708 = memref.load %arg3[%c1_374, %c14_375] : memref<6x32xf32, #tpu.memory_space<smem>>
    %709 = vector.broadcast %708 : f32 to vector<8x128xf32>
    %710 = arith.mulf %18, %709 : vector<8x128xf32>
    %711 = arith.addf %707, %710 : vector<8x128xf32>
    %c2_376 = arith.constant 2 : index
    %c14_377 = arith.constant 14 : index
    %712 = memref.load %arg3[%c2_376, %c14_377] : memref<6x32xf32, #tpu.memory_space<smem>>
    %713 = vector.broadcast %712 : f32 to vector<8x128xf32>
    %714 = arith.mulf %22, %713 : vector<8x128xf32>
    %715 = arith.addf %711, %714 : vector<8x128xf32>
    %716 = vector.broadcast %704 : vector<1x128xf32> to vector<8x128xf32>
    %717 = arith.addf %715, %716 : vector<8x128xf32>
    %cst_378 = arith.constant 0.000000e+00 : f32
    %718 = vector.broadcast %cst_378 : f32 to vector<8x128xf32>
    %719 = arith.maximumf %717, %718 : vector<8x128xf32>
    %c14_379 = arith.constant 14 : index
    %c0_380 = arith.constant 0 : index
    %c0_381 = arith.constant 0 : index
    %720 = vector.load %arg9[%c14_379, %c0_380, %c0_381] : memref<32x8x128xf32, #tpu.memory_space<vmem>>, vector<1x8x128xf32>
    %721 = vector.shape_cast %720 : vector<1x8x128xf32> to vector<8x128xf32>
    %722 = vector.shape_cast %719 : vector<8x128xf32> to vector<1x8x128xf32>
    tpu.vector_store %arg9[%c14_379, %c0_380, %c0_381], %722 {strides = array<i32>} : memref<32x8x128xf32, #tpu.memory_space<vmem>>, vector<1x8x128xf32>,
    %c14_382 = arith.constant 14 : index
    %c0_383 = arith.constant 0 : index
    %723 = memref.load %arg5[%c14_382, %c0_383] : memref<32x12xf32, #tpu.memory_space<smem>>
    %724 = vector.broadcast %723 : f32 to vector<8x128xf32>
    %725 = arith.mulf %719, %724 : vector<8x128xf32>
    %726 = arith.addf %678, %725 : vector<8x128xf32>
    %c14_384 = arith.constant 14 : index
    %c1_385 = arith.constant 1 : index
    %727 = memref.load %arg5[%c14_384, %c1_385] : memref<32x12xf32, #tpu.memory_space<smem>>
    %728 = vector.broadcast %727 : f32 to vector<8x128xf32>
    %729 = arith.mulf %719, %728 : vector<8x128xf32>
    %730 = arith.addf %682, %729 : vector<8x128xf32>
    %c14_386 = arith.constant 14 : index
    %c2_387 = arith.constant 2 : index
    %731 = memref.load %arg5[%c14_386, %c2_387] : memref<32x12xf32, #tpu.memory_space<smem>>
    %732 = vector.broadcast %731 : f32 to vector<8x128xf32>
    %733 = arith.mulf %719, %732 : vector<8x128xf32>
    %734 = arith.addf %686, %733 : vector<8x128xf32>
    %c14_388 = arith.constant 14 : index
    %c3_389 = arith.constant 3 : index
    %735 = memref.load %arg5[%c14_388, %c3_389] : memref<32x12xf32, #tpu.memory_space<smem>>
    %736 = vector.broadcast %735 : f32 to vector<8x128xf32>
    %737 = arith.mulf %719, %736 : vector<8x128xf32>
    %738 = arith.addf %690, %737 : vector<8x128xf32>
    %c3_390 = arith.constant 3 : index
    %c15 = arith.constant 15 : index
    %739 = memref.load %arg3[%c3_390, %c15] : memref<6x32xf32, #tpu.memory_space<smem>>
    %740 = vector.broadcast %739 : f32 to vector<1x128xf32>
    %741 = arith.mulf %8, %740 : vector<1x128xf32>
    %c4_391 = arith.constant 4 : index
    %c15_392 = arith.constant 15 : index
    %742 = memref.load %arg3[%c4_391, %c15_392] : memref<6x32xf32, #tpu.memory_space<smem>>
    %743 = vector.broadcast %742 : f32 to vector<1x128xf32>
    %744 = arith.mulf %9, %743 : vector<1x128xf32>
    %745 = arith.addf %741, %744 : vector<1x128xf32>
    %c5_393 = arith.constant 5 : index
    %c15_394 = arith.constant 15 : index
    %746 = memref.load %arg3[%c5_393, %c15_394] : memref<6x32xf32, #tpu.memory_space<smem>>
    %747 = vector.broadcast %746 : f32 to vector<1x128xf32>
    %748 = arith.mulf %10, %747 : vector<1x128xf32>
    %749 = arith.addf %745, %748 : vector<1x128xf32>
    %c0_395 = arith.constant 0 : index
    %c15_396 = arith.constant 15 : index
    %750 = memref.load %arg4[%c0_395, %c15_396] : memref<1x32xf32, #tpu.memory_space<smem>>
    %751 = vector.broadcast %750 : f32 to vector<1x128xf32>
    %752 = arith.addf %749, %751 : vector<1x128xf32>
    %c0_397 = arith.constant 0 : index
    %c15_398 = arith.constant 15 : index
    %753 = memref.load %arg3[%c0_397, %c15_398] : memref<6x32xf32, #tpu.memory_space<smem>>
    %754 = vector.broadcast %753 : f32 to vector<8x128xf32>
    %755 = arith.mulf %14, %754 : vector<8x128xf32>
    %c1_399 = arith.constant 1 : index
    %c15_400 = arith.constant 15 : index
    %756 = memref.load %arg3[%c1_399, %c15_400] : memref<6x32xf32, #tpu.memory_space<smem>>
    %757 = vector.broadcast %756 : f32 to vector<8x128xf32>
    %758 = arith.mulf %18, %757 : vector<8x128xf32>
    %759 = arith.addf %755, %758 : vector<8x128xf32>
    %c2_401 = arith.constant 2 : index
    %c15_402 = arith.constant 15 : index
    %760 = memref.load %arg3[%c2_401, %c15_402] : memref<6x32xf32, #tpu.memory_space<smem>>
    %761 = vector.broadcast %760 : f32 to vector<8x128xf32>
    %762 = arith.mulf %22, %761 : vector<8x128xf32>
    %763 = arith.addf %759, %762 : vector<8x128xf32>
    %764 = vector.broadcast %752 : vector<1x128xf32> to vector<8x128xf32>
    %765 = arith.addf %763, %764 : vector<8x128xf32>
    %cst_403 = arith.constant 0.000000e+00 : f32
    %766 = vector.broadcast %cst_403 : f32 to vector<8x128xf32>
    %767 = arith.maximumf %765, %766 : vector<8x128xf32>
    %c15_404 = arith.constant 15 : index
    %c0_405 = arith.constant 0 : index
    %c0_406 = arith.constant 0 : index
    %768 = vector.load %arg9[%c15_404, %c0_405, %c0_406] : memref<32x8x128xf32, #tpu.memory_space<vmem>>, vector<1x8x128xf32>
    %769 = vector.shape_cast %768 : vector<1x8x128xf32> to vector<8x128xf32>
    %770 = vector.shape_cast %767 : vector<8x128xf32> to vector<1x8x128xf32>
    tpu.vector_store %arg9[%c15_404, %c0_405, %c0_406], %770 {strides = array<i32>} : memref<32x8x128xf32, #tpu.memory_space<vmem>>, vector<1x8x128xf32>,
    %c15_407 = arith.constant 15 : index
    %c0_408 = arith.constant 0 : index
    %771 = memref.load %arg5[%c15_407, %c0_408] : memref<32x12xf32, #tpu.memory_space<smem>>
    %772 = vector.broadcast %771 : f32 to vector<8x128xf32>
    %773 = arith.mulf %767, %772 : vector<8x128xf32>
    %774 = arith.addf %726, %773 : vector<8x128xf32>
    %c15_409 = arith.constant 15 : index
    %c1_410 = arith.constant 1 : index
    %775 = memref.load %arg5[%c15_409, %c1_410] : memref<32x12xf32, #tpu.memory_space<smem>>
    %776 = vector.broadcast %775 : f32 to vector<8x128xf32>
    %777 = arith.mulf %767, %776 : vector<8x128xf32>
    %778 = arith.addf %730, %777 : vector<8x128xf32>
    %c15_411 = arith.constant 15 : index
    %c2_412 = arith.constant 2 : index
    %779 = memref.load %arg5[%c15_411, %c2_412] : memref<32x12xf32, #tpu.memory_space<smem>>
    %780 = vector.broadcast %779 : f32 to vector<8x128xf32>
    %781 = arith.mulf %767, %780 : vector<8x128xf32>
    %782 = arith.addf %734, %781 : vector<8x128xf32>
    %c15_413 = arith.constant 15 : index
    %c3_414 = arith.constant 3 : index
    %783 = memref.load %arg5[%c15_413, %c3_414] : memref<32x12xf32, #tpu.memory_space<smem>>
    %784 = vector.broadcast %783 : f32 to vector<8x128xf32>
    %785 = arith.mulf %767, %784 : vector<8x128xf32>
    %786 = arith.addf %738, %785 : vector<8x128xf32>
    %c3_415 = arith.constant 3 : index
    %c16 = arith.constant 16 : index
    %787 = memref.load %arg3[%c3_415, %c16] : memref<6x32xf32, #tpu.memory_space<smem>>
    %788 = vector.broadcast %787 : f32 to vector<1x128xf32>
    %789 = arith.mulf %8, %788 : vector<1x128xf32>
    %c4_416 = arith.constant 4 : index
    %c16_417 = arith.constant 16 : index
    %790 = memref.load %arg3[%c4_416, %c16_417] : memref<6x32xf32, #tpu.memory_space<smem>>
    %791 = vector.broadcast %790 : f32 to vector<1x128xf32>
    %792 = arith.mulf %9, %791 : vector<1x128xf32>
    %793 = arith.addf %789, %792 : vector<1x128xf32>
    %c5_418 = arith.constant 5 : index
    %c16_419 = arith.constant 16 : index
    %794 = memref.load %arg3[%c5_418, %c16_419] : memref<6x32xf32, #tpu.memory_space<smem>>
    %795 = vector.broadcast %794 : f32 to vector<1x128xf32>
    %796 = arith.mulf %10, %795 : vector<1x128xf32>
    %797 = arith.addf %793, %796 : vector<1x128xf32>
    %c0_420 = arith.constant 0 : index
    %c16_421 = arith.constant 16 : index
    %798 = memref.load %arg4[%c0_420, %c16_421] : memref<1x32xf32, #tpu.memory_space<smem>>
    %799 = vector.broadcast %798 : f32 to vector<1x128xf32>
    %800 = arith.addf %797, %799 : vector<1x128xf32>
    %c0_422 = arith.constant 0 : index
    %c16_423 = arith.constant 16 : index
    %801 = memref.load %arg3[%c0_422, %c16_423] : memref<6x32xf32, #tpu.memory_space<smem>>
    %802 = vector.broadcast %801 : f32 to vector<8x128xf32>
    %803 = arith.mulf %14, %802 : vector<8x128xf32>
    %c1_424 = arith.constant 1 : index
    %c16_425 = arith.constant 16 : index
    %804 = memref.load %arg3[%c1_424, %c16_425] : memref<6x32xf32, #tpu.memory_space<smem>>
    %805 = vector.broadcast %804 : f32 to vector<8x128xf32>
    %806 = arith.mulf %18, %805 : vector<8x128xf32>
    %807 = arith.addf %803, %806 : vector<8x128xf32>
    %c2_426 = arith.constant 2 : index
    %c16_427 = arith.constant 16 : index
    %808 = memref.load %arg3[%c2_426, %c16_427] : memref<6x32xf32, #tpu.memory_space<smem>>
    %809 = vector.broadcast %808 : f32 to vector<8x128xf32>
    %810 = arith.mulf %22, %809 : vector<8x128xf32>
    %811 = arith.addf %807, %810 : vector<8x128xf32>
    %812 = vector.broadcast %800 : vector<1x128xf32> to vector<8x128xf32>
    %813 = arith.addf %811, %812 : vector<8x128xf32>
    %cst_428 = arith.constant 0.000000e+00 : f32
    %814 = vector.broadcast %cst_428 : f32 to vector<8x128xf32>
    %815 = arith.maximumf %813, %814 : vector<8x128xf32>
    %c16_429 = arith.constant 16 : index
    %c0_430 = arith.constant 0 : index
    %c0_431 = arith.constant 0 : index
    %816 = vector.load %arg9[%c16_429, %c0_430, %c0_431] : memref<32x8x128xf32, #tpu.memory_space<vmem>>, vector<1x8x128xf32>
    %817 = vector.shape_cast %816 : vector<1x8x128xf32> to vector<8x128xf32>
    %818 = vector.shape_cast %815 : vector<8x128xf32> to vector<1x8x128xf32>
    tpu.vector_store %arg9[%c16_429, %c0_430, %c0_431], %818 {strides = array<i32>} : memref<32x8x128xf32, #tpu.memory_space<vmem>>, vector<1x8x128xf32>,
    %c16_432 = arith.constant 16 : index
    %c0_433 = arith.constant 0 : index
    %819 = memref.load %arg5[%c16_432, %c0_433] : memref<32x12xf32, #tpu.memory_space<smem>>
    %820 = vector.broadcast %819 : f32 to vector<8x128xf32>
    %821 = arith.mulf %815, %820 : vector<8x128xf32>
    %822 = arith.addf %774, %821 : vector<8x128xf32>
    %c16_434 = arith.constant 16 : index
    %c1_435 = arith.constant 1 : index
    %823 = memref.load %arg5[%c16_434, %c1_435] : memref<32x12xf32, #tpu.memory_space<smem>>
    %824 = vector.broadcast %823 : f32 to vector<8x128xf32>
    %825 = arith.mulf %815, %824 : vector<8x128xf32>
    %826 = arith.addf %778, %825 : vector<8x128xf32>
    %c16_436 = arith.constant 16 : index
    %c2_437 = arith.constant 2 : index
    %827 = memref.load %arg5[%c16_436, %c2_437] : memref<32x12xf32, #tpu.memory_space<smem>>
    %828 = vector.broadcast %827 : f32 to vector<8x128xf32>
    %829 = arith.mulf %815, %828 : vector<8x128xf32>
    %830 = arith.addf %782, %829 : vector<8x128xf32>
    %c16_438 = arith.constant 16 : index
    %c3_439 = arith.constant 3 : index
    %831 = memref.load %arg5[%c16_438, %c3_439] : memref<32x12xf32, #tpu.memory_space<smem>>
    %832 = vector.broadcast %831 : f32 to vector<8x128xf32>
    %833 = arith.mulf %815, %832 : vector<8x128xf32>
    %834 = arith.addf %786, %833 : vector<8x128xf32>
    %c3_440 = arith.constant 3 : index
    %c17 = arith.constant 17 : index
    %835 = memref.load %arg3[%c3_440, %c17] : memref<6x32xf32, #tpu.memory_space<smem>>
    %836 = vector.broadcast %835 : f32 to vector<1x128xf32>
    %837 = arith.mulf %8, %836 : vector<1x128xf32>
    %c4_441 = arith.constant 4 : index
    %c17_442 = arith.constant 17 : index
    %838 = memref.load %arg3[%c4_441, %c17_442] : memref<6x32xf32, #tpu.memory_space<smem>>
    %839 = vector.broadcast %838 : f32 to vector<1x128xf32>
    %840 = arith.mulf %9, %839 : vector<1x128xf32>
    %841 = arith.addf %837, %840 : vector<1x128xf32>
    %c5_443 = arith.constant 5 : index
    %c17_444 = arith.constant 17 : index
    %842 = memref.load %arg3[%c5_443, %c17_444] : memref<6x32xf32, #tpu.memory_space<smem>>
    %843 = vector.broadcast %842 : f32 to vector<1x128xf32>
    %844 = arith.mulf %10, %843 : vector<1x128xf32>
    %845 = arith.addf %841, %844 : vector<1x128xf32>
    %c0_445 = arith.constant 0 : index
    %c17_446 = arith.constant 17 : index
    %846 = memref.load %arg4[%c0_445, %c17_446] : memref<1x32xf32, #tpu.memory_space<smem>>
    %847 = vector.broadcast %846 : f32 to vector<1x128xf32>
    %848 = arith.addf %845, %847 : vector<1x128xf32>
    %c0_447 = arith.constant 0 : index
    %c17_448 = arith.constant 17 : index
    %849 = memref.load %arg3[%c0_447, %c17_448] : memref<6x32xf32, #tpu.memory_space<smem>>
    %850 = vector.broadcast %849 : f32 to vector<8x128xf32>
    %851 = arith.mulf %14, %850 : vector<8x128xf32>
    %c1_449 = arith.constant 1 : index
    %c17_450 = arith.constant 17 : index
    %852 = memref.load %arg3[%c1_449, %c17_450] : memref<6x32xf32, #tpu.memory_space<smem>>
    %853 = vector.broadcast %852 : f32 to vector<8x128xf32>
    %854 = arith.mulf %18, %853 : vector<8x128xf32>
    %855 = arith.addf %851, %854 : vector<8x128xf32>
    %c2_451 = arith.constant 2 : index
    %c17_452 = arith.constant 17 : index
    %856 = memref.load %arg3[%c2_451, %c17_452] : memref<6x32xf32, #tpu.memory_space<smem>>
    %857 = vector.broadcast %856 : f32 to vector<8x128xf32>
    %858 = arith.mulf %22, %857 : vector<8x128xf32>
    %859 = arith.addf %855, %858 : vector<8x128xf32>
    %860 = vector.broadcast %848 : vector<1x128xf32> to vector<8x128xf32>
    %861 = arith.addf %859, %860 : vector<8x128xf32>
    %cst_453 = arith.constant 0.000000e+00 : f32
    %862 = vector.broadcast %cst_453 : f32 to vector<8x128xf32>
    %863 = arith.maximumf %861, %862 : vector<8x128xf32>
    %c17_454 = arith.constant 17 : index
    %c0_455 = arith.constant 0 : index
    %c0_456 = arith.constant 0 : index
    %864 = vector.load %arg9[%c17_454, %c0_455, %c0_456] : memref<32x8x128xf32, #tpu.memory_space<vmem>>, vector<1x8x128xf32>
    %865 = vector.shape_cast %864 : vector<1x8x128xf32> to vector<8x128xf32>
    %866 = vector.shape_cast %863 : vector<8x128xf32> to vector<1x8x128xf32>
    tpu.vector_store %arg9[%c17_454, %c0_455, %c0_456], %866 {strides = array<i32>} : memref<32x8x128xf32, #tpu.memory_space<vmem>>, vector<1x8x128xf32>,
    %c17_457 = arith.constant 17 : index
    %c0_458 = arith.constant 0 : index
    %867 = memref.load %arg5[%c17_457, %c0_458] : memref<32x12xf32, #tpu.memory_space<smem>>
    %868 = vector.broadcast %867 : f32 to vector<8x128xf32>
    %869 = arith.mulf %863, %868 : vector<8x128xf32>
    %870 = arith.addf %822, %869 : vector<8x128xf32>
    %c17_459 = arith.constant 17 : index
    %c1_460 = arith.constant 1 : index
    %871 = memref.load %arg5[%c17_459, %c1_460] : memref<32x12xf32, #tpu.memory_space<smem>>
    %872 = vector.broadcast %871 : f32 to vector<8x128xf32>
    %873 = arith.mulf %863, %872 : vector<8x128xf32>
    %874 = arith.addf %826, %873 : vector<8x128xf32>
    %c17_461 = arith.constant 17 : index
    %c2_462 = arith.constant 2 : index
    %875 = memref.load %arg5[%c17_461, %c2_462] : memref<32x12xf32, #tpu.memory_space<smem>>
    %876 = vector.broadcast %875 : f32 to vector<8x128xf32>
    %877 = arith.mulf %863, %876 : vector<8x128xf32>
    %878 = arith.addf %830, %877 : vector<8x128xf32>
    %c17_463 = arith.constant 17 : index
    %c3_464 = arith.constant 3 : index
    %879 = memref.load %arg5[%c17_463, %c3_464] : memref<32x12xf32, #tpu.memory_space<smem>>
    %880 = vector.broadcast %879 : f32 to vector<8x128xf32>
    %881 = arith.mulf %863, %880 : vector<8x128xf32>
    %882 = arith.addf %834, %881 : vector<8x128xf32>
    %c3_465 = arith.constant 3 : index
    %c18 = arith.constant 18 : index
    %883 = memref.load %arg3[%c3_465, %c18] : memref<6x32xf32, #tpu.memory_space<smem>>
    %884 = vector.broadcast %883 : f32 to vector<1x128xf32>
    %885 = arith.mulf %8, %884 : vector<1x128xf32>
    %c4_466 = arith.constant 4 : index
    %c18_467 = arith.constant 18 : index
    %886 = memref.load %arg3[%c4_466, %c18_467] : memref<6x32xf32, #tpu.memory_space<smem>>
    %887 = vector.broadcast %886 : f32 to vector<1x128xf32>
    %888 = arith.mulf %9, %887 : vector<1x128xf32>
    %889 = arith.addf %885, %888 : vector<1x128xf32>
    %c5_468 = arith.constant 5 : index
    %c18_469 = arith.constant 18 : index
    %890 = memref.load %arg3[%c5_468, %c18_469] : memref<6x32xf32, #tpu.memory_space<smem>>
    %891 = vector.broadcast %890 : f32 to vector<1x128xf32>
    %892 = arith.mulf %10, %891 : vector<1x128xf32>
    %893 = arith.addf %889, %892 : vector<1x128xf32>
    %c0_470 = arith.constant 0 : index
    %c18_471 = arith.constant 18 : index
    %894 = memref.load %arg4[%c0_470, %c18_471] : memref<1x32xf32, #tpu.memory_space<smem>>
    %895 = vector.broadcast %894 : f32 to vector<1x128xf32>
    %896 = arith.addf %893, %895 : vector<1x128xf32>
    %c0_472 = arith.constant 0 : index
    %c18_473 = arith.constant 18 : index
    %897 = memref.load %arg3[%c0_472, %c18_473] : memref<6x32xf32, #tpu.memory_space<smem>>
    %898 = vector.broadcast %897 : f32 to vector<8x128xf32>
    %899 = arith.mulf %14, %898 : vector<8x128xf32>
    %c1_474 = arith.constant 1 : index
    %c18_475 = arith.constant 18 : index
    %900 = memref.load %arg3[%c1_474, %c18_475] : memref<6x32xf32, #tpu.memory_space<smem>>
    %901 = vector.broadcast %900 : f32 to vector<8x128xf32>
    %902 = arith.mulf %18, %901 : vector<8x128xf32>
    %903 = arith.addf %899, %902 : vector<8x128xf32>
    %c2_476 = arith.constant 2 : index
    %c18_477 = arith.constant 18 : index
    %904 = memref.load %arg3[%c2_476, %c18_477] : memref<6x32xf32, #tpu.memory_space<smem>>
    %905 = vector.broadcast %904 : f32 to vector<8x128xf32>
    %906 = arith.mulf %22, %905 : vector<8x128xf32>
    %907 = arith.addf %903, %906 : vector<8x128xf32>
    %908 = vector.broadcast %896 : vector<1x128xf32> to vector<8x128xf32>
    %909 = arith.addf %907, %908 : vector<8x128xf32>
    %cst_478 = arith.constant 0.000000e+00 : f32
    %910 = vector.broadcast %cst_478 : f32 to vector<8x128xf32>
    %911 = arith.maximumf %909, %910 : vector<8x128xf32>
    %c18_479 = arith.constant 18 : index
    %c0_480 = arith.constant 0 : index
    %c0_481 = arith.constant 0 : index
    %912 = vector.load %arg9[%c18_479, %c0_480, %c0_481] : memref<32x8x128xf32, #tpu.memory_space<vmem>>, vector<1x8x128xf32>
    %913 = vector.shape_cast %912 : vector<1x8x128xf32> to vector<8x128xf32>
    %914 = vector.shape_cast %911 : vector<8x128xf32> to vector<1x8x128xf32>
    tpu.vector_store %arg9[%c18_479, %c0_480, %c0_481], %914 {strides = array<i32>} : memref<32x8x128xf32, #tpu.memory_space<vmem>>, vector<1x8x128xf32>,
    %c18_482 = arith.constant 18 : index
    %c0_483 = arith.constant 0 : index
    %915 = memref.load %arg5[%c18_482, %c0_483] : memref<32x12xf32, #tpu.memory_space<smem>>
    %916 = vector.broadcast %915 : f32 to vector<8x128xf32>
    %917 = arith.mulf %911, %916 : vector<8x128xf32>
    %918 = arith.addf %870, %917 : vector<8x128xf32>
    %c18_484 = arith.constant 18 : index
    %c1_485 = arith.constant 1 : index
    %919 = memref.load %arg5[%c18_484, %c1_485] : memref<32x12xf32, #tpu.memory_space<smem>>
    %920 = vector.broadcast %919 : f32 to vector<8x128xf32>
    %921 = arith.mulf %911, %920 : vector<8x128xf32>
    %922 = arith.addf %874, %921 : vector<8x128xf32>
    %c18_486 = arith.constant 18 : index
    %c2_487 = arith.constant 2 : index
    %923 = memref.load %arg5[%c18_486, %c2_487] : memref<32x12xf32, #tpu.memory_space<smem>>
    %924 = vector.broadcast %923 : f32 to vector<8x128xf32>
    %925 = arith.mulf %911, %924 : vector<8x128xf32>
    %926 = arith.addf %878, %925 : vector<8x128xf32>
    %c18_488 = arith.constant 18 : index
    %c3_489 = arith.constant 3 : index
    %927 = memref.load %arg5[%c18_488, %c3_489] : memref<32x12xf32, #tpu.memory_space<smem>>
    %928 = vector.broadcast %927 : f32 to vector<8x128xf32>
    %929 = arith.mulf %911, %928 : vector<8x128xf32>
    %930 = arith.addf %882, %929 : vector<8x128xf32>
    %c3_490 = arith.constant 3 : index
    %c19 = arith.constant 19 : index
    %931 = memref.load %arg3[%c3_490, %c19] : memref<6x32xf32, #tpu.memory_space<smem>>
    %932 = vector.broadcast %931 : f32 to vector<1x128xf32>
    %933 = arith.mulf %8, %932 : vector<1x128xf32>
    %c4_491 = arith.constant 4 : index
    %c19_492 = arith.constant 19 : index
    %934 = memref.load %arg3[%c4_491, %c19_492] : memref<6x32xf32, #tpu.memory_space<smem>>
    %935 = vector.broadcast %934 : f32 to vector<1x128xf32>
    %936 = arith.mulf %9, %935 : vector<1x128xf32>
    %937 = arith.addf %933, %936 : vector<1x128xf32>
    %c5_493 = arith.constant 5 : index
    %c19_494 = arith.constant 19 : index
    %938 = memref.load %arg3[%c5_493, %c19_494] : memref<6x32xf32, #tpu.memory_space<smem>>
    %939 = vector.broadcast %938 : f32 to vector<1x128xf32>
    %940 = arith.mulf %10, %939 : vector<1x128xf32>
    %941 = arith.addf %937, %940 : vector<1x128xf32>
    %c0_495 = arith.constant 0 : index
    %c19_496 = arith.constant 19 : index
    %942 = memref.load %arg4[%c0_495, %c19_496] : memref<1x32xf32, #tpu.memory_space<smem>>
    %943 = vector.broadcast %942 : f32 to vector<1x128xf32>
    %944 = arith.addf %941, %943 : vector<1x128xf32>
    %c0_497 = arith.constant 0 : index
    %c19_498 = arith.constant 19 : index
    %945 = memref.load %arg3[%c0_497, %c19_498] : memref<6x32xf32, #tpu.memory_space<smem>>
    %946 = vector.broadcast %945 : f32 to vector<8x128xf32>
    %947 = arith.mulf %14, %946 : vector<8x128xf32>
    %c1_499 = arith.constant 1 : index
    %c19_500 = arith.constant 19 : index
    %948 = memref.load %arg3[%c1_499, %c19_500] : memref<6x32xf32, #tpu.memory_space<smem>>
    %949 = vector.broadcast %948 : f32 to vector<8x128xf32>
    %950 = arith.mulf %18, %949 : vector<8x128xf32>
    %951 = arith.addf %947, %950 : vector<8x128xf32>
    %c2_501 = arith.constant 2 : index
    %c19_502 = arith.constant 19 : index
    %952 = memref.load %arg3[%c2_501, %c19_502] : memref<6x32xf32, #tpu.memory_space<smem>>
    %953 = vector.broadcast %952 : f32 to vector<8x128xf32>
    %954 = arith.mulf %22, %953 : vector<8x128xf32>
    %955 = arith.addf %951, %954 : vector<8x128xf32>
    %956 = vector.broadcast %944 : vector<1x128xf32> to vector<8x128xf32>
    %957 = arith.addf %955, %956 : vector<8x128xf32>
    %cst_503 = arith.constant 0.000000e+00 : f32
    %958 = vector.broadcast %cst_503 : f32 to vector<8x128xf32>
    %959 = arith.maximumf %957, %958 : vector<8x128xf32>
    %c19_504 = arith.constant 19 : index
    %c0_505 = arith.constant 0 : index
    %c0_506 = arith.constant 0 : index
    %960 = vector.load %arg9[%c19_504, %c0_505, %c0_506] : memref<32x8x128xf32, #tpu.memory_space<vmem>>, vector<1x8x128xf32>
    %961 = vector.shape_cast %960 : vector<1x8x128xf32> to vector<8x128xf32>
    %962 = vector.shape_cast %959 : vector<8x128xf32> to vector<1x8x128xf32>
    tpu.vector_store %arg9[%c19_504, %c0_505, %c0_506], %962 {strides = array<i32>} : memref<32x8x128xf32, #tpu.memory_space<vmem>>, vector<1x8x128xf32>,
    %c19_507 = arith.constant 19 : index
    %c0_508 = arith.constant 0 : index
    %963 = memref.load %arg5[%c19_507, %c0_508] : memref<32x12xf32, #tpu.memory_space<smem>>
    %964 = vector.broadcast %963 : f32 to vector<8x128xf32>
    %965 = arith.mulf %959, %964 : vector<8x128xf32>
    %966 = arith.addf %918, %965 : vector<8x128xf32>
    %c19_509 = arith.constant 19 : index
    %c1_510 = arith.constant 1 : index
    %967 = memref.load %arg5[%c19_509, %c1_510] : memref<32x12xf32, #tpu.memory_space<smem>>
    %968 = vector.broadcast %967 : f32 to vector<8x128xf32>
    %969 = arith.mulf %959, %968 : vector<8x128xf32>
    %970 = arith.addf %922, %969 : vector<8x128xf32>
    %c19_511 = arith.constant 19 : index
    %c2_512 = arith.constant 2 : index
    %971 = memref.load %arg5[%c19_511, %c2_512] : memref<32x12xf32, #tpu.memory_space<smem>>
    %972 = vector.broadcast %971 : f32 to vector<8x128xf32>
    %973 = arith.mulf %959, %972 : vector<8x128xf32>
    %974 = arith.addf %926, %973 : vector<8x128xf32>
    %c19_513 = arith.constant 19 : index
    %c3_514 = arith.constant 3 : index
    %975 = memref.load %arg5[%c19_513, %c3_514] : memref<32x12xf32, #tpu.memory_space<smem>>
    %976 = vector.broadcast %975 : f32 to vector<8x128xf32>
    %977 = arith.mulf %959, %976 : vector<8x128xf32>
    %978 = arith.addf %930, %977 : vector<8x128xf32>
    %c3_515 = arith.constant 3 : index
    %c20 = arith.constant 20 : index
    %979 = memref.load %arg3[%c3_515, %c20] : memref<6x32xf32, #tpu.memory_space<smem>>
    %980 = vector.broadcast %979 : f32 to vector<1x128xf32>
    %981 = arith.mulf %8, %980 : vector<1x128xf32>
    %c4_516 = arith.constant 4 : index
    %c20_517 = arith.constant 20 : index
    %982 = memref.load %arg3[%c4_516, %c20_517] : memref<6x32xf32, #tpu.memory_space<smem>>
    %983 = vector.broadcast %982 : f32 to vector<1x128xf32>
    %984 = arith.mulf %9, %983 : vector<1x128xf32>
    %985 = arith.addf %981, %984 : vector<1x128xf32>
    %c5_518 = arith.constant 5 : index
    %c20_519 = arith.constant 20 : index
    %986 = memref.load %arg3[%c5_518, %c20_519] : memref<6x32xf32, #tpu.memory_space<smem>>
    %987 = vector.broadcast %986 : f32 to vector<1x128xf32>
    %988 = arith.mulf %10, %987 : vector<1x128xf32>
    %989 = arith.addf %985, %988 : vector<1x128xf32>
    %c0_520 = arith.constant 0 : index
    %c20_521 = arith.constant 20 : index
    %990 = memref.load %arg4[%c0_520, %c20_521] : memref<1x32xf32, #tpu.memory_space<smem>>
    %991 = vector.broadcast %990 : f32 to vector<1x128xf32>
    %992 = arith.addf %989, %991 : vector<1x128xf32>
    %c0_522 = arith.constant 0 : index
    %c20_523 = arith.constant 20 : index
    %993 = memref.load %arg3[%c0_522, %c20_523] : memref<6x32xf32, #tpu.memory_space<smem>>
    %994 = vector.broadcast %993 : f32 to vector<8x128xf32>
    %995 = arith.mulf %14, %994 : vector<8x128xf32>
    %c1_524 = arith.constant 1 : index
    %c20_525 = arith.constant 20 : index
    %996 = memref.load %arg3[%c1_524, %c20_525] : memref<6x32xf32, #tpu.memory_space<smem>>
    %997 = vector.broadcast %996 : f32 to vector<8x128xf32>
    %998 = arith.mulf %18, %997 : vector<8x128xf32>
    %999 = arith.addf %995, %998 : vector<8x128xf32>
    %c2_526 = arith.constant 2 : index
    %c20_527 = arith.constant 20 : index
    %1000 = memref.load %arg3[%c2_526, %c20_527] : memref<6x32xf32, #tpu.memory_space<smem>>
    %1001 = vector.broadcast %1000 : f32 to vector<8x128xf32>
    %1002 = arith.mulf %22, %1001 : vector<8x128xf32>
    %1003 = arith.addf %999, %1002 : vector<8x128xf32>
    %1004 = vector.broadcast %992 : vector<1x128xf32> to vector<8x128xf32>
    %1005 = arith.addf %1003, %1004 : vector<8x128xf32>
    %cst_528 = arith.constant 0.000000e+00 : f32
    %1006 = vector.broadcast %cst_528 : f32 to vector<8x128xf32>
    %1007 = arith.maximumf %1005, %1006 : vector<8x128xf32>
    %c20_529 = arith.constant 20 : index
    %c0_530 = arith.constant 0 : index
    %c0_531 = arith.constant 0 : index
    %1008 = vector.load %arg9[%c20_529, %c0_530, %c0_531] : memref<32x8x128xf32, #tpu.memory_space<vmem>>, vector<1x8x128xf32>
    %1009 = vector.shape_cast %1008 : vector<1x8x128xf32> to vector<8x128xf32>
    %1010 = vector.shape_cast %1007 : vector<8x128xf32> to vector<1x8x128xf32>
    tpu.vector_store %arg9[%c20_529, %c0_530, %c0_531], %1010 {strides = array<i32>} : memref<32x8x128xf32, #tpu.memory_space<vmem>>, vector<1x8x128xf32>,
    %c20_532 = arith.constant 20 : index
    %c0_533 = arith.constant 0 : index
    %1011 = memref.load %arg5[%c20_532, %c0_533] : memref<32x12xf32, #tpu.memory_space<smem>>
    %1012 = vector.broadcast %1011 : f32 to vector<8x128xf32>
    %1013 = arith.mulf %1007, %1012 : vector<8x128xf32>
    %1014 = arith.addf %966, %1013 : vector<8x128xf32>
    %c20_534 = arith.constant 20 : index
    %c1_535 = arith.constant 1 : index
    %1015 = memref.load %arg5[%c20_534, %c1_535] : memref<32x12xf32, #tpu.memory_space<smem>>
    %1016 = vector.broadcast %1015 : f32 to vector<8x128xf32>
    %1017 = arith.mulf %1007, %1016 : vector<8x128xf32>
    %1018 = arith.addf %970, %1017 : vector<8x128xf32>
    %c20_536 = arith.constant 20 : index
    %c2_537 = arith.constant 2 : index
    %1019 = memref.load %arg5[%c20_536, %c2_537] : memref<32x12xf32, #tpu.memory_space<smem>>
    %1020 = vector.broadcast %1019 : f32 to vector<8x128xf32>
    %1021 = arith.mulf %1007, %1020 : vector<8x128xf32>
    %1022 = arith.addf %974, %1021 : vector<8x128xf32>
    %c20_538 = arith.constant 20 : index
    %c3_539 = arith.constant 3 : index
    %1023 = memref.load %arg5[%c20_538, %c3_539] : memref<32x12xf32, #tpu.memory_space<smem>>
    %1024 = vector.broadcast %1023 : f32 to vector<8x128xf32>
    %1025 = arith.mulf %1007, %1024 : vector<8x128xf32>
    %1026 = arith.addf %978, %1025 : vector<8x128xf32>
    %c3_540 = arith.constant 3 : index
    %c21 = arith.constant 21 : index
    %1027 = memref.load %arg3[%c3_540, %c21] : memref<6x32xf32, #tpu.memory_space<smem>>
    %1028 = vector.broadcast %1027 : f32 to vector<1x128xf32>
    %1029 = arith.mulf %8, %1028 : vector<1x128xf32>
    %c4_541 = arith.constant 4 : index
    %c21_542 = arith.constant 21 : index
    %1030 = memref.load %arg3[%c4_541, %c21_542] : memref<6x32xf32, #tpu.memory_space<smem>>
    %1031 = vector.broadcast %1030 : f32 to vector<1x128xf32>
    %1032 = arith.mulf %9, %1031 : vector<1x128xf32>
    %1033 = arith.addf %1029, %1032 : vector<1x128xf32>
    %c5_543 = arith.constant 5 : index
    %c21_544 = arith.constant 21 : index
    %1034 = memref.load %arg3[%c5_543, %c21_544] : memref<6x32xf32, #tpu.memory_space<smem>>
    %1035 = vector.broadcast %1034 : f32 to vector<1x128xf32>
    %1036 = arith.mulf %10, %1035 : vector<1x128xf32>
    %1037 = arith.addf %1033, %1036 : vector<1x128xf32>
    %c0_545 = arith.constant 0 : index
    %c21_546 = arith.constant 21 : index
    %1038 = memref.load %arg4[%c0_545, %c21_546] : memref<1x32xf32, #tpu.memory_space<smem>>
    %1039 = vector.broadcast %1038 : f32 to vector<1x128xf32>
    %1040 = arith.addf %1037, %1039 : vector<1x128xf32>
    %c0_547 = arith.constant 0 : index
    %c21_548 = arith.constant 21 : index
    %1041 = memref.load %arg3[%c0_547, %c21_548] : memref<6x32xf32, #tpu.memory_space<smem>>
    %1042 = vector.broadcast %1041 : f32 to vector<8x128xf32>
    %1043 = arith.mulf %14, %1042 : vector<8x128xf32>
    %c1_549 = arith.constant 1 : index
    %c21_550 = arith.constant 21 : index
    %1044 = memref.load %arg3[%c1_549, %c21_550] : memref<6x32xf32, #tpu.memory_space<smem>>
    %1045 = vector.broadcast %1044 : f32 to vector<8x128xf32>
    %1046 = arith.mulf %18, %1045 : vector<8x128xf32>
    %1047 = arith.addf %1043, %1046 : vector<8x128xf32>
    %c2_551 = arith.constant 2 : index
    %c21_552 = arith.constant 21 : index
    %1048 = memref.load %arg3[%c2_551, %c21_552] : memref<6x32xf32, #tpu.memory_space<smem>>
    %1049 = vector.broadcast %1048 : f32 to vector<8x128xf32>
    %1050 = arith.mulf %22, %1049 : vector<8x128xf32>
    %1051 = arith.addf %1047, %1050 : vector<8x128xf32>
    %1052 = vector.broadcast %1040 : vector<1x128xf32> to vector<8x128xf32>
    %1053 = arith.addf %1051, %1052 : vector<8x128xf32>
    %cst_553 = arith.constant 0.000000e+00 : f32
    %1054 = vector.broadcast %cst_553 : f32 to vector<8x128xf32>
    %1055 = arith.maximumf %1053, %1054 : vector<8x128xf32>
    %c21_554 = arith.constant 21 : index
    %c0_555 = arith.constant 0 : index
    %c0_556 = arith.constant 0 : index
    %1056 = vector.load %arg9[%c21_554, %c0_555, %c0_556] : memref<32x8x128xf32, #tpu.memory_space<vmem>>, vector<1x8x128xf32>
    %1057 = vector.shape_cast %1056 : vector<1x8x128xf32> to vector<8x128xf32>
    %1058 = vector.shape_cast %1055 : vector<8x128xf32> to vector<1x8x128xf32>
    tpu.vector_store %arg9[%c21_554, %c0_555, %c0_556], %1058 {strides = array<i32>} : memref<32x8x128xf32, #tpu.memory_space<vmem>>, vector<1x8x128xf32>,
    %c21_557 = arith.constant 21 : index
    %c0_558 = arith.constant 0 : index
    %1059 = memref.load %arg5[%c21_557, %c0_558] : memref<32x12xf32, #tpu.memory_space<smem>>
    %1060 = vector.broadcast %1059 : f32 to vector<8x128xf32>
    %1061 = arith.mulf %1055, %1060 : vector<8x128xf32>
    %1062 = arith.addf %1014, %1061 : vector<8x128xf32>
    %c21_559 = arith.constant 21 : index
    %c1_560 = arith.constant 1 : index
    %1063 = memref.load %arg5[%c21_559, %c1_560] : memref<32x12xf32, #tpu.memory_space<smem>>
    %1064 = vector.broadcast %1063 : f32 to vector<8x128xf32>
    %1065 = arith.mulf %1055, %1064 : vector<8x128xf32>
    %1066 = arith.addf %1018, %1065 : vector<8x128xf32>
    %c21_561 = arith.constant 21 : index
    %c2_562 = arith.constant 2 : index
    %1067 = memref.load %arg5[%c21_561, %c2_562] : memref<32x12xf32, #tpu.memory_space<smem>>
    %1068 = vector.broadcast %1067 : f32 to vector<8x128xf32>
    %1069 = arith.mulf %1055, %1068 : vector<8x128xf32>
    %1070 = arith.addf %1022, %1069 : vector<8x128xf32>
    %c21_563 = arith.constant 21 : index
    %c3_564 = arith.constant 3 : index
    %1071 = memref.load %arg5[%c21_563, %c3_564] : memref<32x12xf32, #tpu.memory_space<smem>>
    %1072 = vector.broadcast %1071 : f32 to vector<8x128xf32>
    %1073 = arith.mulf %1055, %1072 : vector<8x128xf32>
    %1074 = arith.addf %1026, %1073 : vector<8x128xf32>
    %c3_565 = arith.constant 3 : index
    %c22 = arith.constant 22 : index
    %1075 = memref.load %arg3[%c3_565, %c22] : memref<6x32xf32, #tpu.memory_space<smem>>
    %1076 = vector.broadcast %1075 : f32 to vector<1x128xf32>
    %1077 = arith.mulf %8, %1076 : vector<1x128xf32>
    %c4_566 = arith.constant 4 : index
    %c22_567 = arith.constant 22 : index
    %1078 = memref.load %arg3[%c4_566, %c22_567] : memref<6x32xf32, #tpu.memory_space<smem>>
    %1079 = vector.broadcast %1078 : f32 to vector<1x128xf32>
    %1080 = arith.mulf %9, %1079 : vector<1x128xf32>
    %1081 = arith.addf %1077, %1080 : vector<1x128xf32>
    %c5_568 = arith.constant 5 : index
    %c22_569 = arith.constant 22 : index
    %1082 = memref.load %arg3[%c5_568, %c22_569] : memref<6x32xf32, #tpu.memory_space<smem>>
    %1083 = vector.broadcast %1082 : f32 to vector<1x128xf32>
    %1084 = arith.mulf %10, %1083 : vector<1x128xf32>
    %1085 = arith.addf %1081, %1084 : vector<1x128xf32>
    %c0_570 = arith.constant 0 : index
    %c22_571 = arith.constant 22 : index
    %1086 = memref.load %arg4[%c0_570, %c22_571] : memref<1x32xf32, #tpu.memory_space<smem>>
    %1087 = vector.broadcast %1086 : f32 to vector<1x128xf32>
    %1088 = arith.addf %1085, %1087 : vector<1x128xf32>
    %c0_572 = arith.constant 0 : index
    %c22_573 = arith.constant 22 : index
    %1089 = memref.load %arg3[%c0_572, %c22_573] : memref<6x32xf32, #tpu.memory_space<smem>>
    %1090 = vector.broadcast %1089 : f32 to vector<8x128xf32>
    %1091 = arith.mulf %14, %1090 : vector<8x128xf32>
    %c1_574 = arith.constant 1 : index
    %c22_575 = arith.constant 22 : index
    %1092 = memref.load %arg3[%c1_574, %c22_575] : memref<6x32xf32, #tpu.memory_space<smem>>
    %1093 = vector.broadcast %1092 : f32 to vector<8x128xf32>
    %1094 = arith.mulf %18, %1093 : vector<8x128xf32>
    %1095 = arith.addf %1091, %1094 : vector<8x128xf32>
    %c2_576 = arith.constant 2 : index
    %c22_577 = arith.constant 22 : index
    %1096 = memref.load %arg3[%c2_576, %c22_577] : memref<6x32xf32, #tpu.memory_space<smem>>
    %1097 = vector.broadcast %1096 : f32 to vector<8x128xf32>
    %1098 = arith.mulf %22, %1097 : vector<8x128xf32>
    %1099 = arith.addf %1095, %1098 : vector<8x128xf32>
    %1100 = vector.broadcast %1088 : vector<1x128xf32> to vector<8x128xf32>
    %1101 = arith.addf %1099, %1100 : vector<8x128xf32>
    %cst_578 = arith.constant 0.000000e+00 : f32
    %1102 = vector.broadcast %cst_578 : f32 to vector<8x128xf32>
    %1103 = arith.maximumf %1101, %1102 : vector<8x128xf32>
    %c22_579 = arith.constant 22 : index
    %c0_580 = arith.constant 0 : index
    %c0_581 = arith.constant 0 : index
    %1104 = vector.load %arg9[%c22_579, %c0_580, %c0_581] : memref<32x8x128xf32, #tpu.memory_space<vmem>>, vector<1x8x128xf32>
    %1105 = vector.shape_cast %1104 : vector<1x8x128xf32> to vector<8x128xf32>
    %1106 = vector.shape_cast %1103 : vector<8x128xf32> to vector<1x8x128xf32>
    tpu.vector_store %arg9[%c22_579, %c0_580, %c0_581], %1106 {strides = array<i32>} : memref<32x8x128xf32, #tpu.memory_space<vmem>>, vector<1x8x128xf32>,
    %c22_582 = arith.constant 22 : index
    %c0_583 = arith.constant 0 : index
    %1107 = memref.load %arg5[%c22_582, %c0_583] : memref<32x12xf32, #tpu.memory_space<smem>>
    %1108 = vector.broadcast %1107 : f32 to vector<8x128xf32>
    %1109 = arith.mulf %1103, %1108 : vector<8x128xf32>
    %1110 = arith.addf %1062, %1109 : vector<8x128xf32>
    %c22_584 = arith.constant 22 : index
    %c1_585 = arith.constant 1 : index
    %1111 = memref.load %arg5[%c22_584, %c1_585] : memref<32x12xf32, #tpu.memory_space<smem>>
    %1112 = vector.broadcast %1111 : f32 to vector<8x128xf32>
    %1113 = arith.mulf %1103, %1112 : vector<8x128xf32>
    %1114 = arith.addf %1066, %1113 : vector<8x128xf32>
    %c22_586 = arith.constant 22 : index
    %c2_587 = arith.constant 2 : index
    %1115 = memref.load %arg5[%c22_586, %c2_587] : memref<32x12xf32, #tpu.memory_space<smem>>
    %1116 = vector.broadcast %1115 : f32 to vector<8x128xf32>
    %1117 = arith.mulf %1103, %1116 : vector<8x128xf32>
    %1118 = arith.addf %1070, %1117 : vector<8x128xf32>
    %c22_588 = arith.constant 22 : index
    %c3_589 = arith.constant 3 : index
    %1119 = memref.load %arg5[%c22_588, %c3_589] : memref<32x12xf32, #tpu.memory_space<smem>>
    %1120 = vector.broadcast %1119 : f32 to vector<8x128xf32>
    %1121 = arith.mulf %1103, %1120 : vector<8x128xf32>
    %1122 = arith.addf %1074, %1121 : vector<8x128xf32>
    %c3_590 = arith.constant 3 : index
    %c23 = arith.constant 23 : index
    %1123 = memref.load %arg3[%c3_590, %c23] : memref<6x32xf32, #tpu.memory_space<smem>>
    %1124 = vector.broadcast %1123 : f32 to vector<1x128xf32>
    %1125 = arith.mulf %8, %1124 : vector<1x128xf32>
    %c4_591 = arith.constant 4 : index
    %c23_592 = arith.constant 23 : index
    %1126 = memref.load %arg3[%c4_591, %c23_592] : memref<6x32xf32, #tpu.memory_space<smem>>
    %1127 = vector.broadcast %1126 : f32 to vector<1x128xf32>
    %1128 = arith.mulf %9, %1127 : vector<1x128xf32>
    %1129 = arith.addf %1125, %1128 : vector<1x128xf32>
    %c5_593 = arith.constant 5 : index
    %c23_594 = arith.constant 23 : index
    %1130 = memref.load %arg3[%c5_593, %c23_594] : memref<6x32xf32, #tpu.memory_space<smem>>
    %1131 = vector.broadcast %1130 : f32 to vector<1x128xf32>
    %1132 = arith.mulf %10, %1131 : vector<1x128xf32>
    %1133 = arith.addf %1129, %1132 : vector<1x128xf32>
    %c0_595 = arith.constant 0 : index
    %c23_596 = arith.constant 23 : index
    %1134 = memref.load %arg4[%c0_595, %c23_596] : memref<1x32xf32, #tpu.memory_space<smem>>
    %1135 = vector.broadcast %1134 : f32 to vector<1x128xf32>
    %1136 = arith.addf %1133, %1135 : vector<1x128xf32>
    %c0_597 = arith.constant 0 : index
    %c23_598 = arith.constant 23 : index
    %1137 = memref.load %arg3[%c0_597, %c23_598] : memref<6x32xf32, #tpu.memory_space<smem>>
    %1138 = vector.broadcast %1137 : f32 to vector<8x128xf32>
    %1139 = arith.mulf %14, %1138 : vector<8x128xf32>
    %c1_599 = arith.constant 1 : index
    %c23_600 = arith.constant 23 : index
    %1140 = memref.load %arg3[%c1_599, %c23_600] : memref<6x32xf32, #tpu.memory_space<smem>>
    %1141 = vector.broadcast %1140 : f32 to vector<8x128xf32>
    %1142 = arith.mulf %18, %1141 : vector<8x128xf32>
    %1143 = arith.addf %1139, %1142 : vector<8x128xf32>
    %c2_601 = arith.constant 2 : index
    %c23_602 = arith.constant 23 : index
    %1144 = memref.load %arg3[%c2_601, %c23_602] : memref<6x32xf32, #tpu.memory_space<smem>>
    %1145 = vector.broadcast %1144 : f32 to vector<8x128xf32>
    %1146 = arith.mulf %22, %1145 : vector<8x128xf32>
    %1147 = arith.addf %1143, %1146 : vector<8x128xf32>
    %1148 = vector.broadcast %1136 : vector<1x128xf32> to vector<8x128xf32>
    %1149 = arith.addf %1147, %1148 : vector<8x128xf32>
    %cst_603 = arith.constant 0.000000e+00 : f32
    %1150 = vector.broadcast %cst_603 : f32 to vector<8x128xf32>
    %1151 = arith.maximumf %1149, %1150 : vector<8x128xf32>
    %c23_604 = arith.constant 23 : index
    %c0_605 = arith.constant 0 : index
    %c0_606 = arith.constant 0 : index
    %1152 = vector.load %arg9[%c23_604, %c0_605, %c0_606] : memref<32x8x128xf32, #tpu.memory_space<vmem>>, vector<1x8x128xf32>
    %1153 = vector.shape_cast %1152 : vector<1x8x128xf32> to vector<8x128xf32>
    %1154 = vector.shape_cast %1151 : vector<8x128xf32> to vector<1x8x128xf32>
    tpu.vector_store %arg9[%c23_604, %c0_605, %c0_606], %1154 {strides = array<i32>} : memref<32x8x128xf32, #tpu.memory_space<vmem>>, vector<1x8x128xf32>,
    %c23_607 = arith.constant 23 : index
    %c0_608 = arith.constant 0 : index
    %1155 = memref.load %arg5[%c23_607, %c0_608] : memref<32x12xf32, #tpu.memory_space<smem>>
    %1156 = vector.broadcast %1155 : f32 to vector<8x128xf32>
    %1157 = arith.mulf %1151, %1156 : vector<8x128xf32>
    %1158 = arith.addf %1110, %1157 : vector<8x128xf32>
    %c23_609 = arith.constant 23 : index
    %c1_610 = arith.constant 1 : index
    %1159 = memref.load %arg5[%c23_609, %c1_610] : memref<32x12xf32, #tpu.memory_space<smem>>
    %1160 = vector.broadcast %1159 : f32 to vector<8x128xf32>
    %1161 = arith.mulf %1151, %1160 : vector<8x128xf32>
    %1162 = arith.addf %1114, %1161 : vector<8x128xf32>
    %c23_611 = arith.constant 23 : index
    %c2_612 = arith.constant 2 : index
    %1163 = memref.load %arg5[%c23_611, %c2_612] : memref<32x12xf32, #tpu.memory_space<smem>>
    %1164 = vector.broadcast %1163 : f32 to vector<8x128xf32>
    %1165 = arith.mulf %1151, %1164 : vector<8x128xf32>
    %1166 = arith.addf %1118, %1165 : vector<8x128xf32>
    %c23_613 = arith.constant 23 : index
    %c3_614 = arith.constant 3 : index
    %1167 = memref.load %arg5[%c23_613, %c3_614] : memref<32x12xf32, #tpu.memory_space<smem>>
    %1168 = vector.broadcast %1167 : f32 to vector<8x128xf32>
    %1169 = arith.mulf %1151, %1168 : vector<8x128xf32>
    %1170 = arith.addf %1122, %1169 : vector<8x128xf32>
    %c3_615 = arith.constant 3 : index
    %c24 = arith.constant 24 : index
    %1171 = memref.load %arg3[%c3_615, %c24] : memref<6x32xf32, #tpu.memory_space<smem>>
    %1172 = vector.broadcast %1171 : f32 to vector<1x128xf32>
    %1173 = arith.mulf %8, %1172 : vector<1x128xf32>
    %c4_616 = arith.constant 4 : index
    %c24_617 = arith.constant 24 : index
    %1174 = memref.load %arg3[%c4_616, %c24_617] : memref<6x32xf32, #tpu.memory_space<smem>>
    %1175 = vector.broadcast %1174 : f32 to vector<1x128xf32>
    %1176 = arith.mulf %9, %1175 : vector<1x128xf32>
    %1177 = arith.addf %1173, %1176 : vector<1x128xf32>
    %c5_618 = arith.constant 5 : index
    %c24_619 = arith.constant 24 : index
    %1178 = memref.load %arg3[%c5_618, %c24_619] : memref<6x32xf32, #tpu.memory_space<smem>>
    %1179 = vector.broadcast %1178 : f32 to vector<1x128xf32>
    %1180 = arith.mulf %10, %1179 : vector<1x128xf32>
    %1181 = arith.addf %1177, %1180 : vector<1x128xf32>
    %c0_620 = arith.constant 0 : index
    %c24_621 = arith.constant 24 : index
    %1182 = memref.load %arg4[%c0_620, %c24_621] : memref<1x32xf32, #tpu.memory_space<smem>>
    %1183 = vector.broadcast %1182 : f32 to vector<1x128xf32>
    %1184 = arith.addf %1181, %1183 : vector<1x128xf32>
    %c0_622 = arith.constant 0 : index
    %c24_623 = arith.constant 24 : index
    %1185 = memref.load %arg3[%c0_622, %c24_623] : memref<6x32xf32, #tpu.memory_space<smem>>
    %1186 = vector.broadcast %1185 : f32 to vector<8x128xf32>
    %1187 = arith.mulf %14, %1186 : vector<8x128xf32>
    %c1_624 = arith.constant 1 : index
    %c24_625 = arith.constant 24 : index
    %1188 = memref.load %arg3[%c1_624, %c24_625] : memref<6x32xf32, #tpu.memory_space<smem>>
    %1189 = vector.broadcast %1188 : f32 to vector<8x128xf32>
    %1190 = arith.mulf %18, %1189 : vector<8x128xf32>
    %1191 = arith.addf %1187, %1190 : vector<8x128xf32>
    %c2_626 = arith.constant 2 : index
    %c24_627 = arith.constant 24 : index
    %1192 = memref.load %arg3[%c2_626, %c24_627] : memref<6x32xf32, #tpu.memory_space<smem>>
    %1193 = vector.broadcast %1192 : f32 to vector<8x128xf32>
    %1194 = arith.mulf %22, %1193 : vector<8x128xf32>
    %1195 = arith.addf %1191, %1194 : vector<8x128xf32>
    %1196 = vector.broadcast %1184 : vector<1x128xf32> to vector<8x128xf32>
    %1197 = arith.addf %1195, %1196 : vector<8x128xf32>
    %cst_628 = arith.constant 0.000000e+00 : f32
    %1198 = vector.broadcast %cst_628 : f32 to vector<8x128xf32>
    %1199 = arith.maximumf %1197, %1198 : vector<8x128xf32>
    %c24_629 = arith.constant 24 : index
    %c0_630 = arith.constant 0 : index
    %c0_631 = arith.constant 0 : index
    %1200 = vector.load %arg9[%c24_629, %c0_630, %c0_631] : memref<32x8x128xf32, #tpu.memory_space<vmem>>, vector<1x8x128xf32>
    %1201 = vector.shape_cast %1200 : vector<1x8x128xf32> to vector<8x128xf32>
    %1202 = vector.shape_cast %1199 : vector<8x128xf32> to vector<1x8x128xf32>
    tpu.vector_store %arg9[%c24_629, %c0_630, %c0_631], %1202 {strides = array<i32>} : memref<32x8x128xf32, #tpu.memory_space<vmem>>, vector<1x8x128xf32>,
    %c24_632 = arith.constant 24 : index
    %c0_633 = arith.constant 0 : index
    %1203 = memref.load %arg5[%c24_632, %c0_633] : memref<32x12xf32, #tpu.memory_space<smem>>
    %1204 = vector.broadcast %1203 : f32 to vector<8x128xf32>
    %1205 = arith.mulf %1199, %1204 : vector<8x128xf32>
    %1206 = arith.addf %1158, %1205 : vector<8x128xf32>
    %c24_634 = arith.constant 24 : index
    %c1_635 = arith.constant 1 : index
    %1207 = memref.load %arg5[%c24_634, %c1_635] : memref<32x12xf32, #tpu.memory_space<smem>>
    %1208 = vector.broadcast %1207 : f32 to vector<8x128xf32>
    %1209 = arith.mulf %1199, %1208 : vector<8x128xf32>
    %1210 = arith.addf %1162, %1209 : vector<8x128xf32>
    %c24_636 = arith.constant 24 : index
    %c2_637 = arith.constant 2 : index
    %1211 = memref.load %arg5[%c24_636, %c2_637] : memref<32x12xf32, #tpu.memory_space<smem>>
    %1212 = vector.broadcast %1211 : f32 to vector<8x128xf32>
    %1213 = arith.mulf %1199, %1212 : vector<8x128xf32>
    %1214 = arith.addf %1166, %1213 : vector<8x128xf32>
    %c24_638 = arith.constant 24 : index
    %c3_639 = arith.constant 3 : index
    %1215 = memref.load %arg5[%c24_638, %c3_639] : memref<32x12xf32, #tpu.memory_space<smem>>
    %1216 = vector.broadcast %1215 : f32 to vector<8x128xf32>
    %1217 = arith.mulf %1199, %1216 : vector<8x128xf32>
    %1218 = arith.addf %1170, %1217 : vector<8x128xf32>
    %c3_640 = arith.constant 3 : index
    %c25 = arith.constant 25 : index
    %1219 = memref.load %arg3[%c3_640, %c25] : memref<6x32xf32, #tpu.memory_space<smem>>
    %1220 = vector.broadcast %1219 : f32 to vector<1x128xf32>
    %1221 = arith.mulf %8, %1220 : vector<1x128xf32>
    %c4_641 = arith.constant 4 : index
    %c25_642 = arith.constant 25 : index
    %1222 = memref.load %arg3[%c4_641, %c25_642] : memref<6x32xf32, #tpu.memory_space<smem>>
    %1223 = vector.broadcast %1222 : f32 to vector<1x128xf32>
    %1224 = arith.mulf %9, %1223 : vector<1x128xf32>
    %1225 = arith.addf %1221, %1224 : vector<1x128xf32>
    %c5_643 = arith.constant 5 : index
    %c25_644 = arith.constant 25 : index
    %1226 = memref.load %arg3[%c5_643, %c25_644] : memref<6x32xf32, #tpu.memory_space<smem>>
    %1227 = vector.broadcast %1226 : f32 to vector<1x128xf32>
    %1228 = arith.mulf %10, %1227 : vector<1x128xf32>
    %1229 = arith.addf %1225, %1228 : vector<1x128xf32>
    %c0_645 = arith.constant 0 : index
    %c25_646 = arith.constant 25 : index
    %1230 = memref.load %arg4[%c0_645, %c25_646] : memref<1x32xf32, #tpu.memory_space<smem>>
    %1231 = vector.broadcast %1230 : f32 to vector<1x128xf32>
    %1232 = arith.addf %1229, %1231 : vector<1x128xf32>
    %c0_647 = arith.constant 0 : index
    %c25_648 = arith.constant 25 : index
    %1233 = memref.load %arg3[%c0_647, %c25_648] : memref<6x32xf32, #tpu.memory_space<smem>>
    %1234 = vector.broadcast %1233 : f32 to vector<8x128xf32>
    %1235 = arith.mulf %14, %1234 : vector<8x128xf32>
    %c1_649 = arith.constant 1 : index
    %c25_650 = arith.constant 25 : index
    %1236 = memref.load %arg3[%c1_649, %c25_650] : memref<6x32xf32, #tpu.memory_space<smem>>
    %1237 = vector.broadcast %1236 : f32 to vector<8x128xf32>
    %1238 = arith.mulf %18, %1237 : vector<8x128xf32>
    %1239 = arith.addf %1235, %1238 : vector<8x128xf32>
    %c2_651 = arith.constant 2 : index
    %c25_652 = arith.constant 25 : index
    %1240 = memref.load %arg3[%c2_651, %c25_652] : memref<6x32xf32, #tpu.memory_space<smem>>
    %1241 = vector.broadcast %1240 : f32 to vector<8x128xf32>
    %1242 = arith.mulf %22, %1241 : vector<8x128xf32>
    %1243 = arith.addf %1239, %1242 : vector<8x128xf32>
    %1244 = vector.broadcast %1232 : vector<1x128xf32> to vector<8x128xf32>
    %1245 = arith.addf %1243, %1244 : vector<8x128xf32>
    %cst_653 = arith.constant 0.000000e+00 : f32
    %1246 = vector.broadcast %cst_653 : f32 to vector<8x128xf32>
    %1247 = arith.maximumf %1245, %1246 : vector<8x128xf32>
    %c25_654 = arith.constant 25 : index
    %c0_655 = arith.constant 0 : index
    %c0_656 = arith.constant 0 : index
    %1248 = vector.load %arg9[%c25_654, %c0_655, %c0_656] : memref<32x8x128xf32, #tpu.memory_space<vmem>>, vector<1x8x128xf32>
    %1249 = vector.shape_cast %1248 : vector<1x8x128xf32> to vector<8x128xf32>
    %1250 = vector.shape_cast %1247 : vector<8x128xf32> to vector<1x8x128xf32>
    tpu.vector_store %arg9[%c25_654, %c0_655, %c0_656], %1250 {strides = array<i32>} : memref<32x8x128xf32, #tpu.memory_space<vmem>>, vector<1x8x128xf32>,
    %c25_657 = arith.constant 25 : index
    %c0_658 = arith.constant 0 : index
    %1251 = memref.load %arg5[%c25_657, %c0_658] : memref<32x12xf32, #tpu.memory_space<smem>>
    %1252 = vector.broadcast %1251 : f32 to vector<8x128xf32>
    %1253 = arith.mulf %1247, %1252 : vector<8x128xf32>
    %1254 = arith.addf %1206, %1253 : vector<8x128xf32>
    %c25_659 = arith.constant 25 : index
    %c1_660 = arith.constant 1 : index
    %1255 = memref.load %arg5[%c25_659, %c1_660] : memref<32x12xf32, #tpu.memory_space<smem>>
    %1256 = vector.broadcast %1255 : f32 to vector<8x128xf32>
    %1257 = arith.mulf %1247, %1256 : vector<8x128xf32>
    %1258 = arith.addf %1210, %1257 : vector<8x128xf32>
    %c25_661 = arith.constant 25 : index
    %c2_662 = arith.constant 2 : index
    %1259 = memref.load %arg5[%c25_661, %c2_662] : memref<32x12xf32, #tpu.memory_space<smem>>
    %1260 = vector.broadcast %1259 : f32 to vector<8x128xf32>
    %1261 = arith.mulf %1247, %1260 : vector<8x128xf32>
    %1262 = arith.addf %1214, %1261 : vector<8x128xf32>
    %c25_663 = arith.constant 25 : index
    %c3_664 = arith.constant 3 : index
    %1263 = memref.load %arg5[%c25_663, %c3_664] : memref<32x12xf32, #tpu.memory_space<smem>>
    %1264 = vector.broadcast %1263 : f32 to vector<8x128xf32>
    %1265 = arith.mulf %1247, %1264 : vector<8x128xf32>
    %1266 = arith.addf %1218, %1265 : vector<8x128xf32>
    %c3_665 = arith.constant 3 : index
    %c26 = arith.constant 26 : index
    %1267 = memref.load %arg3[%c3_665, %c26] : memref<6x32xf32, #tpu.memory_space<smem>>
    %1268 = vector.broadcast %1267 : f32 to vector<1x128xf32>
    %1269 = arith.mulf %8, %1268 : vector<1x128xf32>
    %c4_666 = arith.constant 4 : index
    %c26_667 = arith.constant 26 : index
    %1270 = memref.load %arg3[%c4_666, %c26_667] : memref<6x32xf32, #tpu.memory_space<smem>>
    %1271 = vector.broadcast %1270 : f32 to vector<1x128xf32>
    %1272 = arith.mulf %9, %1271 : vector<1x128xf32>
    %1273 = arith.addf %1269, %1272 : vector<1x128xf32>
    %c5_668 = arith.constant 5 : index
    %c26_669 = arith.constant 26 : index
    %1274 = memref.load %arg3[%c5_668, %c26_669] : memref<6x32xf32, #tpu.memory_space<smem>>
    %1275 = vector.broadcast %1274 : f32 to vector<1x128xf32>
    %1276 = arith.mulf %10, %1275 : vector<1x128xf32>
    %1277 = arith.addf %1273, %1276 : vector<1x128xf32>
    %c0_670 = arith.constant 0 : index
    %c26_671 = arith.constant 26 : index
    %1278 = memref.load %arg4[%c0_670, %c26_671] : memref<1x32xf32, #tpu.memory_space<smem>>
    %1279 = vector.broadcast %1278 : f32 to vector<1x128xf32>
    %1280 = arith.addf %1277, %1279 : vector<1x128xf32>
    %c0_672 = arith.constant 0 : index
    %c26_673 = arith.constant 26 : index
    %1281 = memref.load %arg3[%c0_672, %c26_673] : memref<6x32xf32, #tpu.memory_space<smem>>
    %1282 = vector.broadcast %1281 : f32 to vector<8x128xf32>
    %1283 = arith.mulf %14, %1282 : vector<8x128xf32>
    %c1_674 = arith.constant 1 : index
    %c26_675 = arith.constant 26 : index
    %1284 = memref.load %arg3[%c1_674, %c26_675] : memref<6x32xf32, #tpu.memory_space<smem>>
    %1285 = vector.broadcast %1284 : f32 to vector<8x128xf32>
    %1286 = arith.mulf %18, %1285 : vector<8x128xf32>
    %1287 = arith.addf %1283, %1286 : vector<8x128xf32>
    %c2_676 = arith.constant 2 : index
    %c26_677 = arith.constant 26 : index
    %1288 = memref.load %arg3[%c2_676, %c26_677] : memref<6x32xf32, #tpu.memory_space<smem>>
    %1289 = vector.broadcast %1288 : f32 to vector<8x128xf32>
    %1290 = arith.mulf %22, %1289 : vector<8x128xf32>
    %1291 = arith.addf %1287, %1290 : vector<8x128xf32>
    %1292 = vector.broadcast %1280 : vector<1x128xf32> to vector<8x128xf32>
    %1293 = arith.addf %1291, %1292 : vector<8x128xf32>
    %cst_678 = arith.constant 0.000000e+00 : f32
    %1294 = vector.broadcast %cst_678 : f32 to vector<8x128xf32>
    %1295 = arith.maximumf %1293, %1294 : vector<8x128xf32>
    %c26_679 = arith.constant 26 : index
    %c0_680 = arith.constant 0 : index
    %c0_681 = arith.constant 0 : index
    %1296 = vector.load %arg9[%c26_679, %c0_680, %c0_681] : memref<32x8x128xf32, #tpu.memory_space<vmem>>, vector<1x8x128xf32>
    %1297 = vector.shape_cast %1296 : vector<1x8x128xf32> to vector<8x128xf32>
    %1298 = vector.shape_cast %1295 : vector<8x128xf32> to vector<1x8x128xf32>
    tpu.vector_store %arg9[%c26_679, %c0_680, %c0_681], %1298 {strides = array<i32>} : memref<32x8x128xf32, #tpu.memory_space<vmem>>, vector<1x8x128xf32>,
    %c26_682 = arith.constant 26 : index
    %c0_683 = arith.constant 0 : index
    %1299 = memref.load %arg5[%c26_682, %c0_683] : memref<32x12xf32, #tpu.memory_space<smem>>
    %1300 = vector.broadcast %1299 : f32 to vector<8x128xf32>
    %1301 = arith.mulf %1295, %1300 : vector<8x128xf32>
    %1302 = arith.addf %1254, %1301 : vector<8x128xf32>
    %c26_684 = arith.constant 26 : index
    %c1_685 = arith.constant 1 : index
    %1303 = memref.load %arg5[%c26_684, %c1_685] : memref<32x12xf32, #tpu.memory_space<smem>>
    %1304 = vector.broadcast %1303 : f32 to vector<8x128xf32>
    %1305 = arith.mulf %1295, %1304 : vector<8x128xf32>
    %1306 = arith.addf %1258, %1305 : vector<8x128xf32>
    %c26_686 = arith.constant 26 : index
    %c2_687 = arith.constant 2 : index
    %1307 = memref.load %arg5[%c26_686, %c2_687] : memref<32x12xf32, #tpu.memory_space<smem>>
    %1308 = vector.broadcast %1307 : f32 to vector<8x128xf32>
    %1309 = arith.mulf %1295, %1308 : vector<8x128xf32>
    %1310 = arith.addf %1262, %1309 : vector<8x128xf32>
    %c26_688 = arith.constant 26 : index
    %c3_689 = arith.constant 3 : index
    %1311 = memref.load %arg5[%c26_688, %c3_689] : memref<32x12xf32, #tpu.memory_space<smem>>
    %1312 = vector.broadcast %1311 : f32 to vector<8x128xf32>
    %1313 = arith.mulf %1295, %1312 : vector<8x128xf32>
    %1314 = arith.addf %1266, %1313 : vector<8x128xf32>
    %c3_690 = arith.constant 3 : index
    %c27 = arith.constant 27 : index
    %1315 = memref.load %arg3[%c3_690, %c27] : memref<6x32xf32, #tpu.memory_space<smem>>
    %1316 = vector.broadcast %1315 : f32 to vector<1x128xf32>
    %1317 = arith.mulf %8, %1316 : vector<1x128xf32>
    %c4_691 = arith.constant 4 : index
    %c27_692 = arith.constant 27 : index
    %1318 = memref.load %arg3[%c4_691, %c27_692] : memref<6x32xf32, #tpu.memory_space<smem>>
    %1319 = vector.broadcast %1318 : f32 to vector<1x128xf32>
    %1320 = arith.mulf %9, %1319 : vector<1x128xf32>
    %1321 = arith.addf %1317, %1320 : vector<1x128xf32>
    %c5_693 = arith.constant 5 : index
    %c27_694 = arith.constant 27 : index
    %1322 = memref.load %arg3[%c5_693, %c27_694] : memref<6x32xf32, #tpu.memory_space<smem>>
    %1323 = vector.broadcast %1322 : f32 to vector<1x128xf32>
    %1324 = arith.mulf %10, %1323 : vector<1x128xf32>
    %1325 = arith.addf %1321, %1324 : vector<1x128xf32>
    %c0_695 = arith.constant 0 : index
    %c27_696 = arith.constant 27 : index
    %1326 = memref.load %arg4[%c0_695, %c27_696] : memref<1x32xf32, #tpu.memory_space<smem>>
    %1327 = vector.broadcast %1326 : f32 to vector<1x128xf32>
    %1328 = arith.addf %1325, %1327 : vector<1x128xf32>
    %c0_697 = arith.constant 0 : index
    %c27_698 = arith.constant 27 : index
    %1329 = memref.load %arg3[%c0_697, %c27_698] : memref<6x32xf32, #tpu.memory_space<smem>>
    %1330 = vector.broadcast %1329 : f32 to vector<8x128xf32>
    %1331 = arith.mulf %14, %1330 : vector<8x128xf32>
    %c1_699 = arith.constant 1 : index
    %c27_700 = arith.constant 27 : index
    %1332 = memref.load %arg3[%c1_699, %c27_700] : memref<6x32xf32, #tpu.memory_space<smem>>
    %1333 = vector.broadcast %1332 : f32 to vector<8x128xf32>
    %1334 = arith.mulf %18, %1333 : vector<8x128xf32>
    %1335 = arith.addf %1331, %1334 : vector<8x128xf32>
    %c2_701 = arith.constant 2 : index
    %c27_702 = arith.constant 27 : index
    %1336 = memref.load %arg3[%c2_701, %c27_702] : memref<6x32xf32, #tpu.memory_space<smem>>
    %1337 = vector.broadcast %1336 : f32 to vector<8x128xf32>
    %1338 = arith.mulf %22, %1337 : vector<8x128xf32>
    %1339 = arith.addf %1335, %1338 : vector<8x128xf32>
    %1340 = vector.broadcast %1328 : vector<1x128xf32> to vector<8x128xf32>
    %1341 = arith.addf %1339, %1340 : vector<8x128xf32>
    %cst_703 = arith.constant 0.000000e+00 : f32
    %1342 = vector.broadcast %cst_703 : f32 to vector<8x128xf32>
    %1343 = arith.maximumf %1341, %1342 : vector<8x128xf32>
    %c27_704 = arith.constant 27 : index
    %c0_705 = arith.constant 0 : index
    %c0_706 = arith.constant 0 : index
    %1344 = vector.load %arg9[%c27_704, %c0_705, %c0_706] : memref<32x8x128xf32, #tpu.memory_space<vmem>>, vector<1x8x128xf32>
    %1345 = vector.shape_cast %1344 : vector<1x8x128xf32> to vector<8x128xf32>
    %1346 = vector.shape_cast %1343 : vector<8x128xf32> to vector<1x8x128xf32>
    tpu.vector_store %arg9[%c27_704, %c0_705, %c0_706], %1346 {strides = array<i32>} : memref<32x8x128xf32, #tpu.memory_space<vmem>>, vector<1x8x128xf32>,
    %c27_707 = arith.constant 27 : index
    %c0_708 = arith.constant 0 : index
    %1347 = memref.load %arg5[%c27_707, %c0_708] : memref<32x12xf32, #tpu.memory_space<smem>>
    %1348 = vector.broadcast %1347 : f32 to vector<8x128xf32>
    %1349 = arith.mulf %1343, %1348 : vector<8x128xf32>
    %1350 = arith.addf %1302, %1349 : vector<8x128xf32>
    %c27_709 = arith.constant 27 : index
    %c1_710 = arith.constant 1 : index
    %1351 = memref.load %arg5[%c27_709, %c1_710] : memref<32x12xf32, #tpu.memory_space<smem>>
    %1352 = vector.broadcast %1351 : f32 to vector<8x128xf32>
    %1353 = arith.mulf %1343, %1352 : vector<8x128xf32>
    %1354 = arith.addf %1306, %1353 : vector<8x128xf32>
    %c27_711 = arith.constant 27 : index
    %c2_712 = arith.constant 2 : index
    %1355 = memref.load %arg5[%c27_711, %c2_712] : memref<32x12xf32, #tpu.memory_space<smem>>
    %1356 = vector.broadcast %1355 : f32 to vector<8x128xf32>
    %1357 = arith.mulf %1343, %1356 : vector<8x128xf32>
    %1358 = arith.addf %1310, %1357 : vector<8x128xf32>
    %c27_713 = arith.constant 27 : index
    %c3_714 = arith.constant 3 : index
    %1359 = memref.load %arg5[%c27_713, %c3_714] : memref<32x12xf32, #tpu.memory_space<smem>>
    %1360 = vector.broadcast %1359 : f32 to vector<8x128xf32>
    %1361 = arith.mulf %1343, %1360 : vector<8x128xf32>
    %1362 = arith.addf %1314, %1361 : vector<8x128xf32>
    %c3_715 = arith.constant 3 : index
    %c28 = arith.constant 28 : index
    %1363 = memref.load %arg3[%c3_715, %c28] : memref<6x32xf32, #tpu.memory_space<smem>>
    %1364 = vector.broadcast %1363 : f32 to vector<1x128xf32>
    %1365 = arith.mulf %8, %1364 : vector<1x128xf32>
    %c4_716 = arith.constant 4 : index
    %c28_717 = arith.constant 28 : index
    %1366 = memref.load %arg3[%c4_716, %c28_717] : memref<6x32xf32, #tpu.memory_space<smem>>
    %1367 = vector.broadcast %1366 : f32 to vector<1x128xf32>
    %1368 = arith.mulf %9, %1367 : vector<1x128xf32>
    %1369 = arith.addf %1365, %1368 : vector<1x128xf32>
    %c5_718 = arith.constant 5 : index
    %c28_719 = arith.constant 28 : index
    %1370 = memref.load %arg3[%c5_718, %c28_719] : memref<6x32xf32, #tpu.memory_space<smem>>
    %1371 = vector.broadcast %1370 : f32 to vector<1x128xf32>
    %1372 = arith.mulf %10, %1371 : vector<1x128xf32>
    %1373 = arith.addf %1369, %1372 : vector<1x128xf32>
    %c0_720 = arith.constant 0 : index
    %c28_721 = arith.constant 28 : index
    %1374 = memref.load %arg4[%c0_720, %c28_721] : memref<1x32xf32, #tpu.memory_space<smem>>
    %1375 = vector.broadcast %1374 : f32 to vector<1x128xf32>
    %1376 = arith.addf %1373, %1375 : vector<1x128xf32>
    %c0_722 = arith.constant 0 : index
    %c28_723 = arith.constant 28 : index
    %1377 = memref.load %arg3[%c0_722, %c28_723] : memref<6x32xf32, #tpu.memory_space<smem>>
    %1378 = vector.broadcast %1377 : f32 to vector<8x128xf32>
    %1379 = arith.mulf %14, %1378 : vector<8x128xf32>
    %c1_724 = arith.constant 1 : index
    %c28_725 = arith.constant 28 : index
    %1380 = memref.load %arg3[%c1_724, %c28_725] : memref<6x32xf32, #tpu.memory_space<smem>>
    %1381 = vector.broadcast %1380 : f32 to vector<8x128xf32>
    %1382 = arith.mulf %18, %1381 : vector<8x128xf32>
    %1383 = arith.addf %1379, %1382 : vector<8x128xf32>
    %c2_726 = arith.constant 2 : index
    %c28_727 = arith.constant 28 : index
    %1384 = memref.load %arg3[%c2_726, %c28_727] : memref<6x32xf32, #tpu.memory_space<smem>>
    %1385 = vector.broadcast %1384 : f32 to vector<8x128xf32>
    %1386 = arith.mulf %22, %1385 : vector<8x128xf32>
    %1387 = arith.addf %1383, %1386 : vector<8x128xf32>
    %1388 = vector.broadcast %1376 : vector<1x128xf32> to vector<8x128xf32>
    %1389 = arith.addf %1387, %1388 : vector<8x128xf32>
    %cst_728 = arith.constant 0.000000e+00 : f32
    %1390 = vector.broadcast %cst_728 : f32 to vector<8x128xf32>
    %1391 = arith.maximumf %1389, %1390 : vector<8x128xf32>
    %c28_729 = arith.constant 28 : index
    %c0_730 = arith.constant 0 : index
    %c0_731 = arith.constant 0 : index
    %1392 = vector.load %arg9[%c28_729, %c0_730, %c0_731] : memref<32x8x128xf32, #tpu.memory_space<vmem>>, vector<1x8x128xf32>
    %1393 = vector.shape_cast %1392 : vector<1x8x128xf32> to vector<8x128xf32>
    %1394 = vector.shape_cast %1391 : vector<8x128xf32> to vector<1x8x128xf32>
    tpu.vector_store %arg9[%c28_729, %c0_730, %c0_731], %1394 {strides = array<i32>} : memref<32x8x128xf32, #tpu.memory_space<vmem>>, vector<1x8x128xf32>,
    %c28_732 = arith.constant 28 : index
    %c0_733 = arith.constant 0 : index
    %1395 = memref.load %arg5[%c28_732, %c0_733] : memref<32x12xf32, #tpu.memory_space<smem>>
    %1396 = vector.broadcast %1395 : f32 to vector<8x128xf32>
    %1397 = arith.mulf %1391, %1396 : vector<8x128xf32>
    %1398 = arith.addf %1350, %1397 : vector<8x128xf32>
    %c28_734 = arith.constant 28 : index
    %c1_735 = arith.constant 1 : index
    %1399 = memref.load %arg5[%c28_734, %c1_735] : memref<32x12xf32, #tpu.memory_space<smem>>
    %1400 = vector.broadcast %1399 : f32 to vector<8x128xf32>
    %1401 = arith.mulf %1391, %1400 : vector<8x128xf32>
    %1402 = arith.addf %1354, %1401 : vector<8x128xf32>
    %c28_736 = arith.constant 28 : index
    %c2_737 = arith.constant 2 : index
    %1403 = memref.load %arg5[%c28_736, %c2_737] : memref<32x12xf32, #tpu.memory_space<smem>>
    %1404 = vector.broadcast %1403 : f32 to vector<8x128xf32>
    %1405 = arith.mulf %1391, %1404 : vector<8x128xf32>
    %1406 = arith.addf %1358, %1405 : vector<8x128xf32>
    %c28_738 = arith.constant 28 : index
    %c3_739 = arith.constant 3 : index
    %1407 = memref.load %arg5[%c28_738, %c3_739] : memref<32x12xf32, #tpu.memory_space<smem>>
    %1408 = vector.broadcast %1407 : f32 to vector<8x128xf32>
    %1409 = arith.mulf %1391, %1408 : vector<8x128xf32>
    %1410 = arith.addf %1362, %1409 : vector<8x128xf32>
    %c3_740 = arith.constant 3 : index
    %c29 = arith.constant 29 : index
    %1411 = memref.load %arg3[%c3_740, %c29] : memref<6x32xf32, #tpu.memory_space<smem>>
    %1412 = vector.broadcast %1411 : f32 to vector<1x128xf32>
    %1413 = arith.mulf %8, %1412 : vector<1x128xf32>
    %c4_741 = arith.constant 4 : index
    %c29_742 = arith.constant 29 : index
    %1414 = memref.load %arg3[%c4_741, %c29_742] : memref<6x32xf32, #tpu.memory_space<smem>>
    %1415 = vector.broadcast %1414 : f32 to vector<1x128xf32>
    %1416 = arith.mulf %9, %1415 : vector<1x128xf32>
    %1417 = arith.addf %1413, %1416 : vector<1x128xf32>
    %c5_743 = arith.constant 5 : index
    %c29_744 = arith.constant 29 : index
    %1418 = memref.load %arg3[%c5_743, %c29_744] : memref<6x32xf32, #tpu.memory_space<smem>>
    %1419 = vector.broadcast %1418 : f32 to vector<1x128xf32>
    %1420 = arith.mulf %10, %1419 : vector<1x128xf32>
    %1421 = arith.addf %1417, %1420 : vector<1x128xf32>
    %c0_745 = arith.constant 0 : index
    %c29_746 = arith.constant 29 : index
    %1422 = memref.load %arg4[%c0_745, %c29_746] : memref<1x32xf32, #tpu.memory_space<smem>>
    %1423 = vector.broadcast %1422 : f32 to vector<1x128xf32>
    %1424 = arith.addf %1421, %1423 : vector<1x128xf32>
    %c0_747 = arith.constant 0 : index
    %c29_748 = arith.constant 29 : index
    %1425 = memref.load %arg3[%c0_747, %c29_748] : memref<6x32xf32, #tpu.memory_space<smem>>
    %1426 = vector.broadcast %1425 : f32 to vector<8x128xf32>
    %1427 = arith.mulf %14, %1426 : vector<8x128xf32>
    %c1_749 = arith.constant 1 : index
    %c29_750 = arith.constant 29 : index
    %1428 = memref.load %arg3[%c1_749, %c29_750] : memref<6x32xf32, #tpu.memory_space<smem>>
    %1429 = vector.broadcast %1428 : f32 to vector<8x128xf32>
    %1430 = arith.mulf %18, %1429 : vector<8x128xf32>
    %1431 = arith.addf %1427, %1430 : vector<8x128xf32>
    %c2_751 = arith.constant 2 : index
    %c29_752 = arith.constant 29 : index
    %1432 = memref.load %arg3[%c2_751, %c29_752] : memref<6x32xf32, #tpu.memory_space<smem>>
    %1433 = vector.broadcast %1432 : f32 to vector<8x128xf32>
    %1434 = arith.mulf %22, %1433 : vector<8x128xf32>
    %1435 = arith.addf %1431, %1434 : vector<8x128xf32>
    %1436 = vector.broadcast %1424 : vector<1x128xf32> to vector<8x128xf32>
    %1437 = arith.addf %1435, %1436 : vector<8x128xf32>
    %cst_753 = arith.constant 0.000000e+00 : f32
    %1438 = vector.broadcast %cst_753 : f32 to vector<8x128xf32>
    %1439 = arith.maximumf %1437, %1438 : vector<8x128xf32>
    %c29_754 = arith.constant 29 : index
    %c0_755 = arith.constant 0 : index
    %c0_756 = arith.constant 0 : index
    %1440 = vector.load %arg9[%c29_754, %c0_755, %c0_756] : memref<32x8x128xf32, #tpu.memory_space<vmem>>, vector<1x8x128xf32>
    %1441 = vector.shape_cast %1440 : vector<1x8x128xf32> to vector<8x128xf32>
    %1442 = vector.shape_cast %1439 : vector<8x128xf32> to vector<1x8x128xf32>
    tpu.vector_store %arg9[%c29_754, %c0_755, %c0_756], %1442 {strides = array<i32>} : memref<32x8x128xf32, #tpu.memory_space<vmem>>, vector<1x8x128xf32>,
    %c29_757 = arith.constant 29 : index
    %c0_758 = arith.constant 0 : index
    %1443 = memref.load %arg5[%c29_757, %c0_758] : memref<32x12xf32, #tpu.memory_space<smem>>
    %1444 = vector.broadcast %1443 : f32 to vector<8x128xf32>
    %1445 = arith.mulf %1439, %1444 : vector<8x128xf32>
    %1446 = arith.addf %1398, %1445 : vector<8x128xf32>
    %c29_759 = arith.constant 29 : index
    %c1_760 = arith.constant 1 : index
    %1447 = memref.load %arg5[%c29_759, %c1_760] : memref<32x12xf32, #tpu.memory_space<smem>>
    %1448 = vector.broadcast %1447 : f32 to vector<8x128xf32>
    %1449 = arith.mulf %1439, %1448 : vector<8x128xf32>
    %1450 = arith.addf %1402, %1449 : vector<8x128xf32>
    %c29_761 = arith.constant 29 : index
    %c2_762 = arith.constant 2 : index
    %1451 = memref.load %arg5[%c29_761, %c2_762] : memref<32x12xf32, #tpu.memory_space<smem>>
    %1452 = vector.broadcast %1451 : f32 to vector<8x128xf32>
    %1453 = arith.mulf %1439, %1452 : vector<8x128xf32>
    %1454 = arith.addf %1406, %1453 : vector<8x128xf32>
    %c29_763 = arith.constant 29 : index
    %c3_764 = arith.constant 3 : index
    %1455 = memref.load %arg5[%c29_763, %c3_764] : memref<32x12xf32, #tpu.memory_space<smem>>
    %1456 = vector.broadcast %1455 : f32 to vector<8x128xf32>
    %1457 = arith.mulf %1439, %1456 : vector<8x128xf32>
    %1458 = arith.addf %1410, %1457 : vector<8x128xf32>
    %c3_765 = arith.constant 3 : index
    %c30 = arith.constant 30 : index
    %1459 = memref.load %arg3[%c3_765, %c30] : memref<6x32xf32, #tpu.memory_space<smem>>
    %1460 = vector.broadcast %1459 : f32 to vector<1x128xf32>
    %1461 = arith.mulf %8, %1460 : vector<1x128xf32>
    %c4_766 = arith.constant 4 : index
    %c30_767 = arith.constant 30 : index
    %1462 = memref.load %arg3[%c4_766, %c30_767] : memref<6x32xf32, #tpu.memory_space<smem>>
    %1463 = vector.broadcast %1462 : f32 to vector<1x128xf32>
    %1464 = arith.mulf %9, %1463 : vector<1x128xf32>
    %1465 = arith.addf %1461, %1464 : vector<1x128xf32>
    %c5_768 = arith.constant 5 : index
    %c30_769 = arith.constant 30 : index
    %1466 = memref.load %arg3[%c5_768, %c30_769] : memref<6x32xf32, #tpu.memory_space<smem>>
    %1467 = vector.broadcast %1466 : f32 to vector<1x128xf32>
    %1468 = arith.mulf %10, %1467 : vector<1x128xf32>
    %1469 = arith.addf %1465, %1468 : vector<1x128xf32>
    %c0_770 = arith.constant 0 : index
    %c30_771 = arith.constant 30 : index
    %1470 = memref.load %arg4[%c0_770, %c30_771] : memref<1x32xf32, #tpu.memory_space<smem>>
    %1471 = vector.broadcast %1470 : f32 to vector<1x128xf32>
    %1472 = arith.addf %1469, %1471 : vector<1x128xf32>
    %c0_772 = arith.constant 0 : index
    %c30_773 = arith.constant 30 : index
    %1473 = memref.load %arg3[%c0_772, %c30_773] : memref<6x32xf32, #tpu.memory_space<smem>>
    %1474 = vector.broadcast %1473 : f32 to vector<8x128xf32>
    %1475 = arith.mulf %14, %1474 : vector<8x128xf32>
    %c1_774 = arith.constant 1 : index
    %c30_775 = arith.constant 30 : index
    %1476 = memref.load %arg3[%c1_774, %c30_775] : memref<6x32xf32, #tpu.memory_space<smem>>
    %1477 = vector.broadcast %1476 : f32 to vector<8x128xf32>
    %1478 = arith.mulf %18, %1477 : vector<8x128xf32>
    %1479 = arith.addf %1475, %1478 : vector<8x128xf32>
    %c2_776 = arith.constant 2 : index
    %c30_777 = arith.constant 30 : index
    %1480 = memref.load %arg3[%c2_776, %c30_777] : memref<6x32xf32, #tpu.memory_space<smem>>
    %1481 = vector.broadcast %1480 : f32 to vector<8x128xf32>
    %1482 = arith.mulf %22, %1481 : vector<8x128xf32>
    %1483 = arith.addf %1479, %1482 : vector<8x128xf32>
    %1484 = vector.broadcast %1472 : vector<1x128xf32> to vector<8x128xf32>
    %1485 = arith.addf %1483, %1484 : vector<8x128xf32>
    %cst_778 = arith.constant 0.000000e+00 : f32
    %1486 = vector.broadcast %cst_778 : f32 to vector<8x128xf32>
    %1487 = arith.maximumf %1485, %1486 : vector<8x128xf32>
    %c30_779 = arith.constant 30 : index
    %c0_780 = arith.constant 0 : index
    %c0_781 = arith.constant 0 : index
    %1488 = vector.load %arg9[%c30_779, %c0_780, %c0_781] : memref<32x8x128xf32, #tpu.memory_space<vmem>>, vector<1x8x128xf32>
    %1489 = vector.shape_cast %1488 : vector<1x8x128xf32> to vector<8x128xf32>
    %1490 = vector.shape_cast %1487 : vector<8x128xf32> to vector<1x8x128xf32>
    tpu.vector_store %arg9[%c30_779, %c0_780, %c0_781], %1490 {strides = array<i32>} : memref<32x8x128xf32, #tpu.memory_space<vmem>>, vector<1x8x128xf32>,
    %c30_782 = arith.constant 30 : index
    %c0_783 = arith.constant 0 : index
    %1491 = memref.load %arg5[%c30_782, %c0_783] : memref<32x12xf32, #tpu.memory_space<smem>>
    %1492 = vector.broadcast %1491 : f32 to vector<8x128xf32>
    %1493 = arith.mulf %1487, %1492 : vector<8x128xf32>
    %1494 = arith.addf %1446, %1493 : vector<8x128xf32>
    %c30_784 = arith.constant 30 : index
    %c1_785 = arith.constant 1 : index
    %1495 = memref.load %arg5[%c30_784, %c1_785] : memref<32x12xf32, #tpu.memory_space<smem>>
    %1496 = vector.broadcast %1495 : f32 to vector<8x128xf32>
    %1497 = arith.mulf %1487, %1496 : vector<8x128xf32>
    %1498 = arith.addf %1450, %1497 : vector<8x128xf32>
    %c30_786 = arith.constant 30 : index
    %c2_787 = arith.constant 2 : index
    %1499 = memref.load %arg5[%c30_786, %c2_787] : memref<32x12xf32, #tpu.memory_space<smem>>
    %1500 = vector.broadcast %1499 : f32 to vector<8x128xf32>
    %1501 = arith.mulf %1487, %1500 : vector<8x128xf32>
    %1502 = arith.addf %1454, %1501 : vector<8x128xf32>
    %c30_788 = arith.constant 30 : index
    %c3_789 = arith.constant 3 : index
    %1503 = memref.load %arg5[%c30_788, %c3_789] : memref<32x12xf32, #tpu.memory_space<smem>>
    %1504 = vector.broadcast %1503 : f32 to vector<8x128xf32>
    %1505 = arith.mulf %1487, %1504 : vector<8x128xf32>
    %1506 = arith.addf %1458, %1505 : vector<8x128xf32>
    %c3_790 = arith.constant 3 : index
    %c31 = arith.constant 31 : index
    %1507 = memref.load %arg3[%c3_790, %c31] : memref<6x32xf32, #tpu.memory_space<smem>>
    %1508 = vector.broadcast %1507 : f32 to vector<1x128xf32>
    %1509 = arith.mulf %8, %1508 : vector<1x128xf32>
    %c4_791 = arith.constant 4 : index
    %c31_792 = arith.constant 31 : index
    %1510 = memref.load %arg3[%c4_791, %c31_792] : memref<6x32xf32, #tpu.memory_space<smem>>
    %1511 = vector.broadcast %1510 : f32 to vector<1x128xf32>
    %1512 = arith.mulf %9, %1511 : vector<1x128xf32>
    %1513 = arith.addf %1509, %1512 : vector<1x128xf32>
    %c5_793 = arith.constant 5 : index
    %c31_794 = arith.constant 31 : index
    %1514 = memref.load %arg3[%c5_793, %c31_794] : memref<6x32xf32, #tpu.memory_space<smem>>
    %1515 = vector.broadcast %1514 : f32 to vector<1x128xf32>
    %1516 = arith.mulf %10, %1515 : vector<1x128xf32>
    %1517 = arith.addf %1513, %1516 : vector<1x128xf32>
    %c0_795 = arith.constant 0 : index
    %c31_796 = arith.constant 31 : index
    %1518 = memref.load %arg4[%c0_795, %c31_796] : memref<1x32xf32, #tpu.memory_space<smem>>
    %1519 = vector.broadcast %1518 : f32 to vector<1x128xf32>
    %1520 = arith.addf %1517, %1519 : vector<1x128xf32>
    %c0_797 = arith.constant 0 : index
    %c31_798 = arith.constant 31 : index
    %1521 = memref.load %arg3[%c0_797, %c31_798] : memref<6x32xf32, #tpu.memory_space<smem>>
    %1522 = vector.broadcast %1521 : f32 to vector<8x128xf32>
    %1523 = arith.mulf %14, %1522 : vector<8x128xf32>
    %c1_799 = arith.constant 1 : index
    %c31_800 = arith.constant 31 : index
    %1524 = memref.load %arg3[%c1_799, %c31_800] : memref<6x32xf32, #tpu.memory_space<smem>>
    %1525 = vector.broadcast %1524 : f32 to vector<8x128xf32>
    %1526 = arith.mulf %18, %1525 : vector<8x128xf32>
    %1527 = arith.addf %1523, %1526 : vector<8x128xf32>
    %c2_801 = arith.constant 2 : index
    %c31_802 = arith.constant 31 : index
    %1528 = memref.load %arg3[%c2_801, %c31_802] : memref<6x32xf32, #tpu.memory_space<smem>>
    %1529 = vector.broadcast %1528 : f32 to vector<8x128xf32>
    %1530 = arith.mulf %22, %1529 : vector<8x128xf32>
    %1531 = arith.addf %1527, %1530 : vector<8x128xf32>
    %1532 = vector.broadcast %1520 : vector<1x128xf32> to vector<8x128xf32>
    %1533 = arith.addf %1531, %1532 : vector<8x128xf32>
    %cst_803 = arith.constant 0.000000e+00 : f32
    %1534 = vector.broadcast %cst_803 : f32 to vector<8x128xf32>
    %1535 = arith.maximumf %1533, %1534 : vector<8x128xf32>
    %c31_804 = arith.constant 31 : index
    %c0_805 = arith.constant 0 : index
    %c0_806 = arith.constant 0 : index
    %1536 = vector.load %arg9[%c31_804, %c0_805, %c0_806] : memref<32x8x128xf32, #tpu.memory_space<vmem>>, vector<1x8x128xf32>
    %1537 = vector.shape_cast %1536 : vector<1x8x128xf32> to vector<8x128xf32>
    %1538 = vector.shape_cast %1535 : vector<8x128xf32> to vector<1x8x128xf32>
    tpu.vector_store %arg9[%c31_804, %c0_805, %c0_806], %1538 {strides = array<i32>} : memref<32x8x128xf32, #tpu.memory_space<vmem>>, vector<1x8x128xf32>,
    %c31_807 = arith.constant 31 : index
    %c0_808 = arith.constant 0 : index
    %1539 = memref.load %arg5[%c31_807, %c0_808] : memref<32x12xf32, #tpu.memory_space<smem>>
    %1540 = vector.broadcast %1539 : f32 to vector<8x128xf32>
    %1541 = arith.mulf %1535, %1540 : vector<8x128xf32>
    %1542 = arith.addf %1494, %1541 : vector<8x128xf32>
    %c31_809 = arith.constant 31 : index
    %c1_810 = arith.constant 1 : index
    %1543 = memref.load %arg5[%c31_809, %c1_810] : memref<32x12xf32, #tpu.memory_space<smem>>
    %1544 = vector.broadcast %1543 : f32 to vector<8x128xf32>
    %1545 = arith.mulf %1535, %1544 : vector<8x128xf32>
    %1546 = arith.addf %1498, %1545 : vector<8x128xf32>
    %c31_811 = arith.constant 31 : index
    %c2_812 = arith.constant 2 : index
    %1547 = memref.load %arg5[%c31_811, %c2_812] : memref<32x12xf32, #tpu.memory_space<smem>>
    %1548 = vector.broadcast %1547 : f32 to vector<8x128xf32>
    %1549 = arith.mulf %1535, %1548 : vector<8x128xf32>
    %1550 = arith.addf %1502, %1549 : vector<8x128xf32>
    %c31_813 = arith.constant 31 : index
    %c3_814 = arith.constant 3 : index
    %1551 = memref.load %arg5[%c31_813, %c3_814] : memref<32x12xf32, #tpu.memory_space<smem>>
    %1552 = vector.broadcast %1551 : f32 to vector<8x128xf32>
    %1553 = arith.mulf %1535, %1552 : vector<8x128xf32>
    %1554 = arith.addf %1506, %1553 : vector<8x128xf32>
    %c0_815 = arith.constant 0 : index
    %c0_816 = arith.constant 0 : index
    %1555 = memref.load %arg6[%c0_815, %c0_816] : memref<1x12xf32, #tpu.memory_space<smem>>
    %1556 = vector.broadcast %1555 : f32 to vector<8x128xf32>
    %1557 = arith.addf %1542, %1556 : vector<8x128xf32>
    %c0_817 = arith.constant 0 : index
    %c1_818 = arith.constant 1 : index
    %1558 = memref.load %arg6[%c0_817, %c1_818] : memref<1x12xf32, #tpu.memory_space<smem>>
    %1559 = vector.broadcast %1558 : f32 to vector<8x128xf32>
    %1560 = arith.addf %1546, %1559 : vector<8x128xf32>
    %c0_819 = arith.constant 0 : index
    %c2_820 = arith.constant 2 : index
    %1561 = memref.load %arg6[%c0_819, %c2_820] : memref<1x12xf32, #tpu.memory_space<smem>>
    %1562 = vector.broadcast %1561 : f32 to vector<8x128xf32>
    %1563 = arith.addf %1550, %1562 : vector<8x128xf32>
    %c0_821 = arith.constant 0 : index
    %c3_822 = arith.constant 3 : index
    %1564 = memref.load %arg6[%c0_821, %c3_822] : memref<1x12xf32, #tpu.memory_space<smem>>
    %1565 = vector.broadcast %1564 : f32 to vector<8x128xf32>
    %1566 = arith.addf %1554, %1565 : vector<8x128xf32>
    %cst_823 = arith.constant 0.000000e+00 : f32
    %1567 = vector.broadcast %cst_823 : f32 to vector<8x128xf32>
    %1568 = arith.maximumf %1566, %1567 : vector<8x128xf32>
    %1569 = arith.mulf %4, %1568 : vector<8x128xf32>
    %cst_824 = arith.constant 0.000000e+00 : f32
    %1570 = vector.broadcast %cst_824 : f32 to vector<8x128xf32>
    %1571 = arith.subf %1570, %1569 : vector<8x128xf32>
    %1572 = math.exp %1571 : vector<8x128xf32>
    %cst_825 = arith.constant 1.000000e+00 : f32
    %1573 = vector.broadcast %cst_825 : f32 to vector<8x128xf32>
    %1574 = arith.subf %1573, %1572 : vector<8x128xf32>
    %cst_826 = arith.constant 0.000000e+00 : f32
    %1575 = vector.broadcast %cst_826 : f32 to vector<1x128xf32>
    %1576 = vector.extract_strided_slice %1569 {offsets = [0, 0], sizes = [1, 128], strides = [1, 1]} : vector<8x128xf32> to vector<1x128xf32>
    %1577 = arith.addf %1575, %1576 : vector<1x128xf32>
    %1578 = vector.extract_strided_slice %1569 {offsets = [1, 0], sizes = [1, 128], strides = [1, 1]} : vector<8x128xf32> to vector<1x128xf32>
    %1579 = arith.addf %1577, %1578 : vector<1x128xf32>
    %1580 = vector.extract_strided_slice %1569 {offsets = [2, 0], sizes = [1, 128], strides = [1, 1]} : vector<8x128xf32> to vector<1x128xf32>
    %1581 = arith.addf %1579, %1580 : vector<1x128xf32>
    %1582 = vector.extract_strided_slice %1569 {offsets = [3, 0], sizes = [1, 128], strides = [1, 1]} : vector<8x128xf32> to vector<1x128xf32>
    %1583 = arith.addf %1581, %1582 : vector<1x128xf32>
    %1584 = vector.extract_strided_slice %1569 {offsets = [4, 0], sizes = [1, 128], strides = [1, 1]} : vector<8x128xf32> to vector<1x128xf32>
    %1585 = arith.addf %1583, %1584 : vector<1x128xf32>
    %1586 = vector.extract_strided_slice %1569 {offsets = [5, 0], sizes = [1, 128], strides = [1, 1]} : vector<8x128xf32> to vector<1x128xf32>
    %1587 = arith.addf %1585, %1586 : vector<1x128xf32>
    %1588 = vector.extract_strided_slice %1569 {offsets = [6, 0], sizes = [1, 128], strides = [1, 1]} : vector<8x128xf32> to vector<1x128xf32>
    %1589 = arith.addf %1587, %1588 : vector<1x128xf32>
    %1590 = tpu.concatenate %1575, %1577, %1579, %1581, %1583, %1585, %1587, %1589 in 0 : vector<1x128xf32>, vector<1x128xf32>, vector<1x128xf32>, vector<1x128xf32>, vector<1x128xf32>, vector<1x128xf32>, vector<1x128xf32>, vector<1x128xf32> -> vector<8x128xf32>
    %cst_827 = arith.constant 0.000000e+00 : f32
    %1591 = vector.broadcast %cst_827 : f32 to vector<8x128xf32>
    %1592 = arith.subf %1591, %1590 : vector<8x128xf32>
    %1593 = math.exp %1592 : vector<8x128xf32>
    %1594 = arith.mulf %1574, %1593 : vector<8x128xf32>
    %c0_828 = arith.constant 0 : index
    %c0_829 = arith.constant 0 : index
    %1595 = vector.load %arg7[%c0_828, %c0_829] : memref<8x128xf32, #tpu.memory_space<vmem>>, vector<8x128xf32>
    tpu.vector_store %arg7[%c0_828, %c0_829], %1594 {strides = array<i32>} : memref<8x128xf32, #tpu.memory_space<vmem>>, vector<8x128xf32>,
    %cst_830 = arith.constant dense<0.000000e+00> : vector<128xf32>
    %1596 = vector.multi_reduction <add>, %1594, %cst_830 [0] : vector<8x128xf32> to vector<128xf32>
    %1597 = vector.shape_cast %1596 : vector<128xf32> to vector<1x128xf32>
    %cst_831 = arith.constant 0.000000e+00 : f32
    %1598 = vector.broadcast %cst_831 : f32 to vector<1x128xf32>
    %cst_832 = arith.constant 0.000000e+00 : f32
    %1599 = vector.broadcast %cst_832 : f32 to vector<1x128xf32>
    %cst_833 = arith.constant 0.000000e+00 : f32
    %1600 = vector.broadcast %cst_833 : f32 to vector<1x128xf32>
    %cst_834 = arith.constant 0.000000e+00 : f32
    %1601 = vector.broadcast %cst_834 : f32 to vector<1x128xf32>
    %cst_835 = arith.constant 0.000000e+00 : f32
    %1602 = vector.broadcast %cst_835 : f32 to vector<1x128xf32>
    %cst_836 = arith.constant 0.000000e+00 : f32
    %1603 = vector.broadcast %cst_836 : f32 to vector<1x128xf32>
    %cst_837 = arith.constant 0.000000e+00 : f32
    %1604 = vector.broadcast %cst_837 : f32 to vector<1x128xf32>
    %cst_838 = arith.constant 0.000000e+00 : f32
    %1605 = vector.broadcast %cst_838 : f32 to vector<1x128xf32>
    %c0_839 = arith.constant 0 : index
    %c0_840 = arith.constant 0 : index
    %c0_841 = arith.constant 0 : index
    %1606 = vector.load %arg9[%c0_839, %c0_840, %c0_841] : memref<32x8x128xf32, #tpu.memory_space<vmem>>, vector<1x8x128xf32>
    %1607 = vector.shape_cast %1606 : vector<1x8x128xf32> to vector<8x128xf32>
    %1608 = arith.mulf %1594, %1607 : vector<8x128xf32>
    %cst_842 = arith.constant dense<0.000000e+00> : vector<128xf32>
    %1609 = vector.multi_reduction <add>, %1608, %cst_842 [0] : vector<8x128xf32> to vector<128xf32>
    %1610 = vector.shape_cast %1609 : vector<128xf32> to vector<1x128xf32>
    %c0_843 = arith.constant 0 : index
    %c4_844 = arith.constant 4 : index
    %1611 = memref.load %arg5[%c0_843, %c4_844] : memref<32x12xf32, #tpu.memory_space<smem>>
    %1612 = vector.broadcast %1611 : f32 to vector<1x128xf32>
    %1613 = arith.mulf %1610, %1612 : vector<1x128xf32>
    %1614 = arith.addf %1598, %1613 : vector<1x128xf32>
    %c0_845 = arith.constant 0 : index
    %c5_846 = arith.constant 5 : index
    %1615 = memref.load %arg5[%c0_845, %c5_846] : memref<32x12xf32, #tpu.memory_space<smem>>
    %1616 = vector.broadcast %1615 : f32 to vector<1x128xf32>
    %1617 = arith.mulf %1610, %1616 : vector<1x128xf32>
    %1618 = arith.addf %1599, %1617 : vector<1x128xf32>
    %c0_847 = arith.constant 0 : index
    %c6_848 = arith.constant 6 : index
    %1619 = memref.load %arg5[%c0_847, %c6_848] : memref<32x12xf32, #tpu.memory_space<smem>>
    %1620 = vector.broadcast %1619 : f32 to vector<1x128xf32>
    %1621 = arith.mulf %1610, %1620 : vector<1x128xf32>
    %1622 = arith.addf %1600, %1621 : vector<1x128xf32>
    %c0_849 = arith.constant 0 : index
    %c7_850 = arith.constant 7 : index
    %1623 = memref.load %arg5[%c0_849, %c7_850] : memref<32x12xf32, #tpu.memory_space<smem>>
    %1624 = vector.broadcast %1623 : f32 to vector<1x128xf32>
    %1625 = arith.mulf %1610, %1624 : vector<1x128xf32>
    %1626 = arith.addf %1601, %1625 : vector<1x128xf32>
    %c0_851 = arith.constant 0 : index
    %c8_852 = arith.constant 8 : index
    %1627 = memref.load %arg5[%c0_851, %c8_852] : memref<32x12xf32, #tpu.memory_space<smem>>
    %1628 = vector.broadcast %1627 : f32 to vector<1x128xf32>
    %1629 = arith.mulf %1610, %1628 : vector<1x128xf32>
    %1630 = arith.addf %1602, %1629 : vector<1x128xf32>
    %c0_853 = arith.constant 0 : index
    %c9_854 = arith.constant 9 : index
    %1631 = memref.load %arg5[%c0_853, %c9_854] : memref<32x12xf32, #tpu.memory_space<smem>>
    %1632 = vector.broadcast %1631 : f32 to vector<1x128xf32>
    %1633 = arith.mulf %1610, %1632 : vector<1x128xf32>
    %1634 = arith.addf %1603, %1633 : vector<1x128xf32>
    %c0_855 = arith.constant 0 : index
    %c10_856 = arith.constant 10 : index
    %1635 = memref.load %arg5[%c0_855, %c10_856] : memref<32x12xf32, #tpu.memory_space<smem>>
    %1636 = vector.broadcast %1635 : f32 to vector<1x128xf32>
    %1637 = arith.mulf %1610, %1636 : vector<1x128xf32>
    %1638 = arith.addf %1604, %1637 : vector<1x128xf32>
    %c0_857 = arith.constant 0 : index
    %c11_858 = arith.constant 11 : index
    %1639 = memref.load %arg5[%c0_857, %c11_858] : memref<32x12xf32, #tpu.memory_space<smem>>
    %1640 = vector.broadcast %1639 : f32 to vector<1x128xf32>
    %1641 = arith.mulf %1610, %1640 : vector<1x128xf32>
    %1642 = arith.addf %1605, %1641 : vector<1x128xf32>
    %c1_859 = arith.constant 1 : index
    %c0_860 = arith.constant 0 : index
    %c0_861 = arith.constant 0 : index
    %1643 = vector.load %arg9[%c1_859, %c0_860, %c0_861] : memref<32x8x128xf32, #tpu.memory_space<vmem>>, vector<1x8x128xf32>
    %1644 = vector.shape_cast %1643 : vector<1x8x128xf32> to vector<8x128xf32>
    %1645 = arith.mulf %1594, %1644 : vector<8x128xf32>
    %cst_862 = arith.constant dense<0.000000e+00> : vector<128xf32>
    %1646 = vector.multi_reduction <add>, %1645, %cst_862 [0] : vector<8x128xf32> to vector<128xf32>
    %1647 = vector.shape_cast %1646 : vector<128xf32> to vector<1x128xf32>
    %c1_863 = arith.constant 1 : index
    %c4_864 = arith.constant 4 : index
    %1648 = memref.load %arg5[%c1_863, %c4_864] : memref<32x12xf32, #tpu.memory_space<smem>>
    %1649 = vector.broadcast %1648 : f32 to vector<1x128xf32>
    %1650 = arith.mulf %1647, %1649 : vector<1x128xf32>
    %1651 = arith.addf %1614, %1650 : vector<1x128xf32>
    %c1_865 = arith.constant 1 : index
    %c5_866 = arith.constant 5 : index
    %1652 = memref.load %arg5[%c1_865, %c5_866] : memref<32x12xf32, #tpu.memory_space<smem>>
    %1653 = vector.broadcast %1652 : f32 to vector<1x128xf32>
    %1654 = arith.mulf %1647, %1653 : vector<1x128xf32>
    %1655 = arith.addf %1618, %1654 : vector<1x128xf32>
    %c1_867 = arith.constant 1 : index
    %c6_868 = arith.constant 6 : index
    %1656 = memref.load %arg5[%c1_867, %c6_868] : memref<32x12xf32, #tpu.memory_space<smem>>
    %1657 = vector.broadcast %1656 : f32 to vector<1x128xf32>
    %1658 = arith.mulf %1647, %1657 : vector<1x128xf32>
    %1659 = arith.addf %1622, %1658 : vector<1x128xf32>
    %c1_869 = arith.constant 1 : index
    %c7_870 = arith.constant 7 : index
    %1660 = memref.load %arg5[%c1_869, %c7_870] : memref<32x12xf32, #tpu.memory_space<smem>>
    %1661 = vector.broadcast %1660 : f32 to vector<1x128xf32>
    %1662 = arith.mulf %1647, %1661 : vector<1x128xf32>
    %1663 = arith.addf %1626, %1662 : vector<1x128xf32>
    %c1_871 = arith.constant 1 : index
    %c8_872 = arith.constant 8 : index
    %1664 = memref.load %arg5[%c1_871, %c8_872] : memref<32x12xf32, #tpu.memory_space<smem>>
    %1665 = vector.broadcast %1664 : f32 to vector<1x128xf32>
    %1666 = arith.mulf %1647, %1665 : vector<1x128xf32>
    %1667 = arith.addf %1630, %1666 : vector<1x128xf32>
    %c1_873 = arith.constant 1 : index
    %c9_874 = arith.constant 9 : index
    %1668 = memref.load %arg5[%c1_873, %c9_874] : memref<32x12xf32, #tpu.memory_space<smem>>
    %1669 = vector.broadcast %1668 : f32 to vector<1x128xf32>
    %1670 = arith.mulf %1647, %1669 : vector<1x128xf32>
    %1671 = arith.addf %1634, %1670 : vector<1x128xf32>
    %c1_875 = arith.constant 1 : index
    %c10_876 = arith.constant 10 : index
    %1672 = memref.load %arg5[%c1_875, %c10_876] : memref<32x12xf32, #tpu.memory_space<smem>>
    %1673 = vector.broadcast %1672 : f32 to vector<1x128xf32>
    %1674 = arith.mulf %1647, %1673 : vector<1x128xf32>
    %1675 = arith.addf %1638, %1674 : vector<1x128xf32>
    %c1_877 = arith.constant 1 : index
    %c11_878 = arith.constant 11 : index
    %1676 = memref.load %arg5[%c1_877, %c11_878] : memref<32x12xf32, #tpu.memory_space<smem>>
    %1677 = vector.broadcast %1676 : f32 to vector<1x128xf32>
    %1678 = arith.mulf %1647, %1677 : vector<1x128xf32>
    %1679 = arith.addf %1642, %1678 : vector<1x128xf32>
    %c2_879 = arith.constant 2 : index
    %c0_880 = arith.constant 0 : index
    %c0_881 = arith.constant 0 : index
    %1680 = vector.load %arg9[%c2_879, %c0_880, %c0_881] : memref<32x8x128xf32, #tpu.memory_space<vmem>>, vector<1x8x128xf32>
    %1681 = vector.shape_cast %1680 : vector<1x8x128xf32> to vector<8x128xf32>
    %1682 = arith.mulf %1594, %1681 : vector<8x128xf32>
    %cst_882 = arith.constant dense<0.000000e+00> : vector<128xf32>
    %1683 = vector.multi_reduction <add>, %1682, %cst_882 [0] : vector<8x128xf32> to vector<128xf32>
    %1684 = vector.shape_cast %1683 : vector<128xf32> to vector<1x128xf32>
    %c2_883 = arith.constant 2 : index
    %c4_884 = arith.constant 4 : index
    %1685 = memref.load %arg5[%c2_883, %c4_884] : memref<32x12xf32, #tpu.memory_space<smem>>
    %1686 = vector.broadcast %1685 : f32 to vector<1x128xf32>
    %1687 = arith.mulf %1684, %1686 : vector<1x128xf32>
    %1688 = arith.addf %1651, %1687 : vector<1x128xf32>
    %c2_885 = arith.constant 2 : index
    %c5_886 = arith.constant 5 : index
    %1689 = memref.load %arg5[%c2_885, %c5_886] : memref<32x12xf32, #tpu.memory_space<smem>>
    %1690 = vector.broadcast %1689 : f32 to vector<1x128xf32>
    %1691 = arith.mulf %1684, %1690 : vector<1x128xf32>
    %1692 = arith.addf %1655, %1691 : vector<1x128xf32>
    %c2_887 = arith.constant 2 : index
    %c6_888 = arith.constant 6 : index
    %1693 = memref.load %arg5[%c2_887, %c6_888] : memref<32x12xf32, #tpu.memory_space<smem>>
    %1694 = vector.broadcast %1693 : f32 to vector<1x128xf32>
    %1695 = arith.mulf %1684, %1694 : vector<1x128xf32>
    %1696 = arith.addf %1659, %1695 : vector<1x128xf32>
    %c2_889 = arith.constant 2 : index
    %c7_890 = arith.constant 7 : index
    %1697 = memref.load %arg5[%c2_889, %c7_890] : memref<32x12xf32, #tpu.memory_space<smem>>
    %1698 = vector.broadcast %1697 : f32 to vector<1x128xf32>
    %1699 = arith.mulf %1684, %1698 : vector<1x128xf32>
    %1700 = arith.addf %1663, %1699 : vector<1x128xf32>
    %c2_891 = arith.constant 2 : index
    %c8_892 = arith.constant 8 : index
    %1701 = memref.load %arg5[%c2_891, %c8_892] : memref<32x12xf32, #tpu.memory_space<smem>>
    %1702 = vector.broadcast %1701 : f32 to vector<1x128xf32>
    %1703 = arith.mulf %1684, %1702 : vector<1x128xf32>
    %1704 = arith.addf %1667, %1703 : vector<1x128xf32>
    %c2_893 = arith.constant 2 : index
    %c9_894 = arith.constant 9 : index
    %1705 = memref.load %arg5[%c2_893, %c9_894] : memref<32x12xf32, #tpu.memory_space<smem>>
    %1706 = vector.broadcast %1705 : f32 to vector<1x128xf32>
    %1707 = arith.mulf %1684, %1706 : vector<1x128xf32>
    %1708 = arith.addf %1671, %1707 : vector<1x128xf32>
    %c2_895 = arith.constant 2 : index
    %c10_896 = arith.constant 10 : index
    %1709 = memref.load %arg5[%c2_895, %c10_896] : memref<32x12xf32, #tpu.memory_space<smem>>
    %1710 = vector.broadcast %1709 : f32 to vector<1x128xf32>
    %1711 = arith.mulf %1684, %1710 : vector<1x128xf32>
    %1712 = arith.addf %1675, %1711 : vector<1x128xf32>
    %c2_897 = arith.constant 2 : index
    %c11_898 = arith.constant 11 : index
    %1713 = memref.load %arg5[%c2_897, %c11_898] : memref<32x12xf32, #tpu.memory_space<smem>>
    %1714 = vector.broadcast %1713 : f32 to vector<1x128xf32>
    %1715 = arith.mulf %1684, %1714 : vector<1x128xf32>
    %1716 = arith.addf %1679, %1715 : vector<1x128xf32>
    %c3_899 = arith.constant 3 : index
    %c0_900 = arith.constant 0 : index
    %c0_901 = arith.constant 0 : index
    %1717 = vector.load %arg9[%c3_899, %c0_900, %c0_901] : memref<32x8x128xf32, #tpu.memory_space<vmem>>, vector<1x8x128xf32>
    %1718 = vector.shape_cast %1717 : vector<1x8x128xf32> to vector<8x128xf32>
    %1719 = arith.mulf %1594, %1718 : vector<8x128xf32>
    %cst_902 = arith.constant dense<0.000000e+00> : vector<128xf32>
    %1720 = vector.multi_reduction <add>, %1719, %cst_902 [0] : vector<8x128xf32> to vector<128xf32>
    %1721 = vector.shape_cast %1720 : vector<128xf32> to vector<1x128xf32>
    %c3_903 = arith.constant 3 : index
    %c4_904 = arith.constant 4 : index
    %1722 = memref.load %arg5[%c3_903, %c4_904] : memref<32x12xf32, #tpu.memory_space<smem>>
    %1723 = vector.broadcast %1722 : f32 to vector<1x128xf32>
    %1724 = arith.mulf %1721, %1723 : vector<1x128xf32>
    %1725 = arith.addf %1688, %1724 : vector<1x128xf32>
    %c3_905 = arith.constant 3 : index
    %c5_906 = arith.constant 5 : index
    %1726 = memref.load %arg5[%c3_905, %c5_906] : memref<32x12xf32, #tpu.memory_space<smem>>
    %1727 = vector.broadcast %1726 : f32 to vector<1x128xf32>
    %1728 = arith.mulf %1721, %1727 : vector<1x128xf32>
    %1729 = arith.addf %1692, %1728 : vector<1x128xf32>
    %c3_907 = arith.constant 3 : index
    %c6_908 = arith.constant 6 : index
    %1730 = memref.load %arg5[%c3_907, %c6_908] : memref<32x12xf32, #tpu.memory_space<smem>>
    %1731 = vector.broadcast %1730 : f32 to vector<1x128xf32>
    %1732 = arith.mulf %1721, %1731 : vector<1x128xf32>
    %1733 = arith.addf %1696, %1732 : vector<1x128xf32>
    %c3_909 = arith.constant 3 : index
    %c7_910 = arith.constant 7 : index
    %1734 = memref.load %arg5[%c3_909, %c7_910] : memref<32x12xf32, #tpu.memory_space<smem>>
    %1735 = vector.broadcast %1734 : f32 to vector<1x128xf32>
    %1736 = arith.mulf %1721, %1735 : vector<1x128xf32>
    %1737 = arith.addf %1700, %1736 : vector<1x128xf32>
    %c3_911 = arith.constant 3 : index
    %c8_912 = arith.constant 8 : index
    %1738 = memref.load %arg5[%c3_911, %c8_912] : memref<32x12xf32, #tpu.memory_space<smem>>
    %1739 = vector.broadcast %1738 : f32 to vector<1x128xf32>
    %1740 = arith.mulf %1721, %1739 : vector<1x128xf32>
    %1741 = arith.addf %1704, %1740 : vector<1x128xf32>
    %c3_913 = arith.constant 3 : index
    %c9_914 = arith.constant 9 : index
    %1742 = memref.load %arg5[%c3_913, %c9_914] : memref<32x12xf32, #tpu.memory_space<smem>>
    %1743 = vector.broadcast %1742 : f32 to vector<1x128xf32>
    %1744 = arith.mulf %1721, %1743 : vector<1x128xf32>
    %1745 = arith.addf %1708, %1744 : vector<1x128xf32>
    %c3_915 = arith.constant 3 : index
    %c10_916 = arith.constant 10 : index
    %1746 = memref.load %arg5[%c3_915, %c10_916] : memref<32x12xf32, #tpu.memory_space<smem>>
    %1747 = vector.broadcast %1746 : f32 to vector<1x128xf32>
    %1748 = arith.mulf %1721, %1747 : vector<1x128xf32>
    %1749 = arith.addf %1712, %1748 : vector<1x128xf32>
    %c3_917 = arith.constant 3 : index
    %c11_918 = arith.constant 11 : index
    %1750 = memref.load %arg5[%c3_917, %c11_918] : memref<32x12xf32, #tpu.memory_space<smem>>
    %1751 = vector.broadcast %1750 : f32 to vector<1x128xf32>
    %1752 = arith.mulf %1721, %1751 : vector<1x128xf32>
    %1753 = arith.addf %1716, %1752 : vector<1x128xf32>
    %c4_919 = arith.constant 4 : index
    %c0_920 = arith.constant 0 : index
    %c0_921 = arith.constant 0 : index
    %1754 = vector.load %arg9[%c4_919, %c0_920, %c0_921] : memref<32x8x128xf32, #tpu.memory_space<vmem>>, vector<1x8x128xf32>
    %1755 = vector.shape_cast %1754 : vector<1x8x128xf32> to vector<8x128xf32>
    %1756 = arith.mulf %1594, %1755 : vector<8x128xf32>
    %cst_922 = arith.constant dense<0.000000e+00> : vector<128xf32>
    %1757 = vector.multi_reduction <add>, %1756, %cst_922 [0] : vector<8x128xf32> to vector<128xf32>
    %1758 = vector.shape_cast %1757 : vector<128xf32> to vector<1x128xf32>
    %c4_923 = arith.constant 4 : index
    %c4_924 = arith.constant 4 : index
    %1759 = memref.load %arg5[%c4_923, %c4_924] : memref<32x12xf32, #tpu.memory_space<smem>>
    %1760 = vector.broadcast %1759 : f32 to vector<1x128xf32>
    %1761 = arith.mulf %1758, %1760 : vector<1x128xf32>
    %1762 = arith.addf %1725, %1761 : vector<1x128xf32>
    %c4_925 = arith.constant 4 : index
    %c5_926 = arith.constant 5 : index
    %1763 = memref.load %arg5[%c4_925, %c5_926] : memref<32x12xf32, #tpu.memory_space<smem>>
    %1764 = vector.broadcast %1763 : f32 to vector<1x128xf32>
    %1765 = arith.mulf %1758, %1764 : vector<1x128xf32>
    %1766 = arith.addf %1729, %1765 : vector<1x128xf32>
    %c4_927 = arith.constant 4 : index
    %c6_928 = arith.constant 6 : index
    %1767 = memref.load %arg5[%c4_927, %c6_928] : memref<32x12xf32, #tpu.memory_space<smem>>
    %1768 = vector.broadcast %1767 : f32 to vector<1x128xf32>
    %1769 = arith.mulf %1758, %1768 : vector<1x128xf32>
    %1770 = arith.addf %1733, %1769 : vector<1x128xf32>
    %c4_929 = arith.constant 4 : index
    %c7_930 = arith.constant 7 : index
    %1771 = memref.load %arg5[%c4_929, %c7_930] : memref<32x12xf32, #tpu.memory_space<smem>>
    %1772 = vector.broadcast %1771 : f32 to vector<1x128xf32>
    %1773 = arith.mulf %1758, %1772 : vector<1x128xf32>
    %1774 = arith.addf %1737, %1773 : vector<1x128xf32>
    %c4_931 = arith.constant 4 : index
    %c8_932 = arith.constant 8 : index
    %1775 = memref.load %arg5[%c4_931, %c8_932] : memref<32x12xf32, #tpu.memory_space<smem>>
    %1776 = vector.broadcast %1775 : f32 to vector<1x128xf32>
    %1777 = arith.mulf %1758, %1776 : vector<1x128xf32>
    %1778 = arith.addf %1741, %1777 : vector<1x128xf32>
    %c4_933 = arith.constant 4 : index
    %c9_934 = arith.constant 9 : index
    %1779 = memref.load %arg5[%c4_933, %c9_934] : memref<32x12xf32, #tpu.memory_space<smem>>
    %1780 = vector.broadcast %1779 : f32 to vector<1x128xf32>
    %1781 = arith.mulf %1758, %1780 : vector<1x128xf32>
    %1782 = arith.addf %1745, %1781 : vector<1x128xf32>
    %c4_935 = arith.constant 4 : index
    %c10_936 = arith.constant 10 : index
    %1783 = memref.load %arg5[%c4_935, %c10_936] : memref<32x12xf32, #tpu.memory_space<smem>>
    %1784 = vector.broadcast %1783 : f32 to vector<1x128xf32>
    %1785 = arith.mulf %1758, %1784 : vector<1x128xf32>
    %1786 = arith.addf %1749, %1785 : vector<1x128xf32>
    %c4_937 = arith.constant 4 : index
    %c11_938 = arith.constant 11 : index
    %1787 = memref.load %arg5[%c4_937, %c11_938] : memref<32x12xf32, #tpu.memory_space<smem>>
    %1788 = vector.broadcast %1787 : f32 to vector<1x128xf32>
    %1789 = arith.mulf %1758, %1788 : vector<1x128xf32>
    %1790 = arith.addf %1753, %1789 : vector<1x128xf32>
    %c5_939 = arith.constant 5 : index
    %c0_940 = arith.constant 0 : index
    %c0_941 = arith.constant 0 : index
    %1791 = vector.load %arg9[%c5_939, %c0_940, %c0_941] : memref<32x8x128xf32, #tpu.memory_space<vmem>>, vector<1x8x128xf32>
    %1792 = vector.shape_cast %1791 : vector<1x8x128xf32> to vector<8x128xf32>
    %1793 = arith.mulf %1594, %1792 : vector<8x128xf32>
    %cst_942 = arith.constant dense<0.000000e+00> : vector<128xf32>
    %1794 = vector.multi_reduction <add>, %1793, %cst_942 [0] : vector<8x128xf32> to vector<128xf32>
    %1795 = vector.shape_cast %1794 : vector<128xf32> to vector<1x128xf32>
    %c5_943 = arith.constant 5 : index
    %c4_944 = arith.constant 4 : index
    %1796 = memref.load %arg5[%c5_943, %c4_944] : memref<32x12xf32, #tpu.memory_space<smem>>
    %1797 = vector.broadcast %1796 : f32 to vector<1x128xf32>
    %1798 = arith.mulf %1795, %1797 : vector<1x128xf32>
    %1799 = arith.addf %1762, %1798 : vector<1x128xf32>
    %c5_945 = arith.constant 5 : index
    %c5_946 = arith.constant 5 : index
    %1800 = memref.load %arg5[%c5_945, %c5_946] : memref<32x12xf32, #tpu.memory_space<smem>>
    %1801 = vector.broadcast %1800 : f32 to vector<1x128xf32>
    %1802 = arith.mulf %1795, %1801 : vector<1x128xf32>
    %1803 = arith.addf %1766, %1802 : vector<1x128xf32>
    %c5_947 = arith.constant 5 : index
    %c6_948 = arith.constant 6 : index
    %1804 = memref.load %arg5[%c5_947, %c6_948] : memref<32x12xf32, #tpu.memory_space<smem>>
    %1805 = vector.broadcast %1804 : f32 to vector<1x128xf32>
    %1806 = arith.mulf %1795, %1805 : vector<1x128xf32>
    %1807 = arith.addf %1770, %1806 : vector<1x128xf32>
    %c5_949 = arith.constant 5 : index
    %c7_950 = arith.constant 7 : index
    %1808 = memref.load %arg5[%c5_949, %c7_950] : memref<32x12xf32, #tpu.memory_space<smem>>
    %1809 = vector.broadcast %1808 : f32 to vector<1x128xf32>
    %1810 = arith.mulf %1795, %1809 : vector<1x128xf32>
    %1811 = arith.addf %1774, %1810 : vector<1x128xf32>
    %c5_951 = arith.constant 5 : index
    %c8_952 = arith.constant 8 : index
    %1812 = memref.load %arg5[%c5_951, %c8_952] : memref<32x12xf32, #tpu.memory_space<smem>>
    %1813 = vector.broadcast %1812 : f32 to vector<1x128xf32>
    %1814 = arith.mulf %1795, %1813 : vector<1x128xf32>
    %1815 = arith.addf %1778, %1814 : vector<1x128xf32>
    %c5_953 = arith.constant 5 : index
    %c9_954 = arith.constant 9 : index
    %1816 = memref.load %arg5[%c5_953, %c9_954] : memref<32x12xf32, #tpu.memory_space<smem>>
    %1817 = vector.broadcast %1816 : f32 to vector<1x128xf32>
    %1818 = arith.mulf %1795, %1817 : vector<1x128xf32>
    %1819 = arith.addf %1782, %1818 : vector<1x128xf32>
    %c5_955 = arith.constant 5 : index
    %c10_956 = arith.constant 10 : index
    %1820 = memref.load %arg5[%c5_955, %c10_956] : memref<32x12xf32, #tpu.memory_space<smem>>
    %1821 = vector.broadcast %1820 : f32 to vector<1x128xf32>
    %1822 = arith.mulf %1795, %1821 : vector<1x128xf32>
    %1823 = arith.addf %1786, %1822 : vector<1x128xf32>
    %c5_957 = arith.constant 5 : index
    %c11_958 = arith.constant 11 : index
    %1824 = memref.load %arg5[%c5_957, %c11_958] : memref<32x12xf32, #tpu.memory_space<smem>>
    %1825 = vector.broadcast %1824 : f32 to vector<1x128xf32>
    %1826 = arith.mulf %1795, %1825 : vector<1x128xf32>
    %1827 = arith.addf %1790, %1826 : vector<1x128xf32>
    %c6_959 = arith.constant 6 : index
    %c0_960 = arith.constant 0 : index
    %c0_961 = arith.constant 0 : index
    %1828 = vector.load %arg9[%c6_959, %c0_960, %c0_961] : memref<32x8x128xf32, #tpu.memory_space<vmem>>, vector<1x8x128xf32>
    %1829 = vector.shape_cast %1828 : vector<1x8x128xf32> to vector<8x128xf32>
    %1830 = arith.mulf %1594, %1829 : vector<8x128xf32>
    %cst_962 = arith.constant dense<0.000000e+00> : vector<128xf32>
    %1831 = vector.multi_reduction <add>, %1830, %cst_962 [0] : vector<8x128xf32> to vector<128xf32>
    %1832 = vector.shape_cast %1831 : vector<128xf32> to vector<1x128xf32>
    %c6_963 = arith.constant 6 : index
    %c4_964 = arith.constant 4 : index
    %1833 = memref.load %arg5[%c6_963, %c4_964] : memref<32x12xf32, #tpu.memory_space<smem>>
    %1834 = vector.broadcast %1833 : f32 to vector<1x128xf32>
    %1835 = arith.mulf %1832, %1834 : vector<1x128xf32>
    %1836 = arith.addf %1799, %1835 : vector<1x128xf32>
    %c6_965 = arith.constant 6 : index
    %c5_966 = arith.constant 5 : index
    %1837 = memref.load %arg5[%c6_965, %c5_966] : memref<32x12xf32, #tpu.memory_space<smem>>
    %1838 = vector.broadcast %1837 : f32 to vector<1x128xf32>
    %1839 = arith.mulf %1832, %1838 : vector<1x128xf32>
    %1840 = arith.addf %1803, %1839 : vector<1x128xf32>
    %c6_967 = arith.constant 6 : index
    %c6_968 = arith.constant 6 : index
    %1841 = memref.load %arg5[%c6_967, %c6_968] : memref<32x12xf32, #tpu.memory_space<smem>>
    %1842 = vector.broadcast %1841 : f32 to vector<1x128xf32>
    %1843 = arith.mulf %1832, %1842 : vector<1x128xf32>
    %1844 = arith.addf %1807, %1843 : vector<1x128xf32>
    %c6_969 = arith.constant 6 : index
    %c7_970 = arith.constant 7 : index
    %1845 = memref.load %arg5[%c6_969, %c7_970] : memref<32x12xf32, #tpu.memory_space<smem>>
    %1846 = vector.broadcast %1845 : f32 to vector<1x128xf32>
    %1847 = arith.mulf %1832, %1846 : vector<1x128xf32>
    %1848 = arith.addf %1811, %1847 : vector<1x128xf32>
    %c6_971 = arith.constant 6 : index
    %c8_972 = arith.constant 8 : index
    %1849 = memref.load %arg5[%c6_971, %c8_972] : memref<32x12xf32, #tpu.memory_space<smem>>
    %1850 = vector.broadcast %1849 : f32 to vector<1x128xf32>
    %1851 = arith.mulf %1832, %1850 : vector<1x128xf32>
    %1852 = arith.addf %1815, %1851 : vector<1x128xf32>
    %c6_973 = arith.constant 6 : index
    %c9_974 = arith.constant 9 : index
    %1853 = memref.load %arg5[%c6_973, %c9_974] : memref<32x12xf32, #tpu.memory_space<smem>>
    %1854 = vector.broadcast %1853 : f32 to vector<1x128xf32>
    %1855 = arith.mulf %1832, %1854 : vector<1x128xf32>
    %1856 = arith.addf %1819, %1855 : vector<1x128xf32>
    %c6_975 = arith.constant 6 : index
    %c10_976 = arith.constant 10 : index
    %1857 = memref.load %arg5[%c6_975, %c10_976] : memref<32x12xf32, #tpu.memory_space<smem>>
    %1858 = vector.broadcast %1857 : f32 to vector<1x128xf32>
    %1859 = arith.mulf %1832, %1858 : vector<1x128xf32>
    %1860 = arith.addf %1823, %1859 : vector<1x128xf32>
    %c6_977 = arith.constant 6 : index
    %c11_978 = arith.constant 11 : index
    %1861 = memref.load %arg5[%c6_977, %c11_978] : memref<32x12xf32, #tpu.memory_space<smem>>
    %1862 = vector.broadcast %1861 : f32 to vector<1x128xf32>
    %1863 = arith.mulf %1832, %1862 : vector<1x128xf32>
    %1864 = arith.addf %1827, %1863 : vector<1x128xf32>
    %c7_979 = arith.constant 7 : index
    %c0_980 = arith.constant 0 : index
    %c0_981 = arith.constant 0 : index
    %1865 = vector.load %arg9[%c7_979, %c0_980, %c0_981] : memref<32x8x128xf32, #tpu.memory_space<vmem>>, vector<1x8x128xf32>
    %1866 = vector.shape_cast %1865 : vector<1x8x128xf32> to vector<8x128xf32>
    %1867 = arith.mulf %1594, %1866 : vector<8x128xf32>
    %cst_982 = arith.constant dense<0.000000e+00> : vector<128xf32>
    %1868 = vector.multi_reduction <add>, %1867, %cst_982 [0] : vector<8x128xf32> to vector<128xf32>
    %1869 = vector.shape_cast %1868 : vector<128xf32> to vector<1x128xf32>
    %c7_983 = arith.constant 7 : index
    %c4_984 = arith.constant 4 : index
    %1870 = memref.load %arg5[%c7_983, %c4_984] : memref<32x12xf32, #tpu.memory_space<smem>>
    %1871 = vector.broadcast %1870 : f32 to vector<1x128xf32>
    %1872 = arith.mulf %1869, %1871 : vector<1x128xf32>
    %1873 = arith.addf %1836, %1872 : vector<1x128xf32>
    %c7_985 = arith.constant 7 : index
    %c5_986 = arith.constant 5 : index
    %1874 = memref.load %arg5[%c7_985, %c5_986] : memref<32x12xf32, #tpu.memory_space<smem>>
    %1875 = vector.broadcast %1874 : f32 to vector<1x128xf32>
    %1876 = arith.mulf %1869, %1875 : vector<1x128xf32>
    %1877 = arith.addf %1840, %1876 : vector<1x128xf32>
    %c7_987 = arith.constant 7 : index
    %c6_988 = arith.constant 6 : index
    %1878 = memref.load %arg5[%c7_987, %c6_988] : memref<32x12xf32, #tpu.memory_space<smem>>
    %1879 = vector.broadcast %1878 : f32 to vector<1x128xf32>
    %1880 = arith.mulf %1869, %1879 : vector<1x128xf32>
    %1881 = arith.addf %1844, %1880 : vector<1x128xf32>
    %c7_989 = arith.constant 7 : index
    %c7_990 = arith.constant 7 : index
    %1882 = memref.load %arg5[%c7_989, %c7_990] : memref<32x12xf32, #tpu.memory_space<smem>>
    %1883 = vector.broadcast %1882 : f32 to vector<1x128xf32>
    %1884 = arith.mulf %1869, %1883 : vector<1x128xf32>
    %1885 = arith.addf %1848, %1884 : vector<1x128xf32>
    %c7_991 = arith.constant 7 : index
    %c8_992 = arith.constant 8 : index
    %1886 = memref.load %arg5[%c7_991, %c8_992] : memref<32x12xf32, #tpu.memory_space<smem>>
    %1887 = vector.broadcast %1886 : f32 to vector<1x128xf32>
    %1888 = arith.mulf %1869, %1887 : vector<1x128xf32>
    %1889 = arith.addf %1852, %1888 : vector<1x128xf32>
    %c7_993 = arith.constant 7 : index
    %c9_994 = arith.constant 9 : index
    %1890 = memref.load %arg5[%c7_993, %c9_994] : memref<32x12xf32, #tpu.memory_space<smem>>
    %1891 = vector.broadcast %1890 : f32 to vector<1x128xf32>
    %1892 = arith.mulf %1869, %1891 : vector<1x128xf32>
    %1893 = arith.addf %1856, %1892 : vector<1x128xf32>
    %c7_995 = arith.constant 7 : index
    %c10_996 = arith.constant 10 : index
    %1894 = memref.load %arg5[%c7_995, %c10_996] : memref<32x12xf32, #tpu.memory_space<smem>>
    %1895 = vector.broadcast %1894 : f32 to vector<1x128xf32>
    %1896 = arith.mulf %1869, %1895 : vector<1x128xf32>
    %1897 = arith.addf %1860, %1896 : vector<1x128xf32>
    %c7_997 = arith.constant 7 : index
    %c11_998 = arith.constant 11 : index
    %1898 = memref.load %arg5[%c7_997, %c11_998] : memref<32x12xf32, #tpu.memory_space<smem>>
    %1899 = vector.broadcast %1898 : f32 to vector<1x128xf32>
    %1900 = arith.mulf %1869, %1899 : vector<1x128xf32>
    %1901 = arith.addf %1864, %1900 : vector<1x128xf32>
    %c8_999 = arith.constant 8 : index
    %c0_1000 = arith.constant 0 : index
    %c0_1001 = arith.constant 0 : index
    %1902 = vector.load %arg9[%c8_999, %c0_1000, %c0_1001] : memref<32x8x128xf32, #tpu.memory_space<vmem>>, vector<1x8x128xf32>
    %1903 = vector.shape_cast %1902 : vector<1x8x128xf32> to vector<8x128xf32>
    %1904 = arith.mulf %1594, %1903 : vector<8x128xf32>
    %cst_1002 = arith.constant dense<0.000000e+00> : vector<128xf32>
    %1905 = vector.multi_reduction <add>, %1904, %cst_1002 [0] : vector<8x128xf32> to vector<128xf32>
    %1906 = vector.shape_cast %1905 : vector<128xf32> to vector<1x128xf32>
    %c8_1003 = arith.constant 8 : index
    %c4_1004 = arith.constant 4 : index
    %1907 = memref.load %arg5[%c8_1003, %c4_1004] : memref<32x12xf32, #tpu.memory_space<smem>>
    %1908 = vector.broadcast %1907 : f32 to vector<1x128xf32>
    %1909 = arith.mulf %1906, %1908 : vector<1x128xf32>
    %1910 = arith.addf %1873, %1909 : vector<1x128xf32>
    %c8_1005 = arith.constant 8 : index
    %c5_1006 = arith.constant 5 : index
    %1911 = memref.load %arg5[%c8_1005, %c5_1006] : memref<32x12xf32, #tpu.memory_space<smem>>
    %1912 = vector.broadcast %1911 : f32 to vector<1x128xf32>
    %1913 = arith.mulf %1906, %1912 : vector<1x128xf32>
    %1914 = arith.addf %1877, %1913 : vector<1x128xf32>
    %c8_1007 = arith.constant 8 : index
    %c6_1008 = arith.constant 6 : index
    %1915 = memref.load %arg5[%c8_1007, %c6_1008] : memref<32x12xf32, #tpu.memory_space<smem>>
    %1916 = vector.broadcast %1915 : f32 to vector<1x128xf32>
    %1917 = arith.mulf %1906, %1916 : vector<1x128xf32>
    %1918 = arith.addf %1881, %1917 : vector<1x128xf32>
    %c8_1009 = arith.constant 8 : index
    %c7_1010 = arith.constant 7 : index
    %1919 = memref.load %arg5[%c8_1009, %c7_1010] : memref<32x12xf32, #tpu.memory_space<smem>>
    %1920 = vector.broadcast %1919 : f32 to vector<1x128xf32>
    %1921 = arith.mulf %1906, %1920 : vector<1x128xf32>
    %1922 = arith.addf %1885, %1921 : vector<1x128xf32>
    %c8_1011 = arith.constant 8 : index
    %c8_1012 = arith.constant 8 : index
    %1923 = memref.load %arg5[%c8_1011, %c8_1012] : memref<32x12xf32, #tpu.memory_space<smem>>
    %1924 = vector.broadcast %1923 : f32 to vector<1x128xf32>
    %1925 = arith.mulf %1906, %1924 : vector<1x128xf32>
    %1926 = arith.addf %1889, %1925 : vector<1x128xf32>
    %c8_1013 = arith.constant 8 : index
    %c9_1014 = arith.constant 9 : index
    %1927 = memref.load %arg5[%c8_1013, %c9_1014] : memref<32x12xf32, #tpu.memory_space<smem>>
    %1928 = vector.broadcast %1927 : f32 to vector<1x128xf32>
    %1929 = arith.mulf %1906, %1928 : vector<1x128xf32>
    %1930 = arith.addf %1893, %1929 : vector<1x128xf32>
    %c8_1015 = arith.constant 8 : index
    %c10_1016 = arith.constant 10 : index
    %1931 = memref.load %arg5[%c8_1015, %c10_1016] : memref<32x12xf32, #tpu.memory_space<smem>>
    %1932 = vector.broadcast %1931 : f32 to vector<1x128xf32>
    %1933 = arith.mulf %1906, %1932 : vector<1x128xf32>
    %1934 = arith.addf %1897, %1933 : vector<1x128xf32>
    %c8_1017 = arith.constant 8 : index
    %c11_1018 = arith.constant 11 : index
    %1935 = memref.load %arg5[%c8_1017, %c11_1018] : memref<32x12xf32, #tpu.memory_space<smem>>
    %1936 = vector.broadcast %1935 : f32 to vector<1x128xf32>
    %1937 = arith.mulf %1906, %1936 : vector<1x128xf32>
    %1938 = arith.addf %1901, %1937 : vector<1x128xf32>
    %c9_1019 = arith.constant 9 : index
    %c0_1020 = arith.constant 0 : index
    %c0_1021 = arith.constant 0 : index
    %1939 = vector.load %arg9[%c9_1019, %c0_1020, %c0_1021] : memref<32x8x128xf32, #tpu.memory_space<vmem>>, vector<1x8x128xf32>
    %1940 = vector.shape_cast %1939 : vector<1x8x128xf32> to vector<8x128xf32>
    %1941 = arith.mulf %1594, %1940 : vector<8x128xf32>
    %cst_1022 = arith.constant dense<0.000000e+00> : vector<128xf32>
    %1942 = vector.multi_reduction <add>, %1941, %cst_1022 [0] : vector<8x128xf32> to vector<128xf32>
    %1943 = vector.shape_cast %1942 : vector<128xf32> to vector<1x128xf32>
    %c9_1023 = arith.constant 9 : index
    %c4_1024 = arith.constant 4 : index
    %1944 = memref.load %arg5[%c9_1023, %c4_1024] : memref<32x12xf32, #tpu.memory_space<smem>>
    %1945 = vector.broadcast %1944 : f32 to vector<1x128xf32>
    %1946 = arith.mulf %1943, %1945 : vector<1x128xf32>
    %1947 = arith.addf %1910, %1946 : vector<1x128xf32>
    %c9_1025 = arith.constant 9 : index
    %c5_1026 = arith.constant 5 : index
    %1948 = memref.load %arg5[%c9_1025, %c5_1026] : memref<32x12xf32, #tpu.memory_space<smem>>
    %1949 = vector.broadcast %1948 : f32 to vector<1x128xf32>
    %1950 = arith.mulf %1943, %1949 : vector<1x128xf32>
    %1951 = arith.addf %1914, %1950 : vector<1x128xf32>
    %c9_1027 = arith.constant 9 : index
    %c6_1028 = arith.constant 6 : index
    %1952 = memref.load %arg5[%c9_1027, %c6_1028] : memref<32x12xf32, #tpu.memory_space<smem>>
    %1953 = vector.broadcast %1952 : f32 to vector<1x128xf32>
    %1954 = arith.mulf %1943, %1953 : vector<1x128xf32>
    %1955 = arith.addf %1918, %1954 : vector<1x128xf32>
    %c9_1029 = arith.constant 9 : index
    %c7_1030 = arith.constant 7 : index
    %1956 = memref.load %arg5[%c9_1029, %c7_1030] : memref<32x12xf32, #tpu.memory_space<smem>>
    %1957 = vector.broadcast %1956 : f32 to vector<1x128xf32>
    %1958 = arith.mulf %1943, %1957 : vector<1x128xf32>
    %1959 = arith.addf %1922, %1958 : vector<1x128xf32>
    %c9_1031 = arith.constant 9 : index
    %c8_1032 = arith.constant 8 : index
    %1960 = memref.load %arg5[%c9_1031, %c8_1032] : memref<32x12xf32, #tpu.memory_space<smem>>
    %1961 = vector.broadcast %1960 : f32 to vector<1x128xf32>
    %1962 = arith.mulf %1943, %1961 : vector<1x128xf32>
    %1963 = arith.addf %1926, %1962 : vector<1x128xf32>
    %c9_1033 = arith.constant 9 : index
    %c9_1034 = arith.constant 9 : index
    %1964 = memref.load %arg5[%c9_1033, %c9_1034] : memref<32x12xf32, #tpu.memory_space<smem>>
    %1965 = vector.broadcast %1964 : f32 to vector<1x128xf32>
    %1966 = arith.mulf %1943, %1965 : vector<1x128xf32>
    %1967 = arith.addf %1930, %1966 : vector<1x128xf32>
    %c9_1035 = arith.constant 9 : index
    %c10_1036 = arith.constant 10 : index
    %1968 = memref.load %arg5[%c9_1035, %c10_1036] : memref<32x12xf32, #tpu.memory_space<smem>>
    %1969 = vector.broadcast %1968 : f32 to vector<1x128xf32>
    %1970 = arith.mulf %1943, %1969 : vector<1x128xf32>
    %1971 = arith.addf %1934, %1970 : vector<1x128xf32>
    %c9_1037 = arith.constant 9 : index
    %c11_1038 = arith.constant 11 : index
    %1972 = memref.load %arg5[%c9_1037, %c11_1038] : memref<32x12xf32, #tpu.memory_space<smem>>
    %1973 = vector.broadcast %1972 : f32 to vector<1x128xf32>
    %1974 = arith.mulf %1943, %1973 : vector<1x128xf32>
    %1975 = arith.addf %1938, %1974 : vector<1x128xf32>
    %c10_1039 = arith.constant 10 : index
    %c0_1040 = arith.constant 0 : index
    %c0_1041 = arith.constant 0 : index
    %1976 = vector.load %arg9[%c10_1039, %c0_1040, %c0_1041] : memref<32x8x128xf32, #tpu.memory_space<vmem>>, vector<1x8x128xf32>
    %1977 = vector.shape_cast %1976 : vector<1x8x128xf32> to vector<8x128xf32>
    %1978 = arith.mulf %1594, %1977 : vector<8x128xf32>
    %cst_1042 = arith.constant dense<0.000000e+00> : vector<128xf32>
    %1979 = vector.multi_reduction <add>, %1978, %cst_1042 [0] : vector<8x128xf32> to vector<128xf32>
    %1980 = vector.shape_cast %1979 : vector<128xf32> to vector<1x128xf32>
    %c10_1043 = arith.constant 10 : index
    %c4_1044 = arith.constant 4 : index
    %1981 = memref.load %arg5[%c10_1043, %c4_1044] : memref<32x12xf32, #tpu.memory_space<smem>>
    %1982 = vector.broadcast %1981 : f32 to vector<1x128xf32>
    %1983 = arith.mulf %1980, %1982 : vector<1x128xf32>
    %1984 = arith.addf %1947, %1983 : vector<1x128xf32>
    %c10_1045 = arith.constant 10 : index
    %c5_1046 = arith.constant 5 : index
    %1985 = memref.load %arg5[%c10_1045, %c5_1046] : memref<32x12xf32, #tpu.memory_space<smem>>
    %1986 = vector.broadcast %1985 : f32 to vector<1x128xf32>
    %1987 = arith.mulf %1980, %1986 : vector<1x128xf32>
    %1988 = arith.addf %1951, %1987 : vector<1x128xf32>
    %c10_1047 = arith.constant 10 : index
    %c6_1048 = arith.constant 6 : index
    %1989 = memref.load %arg5[%c10_1047, %c6_1048] : memref<32x12xf32, #tpu.memory_space<smem>>
    %1990 = vector.broadcast %1989 : f32 to vector<1x128xf32>
    %1991 = arith.mulf %1980, %1990 : vector<1x128xf32>
    %1992 = arith.addf %1955, %1991 : vector<1x128xf32>
    %c10_1049 = arith.constant 10 : index
    %c7_1050 = arith.constant 7 : index
    %1993 = memref.load %arg5[%c10_1049, %c7_1050] : memref<32x12xf32, #tpu.memory_space<smem>>
    %1994 = vector.broadcast %1993 : f32 to vector<1x128xf32>
    %1995 = arith.mulf %1980, %1994 : vector<1x128xf32>
    %1996 = arith.addf %1959, %1995 : vector<1x128xf32>
    %c10_1051 = arith.constant 10 : index
    %c8_1052 = arith.constant 8 : index
    %1997 = memref.load %arg5[%c10_1051, %c8_1052] : memref<32x12xf32, #tpu.memory_space<smem>>
    %1998 = vector.broadcast %1997 : f32 to vector<1x128xf32>
    %1999 = arith.mulf %1980, %1998 : vector<1x128xf32>
    %2000 = arith.addf %1963, %1999 : vector<1x128xf32>
    %c10_1053 = arith.constant 10 : index
    %c9_1054 = arith.constant 9 : index
    %2001 = memref.load %arg5[%c10_1053, %c9_1054] : memref<32x12xf32, #tpu.memory_space<smem>>
    %2002 = vector.broadcast %2001 : f32 to vector<1x128xf32>
    %2003 = arith.mulf %1980, %2002 : vector<1x128xf32>
    %2004 = arith.addf %1967, %2003 : vector<1x128xf32>
    %c10_1055 = arith.constant 10 : index
    %c10_1056 = arith.constant 10 : index
    %2005 = memref.load %arg5[%c10_1055, %c10_1056] : memref<32x12xf32, #tpu.memory_space<smem>>
    %2006 = vector.broadcast %2005 : f32 to vector<1x128xf32>
    %2007 = arith.mulf %1980, %2006 : vector<1x128xf32>
    %2008 = arith.addf %1971, %2007 : vector<1x128xf32>
    %c10_1057 = arith.constant 10 : index
    %c11_1058 = arith.constant 11 : index
    %2009 = memref.load %arg5[%c10_1057, %c11_1058] : memref<32x12xf32, #tpu.memory_space<smem>>
    %2010 = vector.broadcast %2009 : f32 to vector<1x128xf32>
    %2011 = arith.mulf %1980, %2010 : vector<1x128xf32>
    %2012 = arith.addf %1975, %2011 : vector<1x128xf32>
    %c11_1059 = arith.constant 11 : index
    %c0_1060 = arith.constant 0 : index
    %c0_1061 = arith.constant 0 : index
    %2013 = vector.load %arg9[%c11_1059, %c0_1060, %c0_1061] : memref<32x8x128xf32, #tpu.memory_space<vmem>>, vector<1x8x128xf32>
    %2014 = vector.shape_cast %2013 : vector<1x8x128xf32> to vector<8x128xf32>
    %2015 = arith.mulf %1594, %2014 : vector<8x128xf32>
    %cst_1062 = arith.constant dense<0.000000e+00> : vector<128xf32>
    %2016 = vector.multi_reduction <add>, %2015, %cst_1062 [0] : vector<8x128xf32> to vector<128xf32>
    %2017 = vector.shape_cast %2016 : vector<128xf32> to vector<1x128xf32>
    %c11_1063 = arith.constant 11 : index
    %c4_1064 = arith.constant 4 : index
    %2018 = memref.load %arg5[%c11_1063, %c4_1064] : memref<32x12xf32, #tpu.memory_space<smem>>
    %2019 = vector.broadcast %2018 : f32 to vector<1x128xf32>
    %2020 = arith.mulf %2017, %2019 : vector<1x128xf32>
    %2021 = arith.addf %1984, %2020 : vector<1x128xf32>
    %c11_1065 = arith.constant 11 : index
    %c5_1066 = arith.constant 5 : index
    %2022 = memref.load %arg5[%c11_1065, %c5_1066] : memref<32x12xf32, #tpu.memory_space<smem>>
    %2023 = vector.broadcast %2022 : f32 to vector<1x128xf32>
    %2024 = arith.mulf %2017, %2023 : vector<1x128xf32>
    %2025 = arith.addf %1988, %2024 : vector<1x128xf32>
    %c11_1067 = arith.constant 11 : index
    %c6_1068 = arith.constant 6 : index
    %2026 = memref.load %arg5[%c11_1067, %c6_1068] : memref<32x12xf32, #tpu.memory_space<smem>>
    %2027 = vector.broadcast %2026 : f32 to vector<1x128xf32>
    %2028 = arith.mulf %2017, %2027 : vector<1x128xf32>
    %2029 = arith.addf %1992, %2028 : vector<1x128xf32>
    %c11_1069 = arith.constant 11 : index
    %c7_1070 = arith.constant 7 : index
    %2030 = memref.load %arg5[%c11_1069, %c7_1070] : memref<32x12xf32, #tpu.memory_space<smem>>
    %2031 = vector.broadcast %2030 : f32 to vector<1x128xf32>
    %2032 = arith.mulf %2017, %2031 : vector<1x128xf32>
    %2033 = arith.addf %1996, %2032 : vector<1x128xf32>
    %c11_1071 = arith.constant 11 : index
    %c8_1072 = arith.constant 8 : index
    %2034 = memref.load %arg5[%c11_1071, %c8_1072] : memref<32x12xf32, #tpu.memory_space<smem>>
    %2035 = vector.broadcast %2034 : f32 to vector<1x128xf32>
    %2036 = arith.mulf %2017, %2035 : vector<1x128xf32>
    %2037 = arith.addf %2000, %2036 : vector<1x128xf32>
    %c11_1073 = arith.constant 11 : index
    %c9_1074 = arith.constant 9 : index
    %2038 = memref.load %arg5[%c11_1073, %c9_1074] : memref<32x12xf32, #tpu.memory_space<smem>>
    %2039 = vector.broadcast %2038 : f32 to vector<1x128xf32>
    %2040 = arith.mulf %2017, %2039 : vector<1x128xf32>
    %2041 = arith.addf %2004, %2040 : vector<1x128xf32>
    %c11_1075 = arith.constant 11 : index
    %c10_1076 = arith.constant 10 : index
    %2042 = memref.load %arg5[%c11_1075, %c10_1076] : memref<32x12xf32, #tpu.memory_space<smem>>
    %2043 = vector.broadcast %2042 : f32 to vector<1x128xf32>
    %2044 = arith.mulf %2017, %2043 : vector<1x128xf32>
    %2045 = arith.addf %2008, %2044 : vector<1x128xf32>
    %c11_1077 = arith.constant 11 : index
    %c11_1078 = arith.constant 11 : index
    %2046 = memref.load %arg5[%c11_1077, %c11_1078] : memref<32x12xf32, #tpu.memory_space<smem>>
    %2047 = vector.broadcast %2046 : f32 to vector<1x128xf32>
    %2048 = arith.mulf %2017, %2047 : vector<1x128xf32>
    %2049 = arith.addf %2012, %2048 : vector<1x128xf32>
    %c12_1079 = arith.constant 12 : index
    %c0_1080 = arith.constant 0 : index
    %c0_1081 = arith.constant 0 : index
    %2050 = vector.load %arg9[%c12_1079, %c0_1080, %c0_1081] : memref<32x8x128xf32, #tpu.memory_space<vmem>>, vector<1x8x128xf32>
    %2051 = vector.shape_cast %2050 : vector<1x8x128xf32> to vector<8x128xf32>
    %2052 = arith.mulf %1594, %2051 : vector<8x128xf32>
    %cst_1082 = arith.constant dense<0.000000e+00> : vector<128xf32>
    %2053 = vector.multi_reduction <add>, %2052, %cst_1082 [0] : vector<8x128xf32> to vector<128xf32>
    %2054 = vector.shape_cast %2053 : vector<128xf32> to vector<1x128xf32>
    %c12_1083 = arith.constant 12 : index
    %c4_1084 = arith.constant 4 : index
    %2055 = memref.load %arg5[%c12_1083, %c4_1084] : memref<32x12xf32, #tpu.memory_space<smem>>
    %2056 = vector.broadcast %2055 : f32 to vector<1x128xf32>
    %2057 = arith.mulf %2054, %2056 : vector<1x128xf32>
    %2058 = arith.addf %2021, %2057 : vector<1x128xf32>
    %c12_1085 = arith.constant 12 : index
    %c5_1086 = arith.constant 5 : index
    %2059 = memref.load %arg5[%c12_1085, %c5_1086] : memref<32x12xf32, #tpu.memory_space<smem>>
    %2060 = vector.broadcast %2059 : f32 to vector<1x128xf32>
    %2061 = arith.mulf %2054, %2060 : vector<1x128xf32>
    %2062 = arith.addf %2025, %2061 : vector<1x128xf32>
    %c12_1087 = arith.constant 12 : index
    %c6_1088 = arith.constant 6 : index
    %2063 = memref.load %arg5[%c12_1087, %c6_1088] : memref<32x12xf32, #tpu.memory_space<smem>>
    %2064 = vector.broadcast %2063 : f32 to vector<1x128xf32>
    %2065 = arith.mulf %2054, %2064 : vector<1x128xf32>
    %2066 = arith.addf %2029, %2065 : vector<1x128xf32>
    %c12_1089 = arith.constant 12 : index
    %c7_1090 = arith.constant 7 : index
    %2067 = memref.load %arg5[%c12_1089, %c7_1090] : memref<32x12xf32, #tpu.memory_space<smem>>
    %2068 = vector.broadcast %2067 : f32 to vector<1x128xf32>
    %2069 = arith.mulf %2054, %2068 : vector<1x128xf32>
    %2070 = arith.addf %2033, %2069 : vector<1x128xf32>
    %c12_1091 = arith.constant 12 : index
    %c8_1092 = arith.constant 8 : index
    %2071 = memref.load %arg5[%c12_1091, %c8_1092] : memref<32x12xf32, #tpu.memory_space<smem>>
    %2072 = vector.broadcast %2071 : f32 to vector<1x128xf32>
    %2073 = arith.mulf %2054, %2072 : vector<1x128xf32>
    %2074 = arith.addf %2037, %2073 : vector<1x128xf32>
    %c12_1093 = arith.constant 12 : index
    %c9_1094 = arith.constant 9 : index
    %2075 = memref.load %arg5[%c12_1093, %c9_1094] : memref<32x12xf32, #tpu.memory_space<smem>>
    %2076 = vector.broadcast %2075 : f32 to vector<1x128xf32>
    %2077 = arith.mulf %2054, %2076 : vector<1x128xf32>
    %2078 = arith.addf %2041, %2077 : vector<1x128xf32>
    %c12_1095 = arith.constant 12 : index
    %c10_1096 = arith.constant 10 : index
    %2079 = memref.load %arg5[%c12_1095, %c10_1096] : memref<32x12xf32, #tpu.memory_space<smem>>
    %2080 = vector.broadcast %2079 : f32 to vector<1x128xf32>
    %2081 = arith.mulf %2054, %2080 : vector<1x128xf32>
    %2082 = arith.addf %2045, %2081 : vector<1x128xf32>
    %c12_1097 = arith.constant 12 : index
    %c11_1098 = arith.constant 11 : index
    %2083 = memref.load %arg5[%c12_1097, %c11_1098] : memref<32x12xf32, #tpu.memory_space<smem>>
    %2084 = vector.broadcast %2083 : f32 to vector<1x128xf32>
    %2085 = arith.mulf %2054, %2084 : vector<1x128xf32>
    %2086 = arith.addf %2049, %2085 : vector<1x128xf32>
    %c13_1099 = arith.constant 13 : index
    %c0_1100 = arith.constant 0 : index
    %c0_1101 = arith.constant 0 : index
    %2087 = vector.load %arg9[%c13_1099, %c0_1100, %c0_1101] : memref<32x8x128xf32, #tpu.memory_space<vmem>>, vector<1x8x128xf32>
    %2088 = vector.shape_cast %2087 : vector<1x8x128xf32> to vector<8x128xf32>
    %2089 = arith.mulf %1594, %2088 : vector<8x128xf32>
    %cst_1102 = arith.constant dense<0.000000e+00> : vector<128xf32>
    %2090 = vector.multi_reduction <add>, %2089, %cst_1102 [0] : vector<8x128xf32> to vector<128xf32>
    %2091 = vector.shape_cast %2090 : vector<128xf32> to vector<1x128xf32>
    %c13_1103 = arith.constant 13 : index
    %c4_1104 = arith.constant 4 : index
    %2092 = memref.load %arg5[%c13_1103, %c4_1104] : memref<32x12xf32, #tpu.memory_space<smem>>
    %2093 = vector.broadcast %2092 : f32 to vector<1x128xf32>
    %2094 = arith.mulf %2091, %2093 : vector<1x128xf32>
    %2095 = arith.addf %2058, %2094 : vector<1x128xf32>
    %c13_1105 = arith.constant 13 : index
    %c5_1106 = arith.constant 5 : index
    %2096 = memref.load %arg5[%c13_1105, %c5_1106] : memref<32x12xf32, #tpu.memory_space<smem>>
    %2097 = vector.broadcast %2096 : f32 to vector<1x128xf32>
    %2098 = arith.mulf %2091, %2097 : vector<1x128xf32>
    %2099 = arith.addf %2062, %2098 : vector<1x128xf32>
    %c13_1107 = arith.constant 13 : index
    %c6_1108 = arith.constant 6 : index
    %2100 = memref.load %arg5[%c13_1107, %c6_1108] : memref<32x12xf32, #tpu.memory_space<smem>>
    %2101 = vector.broadcast %2100 : f32 to vector<1x128xf32>
    %2102 = arith.mulf %2091, %2101 : vector<1x128xf32>
    %2103 = arith.addf %2066, %2102 : vector<1x128xf32>
    %c13_1109 = arith.constant 13 : index
    %c7_1110 = arith.constant 7 : index
    %2104 = memref.load %arg5[%c13_1109, %c7_1110] : memref<32x12xf32, #tpu.memory_space<smem>>
    %2105 = vector.broadcast %2104 : f32 to vector<1x128xf32>
    %2106 = arith.mulf %2091, %2105 : vector<1x128xf32>
    %2107 = arith.addf %2070, %2106 : vector<1x128xf32>
    %c13_1111 = arith.constant 13 : index
    %c8_1112 = arith.constant 8 : index
    %2108 = memref.load %arg5[%c13_1111, %c8_1112] : memref<32x12xf32, #tpu.memory_space<smem>>
    %2109 = vector.broadcast %2108 : f32 to vector<1x128xf32>
    %2110 = arith.mulf %2091, %2109 : vector<1x128xf32>
    %2111 = arith.addf %2074, %2110 : vector<1x128xf32>
    %c13_1113 = arith.constant 13 : index
    %c9_1114 = arith.constant 9 : index
    %2112 = memref.load %arg5[%c13_1113, %c9_1114] : memref<32x12xf32, #tpu.memory_space<smem>>
    %2113 = vector.broadcast %2112 : f32 to vector<1x128xf32>
    %2114 = arith.mulf %2091, %2113 : vector<1x128xf32>
    %2115 = arith.addf %2078, %2114 : vector<1x128xf32>
    %c13_1115 = arith.constant 13 : index
    %c10_1116 = arith.constant 10 : index
    %2116 = memref.load %arg5[%c13_1115, %c10_1116] : memref<32x12xf32, #tpu.memory_space<smem>>
    %2117 = vector.broadcast %2116 : f32 to vector<1x128xf32>
    %2118 = arith.mulf %2091, %2117 : vector<1x128xf32>
    %2119 = arith.addf %2082, %2118 : vector<1x128xf32>
    %c13_1117 = arith.constant 13 : index
    %c11_1118 = arith.constant 11 : index
    %2120 = memref.load %arg5[%c13_1117, %c11_1118] : memref<32x12xf32, #tpu.memory_space<smem>>
    %2121 = vector.broadcast %2120 : f32 to vector<1x128xf32>
    %2122 = arith.mulf %2091, %2121 : vector<1x128xf32>
    %2123 = arith.addf %2086, %2122 : vector<1x128xf32>
    %c14_1119 = arith.constant 14 : index
    %c0_1120 = arith.constant 0 : index
    %c0_1121 = arith.constant 0 : index
    %2124 = vector.load %arg9[%c14_1119, %c0_1120, %c0_1121] : memref<32x8x128xf32, #tpu.memory_space<vmem>>, vector<1x8x128xf32>
    %2125 = vector.shape_cast %2124 : vector<1x8x128xf32> to vector<8x128xf32>
    %2126 = arith.mulf %1594, %2125 : vector<8x128xf32>
    %cst_1122 = arith.constant dense<0.000000e+00> : vector<128xf32>
    %2127 = vector.multi_reduction <add>, %2126, %cst_1122 [0] : vector<8x128xf32> to vector<128xf32>
    %2128 = vector.shape_cast %2127 : vector<128xf32> to vector<1x128xf32>
    %c14_1123 = arith.constant 14 : index
    %c4_1124 = arith.constant 4 : index
    %2129 = memref.load %arg5[%c14_1123, %c4_1124] : memref<32x12xf32, #tpu.memory_space<smem>>
    %2130 = vector.broadcast %2129 : f32 to vector<1x128xf32>
    %2131 = arith.mulf %2128, %2130 : vector<1x128xf32>
    %2132 = arith.addf %2095, %2131 : vector<1x128xf32>
    %c14_1125 = arith.constant 14 : index
    %c5_1126 = arith.constant 5 : index
    %2133 = memref.load %arg5[%c14_1125, %c5_1126] : memref<32x12xf32, #tpu.memory_space<smem>>
    %2134 = vector.broadcast %2133 : f32 to vector<1x128xf32>
    %2135 = arith.mulf %2128, %2134 : vector<1x128xf32>
    %2136 = arith.addf %2099, %2135 : vector<1x128xf32>
    %c14_1127 = arith.constant 14 : index
    %c6_1128 = arith.constant 6 : index
    %2137 = memref.load %arg5[%c14_1127, %c6_1128] : memref<32x12xf32, #tpu.memory_space<smem>>
    %2138 = vector.broadcast %2137 : f32 to vector<1x128xf32>
    %2139 = arith.mulf %2128, %2138 : vector<1x128xf32>
    %2140 = arith.addf %2103, %2139 : vector<1x128xf32>
    %c14_1129 = arith.constant 14 : index
    %c7_1130 = arith.constant 7 : index
    %2141 = memref.load %arg5[%c14_1129, %c7_1130] : memref<32x12xf32, #tpu.memory_space<smem>>
    %2142 = vector.broadcast %2141 : f32 to vector<1x128xf32>
    %2143 = arith.mulf %2128, %2142 : vector<1x128xf32>
    %2144 = arith.addf %2107, %2143 : vector<1x128xf32>
    %c14_1131 = arith.constant 14 : index
    %c8_1132 = arith.constant 8 : index
    %2145 = memref.load %arg5[%c14_1131, %c8_1132] : memref<32x12xf32, #tpu.memory_space<smem>>
    %2146 = vector.broadcast %2145 : f32 to vector<1x128xf32>
    %2147 = arith.mulf %2128, %2146 : vector<1x128xf32>
    %2148 = arith.addf %2111, %2147 : vector<1x128xf32>
    %c14_1133 = arith.constant 14 : index
    %c9_1134 = arith.constant 9 : index
    %2149 = memref.load %arg5[%c14_1133, %c9_1134] : memref<32x12xf32, #tpu.memory_space<smem>>
    %2150 = vector.broadcast %2149 : f32 to vector<1x128xf32>
    %2151 = arith.mulf %2128, %2150 : vector<1x128xf32>
    %2152 = arith.addf %2115, %2151 : vector<1x128xf32>
    %c14_1135 = arith.constant 14 : index
    %c10_1136 = arith.constant 10 : index
    %2153 = memref.load %arg5[%c14_1135, %c10_1136] : memref<32x12xf32, #tpu.memory_space<smem>>
    %2154 = vector.broadcast %2153 : f32 to vector<1x128xf32>
    %2155 = arith.mulf %2128, %2154 : vector<1x128xf32>
    %2156 = arith.addf %2119, %2155 : vector<1x128xf32>
    %c14_1137 = arith.constant 14 : index
    %c11_1138 = arith.constant 11 : index
    %2157 = memref.load %arg5[%c14_1137, %c11_1138] : memref<32x12xf32, #tpu.memory_space<smem>>
    %2158 = vector.broadcast %2157 : f32 to vector<1x128xf32>
    %2159 = arith.mulf %2128, %2158 : vector<1x128xf32>
    %2160 = arith.addf %2123, %2159 : vector<1x128xf32>
    %c15_1139 = arith.constant 15 : index
    %c0_1140 = arith.constant 0 : index
    %c0_1141 = arith.constant 0 : index
    %2161 = vector.load %arg9[%c15_1139, %c0_1140, %c0_1141] : memref<32x8x128xf32, #tpu.memory_space<vmem>>, vector<1x8x128xf32>
    %2162 = vector.shape_cast %2161 : vector<1x8x128xf32> to vector<8x128xf32>
    %2163 = arith.mulf %1594, %2162 : vector<8x128xf32>
    %cst_1142 = arith.constant dense<0.000000e+00> : vector<128xf32>
    %2164 = vector.multi_reduction <add>, %2163, %cst_1142 [0] : vector<8x128xf32> to vector<128xf32>
    %2165 = vector.shape_cast %2164 : vector<128xf32> to vector<1x128xf32>
    %c15_1143 = arith.constant 15 : index
    %c4_1144 = arith.constant 4 : index
    %2166 = memref.load %arg5[%c15_1143, %c4_1144] : memref<32x12xf32, #tpu.memory_space<smem>>
    %2167 = vector.broadcast %2166 : f32 to vector<1x128xf32>
    %2168 = arith.mulf %2165, %2167 : vector<1x128xf32>
    %2169 = arith.addf %2132, %2168 : vector<1x128xf32>
    %c15_1145 = arith.constant 15 : index
    %c5_1146 = arith.constant 5 : index
    %2170 = memref.load %arg5[%c15_1145, %c5_1146] : memref<32x12xf32, #tpu.memory_space<smem>>
    %2171 = vector.broadcast %2170 : f32 to vector<1x128xf32>
    %2172 = arith.mulf %2165, %2171 : vector<1x128xf32>
    %2173 = arith.addf %2136, %2172 : vector<1x128xf32>
    %c15_1147 = arith.constant 15 : index
    %c6_1148 = arith.constant 6 : index
    %2174 = memref.load %arg5[%c15_1147, %c6_1148] : memref<32x12xf32, #tpu.memory_space<smem>>
    %2175 = vector.broadcast %2174 : f32 to vector<1x128xf32>
    %2176 = arith.mulf %2165, %2175 : vector<1x128xf32>
    %2177 = arith.addf %2140, %2176 : vector<1x128xf32>
    %c15_1149 = arith.constant 15 : index
    %c7_1150 = arith.constant 7 : index
    %2178 = memref.load %arg5[%c15_1149, %c7_1150] : memref<32x12xf32, #tpu.memory_space<smem>>
    %2179 = vector.broadcast %2178 : f32 to vector<1x128xf32>
    %2180 = arith.mulf %2165, %2179 : vector<1x128xf32>
    %2181 = arith.addf %2144, %2180 : vector<1x128xf32>
    %c15_1151 = arith.constant 15 : index
    %c8_1152 = arith.constant 8 : index
    %2182 = memref.load %arg5[%c15_1151, %c8_1152] : memref<32x12xf32, #tpu.memory_space<smem>>
    %2183 = vector.broadcast %2182 : f32 to vector<1x128xf32>
    %2184 = arith.mulf %2165, %2183 : vector<1x128xf32>
    %2185 = arith.addf %2148, %2184 : vector<1x128xf32>
    %c15_1153 = arith.constant 15 : index
    %c9_1154 = arith.constant 9 : index
    %2186 = memref.load %arg5[%c15_1153, %c9_1154] : memref<32x12xf32, #tpu.memory_space<smem>>
    %2187 = vector.broadcast %2186 : f32 to vector<1x128xf32>
    %2188 = arith.mulf %2165, %2187 : vector<1x128xf32>
    %2189 = arith.addf %2152, %2188 : vector<1x128xf32>
    %c15_1155 = arith.constant 15 : index
    %c10_1156 = arith.constant 10 : index
    %2190 = memref.load %arg5[%c15_1155, %c10_1156] : memref<32x12xf32, #tpu.memory_space<smem>>
    %2191 = vector.broadcast %2190 : f32 to vector<1x128xf32>
    %2192 = arith.mulf %2165, %2191 : vector<1x128xf32>
    %2193 = arith.addf %2156, %2192 : vector<1x128xf32>
    %c15_1157 = arith.constant 15 : index
    %c11_1158 = arith.constant 11 : index
    %2194 = memref.load %arg5[%c15_1157, %c11_1158] : memref<32x12xf32, #tpu.memory_space<smem>>
    %2195 = vector.broadcast %2194 : f32 to vector<1x128xf32>
    %2196 = arith.mulf %2165, %2195 : vector<1x128xf32>
    %2197 = arith.addf %2160, %2196 : vector<1x128xf32>
    %c16_1159 = arith.constant 16 : index
    %c0_1160 = arith.constant 0 : index
    %c0_1161 = arith.constant 0 : index
    %2198 = vector.load %arg9[%c16_1159, %c0_1160, %c0_1161] : memref<32x8x128xf32, #tpu.memory_space<vmem>>, vector<1x8x128xf32>
    %2199 = vector.shape_cast %2198 : vector<1x8x128xf32> to vector<8x128xf32>
    %2200 = arith.mulf %1594, %2199 : vector<8x128xf32>
    %cst_1162 = arith.constant dense<0.000000e+00> : vector<128xf32>
    %2201 = vector.multi_reduction <add>, %2200, %cst_1162 [0] : vector<8x128xf32> to vector<128xf32>
    %2202 = vector.shape_cast %2201 : vector<128xf32> to vector<1x128xf32>
    %c16_1163 = arith.constant 16 : index
    %c4_1164 = arith.constant 4 : index
    %2203 = memref.load %arg5[%c16_1163, %c4_1164] : memref<32x12xf32, #tpu.memory_space<smem>>
    %2204 = vector.broadcast %2203 : f32 to vector<1x128xf32>
    %2205 = arith.mulf %2202, %2204 : vector<1x128xf32>
    %2206 = arith.addf %2169, %2205 : vector<1x128xf32>
    %c16_1165 = arith.constant 16 : index
    %c5_1166 = arith.constant 5 : index
    %2207 = memref.load %arg5[%c16_1165, %c5_1166] : memref<32x12xf32, #tpu.memory_space<smem>>
    %2208 = vector.broadcast %2207 : f32 to vector<1x128xf32>
    %2209 = arith.mulf %2202, %2208 : vector<1x128xf32>
    %2210 = arith.addf %2173, %2209 : vector<1x128xf32>
    %c16_1167 = arith.constant 16 : index
    %c6_1168 = arith.constant 6 : index
    %2211 = memref.load %arg5[%c16_1167, %c6_1168] : memref<32x12xf32, #tpu.memory_space<smem>>
    %2212 = vector.broadcast %2211 : f32 to vector<1x128xf32>
    %2213 = arith.mulf %2202, %2212 : vector<1x128xf32>
    %2214 = arith.addf %2177, %2213 : vector<1x128xf32>
    %c16_1169 = arith.constant 16 : index
    %c7_1170 = arith.constant 7 : index
    %2215 = memref.load %arg5[%c16_1169, %c7_1170] : memref<32x12xf32, #tpu.memory_space<smem>>
    %2216 = vector.broadcast %2215 : f32 to vector<1x128xf32>
    %2217 = arith.mulf %2202, %2216 : vector<1x128xf32>
    %2218 = arith.addf %2181, %2217 : vector<1x128xf32>
    %c16_1171 = arith.constant 16 : index
    %c8_1172 = arith.constant 8 : index
    %2219 = memref.load %arg5[%c16_1171, %c8_1172] : memref<32x12xf32, #tpu.memory_space<smem>>
    %2220 = vector.broadcast %2219 : f32 to vector<1x128xf32>
    %2221 = arith.mulf %2202, %2220 : vector<1x128xf32>
    %2222 = arith.addf %2185, %2221 : vector<1x128xf32>
    %c16_1173 = arith.constant 16 : index
    %c9_1174 = arith.constant 9 : index
    %2223 = memref.load %arg5[%c16_1173, %c9_1174] : memref<32x12xf32, #tpu.memory_space<smem>>
    %2224 = vector.broadcast %2223 : f32 to vector<1x128xf32>
    %2225 = arith.mulf %2202, %2224 : vector<1x128xf32>
    %2226 = arith.addf %2189, %2225 : vector<1x128xf32>
    %c16_1175 = arith.constant 16 : index
    %c10_1176 = arith.constant 10 : index
    %2227 = memref.load %arg5[%c16_1175, %c10_1176] : memref<32x12xf32, #tpu.memory_space<smem>>
    %2228 = vector.broadcast %2227 : f32 to vector<1x128xf32>
    %2229 = arith.mulf %2202, %2228 : vector<1x128xf32>
    %2230 = arith.addf %2193, %2229 : vector<1x128xf32>
    %c16_1177 = arith.constant 16 : index
    %c11_1178 = arith.constant 11 : index
    %2231 = memref.load %arg5[%c16_1177, %c11_1178] : memref<32x12xf32, #tpu.memory_space<smem>>
    %2232 = vector.broadcast %2231 : f32 to vector<1x128xf32>
    %2233 = arith.mulf %2202, %2232 : vector<1x128xf32>
    %2234 = arith.addf %2197, %2233 : vector<1x128xf32>
    %c17_1179 = arith.constant 17 : index
    %c0_1180 = arith.constant 0 : index
    %c0_1181 = arith.constant 0 : index
    %2235 = vector.load %arg9[%c17_1179, %c0_1180, %c0_1181] : memref<32x8x128xf32, #tpu.memory_space<vmem>>, vector<1x8x128xf32>
    %2236 = vector.shape_cast %2235 : vector<1x8x128xf32> to vector<8x128xf32>
    %2237 = arith.mulf %1594, %2236 : vector<8x128xf32>
    %cst_1182 = arith.constant dense<0.000000e+00> : vector<128xf32>
    %2238 = vector.multi_reduction <add>, %2237, %cst_1182 [0] : vector<8x128xf32> to vector<128xf32>
    %2239 = vector.shape_cast %2238 : vector<128xf32> to vector<1x128xf32>
    %c17_1183 = arith.constant 17 : index
    %c4_1184 = arith.constant 4 : index
    %2240 = memref.load %arg5[%c17_1183, %c4_1184] : memref<32x12xf32, #tpu.memory_space<smem>>
    %2241 = vector.broadcast %2240 : f32 to vector<1x128xf32>
    %2242 = arith.mulf %2239, %2241 : vector<1x128xf32>
    %2243 = arith.addf %2206, %2242 : vector<1x128xf32>
    %c17_1185 = arith.constant 17 : index
    %c5_1186 = arith.constant 5 : index
    %2244 = memref.load %arg5[%c17_1185, %c5_1186] : memref<32x12xf32, #tpu.memory_space<smem>>
    %2245 = vector.broadcast %2244 : f32 to vector<1x128xf32>
    %2246 = arith.mulf %2239, %2245 : vector<1x128xf32>
    %2247 = arith.addf %2210, %2246 : vector<1x128xf32>
    %c17_1187 = arith.constant 17 : index
    %c6_1188 = arith.constant 6 : index
    %2248 = memref.load %arg5[%c17_1187, %c6_1188] : memref<32x12xf32, #tpu.memory_space<smem>>
    %2249 = vector.broadcast %2248 : f32 to vector<1x128xf32>
    %2250 = arith.mulf %2239, %2249 : vector<1x128xf32>
    %2251 = arith.addf %2214, %2250 : vector<1x128xf32>
    %c17_1189 = arith.constant 17 : index
    %c7_1190 = arith.constant 7 : index
    %2252 = memref.load %arg5[%c17_1189, %c7_1190] : memref<32x12xf32, #tpu.memory_space<smem>>
    %2253 = vector.broadcast %2252 : f32 to vector<1x128xf32>
    %2254 = arith.mulf %2239, %2253 : vector<1x128xf32>
    %2255 = arith.addf %2218, %2254 : vector<1x128xf32>
    %c17_1191 = arith.constant 17 : index
    %c8_1192 = arith.constant 8 : index
    %2256 = memref.load %arg5[%c17_1191, %c8_1192] : memref<32x12xf32, #tpu.memory_space<smem>>
    %2257 = vector.broadcast %2256 : f32 to vector<1x128xf32>
    %2258 = arith.mulf %2239, %2257 : vector<1x128xf32>
    %2259 = arith.addf %2222, %2258 : vector<1x128xf32>
    %c17_1193 = arith.constant 17 : index
    %c9_1194 = arith.constant 9 : index
    %2260 = memref.load %arg5[%c17_1193, %c9_1194] : memref<32x12xf32, #tpu.memory_space<smem>>
    %2261 = vector.broadcast %2260 : f32 to vector<1x128xf32>
    %2262 = arith.mulf %2239, %2261 : vector<1x128xf32>
    %2263 = arith.addf %2226, %2262 : vector<1x128xf32>
    %c17_1195 = arith.constant 17 : index
    %c10_1196 = arith.constant 10 : index
    %2264 = memref.load %arg5[%c17_1195, %c10_1196] : memref<32x12xf32, #tpu.memory_space<smem>>
    %2265 = vector.broadcast %2264 : f32 to vector<1x128xf32>
    %2266 = arith.mulf %2239, %2265 : vector<1x128xf32>
    %2267 = arith.addf %2230, %2266 : vector<1x128xf32>
    %c17_1197 = arith.constant 17 : index
    %c11_1198 = arith.constant 11 : index
    %2268 = memref.load %arg5[%c17_1197, %c11_1198] : memref<32x12xf32, #tpu.memory_space<smem>>
    %2269 = vector.broadcast %2268 : f32 to vector<1x128xf32>
    %2270 = arith.mulf %2239, %2269 : vector<1x128xf32>
    %2271 = arith.addf %2234, %2270 : vector<1x128xf32>
    %c18_1199 = arith.constant 18 : index
    %c0_1200 = arith.constant 0 : index
    %c0_1201 = arith.constant 0 : index
    %2272 = vector.load %arg9[%c18_1199, %c0_1200, %c0_1201] : memref<32x8x128xf32, #tpu.memory_space<vmem>>, vector<1x8x128xf32>
    %2273 = vector.shape_cast %2272 : vector<1x8x128xf32> to vector<8x128xf32>
    %2274 = arith.mulf %1594, %2273 : vector<8x128xf32>
    %cst_1202 = arith.constant dense<0.000000e+00> : vector<128xf32>
    %2275 = vector.multi_reduction <add>, %2274, %cst_1202 [0] : vector<8x128xf32> to vector<128xf32>
    %2276 = vector.shape_cast %2275 : vector<128xf32> to vector<1x128xf32>
    %c18_1203 = arith.constant 18 : index
    %c4_1204 = arith.constant 4 : index
    %2277 = memref.load %arg5[%c18_1203, %c4_1204] : memref<32x12xf32, #tpu.memory_space<smem>>
    %2278 = vector.broadcast %2277 : f32 to vector<1x128xf32>
    %2279 = arith.mulf %2276, %2278 : vector<1x128xf32>
    %2280 = arith.addf %2243, %2279 : vector<1x128xf32>
    %c18_1205 = arith.constant 18 : index
    %c5_1206 = arith.constant 5 : index
    %2281 = memref.load %arg5[%c18_1205, %c5_1206] : memref<32x12xf32, #tpu.memory_space<smem>>
    %2282 = vector.broadcast %2281 : f32 to vector<1x128xf32>
    %2283 = arith.mulf %2276, %2282 : vector<1x128xf32>
    %2284 = arith.addf %2247, %2283 : vector<1x128xf32>
    %c18_1207 = arith.constant 18 : index
    %c6_1208 = arith.constant 6 : index
    %2285 = memref.load %arg5[%c18_1207, %c6_1208] : memref<32x12xf32, #tpu.memory_space<smem>>
    %2286 = vector.broadcast %2285 : f32 to vector<1x128xf32>
    %2287 = arith.mulf %2276, %2286 : vector<1x128xf32>
    %2288 = arith.addf %2251, %2287 : vector<1x128xf32>
    %c18_1209 = arith.constant 18 : index
    %c7_1210 = arith.constant 7 : index
    %2289 = memref.load %arg5[%c18_1209, %c7_1210] : memref<32x12xf32, #tpu.memory_space<smem>>
    %2290 = vector.broadcast %2289 : f32 to vector<1x128xf32>
    %2291 = arith.mulf %2276, %2290 : vector<1x128xf32>
    %2292 = arith.addf %2255, %2291 : vector<1x128xf32>
    %c18_1211 = arith.constant 18 : index
    %c8_1212 = arith.constant 8 : index
    %2293 = memref.load %arg5[%c18_1211, %c8_1212] : memref<32x12xf32, #tpu.memory_space<smem>>
    %2294 = vector.broadcast %2293 : f32 to vector<1x128xf32>
    %2295 = arith.mulf %2276, %2294 : vector<1x128xf32>
    %2296 = arith.addf %2259, %2295 : vector<1x128xf32>
    %c18_1213 = arith.constant 18 : index
    %c9_1214 = arith.constant 9 : index
    %2297 = memref.load %arg5[%c18_1213, %c9_1214] : memref<32x12xf32, #tpu.memory_space<smem>>
    %2298 = vector.broadcast %2297 : f32 to vector<1x128xf32>
    %2299 = arith.mulf %2276, %2298 : vector<1x128xf32>
    %2300 = arith.addf %2263, %2299 : vector<1x128xf32>
    %c18_1215 = arith.constant 18 : index
    %c10_1216 = arith.constant 10 : index
    %2301 = memref.load %arg5[%c18_1215, %c10_1216] : memref<32x12xf32, #tpu.memory_space<smem>>
    %2302 = vector.broadcast %2301 : f32 to vector<1x128xf32>
    %2303 = arith.mulf %2276, %2302 : vector<1x128xf32>
    %2304 = arith.addf %2267, %2303 : vector<1x128xf32>
    %c18_1217 = arith.constant 18 : index
    %c11_1218 = arith.constant 11 : index
    %2305 = memref.load %arg5[%c18_1217, %c11_1218] : memref<32x12xf32, #tpu.memory_space<smem>>
    %2306 = vector.broadcast %2305 : f32 to vector<1x128xf32>
    %2307 = arith.mulf %2276, %2306 : vector<1x128xf32>
    %2308 = arith.addf %2271, %2307 : vector<1x128xf32>
    %c19_1219 = arith.constant 19 : index
    %c0_1220 = arith.constant 0 : index
    %c0_1221 = arith.constant 0 : index
    %2309 = vector.load %arg9[%c19_1219, %c0_1220, %c0_1221] : memref<32x8x128xf32, #tpu.memory_space<vmem>>, vector<1x8x128xf32>
    %2310 = vector.shape_cast %2309 : vector<1x8x128xf32> to vector<8x128xf32>
    %2311 = arith.mulf %1594, %2310 : vector<8x128xf32>
    %cst_1222 = arith.constant dense<0.000000e+00> : vector<128xf32>
    %2312 = vector.multi_reduction <add>, %2311, %cst_1222 [0] : vector<8x128xf32> to vector<128xf32>
    %2313 = vector.shape_cast %2312 : vector<128xf32> to vector<1x128xf32>
    %c19_1223 = arith.constant 19 : index
    %c4_1224 = arith.constant 4 : index
    %2314 = memref.load %arg5[%c19_1223, %c4_1224] : memref<32x12xf32, #tpu.memory_space<smem>>
    %2315 = vector.broadcast %2314 : f32 to vector<1x128xf32>
    %2316 = arith.mulf %2313, %2315 : vector<1x128xf32>
    %2317 = arith.addf %2280, %2316 : vector<1x128xf32>
    %c19_1225 = arith.constant 19 : index
    %c5_1226 = arith.constant 5 : index
    %2318 = memref.load %arg5[%c19_1225, %c5_1226] : memref<32x12xf32, #tpu.memory_space<smem>>
    %2319 = vector.broadcast %2318 : f32 to vector<1x128xf32>
    %2320 = arith.mulf %2313, %2319 : vector<1x128xf32>
    %2321 = arith.addf %2284, %2320 : vector<1x128xf32>
    %c19_1227 = arith.constant 19 : index
    %c6_1228 = arith.constant 6 : index
    %2322 = memref.load %arg5[%c19_1227, %c6_1228] : memref<32x12xf32, #tpu.memory_space<smem>>
    %2323 = vector.broadcast %2322 : f32 to vector<1x128xf32>
    %2324 = arith.mulf %2313, %2323 : vector<1x128xf32>
    %2325 = arith.addf %2288, %2324 : vector<1x128xf32>
    %c19_1229 = arith.constant 19 : index
    %c7_1230 = arith.constant 7 : index
    %2326 = memref.load %arg5[%c19_1229, %c7_1230] : memref<32x12xf32, #tpu.memory_space<smem>>
    %2327 = vector.broadcast %2326 : f32 to vector<1x128xf32>
    %2328 = arith.mulf %2313, %2327 : vector<1x128xf32>
    %2329 = arith.addf %2292, %2328 : vector<1x128xf32>
    %c19_1231 = arith.constant 19 : index
    %c8_1232 = arith.constant 8 : index
    %2330 = memref.load %arg5[%c19_1231, %c8_1232] : memref<32x12xf32, #tpu.memory_space<smem>>
    %2331 = vector.broadcast %2330 : f32 to vector<1x128xf32>
    %2332 = arith.mulf %2313, %2331 : vector<1x128xf32>
    %2333 = arith.addf %2296, %2332 : vector<1x128xf32>
    %c19_1233 = arith.constant 19 : index
    %c9_1234 = arith.constant 9 : index
    %2334 = memref.load %arg5[%c19_1233, %c9_1234] : memref<32x12xf32, #tpu.memory_space<smem>>
    %2335 = vector.broadcast %2334 : f32 to vector<1x128xf32>
    %2336 = arith.mulf %2313, %2335 : vector<1x128xf32>
    %2337 = arith.addf %2300, %2336 : vector<1x128xf32>
    %c19_1235 = arith.constant 19 : index
    %c10_1236 = arith.constant 10 : index
    %2338 = memref.load %arg5[%c19_1235, %c10_1236] : memref<32x12xf32, #tpu.memory_space<smem>>
    %2339 = vector.broadcast %2338 : f32 to vector<1x128xf32>
    %2340 = arith.mulf %2313, %2339 : vector<1x128xf32>
    %2341 = arith.addf %2304, %2340 : vector<1x128xf32>
    %c19_1237 = arith.constant 19 : index
    %c11_1238 = arith.constant 11 : index
    %2342 = memref.load %arg5[%c19_1237, %c11_1238] : memref<32x12xf32, #tpu.memory_space<smem>>
    %2343 = vector.broadcast %2342 : f32 to vector<1x128xf32>
    %2344 = arith.mulf %2313, %2343 : vector<1x128xf32>
    %2345 = arith.addf %2308, %2344 : vector<1x128xf32>
    %c20_1239 = arith.constant 20 : index
    %c0_1240 = arith.constant 0 : index
    %c0_1241 = arith.constant 0 : index
    %2346 = vector.load %arg9[%c20_1239, %c0_1240, %c0_1241] : memref<32x8x128xf32, #tpu.memory_space<vmem>>, vector<1x8x128xf32>
    %2347 = vector.shape_cast %2346 : vector<1x8x128xf32> to vector<8x128xf32>
    %2348 = arith.mulf %1594, %2347 : vector<8x128xf32>
    %cst_1242 = arith.constant dense<0.000000e+00> : vector<128xf32>
    %2349 = vector.multi_reduction <add>, %2348, %cst_1242 [0] : vector<8x128xf32> to vector<128xf32>
    %2350 = vector.shape_cast %2349 : vector<128xf32> to vector<1x128xf32>
    %c20_1243 = arith.constant 20 : index
    %c4_1244 = arith.constant 4 : index
    %2351 = memref.load %arg5[%c20_1243, %c4_1244] : memref<32x12xf32, #tpu.memory_space<smem>>
    %2352 = vector.broadcast %2351 : f32 to vector<1x128xf32>
    %2353 = arith.mulf %2350, %2352 : vector<1x128xf32>
    %2354 = arith.addf %2317, %2353 : vector<1x128xf32>
    %c20_1245 = arith.constant 20 : index
    %c5_1246 = arith.constant 5 : index
    %2355 = memref.load %arg5[%c20_1245, %c5_1246] : memref<32x12xf32, #tpu.memory_space<smem>>
    %2356 = vector.broadcast %2355 : f32 to vector<1x128xf32>
    %2357 = arith.mulf %2350, %2356 : vector<1x128xf32>
    %2358 = arith.addf %2321, %2357 : vector<1x128xf32>
    %c20_1247 = arith.constant 20 : index
    %c6_1248 = arith.constant 6 : index
    %2359 = memref.load %arg5[%c20_1247, %c6_1248] : memref<32x12xf32, #tpu.memory_space<smem>>
    %2360 = vector.broadcast %2359 : f32 to vector<1x128xf32>
    %2361 = arith.mulf %2350, %2360 : vector<1x128xf32>
    %2362 = arith.addf %2325, %2361 : vector<1x128xf32>
    %c20_1249 = arith.constant 20 : index
    %c7_1250 = arith.constant 7 : index
    %2363 = memref.load %arg5[%c20_1249, %c7_1250] : memref<32x12xf32, #tpu.memory_space<smem>>
    %2364 = vector.broadcast %2363 : f32 to vector<1x128xf32>
    %2365 = arith.mulf %2350, %2364 : vector<1x128xf32>
    %2366 = arith.addf %2329, %2365 : vector<1x128xf32>
    %c20_1251 = arith.constant 20 : index
    %c8_1252 = arith.constant 8 : index
    %2367 = memref.load %arg5[%c20_1251, %c8_1252] : memref<32x12xf32, #tpu.memory_space<smem>>
    %2368 = vector.broadcast %2367 : f32 to vector<1x128xf32>
    %2369 = arith.mulf %2350, %2368 : vector<1x128xf32>
    %2370 = arith.addf %2333, %2369 : vector<1x128xf32>
    %c20_1253 = arith.constant 20 : index
    %c9_1254 = arith.constant 9 : index
    %2371 = memref.load %arg5[%c20_1253, %c9_1254] : memref<32x12xf32, #tpu.memory_space<smem>>
    %2372 = vector.broadcast %2371 : f32 to vector<1x128xf32>
    %2373 = arith.mulf %2350, %2372 : vector<1x128xf32>
    %2374 = arith.addf %2337, %2373 : vector<1x128xf32>
    %c20_1255 = arith.constant 20 : index
    %c10_1256 = arith.constant 10 : index
    %2375 = memref.load %arg5[%c20_1255, %c10_1256] : memref<32x12xf32, #tpu.memory_space<smem>>
    %2376 = vector.broadcast %2375 : f32 to vector<1x128xf32>
    %2377 = arith.mulf %2350, %2376 : vector<1x128xf32>
    %2378 = arith.addf %2341, %2377 : vector<1x128xf32>
    %c20_1257 = arith.constant 20 : index
    %c11_1258 = arith.constant 11 : index
    %2379 = memref.load %arg5[%c20_1257, %c11_1258] : memref<32x12xf32, #tpu.memory_space<smem>>
    %2380 = vector.broadcast %2379 : f32 to vector<1x128xf32>
    %2381 = arith.mulf %2350, %2380 : vector<1x128xf32>
    %2382 = arith.addf %2345, %2381 : vector<1x128xf32>
    %c21_1259 = arith.constant 21 : index
    %c0_1260 = arith.constant 0 : index
    %c0_1261 = arith.constant 0 : index
    %2383 = vector.load %arg9[%c21_1259, %c0_1260, %c0_1261] : memref<32x8x128xf32, #tpu.memory_space<vmem>>, vector<1x8x128xf32>
    %2384 = vector.shape_cast %2383 : vector<1x8x128xf32> to vector<8x128xf32>
    %2385 = arith.mulf %1594, %2384 : vector<8x128xf32>
    %cst_1262 = arith.constant dense<0.000000e+00> : vector<128xf32>
    %2386 = vector.multi_reduction <add>, %2385, %cst_1262 [0] : vector<8x128xf32> to vector<128xf32>
    %2387 = vector.shape_cast %2386 : vector<128xf32> to vector<1x128xf32>
    %c21_1263 = arith.constant 21 : index
    %c4_1264 = arith.constant 4 : index
    %2388 = memref.load %arg5[%c21_1263, %c4_1264] : memref<32x12xf32, #tpu.memory_space<smem>>
    %2389 = vector.broadcast %2388 : f32 to vector<1x128xf32>
    %2390 = arith.mulf %2387, %2389 : vector<1x128xf32>
    %2391 = arith.addf %2354, %2390 : vector<1x128xf32>
    %c21_1265 = arith.constant 21 : index
    %c5_1266 = arith.constant 5 : index
    %2392 = memref.load %arg5[%c21_1265, %c5_1266] : memref<32x12xf32, #tpu.memory_space<smem>>
    %2393 = vector.broadcast %2392 : f32 to vector<1x128xf32>
    %2394 = arith.mulf %2387, %2393 : vector<1x128xf32>
    %2395 = arith.addf %2358, %2394 : vector<1x128xf32>
    %c21_1267 = arith.constant 21 : index
    %c6_1268 = arith.constant 6 : index
    %2396 = memref.load %arg5[%c21_1267, %c6_1268] : memref<32x12xf32, #tpu.memory_space<smem>>
    %2397 = vector.broadcast %2396 : f32 to vector<1x128xf32>
    %2398 = arith.mulf %2387, %2397 : vector<1x128xf32>
    %2399 = arith.addf %2362, %2398 : vector<1x128xf32>
    %c21_1269 = arith.constant 21 : index
    %c7_1270 = arith.constant 7 : index
    %2400 = memref.load %arg5[%c21_1269, %c7_1270] : memref<32x12xf32, #tpu.memory_space<smem>>
    %2401 = vector.broadcast %2400 : f32 to vector<1x128xf32>
    %2402 = arith.mulf %2387, %2401 : vector<1x128xf32>
    %2403 = arith.addf %2366, %2402 : vector<1x128xf32>
    %c21_1271 = arith.constant 21 : index
    %c8_1272 = arith.constant 8 : index
    %2404 = memref.load %arg5[%c21_1271, %c8_1272] : memref<32x12xf32, #tpu.memory_space<smem>>
    %2405 = vector.broadcast %2404 : f32 to vector<1x128xf32>
    %2406 = arith.mulf %2387, %2405 : vector<1x128xf32>
    %2407 = arith.addf %2370, %2406 : vector<1x128xf32>
    %c21_1273 = arith.constant 21 : index
    %c9_1274 = arith.constant 9 : index
    %2408 = memref.load %arg5[%c21_1273, %c9_1274] : memref<32x12xf32, #tpu.memory_space<smem>>
    %2409 = vector.broadcast %2408 : f32 to vector<1x128xf32>
    %2410 = arith.mulf %2387, %2409 : vector<1x128xf32>
    %2411 = arith.addf %2374, %2410 : vector<1x128xf32>
    %c21_1275 = arith.constant 21 : index
    %c10_1276 = arith.constant 10 : index
    %2412 = memref.load %arg5[%c21_1275, %c10_1276] : memref<32x12xf32, #tpu.memory_space<smem>>
    %2413 = vector.broadcast %2412 : f32 to vector<1x128xf32>
    %2414 = arith.mulf %2387, %2413 : vector<1x128xf32>
    %2415 = arith.addf %2378, %2414 : vector<1x128xf32>
    %c21_1277 = arith.constant 21 : index
    %c11_1278 = arith.constant 11 : index
    %2416 = memref.load %arg5[%c21_1277, %c11_1278] : memref<32x12xf32, #tpu.memory_space<smem>>
    %2417 = vector.broadcast %2416 : f32 to vector<1x128xf32>
    %2418 = arith.mulf %2387, %2417 : vector<1x128xf32>
    %2419 = arith.addf %2382, %2418 : vector<1x128xf32>
    %c22_1279 = arith.constant 22 : index
    %c0_1280 = arith.constant 0 : index
    %c0_1281 = arith.constant 0 : index
    %2420 = vector.load %arg9[%c22_1279, %c0_1280, %c0_1281] : memref<32x8x128xf32, #tpu.memory_space<vmem>>, vector<1x8x128xf32>
    %2421 = vector.shape_cast %2420 : vector<1x8x128xf32> to vector<8x128xf32>
    %2422 = arith.mulf %1594, %2421 : vector<8x128xf32>
    %cst_1282 = arith.constant dense<0.000000e+00> : vector<128xf32>
    %2423 = vector.multi_reduction <add>, %2422, %cst_1282 [0] : vector<8x128xf32> to vector<128xf32>
    %2424 = vector.shape_cast %2423 : vector<128xf32> to vector<1x128xf32>
    %c22_1283 = arith.constant 22 : index
    %c4_1284 = arith.constant 4 : index
    %2425 = memref.load %arg5[%c22_1283, %c4_1284] : memref<32x12xf32, #tpu.memory_space<smem>>
    %2426 = vector.broadcast %2425 : f32 to vector<1x128xf32>
    %2427 = arith.mulf %2424, %2426 : vector<1x128xf32>
    %2428 = arith.addf %2391, %2427 : vector<1x128xf32>
    %c22_1285 = arith.constant 22 : index
    %c5_1286 = arith.constant 5 : index
    %2429 = memref.load %arg5[%c22_1285, %c5_1286] : memref<32x12xf32, #tpu.memory_space<smem>>
    %2430 = vector.broadcast %2429 : f32 to vector<1x128xf32>
    %2431 = arith.mulf %2424, %2430 : vector<1x128xf32>
    %2432 = arith.addf %2395, %2431 : vector<1x128xf32>
    %c22_1287 = arith.constant 22 : index
    %c6_1288 = arith.constant 6 : index
    %2433 = memref.load %arg5[%c22_1287, %c6_1288] : memref<32x12xf32, #tpu.memory_space<smem>>
    %2434 = vector.broadcast %2433 : f32 to vector<1x128xf32>
    %2435 = arith.mulf %2424, %2434 : vector<1x128xf32>
    %2436 = arith.addf %2399, %2435 : vector<1x128xf32>
    %c22_1289 = arith.constant 22 : index
    %c7_1290 = arith.constant 7 : index
    %2437 = memref.load %arg5[%c22_1289, %c7_1290] : memref<32x12xf32, #tpu.memory_space<smem>>
    %2438 = vector.broadcast %2437 : f32 to vector<1x128xf32>
    %2439 = arith.mulf %2424, %2438 : vector<1x128xf32>
    %2440 = arith.addf %2403, %2439 : vector<1x128xf32>
    %c22_1291 = arith.constant 22 : index
    %c8_1292 = arith.constant 8 : index
    %2441 = memref.load %arg5[%c22_1291, %c8_1292] : memref<32x12xf32, #tpu.memory_space<smem>>
    %2442 = vector.broadcast %2441 : f32 to vector<1x128xf32>
    %2443 = arith.mulf %2424, %2442 : vector<1x128xf32>
    %2444 = arith.addf %2407, %2443 : vector<1x128xf32>
    %c22_1293 = arith.constant 22 : index
    %c9_1294 = arith.constant 9 : index
    %2445 = memref.load %arg5[%c22_1293, %c9_1294] : memref<32x12xf32, #tpu.memory_space<smem>>
    %2446 = vector.broadcast %2445 : f32 to vector<1x128xf32>
    %2447 = arith.mulf %2424, %2446 : vector<1x128xf32>
    %2448 = arith.addf %2411, %2447 : vector<1x128xf32>
    %c22_1295 = arith.constant 22 : index
    %c10_1296 = arith.constant 10 : index
    %2449 = memref.load %arg5[%c22_1295, %c10_1296] : memref<32x12xf32, #tpu.memory_space<smem>>
    %2450 = vector.broadcast %2449 : f32 to vector<1x128xf32>
    %2451 = arith.mulf %2424, %2450 : vector<1x128xf32>
    %2452 = arith.addf %2415, %2451 : vector<1x128xf32>
    %c22_1297 = arith.constant 22 : index
    %c11_1298 = arith.constant 11 : index
    %2453 = memref.load %arg5[%c22_1297, %c11_1298] : memref<32x12xf32, #tpu.memory_space<smem>>
    %2454 = vector.broadcast %2453 : f32 to vector<1x128xf32>
    %2455 = arith.mulf %2424, %2454 : vector<1x128xf32>
    %2456 = arith.addf %2419, %2455 : vector<1x128xf32>
    %c23_1299 = arith.constant 23 : index
    %c0_1300 = arith.constant 0 : index
    %c0_1301 = arith.constant 0 : index
    %2457 = vector.load %arg9[%c23_1299, %c0_1300, %c0_1301] : memref<32x8x128xf32, #tpu.memory_space<vmem>>, vector<1x8x128xf32>
    %2458 = vector.shape_cast %2457 : vector<1x8x128xf32> to vector<8x128xf32>
    %2459 = arith.mulf %1594, %2458 : vector<8x128xf32>
    %cst_1302 = arith.constant dense<0.000000e+00> : vector<128xf32>
    %2460 = vector.multi_reduction <add>, %2459, %cst_1302 [0] : vector<8x128xf32> to vector<128xf32>
    %2461 = vector.shape_cast %2460 : vector<128xf32> to vector<1x128xf32>
    %c23_1303 = arith.constant 23 : index
    %c4_1304 = arith.constant 4 : index
    %2462 = memref.load %arg5[%c23_1303, %c4_1304] : memref<32x12xf32, #tpu.memory_space<smem>>
    %2463 = vector.broadcast %2462 : f32 to vector<1x128xf32>
    %2464 = arith.mulf %2461, %2463 : vector<1x128xf32>
    %2465 = arith.addf %2428, %2464 : vector<1x128xf32>
    %c23_1305 = arith.constant 23 : index
    %c5_1306 = arith.constant 5 : index
    %2466 = memref.load %arg5[%c23_1305, %c5_1306] : memref<32x12xf32, #tpu.memory_space<smem>>
    %2467 = vector.broadcast %2466 : f32 to vector<1x128xf32>
    %2468 = arith.mulf %2461, %2467 : vector<1x128xf32>
    %2469 = arith.addf %2432, %2468 : vector<1x128xf32>
    %c23_1307 = arith.constant 23 : index
    %c6_1308 = arith.constant 6 : index
    %2470 = memref.load %arg5[%c23_1307, %c6_1308] : memref<32x12xf32, #tpu.memory_space<smem>>
    %2471 = vector.broadcast %2470 : f32 to vector<1x128xf32>
    %2472 = arith.mulf %2461, %2471 : vector<1x128xf32>
    %2473 = arith.addf %2436, %2472 : vector<1x128xf32>
    %c23_1309 = arith.constant 23 : index
    %c7_1310 = arith.constant 7 : index
    %2474 = memref.load %arg5[%c23_1309, %c7_1310] : memref<32x12xf32, #tpu.memory_space<smem>>
    %2475 = vector.broadcast %2474 : f32 to vector<1x128xf32>
    %2476 = arith.mulf %2461, %2475 : vector<1x128xf32>
    %2477 = arith.addf %2440, %2476 : vector<1x128xf32>
    %c23_1311 = arith.constant 23 : index
    %c8_1312 = arith.constant 8 : index
    %2478 = memref.load %arg5[%c23_1311, %c8_1312] : memref<32x12xf32, #tpu.memory_space<smem>>
    %2479 = vector.broadcast %2478 : f32 to vector<1x128xf32>
    %2480 = arith.mulf %2461, %2479 : vector<1x128xf32>
    %2481 = arith.addf %2444, %2480 : vector<1x128xf32>
    %c23_1313 = arith.constant 23 : index
    %c9_1314 = arith.constant 9 : index
    %2482 = memref.load %arg5[%c23_1313, %c9_1314] : memref<32x12xf32, #tpu.memory_space<smem>>
    %2483 = vector.broadcast %2482 : f32 to vector<1x128xf32>
    %2484 = arith.mulf %2461, %2483 : vector<1x128xf32>
    %2485 = arith.addf %2448, %2484 : vector<1x128xf32>
    %c23_1315 = arith.constant 23 : index
    %c10_1316 = arith.constant 10 : index
    %2486 = memref.load %arg5[%c23_1315, %c10_1316] : memref<32x12xf32, #tpu.memory_space<smem>>
    %2487 = vector.broadcast %2486 : f32 to vector<1x128xf32>
    %2488 = arith.mulf %2461, %2487 : vector<1x128xf32>
    %2489 = arith.addf %2452, %2488 : vector<1x128xf32>
    %c23_1317 = arith.constant 23 : index
    %c11_1318 = arith.constant 11 : index
    %2490 = memref.load %arg5[%c23_1317, %c11_1318] : memref<32x12xf32, #tpu.memory_space<smem>>
    %2491 = vector.broadcast %2490 : f32 to vector<1x128xf32>
    %2492 = arith.mulf %2461, %2491 : vector<1x128xf32>
    %2493 = arith.addf %2456, %2492 : vector<1x128xf32>
    %c24_1319 = arith.constant 24 : index
    %c0_1320 = arith.constant 0 : index
    %c0_1321 = arith.constant 0 : index
    %2494 = vector.load %arg9[%c24_1319, %c0_1320, %c0_1321] : memref<32x8x128xf32, #tpu.memory_space<vmem>>, vector<1x8x128xf32>
    %2495 = vector.shape_cast %2494 : vector<1x8x128xf32> to vector<8x128xf32>
    %2496 = arith.mulf %1594, %2495 : vector<8x128xf32>
    %cst_1322 = arith.constant dense<0.000000e+00> : vector<128xf32>
    %2497 = vector.multi_reduction <add>, %2496, %cst_1322 [0] : vector<8x128xf32> to vector<128xf32>
    %2498 = vector.shape_cast %2497 : vector<128xf32> to vector<1x128xf32>
    %c24_1323 = arith.constant 24 : index
    %c4_1324 = arith.constant 4 : index
    %2499 = memref.load %arg5[%c24_1323, %c4_1324] : memref<32x12xf32, #tpu.memory_space<smem>>
    %2500 = vector.broadcast %2499 : f32 to vector<1x128xf32>
    %2501 = arith.mulf %2498, %2500 : vector<1x128xf32>
    %2502 = arith.addf %2465, %2501 : vector<1x128xf32>
    %c24_1325 = arith.constant 24 : index
    %c5_1326 = arith.constant 5 : index
    %2503 = memref.load %arg5[%c24_1325, %c5_1326] : memref<32x12xf32, #tpu.memory_space<smem>>
    %2504 = vector.broadcast %2503 : f32 to vector<1x128xf32>
    %2505 = arith.mulf %2498, %2504 : vector<1x128xf32>
    %2506 = arith.addf %2469, %2505 : vector<1x128xf32>
    %c24_1327 = arith.constant 24 : index
    %c6_1328 = arith.constant 6 : index
    %2507 = memref.load %arg5[%c24_1327, %c6_1328] : memref<32x12xf32, #tpu.memory_space<smem>>
    %2508 = vector.broadcast %2507 : f32 to vector<1x128xf32>
    %2509 = arith.mulf %2498, %2508 : vector<1x128xf32>
    %2510 = arith.addf %2473, %2509 : vector<1x128xf32>
    %c24_1329 = arith.constant 24 : index
    %c7_1330 = arith.constant 7 : index
    %2511 = memref.load %arg5[%c24_1329, %c7_1330] : memref<32x12xf32, #tpu.memory_space<smem>>
    %2512 = vector.broadcast %2511 : f32 to vector<1x128xf32>
    %2513 = arith.mulf %2498, %2512 : vector<1x128xf32>
    %2514 = arith.addf %2477, %2513 : vector<1x128xf32>
    %c24_1331 = arith.constant 24 : index
    %c8_1332 = arith.constant 8 : index
    %2515 = memref.load %arg5[%c24_1331, %c8_1332] : memref<32x12xf32, #tpu.memory_space<smem>>
    %2516 = vector.broadcast %2515 : f32 to vector<1x128xf32>
    %2517 = arith.mulf %2498, %2516 : vector<1x128xf32>
    %2518 = arith.addf %2481, %2517 : vector<1x128xf32>
    %c24_1333 = arith.constant 24 : index
    %c9_1334 = arith.constant 9 : index
    %2519 = memref.load %arg5[%c24_1333, %c9_1334] : memref<32x12xf32, #tpu.memory_space<smem>>
    %2520 = vector.broadcast %2519 : f32 to vector<1x128xf32>
    %2521 = arith.mulf %2498, %2520 : vector<1x128xf32>
    %2522 = arith.addf %2485, %2521 : vector<1x128xf32>
    %c24_1335 = arith.constant 24 : index
    %c10_1336 = arith.constant 10 : index
    %2523 = memref.load %arg5[%c24_1335, %c10_1336] : memref<32x12xf32, #tpu.memory_space<smem>>
    %2524 = vector.broadcast %2523 : f32 to vector<1x128xf32>
    %2525 = arith.mulf %2498, %2524 : vector<1x128xf32>
    %2526 = arith.addf %2489, %2525 : vector<1x128xf32>
    %c24_1337 = arith.constant 24 : index
    %c11_1338 = arith.constant 11 : index
    %2527 = memref.load %arg5[%c24_1337, %c11_1338] : memref<32x12xf32, #tpu.memory_space<smem>>
    %2528 = vector.broadcast %2527 : f32 to vector<1x128xf32>
    %2529 = arith.mulf %2498, %2528 : vector<1x128xf32>
    %2530 = arith.addf %2493, %2529 : vector<1x128xf32>
    %c25_1339 = arith.constant 25 : index
    %c0_1340 = arith.constant 0 : index
    %c0_1341 = arith.constant 0 : index
    %2531 = vector.load %arg9[%c25_1339, %c0_1340, %c0_1341] : memref<32x8x128xf32, #tpu.memory_space<vmem>>, vector<1x8x128xf32>
    %2532 = vector.shape_cast %2531 : vector<1x8x128xf32> to vector<8x128xf32>
    %2533 = arith.mulf %1594, %2532 : vector<8x128xf32>
    %cst_1342 = arith.constant dense<0.000000e+00> : vector<128xf32>
    %2534 = vector.multi_reduction <add>, %2533, %cst_1342 [0] : vector<8x128xf32> to vector<128xf32>
    %2535 = vector.shape_cast %2534 : vector<128xf32> to vector<1x128xf32>
    %c25_1343 = arith.constant 25 : index
    %c4_1344 = arith.constant 4 : index
    %2536 = memref.load %arg5[%c25_1343, %c4_1344] : memref<32x12xf32, #tpu.memory_space<smem>>
    %2537 = vector.broadcast %2536 : f32 to vector<1x128xf32>
    %2538 = arith.mulf %2535, %2537 : vector<1x128xf32>
    %2539 = arith.addf %2502, %2538 : vector<1x128xf32>
    %c25_1345 = arith.constant 25 : index
    %c5_1346 = arith.constant 5 : index
    %2540 = memref.load %arg5[%c25_1345, %c5_1346] : memref<32x12xf32, #tpu.memory_space<smem>>
    %2541 = vector.broadcast %2540 : f32 to vector<1x128xf32>
    %2542 = arith.mulf %2535, %2541 : vector<1x128xf32>
    %2543 = arith.addf %2506, %2542 : vector<1x128xf32>
    %c25_1347 = arith.constant 25 : index
    %c6_1348 = arith.constant 6 : index
    %2544 = memref.load %arg5[%c25_1347, %c6_1348] : memref<32x12xf32, #tpu.memory_space<smem>>
    %2545 = vector.broadcast %2544 : f32 to vector<1x128xf32>
    %2546 = arith.mulf %2535, %2545 : vector<1x128xf32>
    %2547 = arith.addf %2510, %2546 : vector<1x128xf32>
    %c25_1349 = arith.constant 25 : index
    %c7_1350 = arith.constant 7 : index
    %2548 = memref.load %arg5[%c25_1349, %c7_1350] : memref<32x12xf32, #tpu.memory_space<smem>>
    %2549 = vector.broadcast %2548 : f32 to vector<1x128xf32>
    %2550 = arith.mulf %2535, %2549 : vector<1x128xf32>
    %2551 = arith.addf %2514, %2550 : vector<1x128xf32>
    %c25_1351 = arith.constant 25 : index
    %c8_1352 = arith.constant 8 : index
    %2552 = memref.load %arg5[%c25_1351, %c8_1352] : memref<32x12xf32, #tpu.memory_space<smem>>
    %2553 = vector.broadcast %2552 : f32 to vector<1x128xf32>
    %2554 = arith.mulf %2535, %2553 : vector<1x128xf32>
    %2555 = arith.addf %2518, %2554 : vector<1x128xf32>
    %c25_1353 = arith.constant 25 : index
    %c9_1354 = arith.constant 9 : index
    %2556 = memref.load %arg5[%c25_1353, %c9_1354] : memref<32x12xf32, #tpu.memory_space<smem>>
    %2557 = vector.broadcast %2556 : f32 to vector<1x128xf32>
    %2558 = arith.mulf %2535, %2557 : vector<1x128xf32>
    %2559 = arith.addf %2522, %2558 : vector<1x128xf32>
    %c25_1355 = arith.constant 25 : index
    %c10_1356 = arith.constant 10 : index
    %2560 = memref.load %arg5[%c25_1355, %c10_1356] : memref<32x12xf32, #tpu.memory_space<smem>>
    %2561 = vector.broadcast %2560 : f32 to vector<1x128xf32>
    %2562 = arith.mulf %2535, %2561 : vector<1x128xf32>
    %2563 = arith.addf %2526, %2562 : vector<1x128xf32>
    %c25_1357 = arith.constant 25 : index
    %c11_1358 = arith.constant 11 : index
    %2564 = memref.load %arg5[%c25_1357, %c11_1358] : memref<32x12xf32, #tpu.memory_space<smem>>
    %2565 = vector.broadcast %2564 : f32 to vector<1x128xf32>
    %2566 = arith.mulf %2535, %2565 : vector<1x128xf32>
    %2567 = arith.addf %2530, %2566 : vector<1x128xf32>
    %c26_1359 = arith.constant 26 : index
    %c0_1360 = arith.constant 0 : index
    %c0_1361 = arith.constant 0 : index
    %2568 = vector.load %arg9[%c26_1359, %c0_1360, %c0_1361] : memref<32x8x128xf32, #tpu.memory_space<vmem>>, vector<1x8x128xf32>
    %2569 = vector.shape_cast %2568 : vector<1x8x128xf32> to vector<8x128xf32>
    %2570 = arith.mulf %1594, %2569 : vector<8x128xf32>
    %cst_1362 = arith.constant dense<0.000000e+00> : vector<128xf32>
    %2571 = vector.multi_reduction <add>, %2570, %cst_1362 [0] : vector<8x128xf32> to vector<128xf32>
    %2572 = vector.shape_cast %2571 : vector<128xf32> to vector<1x128xf32>
    %c26_1363 = arith.constant 26 : index
    %c4_1364 = arith.constant 4 : index
    %2573 = memref.load %arg5[%c26_1363, %c4_1364] : memref<32x12xf32, #tpu.memory_space<smem>>
    %2574 = vector.broadcast %2573 : f32 to vector<1x128xf32>
    %2575 = arith.mulf %2572, %2574 : vector<1x128xf32>
    %2576 = arith.addf %2539, %2575 : vector<1x128xf32>
    %c26_1365 = arith.constant 26 : index
    %c5_1366 = arith.constant 5 : index
    %2577 = memref.load %arg5[%c26_1365, %c5_1366] : memref<32x12xf32, #tpu.memory_space<smem>>
    %2578 = vector.broadcast %2577 : f32 to vector<1x128xf32>
    %2579 = arith.mulf %2572, %2578 : vector<1x128xf32>
    %2580 = arith.addf %2543, %2579 : vector<1x128xf32>
    %c26_1367 = arith.constant 26 : index
    %c6_1368 = arith.constant 6 : index
    %2581 = memref.load %arg5[%c26_1367, %c6_1368] : memref<32x12xf32, #tpu.memory_space<smem>>
    %2582 = vector.broadcast %2581 : f32 to vector<1x128xf32>
    %2583 = arith.mulf %2572, %2582 : vector<1x128xf32>
    %2584 = arith.addf %2547, %2583 : vector<1x128xf32>
    %c26_1369 = arith.constant 26 : index
    %c7_1370 = arith.constant 7 : index
    %2585 = memref.load %arg5[%c26_1369, %c7_1370] : memref<32x12xf32, #tpu.memory_space<smem>>
    %2586 = vector.broadcast %2585 : f32 to vector<1x128xf32>
    %2587 = arith.mulf %2572, %2586 : vector<1x128xf32>
    %2588 = arith.addf %2551, %2587 : vector<1x128xf32>
    %c26_1371 = arith.constant 26 : index
    %c8_1372 = arith.constant 8 : index
    %2589 = memref.load %arg5[%c26_1371, %c8_1372] : memref<32x12xf32, #tpu.memory_space<smem>>
    %2590 = vector.broadcast %2589 : f32 to vector<1x128xf32>
    %2591 = arith.mulf %2572, %2590 : vector<1x128xf32>
    %2592 = arith.addf %2555, %2591 : vector<1x128xf32>
    %c26_1373 = arith.constant 26 : index
    %c9_1374 = arith.constant 9 : index
    %2593 = memref.load %arg5[%c26_1373, %c9_1374] : memref<32x12xf32, #tpu.memory_space<smem>>
    %2594 = vector.broadcast %2593 : f32 to vector<1x128xf32>
    %2595 = arith.mulf %2572, %2594 : vector<1x128xf32>
    %2596 = arith.addf %2559, %2595 : vector<1x128xf32>
    %c26_1375 = arith.constant 26 : index
    %c10_1376 = arith.constant 10 : index
    %2597 = memref.load %arg5[%c26_1375, %c10_1376] : memref<32x12xf32, #tpu.memory_space<smem>>
    %2598 = vector.broadcast %2597 : f32 to vector<1x128xf32>
    %2599 = arith.mulf %2572, %2598 : vector<1x128xf32>
    %2600 = arith.addf %2563, %2599 : vector<1x128xf32>
    %c26_1377 = arith.constant 26 : index
    %c11_1378 = arith.constant 11 : index
    %2601 = memref.load %arg5[%c26_1377, %c11_1378] : memref<32x12xf32, #tpu.memory_space<smem>>
    %2602 = vector.broadcast %2601 : f32 to vector<1x128xf32>
    %2603 = arith.mulf %2572, %2602 : vector<1x128xf32>
    %2604 = arith.addf %2567, %2603 : vector<1x128xf32>
    %c27_1379 = arith.constant 27 : index
    %c0_1380 = arith.constant 0 : index
    %c0_1381 = arith.constant 0 : index
    %2605 = vector.load %arg9[%c27_1379, %c0_1380, %c0_1381] : memref<32x8x128xf32, #tpu.memory_space<vmem>>, vector<1x8x128xf32>
    %2606 = vector.shape_cast %2605 : vector<1x8x128xf32> to vector<8x128xf32>
    %2607 = arith.mulf %1594, %2606 : vector<8x128xf32>
    %cst_1382 = arith.constant dense<0.000000e+00> : vector<128xf32>
    %2608 = vector.multi_reduction <add>, %2607, %cst_1382 [0] : vector<8x128xf32> to vector<128xf32>
    %2609 = vector.shape_cast %2608 : vector<128xf32> to vector<1x128xf32>
    %c27_1383 = arith.constant 27 : index
    %c4_1384 = arith.constant 4 : index
    %2610 = memref.load %arg5[%c27_1383, %c4_1384] : memref<32x12xf32, #tpu.memory_space<smem>>
    %2611 = vector.broadcast %2610 : f32 to vector<1x128xf32>
    %2612 = arith.mulf %2609, %2611 : vector<1x128xf32>
    %2613 = arith.addf %2576, %2612 : vector<1x128xf32>
    %c27_1385 = arith.constant 27 : index
    %c5_1386 = arith.constant 5 : index
    %2614 = memref.load %arg5[%c27_1385, %c5_1386] : memref<32x12xf32, #tpu.memory_space<smem>>
    %2615 = vector.broadcast %2614 : f32 to vector<1x128xf32>
    %2616 = arith.mulf %2609, %2615 : vector<1x128xf32>
    %2617 = arith.addf %2580, %2616 : vector<1x128xf32>
    %c27_1387 = arith.constant 27 : index
    %c6_1388 = arith.constant 6 : index
    %2618 = memref.load %arg5[%c27_1387, %c6_1388] : memref<32x12xf32, #tpu.memory_space<smem>>
    %2619 = vector.broadcast %2618 : f32 to vector<1x128xf32>
    %2620 = arith.mulf %2609, %2619 : vector<1x128xf32>
    %2621 = arith.addf %2584, %2620 : vector<1x128xf32>
    %c27_1389 = arith.constant 27 : index
    %c7_1390 = arith.constant 7 : index
    %2622 = memref.load %arg5[%c27_1389, %c7_1390] : memref<32x12xf32, #tpu.memory_space<smem>>
    %2623 = vector.broadcast %2622 : f32 to vector<1x128xf32>
    %2624 = arith.mulf %2609, %2623 : vector<1x128xf32>
    %2625 = arith.addf %2588, %2624 : vector<1x128xf32>
    %c27_1391 = arith.constant 27 : index
    %c8_1392 = arith.constant 8 : index
    %2626 = memref.load %arg5[%c27_1391, %c8_1392] : memref<32x12xf32, #tpu.memory_space<smem>>
    %2627 = vector.broadcast %2626 : f32 to vector<1x128xf32>
    %2628 = arith.mulf %2609, %2627 : vector<1x128xf32>
    %2629 = arith.addf %2592, %2628 : vector<1x128xf32>
    %c27_1393 = arith.constant 27 : index
    %c9_1394 = arith.constant 9 : index
    %2630 = memref.load %arg5[%c27_1393, %c9_1394] : memref<32x12xf32, #tpu.memory_space<smem>>
    %2631 = vector.broadcast %2630 : f32 to vector<1x128xf32>
    %2632 = arith.mulf %2609, %2631 : vector<1x128xf32>
    %2633 = arith.addf %2596, %2632 : vector<1x128xf32>
    %c27_1395 = arith.constant 27 : index
    %c10_1396 = arith.constant 10 : index
    %2634 = memref.load %arg5[%c27_1395, %c10_1396] : memref<32x12xf32, #tpu.memory_space<smem>>
    %2635 = vector.broadcast %2634 : f32 to vector<1x128xf32>
    %2636 = arith.mulf %2609, %2635 : vector<1x128xf32>
    %2637 = arith.addf %2600, %2636 : vector<1x128xf32>
    %c27_1397 = arith.constant 27 : index
    %c11_1398 = arith.constant 11 : index
    %2638 = memref.load %arg5[%c27_1397, %c11_1398] : memref<32x12xf32, #tpu.memory_space<smem>>
    %2639 = vector.broadcast %2638 : f32 to vector<1x128xf32>
    %2640 = arith.mulf %2609, %2639 : vector<1x128xf32>
    %2641 = arith.addf %2604, %2640 : vector<1x128xf32>
    %c28_1399 = arith.constant 28 : index
    %c0_1400 = arith.constant 0 : index
    %c0_1401 = arith.constant 0 : index
    %2642 = vector.load %arg9[%c28_1399, %c0_1400, %c0_1401] : memref<32x8x128xf32, #tpu.memory_space<vmem>>, vector<1x8x128xf32>
    %2643 = vector.shape_cast %2642 : vector<1x8x128xf32> to vector<8x128xf32>
    %2644 = arith.mulf %1594, %2643 : vector<8x128xf32>
    %cst_1402 = arith.constant dense<0.000000e+00> : vector<128xf32>
    %2645 = vector.multi_reduction <add>, %2644, %cst_1402 [0] : vector<8x128xf32> to vector<128xf32>
    %2646 = vector.shape_cast %2645 : vector<128xf32> to vector<1x128xf32>
    %c28_1403 = arith.constant 28 : index
    %c4_1404 = arith.constant 4 : index
    %2647 = memref.load %arg5[%c28_1403, %c4_1404] : memref<32x12xf32, #tpu.memory_space<smem>>
    %2648 = vector.broadcast %2647 : f32 to vector<1x128xf32>
    %2649 = arith.mulf %2646, %2648 : vector<1x128xf32>
    %2650 = arith.addf %2613, %2649 : vector<1x128xf32>
    %c28_1405 = arith.constant 28 : index
    %c5_1406 = arith.constant 5 : index
    %2651 = memref.load %arg5[%c28_1405, %c5_1406] : memref<32x12xf32, #tpu.memory_space<smem>>
    %2652 = vector.broadcast %2651 : f32 to vector<1x128xf32>
    %2653 = arith.mulf %2646, %2652 : vector<1x128xf32>
    %2654 = arith.addf %2617, %2653 : vector<1x128xf32>
    %c28_1407 = arith.constant 28 : index
    %c6_1408 = arith.constant 6 : index
    %2655 = memref.load %arg5[%c28_1407, %c6_1408] : memref<32x12xf32, #tpu.memory_space<smem>>
    %2656 = vector.broadcast %2655 : f32 to vector<1x128xf32>
    %2657 = arith.mulf %2646, %2656 : vector<1x128xf32>
    %2658 = arith.addf %2621, %2657 : vector<1x128xf32>
    %c28_1409 = arith.constant 28 : index
    %c7_1410 = arith.constant 7 : index
    %2659 = memref.load %arg5[%c28_1409, %c7_1410] : memref<32x12xf32, #tpu.memory_space<smem>>
    %2660 = vector.broadcast %2659 : f32 to vector<1x128xf32>
    %2661 = arith.mulf %2646, %2660 : vector<1x128xf32>
    %2662 = arith.addf %2625, %2661 : vector<1x128xf32>
    %c28_1411 = arith.constant 28 : index
    %c8_1412 = arith.constant 8 : index
    %2663 = memref.load %arg5[%c28_1411, %c8_1412] : memref<32x12xf32, #tpu.memory_space<smem>>
    %2664 = vector.broadcast %2663 : f32 to vector<1x128xf32>
    %2665 = arith.mulf %2646, %2664 : vector<1x128xf32>
    %2666 = arith.addf %2629, %2665 : vector<1x128xf32>
    %c28_1413 = arith.constant 28 : index
    %c9_1414 = arith.constant 9 : index
    %2667 = memref.load %arg5[%c28_1413, %c9_1414] : memref<32x12xf32, #tpu.memory_space<smem>>
    %2668 = vector.broadcast %2667 : f32 to vector<1x128xf32>
    %2669 = arith.mulf %2646, %2668 : vector<1x128xf32>
    %2670 = arith.addf %2633, %2669 : vector<1x128xf32>
    %c28_1415 = arith.constant 28 : index
    %c10_1416 = arith.constant 10 : index
    %2671 = memref.load %arg5[%c28_1415, %c10_1416] : memref<32x12xf32, #tpu.memory_space<smem>>
    %2672 = vector.broadcast %2671 : f32 to vector<1x128xf32>
    %2673 = arith.mulf %2646, %2672 : vector<1x128xf32>
    %2674 = arith.addf %2637, %2673 : vector<1x128xf32>
    %c28_1417 = arith.constant 28 : index
    %c11_1418 = arith.constant 11 : index
    %2675 = memref.load %arg5[%c28_1417, %c11_1418] : memref<32x12xf32, #tpu.memory_space<smem>>
    %2676 = vector.broadcast %2675 : f32 to vector<1x128xf32>
    %2677 = arith.mulf %2646, %2676 : vector<1x128xf32>
    %2678 = arith.addf %2641, %2677 : vector<1x128xf32>
    %c29_1419 = arith.constant 29 : index
    %c0_1420 = arith.constant 0 : index
    %c0_1421 = arith.constant 0 : index
    %2679 = vector.load %arg9[%c29_1419, %c0_1420, %c0_1421] : memref<32x8x128xf32, #tpu.memory_space<vmem>>, vector<1x8x128xf32>
    %2680 = vector.shape_cast %2679 : vector<1x8x128xf32> to vector<8x128xf32>
    %2681 = arith.mulf %1594, %2680 : vector<8x128xf32>
    %cst_1422 = arith.constant dense<0.000000e+00> : vector<128xf32>
    %2682 = vector.multi_reduction <add>, %2681, %cst_1422 [0] : vector<8x128xf32> to vector<128xf32>
    %2683 = vector.shape_cast %2682 : vector<128xf32> to vector<1x128xf32>
    %c29_1423 = arith.constant 29 : index
    %c4_1424 = arith.constant 4 : index
    %2684 = memref.load %arg5[%c29_1423, %c4_1424] : memref<32x12xf32, #tpu.memory_space<smem>>
    %2685 = vector.broadcast %2684 : f32 to vector<1x128xf32>
    %2686 = arith.mulf %2683, %2685 : vector<1x128xf32>
    %2687 = arith.addf %2650, %2686 : vector<1x128xf32>
    %c29_1425 = arith.constant 29 : index
    %c5_1426 = arith.constant 5 : index
    %2688 = memref.load %arg5[%c29_1425, %c5_1426] : memref<32x12xf32, #tpu.memory_space<smem>>
    %2689 = vector.broadcast %2688 : f32 to vector<1x128xf32>
    %2690 = arith.mulf %2683, %2689 : vector<1x128xf32>
    %2691 = arith.addf %2654, %2690 : vector<1x128xf32>
    %c29_1427 = arith.constant 29 : index
    %c6_1428 = arith.constant 6 : index
    %2692 = memref.load %arg5[%c29_1427, %c6_1428] : memref<32x12xf32, #tpu.memory_space<smem>>
    %2693 = vector.broadcast %2692 : f32 to vector<1x128xf32>
    %2694 = arith.mulf %2683, %2693 : vector<1x128xf32>
    %2695 = arith.addf %2658, %2694 : vector<1x128xf32>
    %c29_1429 = arith.constant 29 : index
    %c7_1430 = arith.constant 7 : index
    %2696 = memref.load %arg5[%c29_1429, %c7_1430] : memref<32x12xf32, #tpu.memory_space<smem>>
    %2697 = vector.broadcast %2696 : f32 to vector<1x128xf32>
    %2698 = arith.mulf %2683, %2697 : vector<1x128xf32>
    %2699 = arith.addf %2662, %2698 : vector<1x128xf32>
    %c29_1431 = arith.constant 29 : index
    %c8_1432 = arith.constant 8 : index
    %2700 = memref.load %arg5[%c29_1431, %c8_1432] : memref<32x12xf32, #tpu.memory_space<smem>>
    %2701 = vector.broadcast %2700 : f32 to vector<1x128xf32>
    %2702 = arith.mulf %2683, %2701 : vector<1x128xf32>
    %2703 = arith.addf %2666, %2702 : vector<1x128xf32>
    %c29_1433 = arith.constant 29 : index
    %c9_1434 = arith.constant 9 : index
    %2704 = memref.load %arg5[%c29_1433, %c9_1434] : memref<32x12xf32, #tpu.memory_space<smem>>
    %2705 = vector.broadcast %2704 : f32 to vector<1x128xf32>
    %2706 = arith.mulf %2683, %2705 : vector<1x128xf32>
    %2707 = arith.addf %2670, %2706 : vector<1x128xf32>
    %c29_1435 = arith.constant 29 : index
    %c10_1436 = arith.constant 10 : index
    %2708 = memref.load %arg5[%c29_1435, %c10_1436] : memref<32x12xf32, #tpu.memory_space<smem>>
    %2709 = vector.broadcast %2708 : f32 to vector<1x128xf32>
    %2710 = arith.mulf %2683, %2709 : vector<1x128xf32>
    %2711 = arith.addf %2674, %2710 : vector<1x128xf32>
    %c29_1437 = arith.constant 29 : index
    %c11_1438 = arith.constant 11 : index
    %2712 = memref.load %arg5[%c29_1437, %c11_1438] : memref<32x12xf32, #tpu.memory_space<smem>>
    %2713 = vector.broadcast %2712 : f32 to vector<1x128xf32>
    %2714 = arith.mulf %2683, %2713 : vector<1x128xf32>
    %2715 = arith.addf %2678, %2714 : vector<1x128xf32>
    %c30_1439 = arith.constant 30 : index
    %c0_1440 = arith.constant 0 : index
    %c0_1441 = arith.constant 0 : index
    %2716 = vector.load %arg9[%c30_1439, %c0_1440, %c0_1441] : memref<32x8x128xf32, #tpu.memory_space<vmem>>, vector<1x8x128xf32>
    %2717 = vector.shape_cast %2716 : vector<1x8x128xf32> to vector<8x128xf32>
    %2718 = arith.mulf %1594, %2717 : vector<8x128xf32>
    %cst_1442 = arith.constant dense<0.000000e+00> : vector<128xf32>
    %2719 = vector.multi_reduction <add>, %2718, %cst_1442 [0] : vector<8x128xf32> to vector<128xf32>
    %2720 = vector.shape_cast %2719 : vector<128xf32> to vector<1x128xf32>
    %c30_1443 = arith.constant 30 : index
    %c4_1444 = arith.constant 4 : index
    %2721 = memref.load %arg5[%c30_1443, %c4_1444] : memref<32x12xf32, #tpu.memory_space<smem>>
    %2722 = vector.broadcast %2721 : f32 to vector<1x128xf32>
    %2723 = arith.mulf %2720, %2722 : vector<1x128xf32>
    %2724 = arith.addf %2687, %2723 : vector<1x128xf32>
    %c30_1445 = arith.constant 30 : index
    %c5_1446 = arith.constant 5 : index
    %2725 = memref.load %arg5[%c30_1445, %c5_1446] : memref<32x12xf32, #tpu.memory_space<smem>>
    %2726 = vector.broadcast %2725 : f32 to vector<1x128xf32>
    %2727 = arith.mulf %2720, %2726 : vector<1x128xf32>
    %2728 = arith.addf %2691, %2727 : vector<1x128xf32>
    %c30_1447 = arith.constant 30 : index
    %c6_1448 = arith.constant 6 : index
    %2729 = memref.load %arg5[%c30_1447, %c6_1448] : memref<32x12xf32, #tpu.memory_space<smem>>
    %2730 = vector.broadcast %2729 : f32 to vector<1x128xf32>
    %2731 = arith.mulf %2720, %2730 : vector<1x128xf32>
    %2732 = arith.addf %2695, %2731 : vector<1x128xf32>
    %c30_1449 = arith.constant 30 : index
    %c7_1450 = arith.constant 7 : index
    %2733 = memref.load %arg5[%c30_1449, %c7_1450] : memref<32x12xf32, #tpu.memory_space<smem>>
    %2734 = vector.broadcast %2733 : f32 to vector<1x128xf32>
    %2735 = arith.mulf %2720, %2734 : vector<1x128xf32>
    %2736 = arith.addf %2699, %2735 : vector<1x128xf32>
    %c30_1451 = arith.constant 30 : index
    %c8_1452 = arith.constant 8 : index
    %2737 = memref.load %arg5[%c30_1451, %c8_1452] : memref<32x12xf32, #tpu.memory_space<smem>>
    %2738 = vector.broadcast %2737 : f32 to vector<1x128xf32>
    %2739 = arith.mulf %2720, %2738 : vector<1x128xf32>
    %2740 = arith.addf %2703, %2739 : vector<1x128xf32>
    %c30_1453 = arith.constant 30 : index
    %c9_1454 = arith.constant 9 : index
    %2741 = memref.load %arg5[%c30_1453, %c9_1454] : memref<32x12xf32, #tpu.memory_space<smem>>
    %2742 = vector.broadcast %2741 : f32 to vector<1x128xf32>
    %2743 = arith.mulf %2720, %2742 : vector<1x128xf32>
    %2744 = arith.addf %2707, %2743 : vector<1x128xf32>
    %c30_1455 = arith.constant 30 : index
    %c10_1456 = arith.constant 10 : index
    %2745 = memref.load %arg5[%c30_1455, %c10_1456] : memref<32x12xf32, #tpu.memory_space<smem>>
    %2746 = vector.broadcast %2745 : f32 to vector<1x128xf32>
    %2747 = arith.mulf %2720, %2746 : vector<1x128xf32>
    %2748 = arith.addf %2711, %2747 : vector<1x128xf32>
    %c30_1457 = arith.constant 30 : index
    %c11_1458 = arith.constant 11 : index
    %2749 = memref.load %arg5[%c30_1457, %c11_1458] : memref<32x12xf32, #tpu.memory_space<smem>>
    %2750 = vector.broadcast %2749 : f32 to vector<1x128xf32>
    %2751 = arith.mulf %2720, %2750 : vector<1x128xf32>
    %2752 = arith.addf %2715, %2751 : vector<1x128xf32>
    %c31_1459 = arith.constant 31 : index
    %c0_1460 = arith.constant 0 : index
    %c0_1461 = arith.constant 0 : index
    %2753 = vector.load %arg9[%c31_1459, %c0_1460, %c0_1461] : memref<32x8x128xf32, #tpu.memory_space<vmem>>, vector<1x8x128xf32>
    %2754 = vector.shape_cast %2753 : vector<1x8x128xf32> to vector<8x128xf32>
    %2755 = arith.mulf %1594, %2754 : vector<8x128xf32>
    %cst_1462 = arith.constant dense<0.000000e+00> : vector<128xf32>
    %2756 = vector.multi_reduction <add>, %2755, %cst_1462 [0] : vector<8x128xf32> to vector<128xf32>
    %2757 = vector.shape_cast %2756 : vector<128xf32> to vector<1x128xf32>
    %c31_1463 = arith.constant 31 : index
    %c4_1464 = arith.constant 4 : index
    %2758 = memref.load %arg5[%c31_1463, %c4_1464] : memref<32x12xf32, #tpu.memory_space<smem>>
    %2759 = vector.broadcast %2758 : f32 to vector<1x128xf32>
    %2760 = arith.mulf %2757, %2759 : vector<1x128xf32>
    %2761 = arith.addf %2724, %2760 : vector<1x128xf32>
    %c31_1465 = arith.constant 31 : index
    %c5_1466 = arith.constant 5 : index
    %2762 = memref.load %arg5[%c31_1465, %c5_1466] : memref<32x12xf32, #tpu.memory_space<smem>>
    %2763 = vector.broadcast %2762 : f32 to vector<1x128xf32>
    %2764 = arith.mulf %2757, %2763 : vector<1x128xf32>
    %2765 = arith.addf %2728, %2764 : vector<1x128xf32>
    %c31_1467 = arith.constant 31 : index
    %c6_1468 = arith.constant 6 : index
    %2766 = memref.load %arg5[%c31_1467, %c6_1468] : memref<32x12xf32, #tpu.memory_space<smem>>
    %2767 = vector.broadcast %2766 : f32 to vector<1x128xf32>
    %2768 = arith.mulf %2757, %2767 : vector<1x128xf32>
    %2769 = arith.addf %2732, %2768 : vector<1x128xf32>
    %c31_1469 = arith.constant 31 : index
    %c7_1470 = arith.constant 7 : index
    %2770 = memref.load %arg5[%c31_1469, %c7_1470] : memref<32x12xf32, #tpu.memory_space<smem>>
    %2771 = vector.broadcast %2770 : f32 to vector<1x128xf32>
    %2772 = arith.mulf %2757, %2771 : vector<1x128xf32>
    %2773 = arith.addf %2736, %2772 : vector<1x128xf32>
    %c31_1471 = arith.constant 31 : index
    %c8_1472 = arith.constant 8 : index
    %2774 = memref.load %arg5[%c31_1471, %c8_1472] : memref<32x12xf32, #tpu.memory_space<smem>>
    %2775 = vector.broadcast %2774 : f32 to vector<1x128xf32>
    %2776 = arith.mulf %2757, %2775 : vector<1x128xf32>
    %2777 = arith.addf %2740, %2776 : vector<1x128xf32>
    %c31_1473 = arith.constant 31 : index
    %c9_1474 = arith.constant 9 : index
    %2778 = memref.load %arg5[%c31_1473, %c9_1474] : memref<32x12xf32, #tpu.memory_space<smem>>
    %2779 = vector.broadcast %2778 : f32 to vector<1x128xf32>
    %2780 = arith.mulf %2757, %2779 : vector<1x128xf32>
    %2781 = arith.addf %2744, %2780 : vector<1x128xf32>
    %c31_1475 = arith.constant 31 : index
    %c10_1476 = arith.constant 10 : index
    %2782 = memref.load %arg5[%c31_1475, %c10_1476] : memref<32x12xf32, #tpu.memory_space<smem>>
    %2783 = vector.broadcast %2782 : f32 to vector<1x128xf32>
    %2784 = arith.mulf %2757, %2783 : vector<1x128xf32>
    %2785 = arith.addf %2748, %2784 : vector<1x128xf32>
    %c31_1477 = arith.constant 31 : index
    %c11_1478 = arith.constant 11 : index
    %2786 = memref.load %arg5[%c31_1477, %c11_1478] : memref<32x12xf32, #tpu.memory_space<smem>>
    %2787 = vector.broadcast %2786 : f32 to vector<1x128xf32>
    %2788 = arith.mulf %2757, %2787 : vector<1x128xf32>
    %2789 = arith.addf %2752, %2788 : vector<1x128xf32>
    %c0_1479 = arith.constant 0 : index
    %c4_1480 = arith.constant 4 : index
    %2790 = memref.load %arg6[%c0_1479, %c4_1480] : memref<1x12xf32, #tpu.memory_space<smem>>
    %2791 = vector.broadcast %2790 : f32 to vector<1x128xf32>
    %2792 = arith.mulf %2791, %1597 : vector<1x128xf32>
    %2793 = arith.addf %2761, %2792 : vector<1x128xf32>
    %c0_1481 = arith.constant 0 : index
    %c5_1482 = arith.constant 5 : index
    %2794 = memref.load %arg6[%c0_1481, %c5_1482] : memref<1x12xf32, #tpu.memory_space<smem>>
    %2795 = vector.broadcast %2794 : f32 to vector<1x128xf32>
    %2796 = arith.mulf %2795, %1597 : vector<1x128xf32>
    %2797 = arith.addf %2765, %2796 : vector<1x128xf32>
    %c0_1483 = arith.constant 0 : index
    %c6_1484 = arith.constant 6 : index
    %2798 = memref.load %arg6[%c0_1483, %c6_1484] : memref<1x12xf32, #tpu.memory_space<smem>>
    %2799 = vector.broadcast %2798 : f32 to vector<1x128xf32>
    %2800 = arith.mulf %2799, %1597 : vector<1x128xf32>
    %2801 = arith.addf %2769, %2800 : vector<1x128xf32>
    %c0_1485 = arith.constant 0 : index
    %c7_1486 = arith.constant 7 : index
    %2802 = memref.load %arg6[%c0_1485, %c7_1486] : memref<1x12xf32, #tpu.memory_space<smem>>
    %2803 = vector.broadcast %2802 : f32 to vector<1x128xf32>
    %2804 = arith.mulf %2803, %1597 : vector<1x128xf32>
    %2805 = arith.addf %2773, %2804 : vector<1x128xf32>
    %c0_1487 = arith.constant 0 : index
    %c8_1488 = arith.constant 8 : index
    %2806 = memref.load %arg6[%c0_1487, %c8_1488] : memref<1x12xf32, #tpu.memory_space<smem>>
    %2807 = vector.broadcast %2806 : f32 to vector<1x128xf32>
    %2808 = arith.mulf %2807, %1597 : vector<1x128xf32>
    %2809 = arith.addf %2777, %2808 : vector<1x128xf32>
    %c0_1489 = arith.constant 0 : index
    %c9_1490 = arith.constant 9 : index
    %2810 = memref.load %arg6[%c0_1489, %c9_1490] : memref<1x12xf32, #tpu.memory_space<smem>>
    %2811 = vector.broadcast %2810 : f32 to vector<1x128xf32>
    %2812 = arith.mulf %2811, %1597 : vector<1x128xf32>
    %2813 = arith.addf %2781, %2812 : vector<1x128xf32>
    %c0_1491 = arith.constant 0 : index
    %c10_1492 = arith.constant 10 : index
    %2814 = memref.load %arg6[%c0_1491, %c10_1492] : memref<1x12xf32, #tpu.memory_space<smem>>
    %2815 = vector.broadcast %2814 : f32 to vector<1x128xf32>
    %2816 = arith.mulf %2815, %1597 : vector<1x128xf32>
    %2817 = arith.addf %2785, %2816 : vector<1x128xf32>
    %c0_1493 = arith.constant 0 : index
    %c11_1494 = arith.constant 11 : index
    %2818 = memref.load %arg6[%c0_1493, %c11_1494] : memref<1x12xf32, #tpu.memory_space<smem>>
    %2819 = vector.broadcast %2818 : f32 to vector<1x128xf32>
    %2820 = arith.mulf %2819, %1597 : vector<1x128xf32>
    %2821 = arith.addf %2789, %2820 : vector<1x128xf32>
    %2822 = arith.negf %1557 : vector<8x128xf32>
    %2823 = math.exp %2822 : vector<8x128xf32>
    %cst_1495 = arith.constant 1.000000e+00 : f32
    %2824 = vector.broadcast %cst_1495 : f32 to vector<8x128xf32>
    %2825 = arith.addf %2824, %2823 : vector<8x128xf32>
    %2826 = arith.divf %2824, %2825 : vector<8x128xf32>
    %2827 = arith.mulf %1594, %2826 : vector<8x128xf32>
    %cst_1496 = arith.constant dense<0.000000e+00> : vector<128xf32>
    %2828 = vector.multi_reduction <add>, %2827, %cst_1496 [0] : vector<8x128xf32> to vector<128xf32>
    %2829 = vector.shape_cast %2828 : vector<128xf32> to vector<1x128xf32>
    %2830 = arith.negf %1560 : vector<8x128xf32>
    %2831 = math.exp %2830 : vector<8x128xf32>
    %cst_1497 = arith.constant 1.000000e+00 : f32
    %2832 = vector.broadcast %cst_1497 : f32 to vector<8x128xf32>
    %2833 = arith.addf %2832, %2831 : vector<8x128xf32>
    %2834 = arith.divf %2832, %2833 : vector<8x128xf32>
    %2835 = arith.mulf %1594, %2834 : vector<8x128xf32>
    %cst_1498 = arith.constant dense<0.000000e+00> : vector<128xf32>
    %2836 = vector.multi_reduction <add>, %2835, %cst_1498 [0] : vector<8x128xf32> to vector<128xf32>
    %2837 = vector.shape_cast %2836 : vector<128xf32> to vector<1x128xf32>
    %2838 = arith.negf %1563 : vector<8x128xf32>
    %2839 = math.exp %2838 : vector<8x128xf32>
    %cst_1499 = arith.constant 1.000000e+00 : f32
    %2840 = vector.broadcast %cst_1499 : f32 to vector<8x128xf32>
    %2841 = arith.addf %2840, %2839 : vector<8x128xf32>
    %2842 = arith.divf %2840, %2841 : vector<8x128xf32>
    %2843 = arith.mulf %1594, %2842 : vector<8x128xf32>
    %cst_1500 = arith.constant dense<0.000000e+00> : vector<128xf32>
    %2844 = vector.multi_reduction <add>, %2843, %cst_1500 [0] : vector<8x128xf32> to vector<128xf32>
    %2845 = vector.shape_cast %2844 : vector<128xf32> to vector<1x128xf32>
    %2846 = arith.mulf %1594, %0 : vector<8x128xf32>
    %cst_1501 = arith.constant dense<0.000000e+00> : vector<128xf32>
    %2847 = vector.multi_reduction <add>, %2846, %cst_1501 [0] : vector<8x128xf32> to vector<128xf32>
    %2848 = vector.shape_cast %2847 : vector<128xf32> to vector<1x128xf32>
    %cst_1502 = arith.constant 0.000000e+00 : f32
    %2849 = vector.broadcast %cst_1502 : f32 to vector<1x128xf32>
    %2850 = tpu.concatenate %2829, %2837, %2845, %2848, %2793, %2797, %2801, %2805, %2809, %2813, %2817, %2821, %1597, %2849, %2849, %2849 in 0 : vector<1x128xf32>, vector<1x128xf32>, vector<1x128xf32>, vector<1x128xf32>, vector<1x128xf32>, vector<1x128xf32>, vector<1x128xf32>, vector<1x128xf32>, vector<1x128xf32>, vector<1x128xf32>, vector<1x128xf32>, vector<1x128xf32>, vector<1x128xf32>, vector<1x128xf32>, vector<1x128xf32>, vector<1x128xf32> -> vector<16x128xf32>
    %c0_1503 = arith.constant 0 : index
    %c0_1504 = arith.constant 0 : index
    %2851 = vector.load %arg8[%c0_1503, %c0_1504] : memref<16x128xf32, #tpu.memory_space<vmem>>, vector<16x128xf32>
    tpu.vector_store %arg8[%c0_1503, %c0_1504], %2850 {strides = array<i32>} : memref<16x128xf32, #tpu.memory_space<vmem>>, vector<16x128xf32>,
    return
  }
  func.func @transform_0(%arg0: i32) -> (i32, i32) {
    %c0_i32 = arith.constant 0 : i32
    %c0_i32_0 = arith.constant 0 : i32
    return %c0_i32, %arg0 : i32, i32
  }
  func.func @transform_1(%arg0: i32) -> (i32, i32) {
    %c0_i32 = arith.constant 0 : i32
    %c0_i32_0 = arith.constant 0 : i32
    return %c0_i32, %arg0 : i32, i32
  }
  func.func @transform_2(%arg0: i32) -> (i32, i32) {
    %c0_i32 = arith.constant 0 : i32
    %c0_i32_0 = arith.constant 0 : i32
    %c0_i32_1 = arith.constant 0 : i32
    return %c0_i32, %c0_i32_0 : i32, i32
  }
  func.func @transform_3(%arg0: i32) -> (i32, i32) {
    %c0_i32 = arith.constant 0 : i32
    %c0_i32_0 = arith.constant 0 : i32
    %c0_i32_1 = arith.constant 0 : i32
    return %c0_i32, %c0_i32_0 : i32, i32
  }
  func.func @transform_4(%arg0: i32) -> (i32, i32) {
    %c0_i32 = arith.constant 0 : i32
    %c0_i32_0 = arith.constant 0 : i32
    %c0_i32_1 = arith.constant 0 : i32
    return %c0_i32, %c0_i32_0 : i32, i32
  }
  func.func @transform_5(%arg0: i32) -> (i32, i32) {
    %c0_i32 = arith.constant 0 : i32
    %c0_i32_0 = arith.constant 0 : i32
    %c0_i32_1 = arith.constant 0 : i32
    return %c0_i32, %c0_i32_0 : i32, i32
  }
  func.func @transform_6(%arg0: i32) -> (i32, i32) {
    %c0_i32 = arith.constant 0 : i32
    %c0_i32_0 = arith.constant 0 : i32
    return %c0_i32, %arg0 : i32, i32
  }
  func.func @transform_7(%arg0: i32) -> (i32, i32) {
    %c0_i32 = arith.constant 0 : i32
    %c0_i32_0 = arith.constant 0 : i32
    return %c0_i32, %arg0 : i32, i32
  }
}

</mosaic_0001>

<llo_original>
// kernel: tpu_custom_call.1
$region0: #{tpu_custom_call.1}
  #allocation0 [shape = 'u32[]', space=smem, size = 0x4, offset = 0x4, fixed_abs, tag = 'smem constant byte address 0x4 - core index']
  #allocation1 [shape = 'u32[72,128]{1,0:T(1,128)}', space=vmem, size = 0x9000, scoped, tag = 'internal scratch']
  #allocation2 [shape = 'f32[32,8,128]{2,1,0:T(8,128)}', space=vmem, size = 0x20000, scoped, tag = 'scratch operand']
  %s0 = inlined_call_operand.vmem [shape: f32[8,256], index: 0, kind: input, shape index: {}]
  %s1 = inlined_call_operand.vmem [shape: f32[8,256], index: 1, kind: input, shape index: {}]
  %s2 = inlined_call_operand.vmem [shape: f32[6,32], index: 2, kind: input, shape index: {}]
  %s3 = inlined_call_operand.vmem [shape: f32[1,32], index: 3, kind: input, shape index: {}]
  %s4 = inlined_call_operand.vmem [shape: f32[32,12], index: 4, kind: input, shape index: {}]
  %s5 = inlined_call_operand.vmem [shape: f32[1,12], index: 5, kind: input, shape index: {}]
  %s6 = inlined_call_operand.hbm [shape: f32[8,256], index: 6, kind: output, shape index: {0}]
  %s7 = inlined_call_operand.hbm [shape: f32[16,256], index: 7, kind: output, shape index: {1}]
  %8 = xla_tuple %s6, %s7
  %s9 = sld [smem:[#allocation0]]
  $region81: #{tpu_custom_call.1} parent=0
    _
  %s11 = ssub.s32 1, %s9
  %s12 = scalar_select 0, %s11, %s9
  $region1: #{tpu_custom_call.1} parent=0
    #allocation3 [shape = 'u8[4096]{0}', space=smem, size = 0x1000, scoped, tag = 'input window, operand 2, single buffered']
    #allocation4 [shape = 's32[2]{0}', space=sflag, size = 0x8, scoped, tag = 'scoped memory for tpu_custom_call.1']
    #allocation5 [shape = 's32[2]{0}', space=sflag, size = 0x8, scoped, tag = 'scoped memory for tpu_custom_call.1']
    #allocation6 [shape = 'u8[512]{0}', space=smem, size = 0x200, scoped, tag = 'input window, operand 3, single buffered']
    #allocation7 [shape = 's32[1]{0}', space=sflag, size = 0x4, scoped, tag = 'scoped memory for tpu_custom_call.1']
    #allocation8 [shape = 'u8[16384]{0}', space=smem, size = 0x4000, scoped, tag = 'input window, operand 4, single buffered']
    #allocation9 [shape = 'u8[512]{0}', space=smem, size = 0x200, scoped, tag = 'input window, operand 5, single buffered']
    #allocation10 [shape = 's32[1]{0}', space=sflag, size = 0x4, scoped, tag = 'scoped memory for tpu_custom_call.1']
    #allocation11 [shape = 'u8[8192]{0}', space=vmem, size = 0x2000, scoped, tag = 'output window, operand 0']
    #allocation12 [shape = 'u8[16384]{0}', space=vmem, size = 0x4000, scoped, tag = 'output window, operand 1']
    #allocation13 [shape = 's32[2]{0}', space=sflag, size = 0x8, scoped, tag = 'scoped memory for tpu_custom_call.1']
    %13 = vsyncpa [#allocation5], 0
    %14 = vsyncpa [#allocation7], 0
    %15 = vsyncpa [#allocation10], 0
    %16 = vsyncpa [#allocation4], 0
    %s17 = scalar_lea.sflag [#allocation4], 1
    %18 = vsyncpa %s17, 0
    %19 = vsyncpa [#allocation13], 0
    %s20 = scalar_lea.sflag [#allocation13], 1
    %21 = vsyncpa %s20, 0
    loop: start=0, step=1, limit=4
    $region2: #{tpu_custom_call.1} parent=1 // loop_pre_header
      _
    $region3: #{tpu_custom_call.1} parent=1 // loop_header
      %s23 = sphi 0, %s27
      %p24 = scmp.ge.s32.totalorder %s23, 4
      %s33 = sphi 0, %s35
      %s36 = sphi 0, %s33
      %s37 = sphi 0, %s36
      %s53 = sphi 0, %s37
      %s59 = sphi 0, %s61
      %s62 = sphi 0, %s59
      %s63 = sphi 0, %s62
      %s79 = sphi 0, %s63
      %s83 = sphi 0, %s83
      %s85 = sphi 0, %s83
      %s86 = sphi 0, %s85
      %s100 = sphi 0, %s86
      %s104 = sphi 0, %s104
      %s106 = sphi 0, %s104
      %s107 = sphi 0, %s106
      %s121 = sphi 0, %s107
      %s125 = sphi 0, %s125
      %s127 = sphi 0, %s125
      %s128 = sphi 0, %s127
      %s142 = sphi 0, %s128
      %s146 = sphi 0, %s146
      %s148 = sphi 0, %s146
      %s149 = sphi 0, %s148
      %s163 = sphi 0, %s149
      %s169 = sphi 0, %s171
      %s172 = sphi 0, %s169
      %s173 = sphi 0, %s172
      %s189 = sphi 0, %s173
      %s195 = sphi 0, %s197
      %s198 = sphi 0, %s195
      %s199 = sphi 0, %s198
      %s215 = sphi 0, %s199
    $region4: #{tpu_custom_call.1} parent=1 // loop_header_branch
      %26 = sbr.rel (%p24) target = $region8
    $region5: #{tpu_custom_call.1} parent=1 // loop_body
      %s28 = ssub.s32 %s23, 1
      %s29 = ssub.s32 %s23, 2
      %s30 = sadd.s32 %s23, 1
      %s31 = ssub.s32 %s23, %s30
      %p32 = scmp.eq.s32.totalorder %s31, 0
      %s34 = sadd.s32 %s33, 1
      %s35 = scalar_select %p32, %s33, %s34
      %p38 = pneg %p32
      %p39 = scmp.eq.s32.totalorder %s23, 1
      %p40 = por %p38, %p39
      %p41 = scmp.ne.s32.totalorder %s33, %s36
      %p42 = scmp.eq.s32.totalorder %s23, 0
      %p43 = por %p41, %p42
      %p44 = scmp.ne.s32.totalorder %s33, %s36
      %p45 = scmp.eq.s32.totalorder %s28, 1
      %p46 = por %p44, %p45
      %p47 = scmp.ne.s32.totalorder %s36, %s37
      %p48 = scmp.eq.s32.totalorder %s28, 0
      %p49 = por %p47, %p48
      %p50 = scmp.ne.s32.totalorder %s36, %s37
      %p51 = scmp.eq.s32.totalorder %s29, 1
      %p52 = por %p50, %p51
      %p54 = scmp.ne.s32.totalorder %s37, %s53
      %p55 = scmp.eq.s32.totalorder %s29, 0
      %p56 = por %p54, %p55
      %s57 = ssub.s32 %s23, %s30
      %p58 = scmp.eq.s32.totalorder %s57, 0
      %s60 = sadd.s32 %s59, 1
      %s61 = scalar_select %p58, %s59, %s60
      %p64 = pneg %p58
      %p65 = scmp.eq.s32.totalorder %s23, 1
      %p66 = por %p64, %p65
      %p67 = scmp.ne.s32.totalorder %s59, %s62
      %p68 = scmp.eq.s32.totalorder %s23, 0
      %p69 = por %p67, %p68
      %p70 = scmp.ne.s32.totalorder %s59, %s62
      %p71 = scmp.eq.s32.totalorder %s28, 1
      %p72 = por %p70, %p71
      %p73 = scmp.ne.s32.totalorder %s62, %s63
      %p74 = scmp.eq.s32.totalorder %s28, 0
      %p75 = por %p73, %p74
      %p76 = scmp.ne.s32.totalorder %s62, %s63
      %p77 = scmp.eq.s32.totalorder %s29, 1
      %p78 = por %p76, %p77
      %p80 = scmp.ne.s32.totalorder %s63, %s79
      %p81 = scmp.eq.s32.totalorder %s29, 0
      %p82 = por %p80, %p81
      %s84 = sadd.s32 %s83, 1
      %p87 = scmp.eq.s32.totalorder %s23, 1
      %p88 = scmp.ne.s32.totalorder %s83, %s85
      %p89 = scmp.eq.s32.totalorder %s23, 0
      %p90 = por %p88, %p89
      %p91 = scmp.ne.s32.totalorder %s83, %s85
      %p92 = scmp.eq.s32.totalorder %s28, 1
      %p93 = por %p91, %p92
      %p94 = scmp.ne.s32.totalorder %s85, %s86
      %p95 = scmp.eq.s32.totalorder %s28, 0
      %p96 = por %p94, %p95
      %p97 = scmp.ne.s32.totalorder %s85, %s86
      %p98 = scmp.eq.s32.totalorder %s29, 1
      %p99 = por %p97, %p98
      %p101 = scmp.ne.s32.totalorder %s86, %s100
      %p102 = scmp.eq.s32.totalorder %s29, 0
      %p103 = por %p101, %p102
      %s105 = sadd.s32 %s104, 1
      %p108 = scmp.eq.s32.totalorder %s23, 1
      %p109 = scmp.ne.s32.totalorder %s104, %s106
      %p110 = scmp.eq.s32.totalorder %s23, 0
      %p111 = por %p109, %p110
      %p112 = scmp.ne.s32.totalorder %s104, %s106
      %p113 = scmp.eq.s32.totalorder %s28, 1
      %p114 = por %p112, %p113
      %p115 = scmp.ne.s32.totalorder %s106, %s107
      %p116 = scmp.eq.s32.totalorder %s28, 0
      %p117 = por %p115, %p116
      %p118 = scmp.ne.s32.totalorder %s106, %s107
      %p119 = scmp.eq.s32.totalorder %s29, 1
      %p120 = por %p118, %p119
      %p122 = scmp.ne.s32.totalorder %s107, %s121
      %p123 = scmp.eq.s32.totalorder %s29, 0
      %p124 = por %p122, %p123
      %s126 = sadd.s32 %s125, 1
      %p129 = scmp.eq.s32.totalorder %s23, 1
      %p130 = scmp.ne.s32.totalorder %s125, %s127
      %p131 = scmp.eq.s32.totalorder %s23, 0
      %p132 = por %p130, %p131
      %p133 = scmp.ne.s32.totalorder %s125, %s127
      %p134 = scmp.eq.s32.totalorder %s28, 1
      %p135 = por %p133, %p134
      %p136 = scmp.ne.s32.totalorder %s127, %s128
      %p137 = scmp.eq.s32.totalorder %s28, 0
      %p138 = por %p136, %p137
      %p139 = scmp.ne.s32.totalorder %s127, %s128
      %p140 = scmp.eq.s32.totalorder %s29, 1
      %p141 = por %p139, %p140
      %p143 = scmp.ne.s32.totalorder %s128, %s142
      %p144 = scmp.eq.s32.totalorder %s29, 0
      %p145 = por %p143, %p144
      %s147 = sadd.s32 %s146, 1
      %p150 = scmp.eq.s32.totalorder %s23, 1
      %p151 = scmp.ne.s32.totalorder %s146, %s148
      %p152 = scmp.eq.s32.totalorder %s23, 0
      %p153 = por %p151, %p152
      %p154 = scmp.ne.s32.totalorder %s146, %s148
      %p155 = scmp.eq.s32.totalorder %s28, 1
      %p156 = por %p154, %p155
      %p157 = scmp.ne.s32.totalorder %s148, %s149
      %p158 = scmp.eq.s32.totalorder %s28, 0
      %p159 = por %p157, %p158
      %p160 = scmp.ne.s32.totalorder %s148, %s149
      %p161 = scmp.eq.s32.totalorder %s29, 1
      %p162 = por %p160, %p161
      %p164 = scmp.ne.s32.totalorder %s149, %s163
      %p165 = scmp.eq.s32.totalorder %s29, 0
      %p166 = por %p164, %p165
      %s167 = ssub.s32 %s23, %s30
      %p168 = scmp.eq.s32.totalorder %s167, 0
      %s170 = sadd.s32 %s169, 1
      %s171 = scalar_select %p168, %s169, %s170
      %p174 = pneg %p168
      %p175 = scmp.eq.s32.totalorder %s23, 1
      %p176 = por %p174, %p175
      %p177 = scmp.ne.s32.totalorder %s169, %s172
      %p178 = scmp.eq.s32.totalorder %s23, 0
      %p179 = por %p177, %p178
      %p180 = scmp.ne.s32.totalorder %s169, %s172
      %p181 = scmp.eq.s32.totalorder %s28, 1
      %p182 = por %p180, %p181
      %p183 = scmp.ne.s32.totalorder %s172, %s173
      %p184 = scmp.eq.s32.totalorder %s28, 0
      %p185 = por %p183, %p184
      %p186 = scmp.ne.s32.totalorder %s172, %s173
      %p187 = scmp.eq.s32.totalorder %s29, 1
      %p188 = por %p186, %p187
      %p190 = scmp.ne.s32.totalorder %s173, %s189
      %p191 = scmp.eq.s32.totalorder %s29, 0
      %p192 = por %p190, %p191
      %s193 = ssub.s32 %s23, %s30
      %p194 = scmp.eq.s32.totalorder %s193, 0
      %s196 = sadd.s32 %s195, 1
      %s197 = scalar_select %p194, %s195, %s196
      %p200 = pneg %p194
      %p201 = scmp.eq.s32.totalorder %s23, 1
      %p202 = por %p200, %p201
      %p203 = scmp.ne.s32.totalorder %s195, %s198
      %p204 = scmp.eq.s32.totalorder %s23, 0
      %p205 = por %p203, %p204
      %p206 = scmp.ne.s32.totalorder %s195, %s198
      %p207 = scmp.eq.s32.totalorder %s28, 1
      %p208 = por %p206, %p207
      %p209 = scmp.ne.s32.totalorder %s198, %s199
      %p210 = scmp.eq.s32.totalorder %s28, 0
      %p211 = por %p209, %p210
      %p212 = scmp.ne.s32.totalorder %s198, %s199
      %p213 = scmp.eq.s32.totalorder %s29, 1
      %p214 = por %p212, %p213
      %p216 = scmp.ne.s32.totalorder %s199, %s215
      %p217 = scmp.eq.s32.totalorder %s29, 0
      %p218 = por %p216, %p217
      %p219 = scmp.le.s32.totalorder 1, %s23
      %p220 = scmp.lt.s32.totalorder %s23, 3
      %p221 = pnand %p219, %p220
      %p222 = pneg %p221
      // Predicated region
      $region9: #{tpu_custom_call.1} parent=5 // pred_check
        _
      $region10: #{tpu_custom_call.1} parent=5 // pred_check_branch
        %224 = sbr.rel (%p221) target = $region12
      $region11: #{tpu_custom_call.1} parent=5 // pred_region
        %s225 = ssub.s32 %s23, 1
        // Predicated region
        $region13: #{tpu_custom_call.1} parent=11 // pred_check
          %p226 = pneg %p96
        $region14: #{tpu_custom_call.1} parent=11 // pred_check_branch
          %228 = sbr.rel (%p226) target = $region16
        $region15: #{tpu_custom_call.1} parent=11 // pred_region
          %230 = vsyncadd [#allocation5], 0
          %s232 = sshll.u32 %s2, 4
          %s233 = int_to_ptr.vmem [resolvable:$true] %s232
          %235 = dma.vmem_to_smem %s233, 128, [#allocation3], [#allocation5]
        $region16: #{tpu_custom_call.1} parent=11 // pred_fallthru
          _
        // Predicated region
        $region17: #{tpu_custom_call.1} parent=11 // pred_check
          %p236 = pneg %p117
        $region18: #{tpu_custom_call.1} parent=11 // pred_check_branch
          %238 = sbr.rel (%p236) target = $region20
        $region19: #{tpu_custom_call.1} parent=11 // pred_region
          %240 = vsyncadd [#allocation7], 0
          %s242 = sshll.u32 %s3, 4
          %s243 = int_to_ptr.vmem [resolvable:$true] %s242
          %245 = dma.vmem_to_smem %s243, 16, [#allocation6], [#allocation7]
        $region20: #{tpu_custom_call.1} parent=11 // pred_fallthru
          _
        // Predicated region
        $region21: #{tpu_custom_call.1} parent=11 // pred_check
          %p246 = pneg %p138
        $region22: #{tpu_custom_call.1} parent=11 // pred_check_branch
          %248 = sbr.rel (%p246) target = $region24
        $region23: #{tpu_custom_call.1} parent=11 // pred_region
          %250 = vsyncadd [#allocation7], 0
          %s251 = sshll.u32 %s4, 4
          %s252 = int_to_ptr.vmem [resolvable:$true] %s251
          %257 = dma.vmem_to_smem %s252, 512, [#allocation8], [#allocation7], 128, 128, 8
        $region24: #{tpu_custom_call.1} parent=11 // pred_fallthru
          _
        // Predicated region
        $region25: #{tpu_custom_call.1} parent=11 // pred_check
          %p258 = pneg %p159
        $region26: #{tpu_custom_call.1} parent=11 // pred_check_branch
          %260 = sbr.rel (%p258) target = $region28
        $region27: #{tpu_custom_call.1} parent=11 // pred_region
          %262 = vsyncadd [#allocation10], 0
          %s264 = sshll.u32 %s5, 4
          %s265 = int_to_ptr.vmem [resolvable:$true] %s264
          %267 = dma.vmem_to_smem %s265, 16, [#allocation9], [#allocation10]
        $region28: #{tpu_custom_call.1} parent=11 // pred_fallthru
          _
      $region12: #{tpu_custom_call.1} parent=5 // pred_fallthru
        _
      %p268 = scmp.lt.s32.totalorder %s23, 2
      // Predicated region
      $region29: #{tpu_custom_call.1} parent=5 // pred_check
        %p269 = pneg %p268
      $region30: #{tpu_custom_call.1} parent=5 // pred_check_branch
        %271 = sbr.rel (%p269) target = $region32
      $region31: #{tpu_custom_call.1} parent=5 // pred_region
        // Predicated region
        $region33: #{tpu_custom_call.1} parent=31 // pred_check
          %p272 = pneg %p43
        $region34: #{tpu_custom_call.1} parent=31 // pred_check_branch
          %274 = sbr.rel (%p272) target = $region36
        $region35: #{tpu_custom_call.1} parent=31 // pred_region
          %p275 = scmp.lt.s32.totalorder %s23, 1
          %s276 = scalar_select %p275, %s23, 1
          %s277 = smul.addr %s276, 8
          %s278 = scalar_lea.vmem %s0, %s277
        $region36: #{tpu_custom_call.1} parent=31 // pred_fallthru
          _
        // Predicated region
        $region37: #{tpu_custom_call.1} parent=31 // pred_check
          %p279 = pneg %p69
        $region38: #{tpu_custom_call.1} parent=31 // pred_check_branch
          %281 = sbr.rel (%p279) target = $region40
        $region39: #{tpu_custom_call.1} parent=31 // pred_region
          %p282 = scmp.lt.s32.totalorder %s23, 1
          %s283 = scalar_select %p282, %s23, 1
          %s284 = smul.addr %s283, 8
          %s285 = scalar_lea.vmem %s1, %s284
        $region40: #{tpu_custom_call.1} parent=31 // pred_fallthru
          _
      $region32: #{tpu_custom_call.1} parent=5 // pred_fallthru
        _
      %p286 = scmp.le.s32.totalorder 1, %s23
      %p287 = scmp.lt.s32.totalorder %s23, 3
      %p288 = pnand %p286, %p287
      %p289 = pneg %p288
      // Predicated region
      $region41: #{tpu_custom_call.1} parent=5 // pred_check
        _
      $region42: #{tpu_custom_call.1} parent=5 // pred_check_branch
        %291 = sbr.rel (%p288) target = $region44
      $region43: #{tpu_custom_call.1} parent=5 // pred_region
        %s292 = ssub.s32 %s23, 1
        // Predicated region
        $region45: #{tpu_custom_call.1} parent=43 // pred_check
          %p293 = pneg %p96
        $region46: #{tpu_custom_call.1} parent=43 // pred_check_branch
          %295 = sbr.rel (%p293) target = $region48
        $region47: #{tpu_custom_call.1} parent=43 // pred_region
          %297 = dma.done [#allocation5], 128
        $region48: #{tpu_custom_call.1} parent=43 // pred_fallthru
          _
        // Predicated region
        $region49: #{tpu_custom_call.1} parent=43 // pred_check
          %p298 = pneg %p117
        $region50: #{tpu_custom_call.1} parent=43 // pred_check_branch
          %300 = sbr.rel (%p298) target = $region52
        $region51: #{tpu_custom_call.1} parent=43 // pred_region
          %302 = dma.done [#allocation7], 16
        $region52: #{tpu_custom_call.1} parent=43 // pred_fallthru
          _
        // Predicated region
        $region53: #{tpu_custom_call.1} parent=43 // pred_check
          %p303 = pneg %p138
        $region54: #{tpu_custom_call.1} parent=43 // pred_check_branch
          %305 = sbr.rel (%p303) target = $region56
        $region55: #{tpu_custom_call.1} parent=43 // pred_region
          %307 = dma.done [#allocation7], 512
        $region56: #{tpu_custom_call.1} parent=43 // pred_fallthru
          _
        // Predicated region
        $region57: #{tpu_custom_call.1} parent=43 // pred_check
          %p308 = pneg %p159
        $region58: #{tpu_custom_call.1} parent=43 // pred_check_branch
          %310 = sbr.rel (%p308) target = $region60
        $region59: #{tpu_custom_call.1} parent=43 // pred_region
          %312 = dma.done [#allocation10], 16
        $region60: #{tpu_custom_call.1} parent=43 // pred_fallthru
          _
        %313 = sfence
        %p314 = scmp.lt.s32.totalorder %s28, 1
        %s315 = scalar_select %p314, %s28, 1
        %s316 = smul.addr %s315, 8
        %s317 = scalar_lea.vmem %s0, %s316
        %p318 = pneg %p49
        %p319 = pneg %p46
        %p320 = scmp.lt.s32.totalorder %s28, 1
        %s321 = scalar_select %p320, %s28, 1
        %s322 = smul.addr %s321, 8
        %s323 = scalar_lea.vmem %s1, %s322
        %p324 = pneg %p75
        %p325 = pneg %p72
        %p326 = pneg %p96
        %p327 = pneg %p93
        %p328 = pneg %p117
        %p329 = pneg %p114
        %p330 = pneg %p138
        %p331 = pneg %p135
        %p332 = pneg %p159
        %p333 = pneg %p156
        %p334 = pneg %p185
        %p335 = pneg %p182
        %s336 = sand.u32 %s172, 1
        %s337 = scalar_lea.sflag [#allocation4], %s336
        %s338 = sand.u32 %s172, 1
        %s339 = smul.addr %s338, 8
        %s340 = scalar_lea.vmem [#allocation11], %s339
        %p341 = pneg %p211
        %p342 = pneg %p208
        %s343 = sand.u32 %s198, 1
        %s344 = scalar_lea.sflag [#allocation13], %s343
        %s345 = sand.u32 %s198, 1
        %s346 = smul.addr %s345, 16
        %s347 = scalar_lea.vmem [#allocation12], %s346
        %p348 = scmp.lt.s32.totalorder %s28, 1
        %s349 = scalar_select %p348, %s28, 1
        %s350 = smul.addr %s349, 8
        %s351 = scalar_lea.vmem %s0, %s350
        %p352 = scmp.lt.s32.totalorder %s28, 1
        %s353 = scalar_select %p352, %s28, 1
        %s354 = smul.addr %s353, 8
        %s355 = scalar_lea.vmem %s1, %s354
        %v356 = vld [vmem:[%s355] sm:$0xff]
        %v357 = vld [vmem:[%s351 + $0x7] sm:$0x1]
        %v359 = vrot.slane %v356, 1
        %v362 = vrot.slane %v357, 1
        %vm364 = vcmask 1046528
        %v365 = vsel %vm364, %v359, %v362
        %v366 = vsub.f32 %v365, %v356
        %v367 = vld [vmem:[%s351] sm:$0x1]
        %v368 = vld [vmem:[%s351 + $0x1] sm:$0x1]
        %v369 = vld [vmem:[%s351 + $0x2] sm:$0x1]
        %v370 = vld [vmem:[%s351 + $0x3] sm:$0x1]
        %v371 = vld [vmem:[%s351 + $0x4] sm:$0x1]
        %v372 = vld [vmem:[%s351 + $0x5] sm:$0x1]
        %v373 = vperm.slane %v370, 0
        %v374 = vmul.f32 %v356, %v373
        %v375 = vperm.slane %v367, 0
        %v376 = vadd.f32 %v375, %v374
        %v377 = vperm.slane %v371, 0
        %v378 = vmul.f32 %v356, %v377
        %v379 = vperm.slane %v368, 0
        %v380 = vadd.f32 %v379, %v378
        %v381 = vperm.slane %v372, 0
        %v382 = vmul.f32 %v356, %v381
        %v383 = vperm.slane %v369, 0
        %v384 = vadd.f32 %v383, %v382
        %s385 = sld [smem:[#allocation3 + $0x180]]
        %v386 = vstv %s385
        %v387 = vmul.f32 %v370, %v386
        %s388 = sld [smem:[#allocation3 + $0x200]]
        %v389 = vstv %s388
        %v390 = vmul.f32 %v371, %v389
        %v391 = vadd.f32 %v387, %v390
        %s392 = sld [smem:[#allocation3 + $0x280]]
        %v393 = vstv %s392
        %v394 = vmul.f32 %v372, %v393
        %v395 = vadd.f32 %v391, %v394
        %s396 = sld [smem:[#allocation6]]
        %v397 = vstv %s396
        %v398 = vadd.f32 %v395, %v397
        %s399 = sld [smem:[#allocation3]]
        %v400 = vstv %s399
        %v401 = vmul.f32 %v376, %v400
        %s402 = sld [smem:[#allocation3 + $0x80]]
        %v403 = vstv %s402
        %v404 = vmul.f32 %v380, %v403
        %v405 = vadd.f32 %v401, %v404
        %s406 = sld [smem:[#allocation3 + $0x100]]
        %v407 = vstv %s406
        %v408 = vmul.f32 %v384, %v407
        %v409 = vadd.f32 %v405, %v408
        %v410 = vperm.slane %v398, 0
        %v411 = vadd.f32 %v409, %v410
        %v412 = vmax.f32 %v411, 0.0
        %413 = vst [vmem:[#allocation2] sm:$0xff] %v412
        %s414 = sld [smem:[#allocation8]]
        %v415 = vstv %s414
        %v416 = vmul.f32 %v412, %v415
        %s417 = sld [smem:[#allocation8 + $0x1]]
        %v418 = vstv %s417
        %v419 = vmul.f32 %v412, %v418
        %s420 = sld [smem:[#allocation8 + $0x2]]
        %v421 = vstv %s420
        %v422 = vmul.f32 %v412, %v421
        %s423 = sld [smem:[#allocation8 + $0x3]]
        %v424 = vstv %s423
        %v425 = vmul.f32 %v412, %v424
        %s426 = sld [smem:[#allocation3 + $0x181]]
        %v427 = vstv %s426
        %v428 = vmul.f32 %v370, %v427
        %s429 = sld [smem:[#allocation3 + $0x201]]
        %v430 = vstv %s429
        %v431 = vmul.f32 %v371, %v430
        %v432 = vadd.f32 %v428, %v431
        %s433 = sld [smem:[#allocation3 + $0x281]]
        %v434 = vstv %s433
        %v435 = vmul.f32 %v372, %v434
        %v436 = vadd.f32 %v432, %v435
        %s437 = sld [smem:[#allocation6 + $0x1]]
        %v438 = vstv %s437
        %v439 = vadd.f32 %v436, %v438
        %s440 = sld [smem:[#allocation3 + $0x1]]
        %v441 = vstv %s440
        %v442 = vmul.f32 %v376, %v441
        %s443 = sld [smem:[#allocation3 + $0x81]]
        %v444 = vstv %s443
        %v445 = vmul.f32 %v380, %v444
        %v446 = vadd.f32 %v442, %v445
        %s447 = sld [smem:[#allocation3 + $0x101]]
        %v448 = vstv %s447
        %v449 = vmul.f32 %v384, %v448
        %v450 = vadd.f32 %v446, %v449
        %v451 = vperm.slane %v439, 0
        %v452 = vadd.f32 %v450, %v451
        %v453 = vmax.f32 %v452, 0.0
        %s454 = scalar_lea.vmem [#allocation2], 8
        %455 = vst [vmem:[%s454] sm:$0xff] %v453
        %s456 = sld [smem:[#allocation8 + $0x80]]
        %v457 = vstv %s456
        %v458 = vmul.f32 %v453, %v457
        %v459 = vadd.f32 %v416, %v458
        %s460 = sld [smem:[#allocation8 + $0x81]]
        %v461 = vstv %s460
        %v462 = vmul.f32 %v453, %v461
        %v463 = vadd.f32 %v419, %v462
        %s464 = sld [smem:[#allocation8 + $0x82]]
        %v465 = vstv %s464
        %v466 = vmul.f32 %v453, %v465
        %v467 = vadd.f32 %v422, %v466
        %s468 = sld [smem:[#allocation8 + $0x83]]
        %v469 = vstv %s468
        %v470 = vmul.f32 %v453, %v469
        %v471 = vadd.f32 %v425, %v470
        %s472 = sld [smem:[#allocation3 + $0x182]]
        %v473 = vstv %s472
        %v474 = vmul.f32 %v370, %v473
        %s475 = sld [smem:[#allocation3 + $0x202]]
        %v476 = vstv %s475
        %v477 = vmul.f32 %v371, %v476
        %v478 = vadd.f32 %v474, %v477
        %s479 = sld [smem:[#allocation3 + $0x282]]
        %v480 = vstv %s479
        %v481 = vmul.f32 %v372, %v480
        %v482 = vadd.f32 %v478, %v481
        %s483 = sld [smem:[#allocation6 + $0x2]]
        %v484 = vstv %s483
        %v485 = vadd.f32 %v482, %v484
        %s486 = sld [smem:[#allocation3 + $0x2]]
        %v487 = vstv %s486
        %v488 = vmul.f32 %v376, %v487
        %s489 = sld [smem:[#allocation3 + $0x82]]
        %v490 = vstv %s489
        %v491 = vmul.f32 %v380, %v490
        %v492 = vadd.f32 %v488, %v491
        %s493 = sld [smem:[#allocation3 + $0x102]]
        %v494 = vstv %s493
        %v495 = vmul.f32 %v384, %v494
        %v496 = vadd.f32 %v492, %v495
        %v497 = vperm.slane %v485, 0
        %v498 = vadd.f32 %v496, %v497
        %v499 = vmax.f32 %v498, 0.0
        %s500 = scalar_lea.vmem [#allocation2], 16
        %501 = vst [vmem:[%s500] sm:$0xff] %v499
        %s502 = sld [smem:[#allocation8 + $0x100]]
        %v503 = vstv %s502
        %v504 = vmul.f32 %v499, %v503
        %v505 = vadd.f32 %v459, %v504
        %s506 = sld [smem:[#allocation8 + $0x101]]
        %v507 = vstv %s506
        %v508 = vmul.f32 %v499, %v507
        %v509 = vadd.f32 %v463, %v508
        %s510 = sld [smem:[#allocation8 + $0x102]]
        %v511 = vstv %s510
        %v512 = vmul.f32 %v499, %v511
        %v513 = vadd.f32 %v467, %v512
        %s514 = sld [smem:[#allocation8 + $0x103]]
        %v515 = vstv %s514
        %v516 = vmul.f32 %v499, %v515
        %v517 = vadd.f32 %v471, %v516
        %s518 = sld [smem:[#allocation3 + $0x183]]
        %v519 = vstv %s518
        %v520 = vmul.f32 %v370, %v519
        %s521 = sld [smem:[#allocation3 + $0x203]]
        %v522 = vstv %s521
        %v523 = vmul.f32 %v371, %v522
        %v524 = vadd.f32 %v520, %v523
        %s525 = sld [smem:[#allocation3 + $0x283]]
        %v526 = vstv %s525
        %v527 = vmul.f32 %v372, %v526
        %v528 = vadd.f32 %v524, %v527
        %s529 = sld [smem:[#allocation6 + $0x3]]
        %v530 = vstv %s529
        %v531 = vadd.f32 %v528, %v530
        %s532 = sld [smem:[#allocation3 + $0x3]]
        %v533 = vstv %s532
        %v534 = vmul.f32 %v376, %v533
        %s535 = sld [smem:[#allocation3 + $0x83]]
        %v536 = vstv %s535
        %v537 = vmul.f32 %v380, %v536
        %v538 = vadd.f32 %v534, %v537
        %s539 = sld [smem:[#allocation3 + $0x103]]
        %v540 = vstv %s539
        %v541 = vmul.f32 %v384, %v540
        %v542 = vadd.f32 %v538, %v541
        %v543 = vperm.slane %v531, 0
        %v544 = vadd.f32 %v542, %v543
        %v545 = vmax.f32 %v544, 0.0
        %s546 = scalar_lea.vmem [#allocation2], 24
        %547 = vst [vmem:[%s546] sm:$0xff] %v545
        %s548 = sld [smem:[#allocation8 + $0x180]]
        %v549 = vstv %s548
        %v550 = vmul.f32 %v545, %v549
        %v551 = vadd.f32 %v505, %v550
        %s552 = sld [smem:[#allocation8 + $0x181]]
        %v553 = vstv %s552
        %v554 = vmul.f32 %v545, %v553
        %v555 = vadd.f32 %v509, %v554
        %s556 = sld [smem:[#allocation8 + $0x182]]
        %v557 = vstv %s556
        %v558 = vmul.f32 %v545, %v557
        %v559 = vadd.f32 %v513, %v558
        %s560 = sld [smem:[#allocation8 + $0x183]]
        %v561 = vstv %s560
        %v562 = vmul.f32 %v545, %v561
        %v563 = vadd.f32 %v517, %v562
        %s564 = sld [smem:[#allocation3 + $0x184]]
        %v565 = vstv %s564
        %v566 = vmul.f32 %v370, %v565
        %s567 = sld [smem:[#allocation3 + $0x204]]
        %v568 = vstv %s567
        %v569 = vmul.f32 %v371, %v568
        %v570 = vadd.f32 %v566, %v569
        %s571 = sld [smem:[#allocation3 + $0x284]]
        %v572 = vstv %s571
        %v573 = vmul.f32 %v372, %v572
        %v574 = vadd.f32 %v570, %v573
        %s575 = sld [smem:[#allocation6 + $0x4]]
        %v576 = vstv %s575
        %v577 = vadd.f32 %v574, %v576
        %s578 = sld [smem:[#allocation3 + $0x4]]
        %v579 = vstv %s578
        %v580 = vmul.f32 %v376, %v579
        %s581 = sld [smem:[#allocation3 + $0x84]]
        %v582 = vstv %s581
        %v583 = vmul.f32 %v380, %v582
        %v584 = vadd.f32 %v580, %v583
        %s585 = sld [smem:[#allocation3 + $0x104]]
        %v586 = vstv %s585
        %v587 = vmul.f32 %v384, %v586
        %v588 = vadd.f32 %v584, %v587
        %v589 = vperm.slane %v577, 0
        %v590 = vadd.f32 %v588, %v589
        %v591 = vmax.f32 %v590, 0.0
        %s592 = scalar_lea.vmem [#allocation2], 32
        %593 = vst [vmem:[%s592] sm:$0xff] %v591
        %s594 = sld [smem:[#allocation8 + $0x200]]
        %v595 = vstv %s594
        %v596 = vmul.f32 %v591, %v595
        %v597 = vadd.f32 %v551, %v596
        %s598 = sld [smem:[#allocation8 + $0x201]]
        %v599 = vstv %s598
        %v600 = vmul.f32 %v591, %v599
        %v601 = vadd.f32 %v555, %v600
        %s602 = sld [smem:[#allocation8 + $0x202]]
        %v603 = vstv %s602
        %v604 = vmul.f32 %v591, %v603
        %v605 = vadd.f32 %v559, %v604
        %s606 = sld [smem:[#allocation8 + $0x203]]
        %v607 = vstv %s606
        %v608 = vmul.f32 %v591, %v607
        %v609 = vadd.f32 %v563, %v608
        %s610 = sld [smem:[#allocation3 + $0x185]]
        %v611 = vstv %s610
        %v612 = vmul.f32 %v370, %v611
        %s613 = sld [smem:[#allocation3 + $0x205]]
        %v614 = vstv %s613
        %v615 = vmul.f32 %v371, %v614
        %v616 = vadd.f32 %v612, %v615
        %s617 = sld [smem:[#allocation3 + $0x285]]
        %v618 = vstv %s617
        %v619 = vmul.f32 %v372, %v618
        %v620 = vadd.f32 %v616, %v619
        %s621 = sld [smem:[#allocation6 + $0x5]]
        %v622 = vstv %s621
        %v623 = vadd.f32 %v620, %v622
        %s624 = sld [smem:[#allocation3 + $0x5]]
        %v625 = vstv %s624
        %v626 = vmul.f32 %v376, %v625
        %s627 = sld [smem:[#allocation3 + $0x85]]
        %v628 = vstv %s627
        %v629 = vmul.f32 %v380, %v628
        %v630 = vadd.f32 %v626, %v629
        %s631 = sld [smem:[#allocation3 + $0x105]]
        %v632 = vstv %s631
        %v633 = vmul.f32 %v384, %v632
        %v634 = vadd.f32 %v630, %v633
        %v635 = vperm.slane %v623, 0
        %v636 = vadd.f32 %v634, %v635
        %v637 = vmax.f32 %v636, 0.0
        %s638 = scalar_lea.vmem [#allocation2], 40
        %639 = vst [vmem:[%s638] sm:$0xff] %v637
        %s640 = sld [smem:[#allocation8 + $0x280]]
        %v641 = vstv %s640
        %v642 = vmul.f32 %v637, %v641
        %v643 = vadd.f32 %v597, %v642
        %s644 = sld [smem:[#allocation8 + $0x281]]
        %v645 = vstv %s644
        %v646 = vmul.f32 %v637, %v645
        %v647 = vadd.f32 %v601, %v646
        %s648 = sld [smem:[#allocation8 + $0x282]]
        %v649 = vstv %s648
        %v650 = vmul.f32 %v637, %v649
        %v651 = vadd.f32 %v605, %v650
        %s652 = sld [smem:[#allocation8 + $0x283]]
        %v653 = vstv %s652
        %v654 = vmul.f32 %v637, %v653
        %v655 = vadd.f32 %v609, %v654
        %s656 = sld [smem:[#allocation3 + $0x186]]
        %v657 = vstv %s656
        %v658 = vmul.f32 %v370, %v657
        %s659 = sld [smem:[#allocation3 + $0x206]]
        %v660 = vstv %s659
        %v661 = vmul.f32 %v371, %v660
        %v662 = vadd.f32 %v658, %v661
        %s663 = sld [smem:[#allocation3 + $0x286]]
        %v664 = vstv %s663
        %v665 = vmul.f32 %v372, %v664
        %v666 = vadd.f32 %v662, %v665
        %s667 = sld [smem:[#allocation6 + $0x6]]
        %v668 = vstv %s667
        %v669 = vadd.f32 %v666, %v668
        %s670 = sld [smem:[#allocation3 + $0x6]]
        %v671 = vstv %s670
        %v672 = vmul.f32 %v376, %v671
        %s673 = sld [smem:[#allocation3 + $0x86]]
        %v674 = vstv %s673
        %v675 = vmul.f32 %v380, %v674
        %v676 = vadd.f32 %v672, %v675
        %s677 = sld [smem:[#allocation3 + $0x106]]
        %v678 = vstv %s677
        %v679 = vmul.f32 %v384, %v678
        %v680 = vadd.f32 %v676, %v679
        %v681 = vperm.slane %v669, 0
        %v682 = vadd.f32 %v680, %v681
        %v683 = vmax.f32 %v682, 0.0
        %s684 = scalar_lea.vmem [#allocation2], 48
        %685 = vst [vmem:[%s684] sm:$0xff] %v683
        %s686 = sld [smem:[#allocation8 + $0x300]]
        %v687 = vstv %s686
        %v688 = vmul.f32 %v683, %v687
        %v689 = vadd.f32 %v643, %v688
        %s690 = sld [smem:[#allocation8 + $0x301]]
        %v691 = vstv %s690
        %v692 = vmul.f32 %v683, %v691
        %v693 = vadd.f32 %v647, %v692
        %s694 = sld [smem:[#allocation8 + $0x302]]
        %v695 = vstv %s694
        %v696 = vmul.f32 %v683, %v695
        %v697 = vadd.f32 %v651, %v696
        %s698 = sld [smem:[#allocation8 + $0x303]]
        %v699 = vstv %s698
        %v700 = vmul.f32 %v683, %v699
        %v701 = vadd.f32 %v655, %v700
        %s702 = sld [smem:[#allocation3 + $0x187]]
        %v703 = vstv %s702
        %v704 = vmul.f32 %v370, %v703
        %s705 = sld [smem:[#allocation3 + $0x207]]
        %v706 = vstv %s705
        %v707 = vmul.f32 %v371, %v706
        %v708 = vadd.f32 %v704, %v707
        %s709 = sld [smem:[#allocation3 + $0x287]]
        %v710 = vstv %s709
        %v711 = vmul.f32 %v372, %v710
        %v712 = vadd.f32 %v708, %v711
        %s713 = sld [smem:[#allocation6 + $0x7]]
        %v714 = vstv %s713
        %v715 = vadd.f32 %v712, %v714
        %s716 = sld [smem:[#allocation3 + $0x7]]
        %v717 = vstv %s716
        %v718 = vmul.f32 %v376, %v717
        %s719 = sld [smem:[#allocation3 + $0x87]]
        %v720 = vstv %s719
        %v721 = vmul.f32 %v380, %v720
        %v722 = vadd.f32 %v718, %v721
        %s723 = sld [smem:[#allocation3 + $0x107]]
        %v724 = vstv %s723
        %v725 = vmul.f32 %v384, %v724
        %v726 = vadd.f32 %v722, %v725
        %v727 = vperm.slane %v715, 0
        %v728 = vadd.f32 %v726, %v727
        %v729 = vmax.f32 %v728, 0.0
        %s730 = scalar_lea.vmem [#allocation2], 56
        %731 = vst [vmem:[%s730] sm:$0xff] %v729
        %s732 = sld [smem:[#allocation8 + $0x380]]
        %v733 = vstv %s732
        %v734 = vmul.f32 %v729, %v733
        %v735 = vadd.f32 %v689, %v734
        %s736 = sld [smem:[#allocation8 + $0x381]]
        %v737 = vstv %s736
        %v738 = vmul.f32 %v729, %v737
        %v739 = vadd.f32 %v693, %v738
        %s740 = sld [smem:[#allocation8 + $0x382]]
        %v741 = vstv %s740
        %v742 = vmul.f32 %v729, %v741
        %v743 = vadd.f32 %v697, %v742
        %s744 = sld [smem:[#allocation8 + $0x383]]
        %v745 = vstv %s744
        %v746 = vmul.f32 %v729, %v745
        %v747 = vadd.f32 %v701, %v746
        %s748 = sld [smem:[#allocation3 + $0x188]]
        %v749 = vstv %s748
        %v750 = vmul.f32 %v370, %v749
        %s751 = sld [smem:[#allocation3 + $0x208]]
        %v752 = vstv %s751
        %v753 = vmul.f32 %v371, %v752
        %v754 = vadd.f32 %v750, %v753
        %s755 = sld [smem:[#allocation3 + $0x288]]
        %v756 = vstv %s755
        %v757 = vmul.f32 %v372, %v756
        %v758 = vadd.f32 %v754, %v757
        %s759 = sld [smem:[#allocation6 + $0x8]]
        %v760 = vstv %s759
        %v761 = vadd.f32 %v758, %v760
        %s762 = sld [smem:[#allocation3 + $0x8]]
        %v763 = vstv %s762
        %v764 = vmul.f32 %v376, %v763
        %s765 = sld [smem:[#allocation3 + $0x88]]
        %v766 = vstv %s765
        %v767 = vmul.f32 %v380, %v766
        %v768 = vadd.f32 %v764, %v767
        %s769 = sld [smem:[#allocation3 + $0x108]]
        %v770 = vstv %s769
        %v771 = vmul.f32 %v384, %v770
        %v772 = vadd.f32 %v768, %v771
        %v773 = vperm.slane %v761, 0
        %v774 = vadd.f32 %v772, %v773
        %v775 = vmax.f32 %v774, 0.0
        %s776 = scalar_lea.vmem [#allocation2], 64
        %777 = vst [vmem:[%s776] sm:$0xff] %v775
        %s778 = sld [smem:[#allocation8 + $0x400]]
        %v779 = vstv %s778
        %v780 = vmul.f32 %v775, %v779
        %v781 = vadd.f32 %v735, %v780
        %s782 = sld [smem:[#allocation8 + $0x401]]
        %v783 = vstv %s782
        %v784 = vmul.f32 %v775, %v783
        %v785 = vadd.f32 %v739, %v784
        %s786 = sld [smem:[#allocation8 + $0x402]]
        %v787 = vstv %s786
        %v788 = vmul.f32 %v775, %v787
        %v789 = vadd.f32 %v743, %v788
        %s790 = sld [smem:[#allocation8 + $0x403]]
        %v791 = vstv %s790
        %v792 = vmul.f32 %v775, %v791
        %v793 = vadd.f32 %v747, %v792
        %s794 = sld [smem:[#allocation3 + $0x189]]
        %v795 = vstv %s794
        %v796 = vmul.f32 %v370, %v795
        %s797 = sld [smem:[#allocation3 + $0x209]]
        %v798 = vstv %s797
        %v799 = vmul.f32 %v371, %v798
        %v800 = vadd.f32 %v796, %v799
        %s801 = sld [smem:[#allocation3 + $0x289]]
        %v802 = vstv %s801
        %v803 = vmul.f32 %v372, %v802
        %v804 = vadd.f32 %v800, %v803
        %s805 = sld [smem:[#allocation6 + $0x9]]
        %v806 = vstv %s805
        %v807 = vadd.f32 %v804, %v806
        %s808 = sld [smem:[#allocation3 + $0x9]]
        %v809 = vstv %s808
        %v810 = vmul.f32 %v376, %v809
        %s811 = sld [smem:[#allocation3 + $0x89]]
        %v812 = vstv %s811
        %v813 = vmul.f32 %v380, %v812
        %v814 = vadd.f32 %v810, %v813
        %s815 = sld [smem:[#allocation3 + $0x109]]
        %v816 = vstv %s815
        %v817 = vmul.f32 %v384, %v816
        %v818 = vadd.f32 %v814, %v817
        %v819 = vperm.slane %v807, 0
        %v820 = vadd.f32 %v818, %v819
        %v821 = vmax.f32 %v820, 0.0
        %s822 = scalar_lea.vmem [#allocation2], 72
        %823 = vst [vmem:[%s822] sm:$0xff] %v821
        %s824 = sld [smem:[#allocation8 + $0x480]]
        %v825 = vstv %s824
        %v826 = vmul.f32 %v821, %v825
        %v827 = vadd.f32 %v781, %v826
        %s828 = sld [smem:[#allocation8 + $0x481]]
        %v829 = vstv %s828
        %v830 = vmul.f32 %v821, %v829
        %v831 = vadd.f32 %v785, %v830
        %s832 = sld [smem:[#allocation8 + $0x482]]
        %v833 = vstv %s832
        %v834 = vmul.f32 %v821, %v833
        %v835 = vadd.f32 %v789, %v834
        %s836 = sld [smem:[#allocation8 + $0x483]]
        %v837 = vstv %s836
        %v838 = vmul.f32 %v821, %v837
        %v839 = vadd.f32 %v793, %v838
        %s840 = sld [smem:[#allocation3 + $0x18a]]
        %v841 = vstv %s840
        %v842 = vmul.f32 %v370, %v841
        %s843 = sld [smem:[#allocation3 + $0x20a]]
        %v844 = vstv %s843
        %v845 = vmul.f32 %v371, %v844
        %v846 = vadd.f32 %v842, %v845
        %s847 = sld [smem:[#allocation3 + $0x28a]]
        %v848 = vstv %s847
        %v849 = vmul.f32 %v372, %v848
        %v850 = vadd.f32 %v846, %v849
        %s851 = sld [smem:[#allocation6 + $0xa]]
        %v852 = vstv %s851
        %v853 = vadd.f32 %v850, %v852
        %s854 = sld [smem:[#allocation3 + $0xa]]
        %v855 = vstv %s854
        %v856 = vmul.f32 %v376, %v855
        %s857 = sld [smem:[#allocation3 + $0x8a]]
        %v858 = vstv %s857
        %v859 = vmul.f32 %v380, %v858
        %v860 = vadd.f32 %v856, %v859
        %s861 = sld [smem:[#allocation3 + $0x10a]]
        %v862 = vstv %s861
        %v863 = vmul.f32 %v384, %v862
        %v864 = vadd.f32 %v860, %v863
        %v865 = vperm.slane %v853, 0
        %v866 = vadd.f32 %v864, %v865
        %v867 = vmax.f32 %v866, 0.0
        %s868 = scalar_lea.vmem [#allocation2], 80
        %869 = vst [vmem:[%s868] sm:$0xff] %v867
        %s870 = sld [smem:[#allocation8 + $0x500]]
        %v871 = vstv %s870
        %v872 = vmul.f32 %v867, %v871
        %v873 = vadd.f32 %v827, %v872
        %s874 = sld [smem:[#allocation8 + $0x501]]
        %v875 = vstv %s874
        %v876 = vmul.f32 %v867, %v875
        %v877 = vadd.f32 %v831, %v876
        %s878 = sld [smem:[#allocation8 + $0x502]]
        %v879 = vstv %s878
        %v880 = vmul.f32 %v867, %v879
        %v881 = vadd.f32 %v835, %v880
        %s882 = sld [smem:[#allocation8 + $0x503]]
        %v883 = vstv %s882
        %v884 = vmul.f32 %v867, %v883
        %v885 = vadd.f32 %v839, %v884
        %s886 = sld [smem:[#allocation3 + $0x18b]]
        %v887 = vstv %s886
        %v888 = vmul.f32 %v370, %v887
        %s889 = sld [smem:[#allocation3 + $0x20b]]
        %v890 = vstv %s889
        %v891 = vmul.f32 %v371, %v890
        %v892 = vadd.f32 %v888, %v891
        %s893 = sld [smem:[#allocation3 + $0x28b]]
        %v894 = vstv %s893
        %v895 = vmul.f32 %v372, %v894
        %v896 = vadd.f32 %v892, %v895
        %s897 = sld [smem:[#allocation6 + $0xb]]
        %v898 = vstv %s897
        %v899 = vadd.f32 %v896, %v898
        %s900 = sld [smem:[#allocation3 + $0xb]]
        %v901 = vstv %s900
        %v902 = vmul.f32 %v376, %v901
        %s903 = sld [smem:[#allocation3 + $0x8b]]
        %v904 = vstv %s903
        %v905 = vmul.f32 %v380, %v904
        %v906 = vadd.f32 %v902, %v905
        %s907 = sld [smem:[#allocation3 + $0x10b]]
        %v908 = vstv %s907
        %v909 = vmul.f32 %v384, %v908
        %v910 = vadd.f32 %v906, %v909
        %v911 = vperm.slane %v899, 0
        %v912 = vadd.f32 %v910, %v911
        %v913 = vmax.f32 %v912, 0.0
        %s914 = scalar_lea.vmem [#allocation2], 88
        %915 = vst [vmem:[%s914] sm:$0xff] %v913
        %s916 = sld [smem:[#allocation8 + $0x580]]
        %v917 = vstv %s916
        %v918 = vmul.f32 %v913, %v917
        %v919 = vadd.f32 %v873, %v918
        %s920 = sld [smem:[#allocation8 + $0x581]]
        %v921 = vstv %s920
        %v922 = vmul.f32 %v913, %v921
        %v923 = vadd.f32 %v877, %v922
        %s924 = sld [smem:[#allocation8 + $0x582]]
        %v925 = vstv %s924
        %v926 = vmul.f32 %v913, %v925
        %v927 = vadd.f32 %v881, %v926
        %s928 = sld [smem:[#allocation8 + $0x583]]
        %v929 = vstv %s928
        %v930 = vmul.f32 %v913, %v929
        %v931 = vadd.f32 %v885, %v930
        %s932 = sld [smem:[#allocation3 + $0x18c]]
        %v933 = vstv %s932
        %v934 = vmul.f32 %v370, %v933
        %s935 = sld [smem:[#allocation3 + $0x20c]]
        %v936 = vstv %s935
        %v937 = vmul.f32 %v371, %v936
        %v938 = vadd.f32 %v934, %v937
        %s939 = sld [smem:[#allocation3 + $0x28c]]
        %v940 = vstv %s939
        %v941 = vmul.f32 %v372, %v940
        %v942 = vadd.f32 %v938, %v941
        %s943 = sld [smem:[#allocation6 + $0xc]]
        %v944 = vstv %s943
        %v945 = vadd.f32 %v942, %v944
        %s946 = sld [smem:[#allocation3 + $0xc]]
        %v947 = vstv %s946
        %v948 = vmul.f32 %v376, %v947
        %s949 = sld [smem:[#allocation3 + $0x8c]]
        %v950 = vstv %s949
        %v951 = vmul.f32 %v380, %v950
        %v952 = vadd.f32 %v948, %v951
        %s953 = sld [smem:[#allocation3 + $0x10c]]
        %v954 = vstv %s953
        %v955 = vmul.f32 %v384, %v954
        %v956 = vadd.f32 %v952, %v955
        %v957 = vperm.slane %v945, 0
        %v958 = vadd.f32 %v956, %v957
        %v959 = vmax.f32 %v958, 0.0
        %s960 = scalar_lea.vmem [#allocation2], 96
        %961 = vst [vmem:[%s960] sm:$0xff] %v959
        %s962 = sld [smem:[#allocation8 + $0x600]]
        %v963 = vstv %s962
        %v964 = vmul.f32 %v959, %v963
        %v965 = vadd.f32 %v919, %v964
        %s966 = sld [smem:[#allocation8 + $0x601]]
        %v967 = vstv %s966
        %v968 = vmul.f32 %v959, %v967
        %v969 = vadd.f32 %v923, %v968
        %s970 = sld [smem:[#allocation8 + $0x602]]
        %v971 = vstv %s970
        %v972 = vmul.f32 %v959, %v971
        %v973 = vadd.f32 %v927, %v972
        %s974 = sld [smem:[#allocation8 + $0x603]]
        %v975 = vstv %s974
        %v976 = vmul.f32 %v959, %v975
        %v977 = vadd.f32 %v931, %v976
        %s978 = sld [smem:[#allocation3 + $0x18d]]
        %v979 = vstv %s978
        %v980 = vmul.f32 %v370, %v979
        %s981 = sld [smem:[#allocation3 + $0x20d]]
        %v982 = vstv %s981
        %v983 = vmul.f32 %v371, %v982
        %v984 = vadd.f32 %v980, %v983
        %s985 = sld [smem:[#allocation3 + $0x28d]]
        %v986 = vstv %s985
        %v987 = vmul.f32 %v372, %v986
        %v988 = vadd.f32 %v984, %v987
        %s989 = sld [smem:[#allocation6 + $0xd]]
        %v990 = vstv %s989
        %v991 = vadd.f32 %v988, %v990
        %s992 = sld [smem:[#allocation3 + $0xd]]
        %v993 = vstv %s992
        %v994 = vmul.f32 %v376, %v993
        %s995 = sld [smem:[#allocation3 + $0x8d]]
        %v996 = vstv %s995
        %v997 = vmul.f32 %v380, %v996
        %v998 = vadd.f32 %v994, %v997
        %s999 = sld [smem:[#allocation3 + $0x10d]]
        %v1000 = vstv %s999
        %v1001 = vmul.f32 %v384, %v1000
        %v1002 = vadd.f32 %v998, %v1001
        %v1003 = vperm.slane %v991, 0
        %v1004 = vadd.f32 %v1002, %v1003
        %v1005 = vmax.f32 %v1004, 0.0
        %s1006 = scalar_lea.vmem [#allocation2], 104
        %1007 = vst [vmem:[%s1006] sm:$0xff] %v1005
        %s1008 = sld [smem:[#allocation8 + $0x680]]
        %v1009 = vstv %s1008
        %v1010 = vmul.f32 %v1005, %v1009
        %v1011 = vadd.f32 %v965, %v1010
        %s1012 = sld [smem:[#allocation8 + $0x681]]
        %v1013 = vstv %s1012
        %v1014 = vmul.f32 %v1005, %v1013
        %v1015 = vadd.f32 %v969, %v1014
        %s1016 = sld [smem:[#allocation8 + $0x682]]
        %v1017 = vstv %s1016
        %v1018 = vmul.f32 %v1005, %v1017
        %v1019 = vadd.f32 %v973, %v1018
        %s1020 = sld [smem:[#allocation8 + $0x683]]
        %v1021 = vstv %s1020
        %v1022 = vmul.f32 %v1005, %v1021
        %v1023 = vadd.f32 %v977, %v1022
        %s1024 = sld [smem:[#allocation3 + $0x18e]]
        %v1025 = vstv %s1024
        %v1026 = vmul.f32 %v370, %v1025
        %s1027 = sld [smem:[#allocation3 + $0x20e]]
        %v1028 = vstv %s1027
        %v1029 = vmul.f32 %v371, %v1028
        %v1030 = vadd.f32 %v1026, %v1029
        %s1031 = sld [smem:[#allocation3 + $0x28e]]
        %v1032 = vstv %s1031
        %v1033 = vmul.f32 %v372, %v1032
        %v1034 = vadd.f32 %v1030, %v1033
        %s1035 = sld [smem:[#allocation6 + $0xe]]
        %v1036 = vstv %s1035
        %v1037 = vadd.f32 %v1034, %v1036
        %s1038 = sld [smem:[#allocation3 + $0xe]]
        %v1039 = vstv %s1038
        %v1040 = vmul.f32 %v376, %v1039
        %s1041 = sld [smem:[#allocation3 + $0x8e]]
        %v1042 = vstv %s1041
        %v1043 = vmul.f32 %v380, %v1042
        %v1044 = vadd.f32 %v1040, %v1043
        %s1045 = sld [smem:[#allocation3 + $0x10e]]
        %v1046 = vstv %s1045
        %v1047 = vmul.f32 %v384, %v1046
        %v1048 = vadd.f32 %v1044, %v1047
        %v1049 = vperm.slane %v1037, 0
        %v1050 = vadd.f32 %v1048, %v1049
        %v1051 = vmax.f32 %v1050, 0.0
        %s1052 = scalar_lea.vmem [#allocation2], 112
        %1053 = vst [vmem:[%s1052] sm:$0xff] %v1051
        %s1054 = sld [smem:[#allocation8 + $0x700]]
        %v1055 = vstv %s1054
        %v1056 = vmul.f32 %v1051, %v1055
        %v1057 = vadd.f32 %v1011, %v1056
        %s1058 = sld [smem:[#allocation8 + $0x701]]
        %v1059 = vstv %s1058
        %v1060 = vmul.f32 %v1051, %v1059
        %v1061 = vadd.f32 %v1015, %v1060
        %s1062 = sld [smem:[#allocation8 + $0x702]]
        %v1063 = vstv %s1062
        %v1064 = vmul.f32 %v1051, %v1063
        %v1065 = vadd.f32 %v1019, %v1064
        %s1066 = sld [smem:[#allocation8 + $0x703]]
        %v1067 = vstv %s1066
        %v1068 = vmul.f32 %v1051, %v1067
        %v1069 = vadd.f32 %v1023, %v1068
        %s1070 = sld [smem:[#allocation3 + $0x18f]]
        %v1071 = vstv %s1070
        %v1072 = vmul.f32 %v370, %v1071
        %s1073 = sld [smem:[#allocation3 + $0x20f]]
        %v1074 = vstv %s1073
        %v1075 = vmul.f32 %v371, %v1074
        %v1076 = vadd.f32 %v1072, %v1075
        %s1077 = sld [smem:[#allocation3 + $0x28f]]
        %v1078 = vstv %s1077
        %v1079 = vmul.f32 %v372, %v1078
        %v1080 = vadd.f32 %v1076, %v1079
        %s1081 = sld [smem:[#allocation6 + $0xf]]
        %v1082 = vstv %s1081
        %v1083 = vadd.f32 %v1080, %v1082
        %s1084 = sld [smem:[#allocation3 + $0xf]]
        %v1085 = vstv %s1084
        %v1086 = vmul.f32 %v376, %v1085
        %s1087 = sld [smem:[#allocation3 + $0x8f]]
        %v1088 = vstv %s1087
        %v1089 = vmul.f32 %v380, %v1088
        %v1090 = vadd.f32 %v1086, %v1089
        %s1091 = sld [smem:[#allocation3 + $0x10f]]
        %v1092 = vstv %s1091
        %v1093 = vmul.f32 %v384, %v1092
        %v1094 = vadd.f32 %v1090, %v1093
        %v1095 = vperm.slane %v1083, 0
        %v1096 = vadd.f32 %v1094, %v1095
        %v1097 = vmax.f32 %v1096, 0.0
        %s1098 = scalar_lea.vmem [#allocation2], 120
        %1099 = vst [vmem:[%s1098] sm:$0xff] %v1097
        %s1100 = sld [smem:[#allocation8 + $0x780]]
        %v1101 = vstv %s1100
        %v1102 = vmul.f32 %v1097, %v1101
        %v1103 = vadd.f32 %v1057, %v1102
        %s1104 = sld [smem:[#allocation8 + $0x781]]
        %v1105 = vstv %s1104
        %v1106 = vmul.f32 %v1097, %v1105
        %v1107 = vadd.f32 %v1061, %v1106
        %s1108 = sld [smem:[#allocation8 + $0x782]]
        %v1109 = vstv %s1108
        %v1110 = vmul.f32 %v1097, %v1109
        %v1111 = vadd.f32 %v1065, %v1110
        %s1112 = sld [smem:[#allocation8 + $0x783]]
        %v1113 = vstv %s1112
        %v1114 = vmul.f32 %v1097, %v1113
        %v1115 = vadd.f32 %v1069, %v1114
        %s1116 = sld [smem:[#allocation3 + $0x190]]
        %v1117 = vstv %s1116
        %v1118 = vmul.f32 %v370, %v1117
        %s1119 = sld [smem:[#allocation3 + $0x210]]
        %v1120 = vstv %s1119
        %v1121 = vmul.f32 %v371, %v1120
        %v1122 = vadd.f32 %v1118, %v1121
        %s1123 = sld [smem:[#allocation3 + $0x290]]
        %v1124 = vstv %s1123
        %v1125 = vmul.f32 %v372, %v1124
        %v1126 = vadd.f32 %v1122, %v1125
        %s1127 = sld [smem:[#allocation6 + $0x10]]
        %v1128 = vstv %s1127
        %v1129 = vadd.f32 %v1126, %v1128
        %s1130 = sld [smem:[#allocation3 + $0x10]]
        %v1131 = vstv %s1130
        %v1132 = vmul.f32 %v376, %v1131
        %s1133 = sld [smem:[#allocation3 + $0x90]]
        %v1134 = vstv %s1133
        %v1135 = vmul.f32 %v380, %v1134
        %v1136 = vadd.f32 %v1132, %v1135
        %s1137 = sld [smem:[#allocation3 + $0x110]]
        %v1138 = vstv %s1137
        %v1139 = vmul.f32 %v384, %v1138
        %v1140 = vadd.f32 %v1136, %v1139
        %v1141 = vperm.slane %v1129, 0
        %v1142 = vadd.f32 %v1140, %v1141
        %v1143 = vmax.f32 %v1142, 0.0
        %s1144 = scalar_lea.vmem [#allocation2], 128
        %1145 = vst [vmem:[%s1144] sm:$0xff] %v1143
        %s1146 = sld [smem:[#allocation8 + $0x800]]
        %v1147 = vstv %s1146
        %v1148 = vmul.f32 %v1143, %v1147
        %v1149 = vadd.f32 %v1103, %v1148
        %s1150 = sld [smem:[#allocation8 + $0x801]]
        %v1151 = vstv %s1150
        %v1152 = vmul.f32 %v1143, %v1151
        %v1153 = vadd.f32 %v1107, %v1152
        %s1154 = sld [smem:[#allocation8 + $0x802]]
        %v1155 = vstv %s1154
        %v1156 = vmul.f32 %v1143, %v1155
        %v1157 = vadd.f32 %v1111, %v1156
        %s1158 = sld [smem:[#allocation8 + $0x803]]
        %v1159 = vstv %s1158
        %v1160 = vmul.f32 %v1143, %v1159
        %v1161 = vadd.f32 %v1115, %v1160
        %s1162 = sld [smem:[#allocation3 + $0x191]]
        %v1163 = vstv %s1162
        %v1164 = vmul.f32 %v370, %v1163
        %s1165 = sld [smem:[#allocation3 + $0x211]]
        %v1166 = vstv %s1165
        %v1167 = vmul.f32 %v371, %v1166
        %v1168 = vadd.f32 %v1164, %v1167
        %s1169 = sld [smem:[#allocation3 + $0x291]]
        %v1170 = vstv %s1169
        %v1171 = vmul.f32 %v372, %v1170
        %v1172 = vadd.f32 %v1168, %v1171
        %s1173 = sld [smem:[#allocation6 + $0x11]]
        %v1174 = vstv %s1173
        %v1175 = vadd.f32 %v1172, %v1174
        %s1176 = sld [smem:[#allocation3 + $0x11]]
        %v1177 = vstv %s1176
        %v1178 = vmul.f32 %v376, %v1177
        %s1179 = sld [smem:[#allocation3 + $0x91]]
        %v1180 = vstv %s1179
        %v1181 = vmul.f32 %v380, %v1180
        %v1182 = vadd.f32 %v1178, %v1181
        %s1183 = sld [smem:[#allocation3 + $0x111]]
        %v1184 = vstv %s1183
        %v1185 = vmul.f32 %v384, %v1184
        %v1186 = vadd.f32 %v1182, %v1185
        %v1187 = vperm.slane %v1175, 0
        %v1188 = vadd.f32 %v1186, %v1187
        %v1189 = vmax.f32 %v1188, 0.0
        %s1190 = scalar_lea.vmem [#allocation2], 136
        %1191 = vst [vmem:[%s1190] sm:$0xff] %v1189
        %s1192 = sld [smem:[#allocation8 + $0x880]]
        %v1193 = vstv %s1192
        %v1194 = vmul.f32 %v1189, %v1193
        %v1195 = vadd.f32 %v1149, %v1194
        %s1196 = sld [smem:[#allocation8 + $0x881]]
        %v1197 = vstv %s1196
        %v1198 = vmul.f32 %v1189, %v1197
        %v1199 = vadd.f32 %v1153, %v1198
        %s1200 = sld [smem:[#allocation8 + $0x882]]
        %v1201 = vstv %s1200
        %v1202 = vmul.f32 %v1189, %v1201
        %v1203 = vadd.f32 %v1157, %v1202
        %s1204 = sld [smem:[#allocation8 + $0x883]]
        %v1205 = vstv %s1204
        %v1206 = vmul.f32 %v1189, %v1205
        %v1207 = vadd.f32 %v1161, %v1206
        %s1208 = sld [smem:[#allocation3 + $0x192]]
        %v1209 = vstv %s1208
        %v1210 = vmul.f32 %v370, %v1209
        %s1211 = sld [smem:[#allocation3 + $0x212]]
        %v1212 = vstv %s1211
        %v1213 = vmul.f32 %v371, %v1212
        %v1214 = vadd.f32 %v1210, %v1213
        %s1215 = sld [smem:[#allocation3 + $0x292]]
        %v1216 = vstv %s1215
        %v1217 = vmul.f32 %v372, %v1216
        %v1218 = vadd.f32 %v1214, %v1217
        %s1219 = sld [smem:[#allocation6 + $0x12]]
        %v1220 = vstv %s1219
        %v1221 = vadd.f32 %v1218, %v1220
        %s1222 = sld [smem:[#allocation3 + $0x12]]
        %v1223 = vstv %s1222
        %v1224 = vmul.f32 %v376, %v1223
        %s1225 = sld [smem:[#allocation3 + $0x92]]
        %v1226 = vstv %s1225
        %v1227 = vmul.f32 %v380, %v1226
        %v1228 = vadd.f32 %v1224, %v1227
        %s1229 = sld [smem:[#allocation3 + $0x112]]
        %v1230 = vstv %s1229
        %v1231 = vmul.f32 %v384, %v1230
        %v1232 = vadd.f32 %v1228, %v1231
        %v1233 = vperm.slane %v1221, 0
        %v1234 = vadd.f32 %v1232, %v1233
        %v1235 = vmax.f32 %v1234, 0.0
        %s1236 = scalar_lea.vmem [#allocation2], 144
        %1237 = vst [vmem:[%s1236] sm:$0xff] %v1235
        %s1238 = sld [smem:[#allocation8 + $0x900]]
        %v1239 = vstv %s1238
        %v1240 = vmul.f32 %v1235, %v1239
        %v1241 = vadd.f32 %v1195, %v1240
        %s1242 = sld [smem:[#allocation8 + $0x901]]
        %v1243 = vstv %s1242
        %v1244 = vmul.f32 %v1235, %v1243
        %v1245 = vadd.f32 %v1199, %v1244
        %s1246 = sld [smem:[#allocation8 + $0x902]]
        %v1247 = vstv %s1246
        %v1248 = vmul.f32 %v1235, %v1247
        %v1249 = vadd.f32 %v1203, %v1248
        %s1250 = sld [smem:[#allocation8 + $0x903]]
        %v1251 = vstv %s1250
        %v1252 = vmul.f32 %v1235, %v1251
        %v1253 = vadd.f32 %v1207, %v1252
        %s1254 = sld [smem:[#allocation3 + $0x193]]
        %v1255 = vstv %s1254
        %v1256 = vmul.f32 %v370, %v1255
        %s1257 = sld [smem:[#allocation3 + $0x213]]
        %v1258 = vstv %s1257
        %v1259 = vmul.f32 %v371, %v1258
        %v1260 = vadd.f32 %v1256, %v1259
        %s1261 = sld [smem:[#allocation3 + $0x293]]
        %v1262 = vstv %s1261
        %v1263 = vmul.f32 %v372, %v1262
        %v1264 = vadd.f32 %v1260, %v1263
        %s1265 = sld [smem:[#allocation6 + $0x13]]
        %v1266 = vstv %s1265
        %v1267 = vadd.f32 %v1264, %v1266
        %s1268 = sld [smem:[#allocation3 + $0x13]]
        %v1269 = vstv %s1268
        %v1270 = vmul.f32 %v376, %v1269
        %s1271 = sld [smem:[#allocation3 + $0x93]]
        %v1272 = vstv %s1271
        %v1273 = vmul.f32 %v380, %v1272
        %v1274 = vadd.f32 %v1270, %v1273
        %s1275 = sld [smem:[#allocation3 + $0x113]]
        %v1276 = vstv %s1275
        %v1277 = vmul.f32 %v384, %v1276
        %v1278 = vadd.f32 %v1274, %v1277
        %v1279 = vperm.slane %v1267, 0
        %v1280 = vadd.f32 %v1278, %v1279
        %v1281 = vmax.f32 %v1280, 0.0
        %s1282 = scalar_lea.vmem [#allocation2], 152
        %1283 = vst [vmem:[%s1282] sm:$0xff] %v1281
        %s1284 = sld [smem:[#allocation8 + $0x980]]
        %v1285 = vstv %s1284
        %v1286 = vmul.f32 %v1281, %v1285
        %v1287 = vadd.f32 %v1241, %v1286
        %s1288 = sld [smem:[#allocation8 + $0x981]]
        %v1289 = vstv %s1288
        %v1290 = vmul.f32 %v1281, %v1289
        %v1291 = vadd.f32 %v1245, %v1290
        %s1292 = sld [smem:[#allocation8 + $0x982]]
        %v1293 = vstv %s1292
        %v1294 = vmul.f32 %v1281, %v1293
        %v1295 = vadd.f32 %v1249, %v1294
        %s1296 = sld [smem:[#allocation8 + $0x983]]
        %v1297 = vstv %s1296
        %v1298 = vmul.f32 %v1281, %v1297
        %v1299 = vadd.f32 %v1253, %v1298
        %s1300 = sld [smem:[#allocation3 + $0x194]]
        %v1301 = vstv %s1300
        %v1302 = vmul.f32 %v370, %v1301
        %s1303 = sld [smem:[#allocation3 + $0x214]]
        %v1304 = vstv %s1303
        %v1305 = vmul.f32 %v371, %v1304
        %v1306 = vadd.f32 %v1302, %v1305
        %s1307 = sld [smem:[#allocation3 + $0x294]]
        %v1308 = vstv %s1307
        %v1309 = vmul.f32 %v372, %v1308
        %v1310 = vadd.f32 %v1306, %v1309
        %s1311 = sld [smem:[#allocation6 + $0x14]]
        %v1312 = vstv %s1311
        %v1313 = vadd.f32 %v1310, %v1312
        %s1314 = sld [smem:[#allocation3 + $0x14]]
        %v1315 = vstv %s1314
        %v1316 = vmul.f32 %v376, %v1315
        %s1317 = sld [smem:[#allocation3 + $0x94]]
        %v1318 = vstv %s1317
        %v1319 = vmul.f32 %v380, %v1318
        %v1320 = vadd.f32 %v1316, %v1319
        %s1321 = sld [smem:[#allocation3 + $0x114]]
        %v1322 = vstv %s1321
        %v1323 = vmul.f32 %v384, %v1322
        %v1324 = vadd.f32 %v1320, %v1323
        %v1325 = vperm.slane %v1313, 0
        %v1326 = vadd.f32 %v1324, %v1325
        %v1327 = vmax.f32 %v1326, 0.0
        %s1328 = scalar_lea.vmem [#allocation2], 160
        %1329 = vst [vmem:[%s1328] sm:$0xff] %v1327
        %s1330 = sld [smem:[#allocation8 + $0xa00]]
        %v1331 = vstv %s1330
        %v1332 = vmul.f32 %v1327, %v1331
        %v1333 = vadd.f32 %v1287, %v1332
        %s1334 = sld [smem:[#allocation8 + $0xa01]]
        %v1335 = vstv %s1334
        %v1336 = vmul.f32 %v1327, %v1335
        %v1337 = vadd.f32 %v1291, %v1336
        %s1338 = sld [smem:[#allocation8 + $0xa02]]
        %v1339 = vstv %s1338
        %v1340 = vmul.f32 %v1327, %v1339
        %v1341 = vadd.f32 %v1295, %v1340
        %s1342 = sld [smem:[#allocation8 + $0xa03]]
        %v1343 = vstv %s1342
        %v1344 = vmul.f32 %v1327, %v1343
        %v1345 = vadd.f32 %v1299, %v1344
        %s1346 = sld [smem:[#allocation3 + $0x195]]
        %v1347 = vstv %s1346
        %v1348 = vmul.f32 %v370, %v1347
        %s1349 = sld [smem:[#allocation3 + $0x215]]
        %v1350 = vstv %s1349
        %v1351 = vmul.f32 %v371, %v1350
        %v1352 = vadd.f32 %v1348, %v1351
        %s1353 = sld [smem:[#allocation3 + $0x295]]
        %v1354 = vstv %s1353
        %v1355 = vmul.f32 %v372, %v1354
        %v1356 = vadd.f32 %v1352, %v1355
        %s1357 = sld [smem:[#allocation6 + $0x15]]
        %v1358 = vstv %s1357
        %v1359 = vadd.f32 %v1356, %v1358
        %s1360 = sld [smem:[#allocation3 + $0x15]]
        %v1361 = vstv %s1360
        %v1362 = vmul.f32 %v376, %v1361
        %s1363 = sld [smem:[#allocation3 + $0x95]]
        %v1364 = vstv %s1363
        %v1365 = vmul.f32 %v380, %v1364
        %v1366 = vadd.f32 %v1362, %v1365
        %s1367 = sld [smem:[#allocation3 + $0x115]]
        %v1368 = vstv %s1367
        %v1369 = vmul.f32 %v384, %v1368
        %v1370 = vadd.f32 %v1366, %v1369
        %v1371 = vperm.slane %v1359, 0
        %v1372 = vadd.f32 %v1370, %v1371
        %v1373 = vmax.f32 %v1372, 0.0
        %s1374 = scalar_lea.vmem [#allocation2], 168
        %1375 = vst [vmem:[%s1374] sm:$0xff] %v1373
        %s1376 = sld [smem:[#allocation8 + $0xa80]]
        %v1377 = vstv %s1376
        %v1378 = vmul.f32 %v1373, %v1377
        %v1379 = vadd.f32 %v1333, %v1378
        %s1380 = sld [smem:[#allocation8 + $0xa81]]
        %v1381 = vstv %s1380
        %v1382 = vmul.f32 %v1373, %v1381
        %v1383 = vadd.f32 %v1337, %v1382
        %s1384 = sld [smem:[#allocation8 + $0xa82]]
        %v1385 = vstv %s1384
        %v1386 = vmul.f32 %v1373, %v1385
        %v1387 = vadd.f32 %v1341, %v1386
        %s1388 = sld [smem:[#allocation8 + $0xa83]]
        %v1389 = vstv %s1388
        %v1390 = vmul.f32 %v1373, %v1389
        %v1391 = vadd.f32 %v1345, %v1390
        %s1392 = sld [smem:[#allocation3 + $0x196]]
        %v1393 = vstv %s1392
        %v1394 = vmul.f32 %v370, %v1393
        %s1395 = sld [smem:[#allocation3 + $0x216]]
        %v1396 = vstv %s1395
        %v1397 = vmul.f32 %v371, %v1396
        %v1398 = vadd.f32 %v1394, %v1397
        %s1399 = sld [smem:[#allocation3 + $0x296]]
        %v1400 = vstv %s1399
        %v1401 = vmul.f32 %v372, %v1400
        %v1402 = vadd.f32 %v1398, %v1401
        %s1403 = sld [smem:[#allocation6 + $0x16]]
        %v1404 = vstv %s1403
        %v1405 = vadd.f32 %v1402, %v1404
        %s1406 = sld [smem:[#allocation3 + $0x16]]
        %v1407 = vstv %s1406
        %v1408 = vmul.f32 %v376, %v1407
        %s1409 = sld [smem:[#allocation3 + $0x96]]
        %v1410 = vstv %s1409
        %v1411 = vmul.f32 %v380, %v1410
        %v1412 = vadd.f32 %v1408, %v1411
        %s1413 = sld [smem:[#allocation3 + $0x116]]
        %v1414 = vstv %s1413
        %v1415 = vmul.f32 %v384, %v1414
        %v1416 = vadd.f32 %v1412, %v1415
        %v1417 = vperm.slane %v1405, 0
        %v1418 = vadd.f32 %v1416, %v1417
        %v1419 = vmax.f32 %v1418, 0.0
        %s1420 = scalar_lea.vmem [#allocation2], 176
        %1421 = vst [vmem:[%s1420] sm:$0xff] %v1419
        %s1422 = sld [smem:[#allocation8 + $0xb00]]
        %v1423 = vstv %s1422
        %v1424 = vmul.f32 %v1419, %v1423
        %v1425 = vadd.f32 %v1379, %v1424
        %s1426 = sld [smem:[#allocation8 + $0xb01]]
        %v1427 = vstv %s1426
        %v1428 = vmul.f32 %v1419, %v1427
        %v1429 = vadd.f32 %v1383, %v1428
        %s1430 = sld [smem:[#allocation8 + $0xb02]]
        %v1431 = vstv %s1430
        %v1432 = vmul.f32 %v1419, %v1431
        %v1433 = vadd.f32 %v1387, %v1432
        %s1434 = sld [smem:[#allocation8 + $0xb03]]
        %v1435 = vstv %s1434
        %v1436 = vmul.f32 %v1419, %v1435
        %v1437 = vadd.f32 %v1391, %v1436
        %s1438 = sld [smem:[#allocation3 + $0x197]]
        %v1439 = vstv %s1438
        %v1440 = vmul.f32 %v370, %v1439
        %s1441 = sld [smem:[#allocation3 + $0x217]]
        %v1442 = vstv %s1441
        %v1443 = vmul.f32 %v371, %v1442
        %v1444 = vadd.f32 %v1440, %v1443
        %s1445 = sld [smem:[#allocation3 + $0x297]]
        %v1446 = vstv %s1445
        %v1447 = vmul.f32 %v372, %v1446
        %v1448 = vadd.f32 %v1444, %v1447
        %s1449 = sld [smem:[#allocation6 + $0x17]]
        %v1450 = vstv %s1449
        %v1451 = vadd.f32 %v1448, %v1450
        %s1452 = sld [smem:[#allocation3 + $0x17]]
        %v1453 = vstv %s1452
        %v1454 = vmul.f32 %v376, %v1453
        %s1455 = sld [smem:[#allocation3 + $0x97]]
        %v1456 = vstv %s1455
        %v1457 = vmul.f32 %v380, %v1456
        %v1458 = vadd.f32 %v1454, %v1457
        %s1459 = sld [smem:[#allocation3 + $0x117]]
        %v1460 = vstv %s1459
        %v1461 = vmul.f32 %v384, %v1460
        %v1462 = vadd.f32 %v1458, %v1461
        %v1463 = vperm.slane %v1451, 0
        %v1464 = vadd.f32 %v1462, %v1463
        %v1465 = vmax.f32 %v1464, 0.0
        %s1466 = scalar_lea.vmem [#allocation2], 184
        %1467 = vst [vmem:[%s1466] sm:$0xff] %v1465
        %s1468 = sld [smem:[#allocation8 + $0xb80]]
        %v1469 = vstv %s1468
        %v1470 = vmul.f32 %v1465, %v1469
        %v1471 = vadd.f32 %v1425, %v1470
        %s1472 = sld [smem:[#allocation8 + $0xb81]]
        %v1473 = vstv %s1472
        %v1474 = vmul.f32 %v1465, %v1473
        %v1475 = vadd.f32 %v1429, %v1474
        %s1476 = sld [smem:[#allocation8 + $0xb82]]
        %v1477 = vstv %s1476
        %v1478 = vmul.f32 %v1465, %v1477
        %v1479 = vadd.f32 %v1433, %v1478
        %s1480 = sld [smem:[#allocation8 + $0xb83]]
        %v1481 = vstv %s1480
        %v1482 = vmul.f32 %v1465, %v1481
        %v1483 = vadd.f32 %v1437, %v1482
        %s1484 = sld [smem:[#allocation3 + $0x198]]
        %v1485 = vstv %s1484
        %v1486 = vmul.f32 %v370, %v1485
        %s1487 = sld [smem:[#allocation3 + $0x218]]
        %v1488 = vstv %s1487
        %v1489 = vmul.f32 %v371, %v1488
        %v1490 = vadd.f32 %v1486, %v1489
        %s1491 = sld [smem:[#allocation3 + $0x298]]
        %v1492 = vstv %s1491
        %v1493 = vmul.f32 %v372, %v1492
        %v1494 = vadd.f32 %v1490, %v1493
        %s1495 = sld [smem:[#allocation6 + $0x18]]
        %v1496 = vstv %s1495
        %v1497 = vadd.f32 %v1494, %v1496
        %s1498 = sld [smem:[#allocation3 + $0x18]]
        %v1499 = vstv %s1498
        %v1500 = vmul.f32 %v376, %v1499
        %s1501 = sld [smem:[#allocation3 + $0x98]]
        %v1502 = vstv %s1501
        %v1503 = vmul.f32 %v380, %v1502
        %v1504 = vadd.f32 %v1500, %v1503
        %s1505 = sld [smem:[#allocation3 + $0x118]]
        %v1506 = vstv %s1505
        %v1507 = vmul.f32 %v384, %v1506
        %v1508 = vadd.f32 %v1504, %v1507
        %v1509 = vperm.slane %v1497, 0
        %v1510 = vadd.f32 %v1508, %v1509
        %v1511 = vmax.f32 %v1510, 0.0
        %s1512 = scalar_lea.vmem [#allocation2], 192
        %1513 = vst [vmem:[%s1512] sm:$0xff] %v1511
        %s1514 = sld [smem:[#allocation8 + $0xc00]]
        %v1515 = vstv %s1514
        %v1516 = vmul.f32 %v1511, %v1515
        %v1517 = vadd.f32 %v1471, %v1516
        %s1518 = sld [smem:[#allocation8 + $0xc01]]
        %v1519 = vstv %s1518
        %v1520 = vmul.f32 %v1511, %v1519
        %v1521 = vadd.f32 %v1475, %v1520
        %s1522 = sld [smem:[#allocation8 + $0xc02]]
        %v1523 = vstv %s1522
        %v1524 = vmul.f32 %v1511, %v1523
        %v1525 = vadd.f32 %v1479, %v1524
        %s1526 = sld [smem:[#allocation8 + $0xc03]]
        %v1527 = vstv %s1526
        %v1528 = vmul.f32 %v1511, %v1527
        %v1529 = vadd.f32 %v1483, %v1528
        %s1530 = sld [smem:[#allocation3 + $0x199]]
        %v1531 = vstv %s1530
        %v1532 = vmul.f32 %v370, %v1531
        %s1533 = sld [smem:[#allocation3 + $0x219]]
        %v1534 = vstv %s1533
        %v1535 = vmul.f32 %v371, %v1534
        %v1536 = vadd.f32 %v1532, %v1535
        %s1537 = sld [smem:[#allocation3 + $0x299]]
        %v1538 = vstv %s1537
        %v1539 = vmul.f32 %v372, %v1538
        %v1540 = vadd.f32 %v1536, %v1539
        %s1541 = sld [smem:[#allocation6 + $0x19]]
        %v1542 = vstv %s1541
        %v1543 = vadd.f32 %v1540, %v1542
        %s1544 = sld [smem:[#allocation3 + $0x19]]
        %v1545 = vstv %s1544
        %v1546 = vmul.f32 %v376, %v1545
        %s1547 = sld [smem:[#allocation3 + $0x99]]
        %v1548 = vstv %s1547
        %v1549 = vmul.f32 %v380, %v1548
        %v1550 = vadd.f32 %v1546, %v1549
        %s1551 = sld [smem:[#allocation3 + $0x119]]
        %v1552 = vstv %s1551
        %v1553 = vmul.f32 %v384, %v1552
        %v1554 = vadd.f32 %v1550, %v1553
        %v1555 = vperm.slane %v1543, 0
        %v1556 = vadd.f32 %v1554, %v1555
        %v1557 = vmax.f32 %v1556, 0.0
        %s1558 = scalar_lea.vmem [#allocation2], 200
        %1559 = vst [vmem:[%s1558] sm:$0xff] %v1557
        %s1560 = sld [smem:[#allocation8 + $0xc80]]
        %v1561 = vstv %s1560
        %v1562 = vmul.f32 %v1557, %v1561
        %v1563 = vadd.f32 %v1517, %v1562
        %s1564 = sld [smem:[#allocation8 + $0xc81]]
        %v1565 = vstv %s1564
        %v1566 = vmul.f32 %v1557, %v1565
        %v1567 = vadd.f32 %v1521, %v1566
        %s1568 = sld [smem:[#allocation8 + $0xc82]]
        %v1569 = vstv %s1568
        %v1570 = vmul.f32 %v1557, %v1569
        %v1571 = vadd.f32 %v1525, %v1570
        %s1572 = sld [smem:[#allocation8 + $0xc83]]
        %v1573 = vstv %s1572
        %v1574 = vmul.f32 %v1557, %v1573
        %v1575 = vadd.f32 %v1529, %v1574
        %s1576 = sld [smem:[#allocation3 + $0x19a]]
        %v1577 = vstv %s1576
        %v1578 = vmul.f32 %v370, %v1577
        %s1579 = sld [smem:[#allocation3 + $0x21a]]
        %v1580 = vstv %s1579
        %v1581 = vmul.f32 %v371, %v1580
        %v1582 = vadd.f32 %v1578, %v1581
        %s1583 = sld [smem:[#allocation3 + $0x29a]]
        %v1584 = vstv %s1583
        %v1585 = vmul.f32 %v372, %v1584
        %v1586 = vadd.f32 %v1582, %v1585
        %s1587 = sld [smem:[#allocation6 + $0x1a]]
        %v1588 = vstv %s1587
        %v1589 = vadd.f32 %v1586, %v1588
        %s1590 = sld [smem:[#allocation3 + $0x1a]]
        %v1591 = vstv %s1590
        %v1592 = vmul.f32 %v376, %v1591
        %s1593 = sld [smem:[#allocation3 + $0x9a]]
        %v1594 = vstv %s1593
        %v1595 = vmul.f32 %v380, %v1594
        %v1596 = vadd.f32 %v1592, %v1595
        %s1597 = sld [smem:[#allocation3 + $0x11a]]
        %v1598 = vstv %s1597
        %v1599 = vmul.f32 %v384, %v1598
        %v1600 = vadd.f32 %v1596, %v1599
        %v1601 = vperm.slane %v1589, 0
        %v1602 = vadd.f32 %v1600, %v1601
        %v1603 = vmax.f32 %v1602, 0.0
        %s1604 = scalar_lea.vmem [#allocation2], 208
        %1605 = vst [vmem:[%s1604] sm:$0xff] %v1603
        %s1606 = sld [smem:[#allocation8 + $0xd00]]
        %v1607 = vstv %s1606
        %v1608 = vmul.f32 %v1603, %v1607
        %v1609 = vadd.f32 %v1563, %v1608
        %s1610 = sld [smem:[#allocation8 + $0xd01]]
        %v1611 = vstv %s1610
        %v1612 = vmul.f32 %v1603, %v1611
        %v1613 = vadd.f32 %v1567, %v1612
        %s1614 = sld [smem:[#allocation8 + $0xd02]]
        %v1615 = vstv %s1614
        %v1616 = vmul.f32 %v1603, %v1615
        %v1617 = vadd.f32 %v1571, %v1616
        %s1618 = sld [smem:[#allocation8 + $0xd03]]
        %v1619 = vstv %s1618
        %v1620 = vmul.f32 %v1603, %v1619
        %v1621 = vadd.f32 %v1575, %v1620
        %s1622 = sld [smem:[#allocation3 + $0x19b]]
        %v1623 = vstv %s1622
        %v1624 = vmul.f32 %v370, %v1623
        %s1625 = sld [smem:[#allocation3 + $0x21b]]
        %v1626 = vstv %s1625
        %v1627 = vmul.f32 %v371, %v1626
        %v1628 = vadd.f32 %v1624, %v1627
        %s1629 = sld [smem:[#allocation3 + $0x29b]]
        %v1630 = vstv %s1629
        %v1631 = vmul.f32 %v372, %v1630
        %v1632 = vadd.f32 %v1628, %v1631
        %s1633 = sld [smem:[#allocation6 + $0x1b]]
        %v1634 = vstv %s1633
        %v1635 = vadd.f32 %v1632, %v1634
        %s1636 = sld [smem:[#allocation3 + $0x1b]]
        %v1637 = vstv %s1636
        %v1638 = vmul.f32 %v376, %v1637
        %s1639 = sld [smem:[#allocation3 + $0x9b]]
        %v1640 = vstv %s1639
        %v1641 = vmul.f32 %v380, %v1640
        %v1642 = vadd.f32 %v1638, %v1641
        %s1643 = sld [smem:[#allocation3 + $0x11b]]
        %v1644 = vstv %s1643
        %v1645 = vmul.f32 %v384, %v1644
        %v1646 = vadd.f32 %v1642, %v1645
        %v1647 = vperm.slane %v1635, 0
        %v1648 = vadd.f32 %v1646, %v1647
        %v1649 = vmax.f32 %v1648, 0.0
        %s1650 = scalar_lea.vmem [#allocation2], 216
        %1651 = vst [vmem:[%s1650] sm:$0xff] %v1649
        %s1652 = sld [smem:[#allocation8 + $0xd80]]
        %v1653 = vstv %s1652
        %v1654 = vmul.f32 %v1649, %v1653
        %v1655 = vadd.f32 %v1609, %v1654
        %s1656 = sld [smem:[#allocation8 + $0xd81]]
        %v1657 = vstv %s1656
        %v1658 = vmul.f32 %v1649, %v1657
        %v1659 = vadd.f32 %v1613, %v1658
        %s1660 = sld [smem:[#allocation8 + $0xd82]]
        %v1661 = vstv %s1660
        %v1662 = vmul.f32 %v1649, %v1661
        %v1663 = vadd.f32 %v1617, %v1662
        %s1664 = sld [smem:[#allocation8 + $0xd83]]
        %v1665 = vstv %s1664
        %v1666 = vmul.f32 %v1649, %v1665
        %v1667 = vadd.f32 %v1621, %v1666
        %s1668 = sld [smem:[#allocation3 + $0x19c]]
        %v1669 = vstv %s1668
        %v1670 = vmul.f32 %v370, %v1669
        %s1671 = sld [smem:[#allocation3 + $0x21c]]
        %v1672 = vstv %s1671
        %v1673 = vmul.f32 %v371, %v1672
        %v1674 = vadd.f32 %v1670, %v1673
        %s1675 = sld [smem:[#allocation3 + $0x29c]]
        %v1676 = vstv %s1675
        %v1677 = vmul.f32 %v372, %v1676
        %v1678 = vadd.f32 %v1674, %v1677
        %s1679 = sld [smem:[#allocation6 + $0x1c]]
        %v1680 = vstv %s1679
        %v1681 = vadd.f32 %v1678, %v1680
        %s1682 = sld [smem:[#allocation3 + $0x1c]]
        %v1683 = vstv %s1682
        %v1684 = vmul.f32 %v376, %v1683
        %s1685 = sld [smem:[#allocation3 + $0x9c]]
        %v1686 = vstv %s1685
        %v1687 = vmul.f32 %v380, %v1686
        %v1688 = vadd.f32 %v1684, %v1687
        %s1689 = sld [smem:[#allocation3 + $0x11c]]
        %v1690 = vstv %s1689
        %v1691 = vmul.f32 %v384, %v1690
        %v1692 = vadd.f32 %v1688, %v1691
        %v1693 = vperm.slane %v1681, 0
        %v1694 = vadd.f32 %v1692, %v1693
        %v1695 = vmax.f32 %v1694, 0.0
        %s1696 = scalar_lea.vmem [#allocation2], 224
        %1697 = vst [vmem:[%s1696] sm:$0xff] %v1695
        %s1698 = sld [smem:[#allocation8 + $0xe00]]
        %v1699 = vstv %s1698
        %v1700 = vmul.f32 %v1695, %v1699
        %v1701 = vadd.f32 %v1655, %v1700
        %s1702 = sld [smem:[#allocation8 + $0xe01]]
        %v1703 = vstv %s1702
        %v1704 = vmul.f32 %v1695, %v1703
        %v1705 = vadd.f32 %v1659, %v1704
        %s1706 = sld [smem:[#allocation8 + $0xe02]]
        %v1707 = vstv %s1706
        %v1708 = vmul.f32 %v1695, %v1707
        %v1709 = vadd.f32 %v1663, %v1708
        %s1710 = sld [smem:[#allocation8 + $0xe03]]
        %v1711 = vstv %s1710
        %v1712 = vmul.f32 %v1695, %v1711
        %v1713 = vadd.f32 %v1667, %v1712
        %s1714 = sld [smem:[#allocation3 + $0x19d]]
        %v1715 = vstv %s1714
        %v1716 = vmul.f32 %v370, %v1715
        %s1717 = sld [smem:[#allocation3 + $0x21d]]
        %v1718 = vstv %s1717
        %v1719 = vmul.f32 %v371, %v1718
        %v1720 = vadd.f32 %v1716, %v1719
        %s1721 = sld [smem:[#allocation3 + $0x29d]]
        %v1722 = vstv %s1721
        %v1723 = vmul.f32 %v372, %v1722
        %v1724 = vadd.f32 %v1720, %v1723
        %s1725 = sld [smem:[#allocation6 + $0x1d]]
        %v1726 = vstv %s1725
        %v1727 = vadd.f32 %v1724, %v1726
        %s1728 = sld [smem:[#allocation3 + $0x1d]]
        %v1729 = vstv %s1728
        %v1730 = vmul.f32 %v376, %v1729
        %s1731 = sld [smem:[#allocation3 + $0x9d]]
        %v1732 = vstv %s1731
        %v1733 = vmul.f32 %v380, %v1732
        %v1734 = vadd.f32 %v1730, %v1733
        %s1735 = sld [smem:[#allocation3 + $0x11d]]
        %v1736 = vstv %s1735
        %v1737 = vmul.f32 %v384, %v1736
        %v1738 = vadd.f32 %v1734, %v1737
        %v1739 = vperm.slane %v1727, 0
        %v1740 = vadd.f32 %v1738, %v1739
        %v1741 = vmax.f32 %v1740, 0.0
        %s1742 = scalar_lea.vmem [#allocation2], 232
        %1743 = vst [vmem:[%s1742] sm:$0xff] %v1741
        %s1744 = sld [smem:[#allocation8 + $0xe80]]
        %v1745 = vstv %s1744
        %v1746 = vmul.f32 %v1741, %v1745
        %v1747 = vadd.f32 %v1701, %v1746
        %s1748 = sld [smem:[#allocation8 + $0xe81]]
        %v1749 = vstv %s1748
        %v1750 = vmul.f32 %v1741, %v1749
        %v1751 = vadd.f32 %v1705, %v1750
        %s1752 = sld [smem:[#allocation8 + $0xe82]]
        %v1753 = vstv %s1752
        %v1754 = vmul.f32 %v1741, %v1753
        %v1755 = vadd.f32 %v1709, %v1754
        %s1756 = sld [smem:[#allocation8 + $0xe83]]
        %v1757 = vstv %s1756
        %v1758 = vmul.f32 %v1741, %v1757
        %v1759 = vadd.f32 %v1713, %v1758
        %s1760 = sld [smem:[#allocation3 + $0x19e]]
        %v1761 = vstv %s1760
        %v1762 = vmul.f32 %v370, %v1761
        %s1763 = sld [smem:[#allocation3 + $0x21e]]
        %v1764 = vstv %s1763
        %v1765 = vmul.f32 %v371, %v1764
        %v1766 = vadd.f32 %v1762, %v1765
        %s1767 = sld [smem:[#allocation3 + $0x29e]]
        %v1768 = vstv %s1767
        %v1769 = vmul.f32 %v372, %v1768
        %v1770 = vadd.f32 %v1766, %v1769
        %s1771 = sld [smem:[#allocation6 + $0x1e]]
        %v1772 = vstv %s1771
        %v1773 = vadd.f32 %v1770, %v1772
        %s1774 = sld [smem:[#allocation3 + $0x1e]]
        %v1775 = vstv %s1774
        %v1776 = vmul.f32 %v376, %v1775
        %s1777 = sld [smem:[#allocation3 + $0x9e]]
        %v1778 = vstv %s1777
        %v1779 = vmul.f32 %v380, %v1778
        %v1780 = vadd.f32 %v1776, %v1779
        %s1781 = sld [smem:[#allocation3 + $0x11e]]
        %v1782 = vstv %s1781
        %v1783 = vmul.f32 %v384, %v1782
        %v1784 = vadd.f32 %v1780, %v1783
        %v1785 = vperm.slane %v1773, 0
        %v1786 = vadd.f32 %v1784, %v1785
        %v1787 = vmax.f32 %v1786, 0.0
        %s1788 = scalar_lea.vmem [#allocation2], 240
        %1789 = vst [vmem:[%s1788] sm:$0xff] %v1787
        %s1790 = sld [smem:[#allocation8 + $0xf00]]
        %v1791 = vstv %s1790
        %v1792 = vmul.f32 %v1787, %v1791
        %v1793 = vadd.f32 %v1747, %v1792
        %s1794 = sld [smem:[#allocation8 + $0xf01]]
        %v1795 = vstv %s1794
        %v1796 = vmul.f32 %v1787, %v1795
        %v1797 = vadd.f32 %v1751, %v1796
        %s1798 = sld [smem:[#allocation8 + $0xf02]]
        %v1799 = vstv %s1798
        %v1800 = vmul.f32 %v1787, %v1799
        %v1801 = vadd.f32 %v1755, %v1800
        %s1802 = sld [smem:[#allocation8 + $0xf03]]
        %v1803 = vstv %s1802
        %v1804 = vmul.f32 %v1787, %v1803
        %v1805 = vadd.f32 %v1759, %v1804
        %s1806 = sld [smem:[#allocation3 + $0x19f]]
        %v1807 = vstv %s1806
        %v1808 = vmul.f32 %v370, %v1807
        %s1809 = sld [smem:[#allocation3 + $0x21f]]
        %v1810 = vstv %s1809
        %v1811 = vmul.f32 %v371, %v1810
        %v1812 = vadd.f32 %v1808, %v1811
        %s1813 = sld [smem:[#allocation3 + $0x29f]]
        %v1814 = vstv %s1813
        %v1815 = vmul.f32 %v372, %v1814
        %v1816 = vadd.f32 %v1812, %v1815
        %s1817 = sld [smem:[#allocation6 + $0x1f]]
        %v1818 = vstv %s1817
        %v1819 = vadd.f32 %v1816, %v1818
        %s1820 = sld [smem:[#allocation3 + $0x1f]]
        %v1821 = vstv %s1820
        %v1822 = vmul.f32 %v376, %v1821
        %s1823 = sld [smem:[#allocation3 + $0x9f]]
        %v1824 = vstv %s1823
        %v1825 = vmul.f32 %v380, %v1824
        %v1826 = vadd.f32 %v1822, %v1825
        %s1827 = sld [smem:[#allocation3 + $0x11f]]
        %v1828 = vstv %s1827
        %v1829 = vmul.f32 %v384, %v1828
        %v1830 = vadd.f32 %v1826, %v1829
        %v1831 = vperm.slane %v1819, 0
        %v1832 = vadd.f32 %v1830, %v1831
        %v1833 = vmax.f32 %v1832, 0.0
        %s1834 = scalar_lea.vmem [#allocation2], 248
        %1835 = vst [vmem:[%s1834] sm:$0xff] %v1833
        %s1836 = sld [smem:[#allocation8 + $0xf80]]
        %v1837 = vstv %s1836
        %v1838 = vmul.f32 %v1833, %v1837
        %v1839 = vadd.f32 %v1793, %v1838
        %s1840 = sld [smem:[#allocation8 + $0xf81]]
        %v1841 = vstv %s1840
        %v1842 = vmul.f32 %v1833, %v1841
        %v1843 = vadd.f32 %v1797, %v1842
        %s1844 = sld [smem:[#allocation8 + $0xf82]]
        %v1845 = vstv %s1844
        %v1846 = vmul.f32 %v1833, %v1845
        %v1847 = vadd.f32 %v1801, %v1846
        %s1848 = sld [smem:[#allocation8 + $0xf83]]
        %v1849 = vstv %s1848
        %v1850 = vmul.f32 %v1833, %v1849
        %v1851 = vadd.f32 %v1805, %v1850
        %s1852 = sld [smem:[#allocation9]]
        %v1853 = vstv %s1852
        %v1854 = vadd.f32 %v1839, %v1853
        %s1855 = sld [smem:[#allocation9 + $0x1]]
        %v1856 = vstv %s1855
        %v1857 = vadd.f32 %v1843, %v1856
        %s1858 = sld [smem:[#allocation9 + $0x2]]
        %v1859 = vstv %s1858
        %v1860 = vadd.f32 %v1847, %v1859
        %s1861 = sld [smem:[#allocation9 + $0x3]]
        %v1862 = vstv %s1861
        %v1863 = vadd.f32 %v1851, %v1862
        %v1864 = vmax.f32 %v1863, 0.0
        %v1865 = vmul.f32 %v366, %v1864
        %v1866 = vsub.f32 0.0, %v1865
        %v1867 = vmul.f32 %v1866, 1.442695
        %v1868 = vpow.pop %v1867
        %v1869 = vsub.f32 1.0, %v1868
        %v1870 = vadd.f32 %v1865, 0.0
        %v1872 = vrot.slane %v1865, 1
        %v1874 = vadd.f32 %v1870, %v1872
        %v1875 = vrot.slane %v1865, 2
        %v1877 = vadd.f32 %v1874, %v1875
        %v1878 = vrot.slane %v1865, 3
        %v1880 = vadd.f32 %v1877, %v1878
        %v1881 = vrot.slane %v1865, 4
        %v1883 = vadd.f32 %v1880, %v1881
        %v1884 = vrot.slane %v1865, 5
        %v1886 = vadd.f32 %v1883, %v1884
        %v1887 = vrot.slane %v1865, 6
        %v1889 = vadd.f32 %v1886, %v1887
        %v1891 = vrot.slane %v1870, 7
        %v1894 = vrot.slane %v1874, 6
        %v1897 = vrot.slane %v1877, 5
        %v1900 = vrot.slane %v1880, 4
        %v1903 = vrot.slane %v1883, 3
        %v1906 = vrot.slane %v1886, 2
        %v1909 = vrot.slane %v1889, 1
        %vm1911 = vcmask 1040384
        %v1912 = vsel %vm1911, 0.0, %v1891
        %vm1913 = vcmask 1041408
        %v1914 = vsel %vm1913, %v1912, %v1894
        %vm1915 = vcmask 1042432
        %v1916 = vsel %vm1915, %v1914, %v1897
        %vm1917 = vcmask 1043456
        %v1918 = vsel %vm1917, %v1916, %v1900
        %vm1919 = vcmask 1044480
        %v1920 = vsel %vm1919, %v1918, %v1903
        %vm1921 = vcmask 1045504
        %v1922 = vsel %vm1921, %v1920, %v1906
        %v1923 = vsel %vm364, %v1922, %v1909
        %v1924 = vsub.f32 0.0, %v1923
        %v1925 = vmul.f32 %v1924, 1.442695
        %v1926 = vpow.pop %v1925
        %v1927 = vmul.f32 %v1869, %v1926
        %1928 = vst [vmem:[%s340] sm:$0xff] %v1927
        %v1929 = vrot.slane %v1927, 4
        %v1930 = vadd.f32 %v1927, %v1929
        %v1931 = vrot.slane %v1930, 2
        %v1932 = vadd.f32 %v1930, %v1931
        %v1933 = vrot.slane %v1932, 1
        %v1934 = vadd.f32 %v1932, %v1933
        %v1935 = vld [vmem:[#allocation2] sm:$0xff]
        %v1936 = vmul.f32 %v1927, %v1935
        %v1937 = vrot.slane %v1936, 4
        %v1938 = vadd.f32 %v1936, %v1937
        %v1939 = vrot.slane %v1938, 2
        %v1940 = vadd.f32 %v1938, %v1939
        %v1941 = vrot.slane %v1940, 1
        %v1942 = vadd.f32 %v1940, %v1941
        %s1943 = sld [smem:[#allocation8 + $0x4]]
        %v1944 = vstv %s1943
        %v1945 = vmul.f32 %v1942, %v1944
        %v1946 = vadd.f32 %v1945, 0.0
        %s1947 = sld [smem:[#allocation8 + $0x5]]
        %v1948 = vstv %s1947
        %v1949 = vmul.f32 %v1942, %v1948
        %v1950 = vadd.f32 %v1949, 0.0
        %s1951 = sld [smem:[#allocation8 + $0x6]]
        %v1952 = vstv %s1951
        %v1953 = vmul.f32 %v1942, %v1952
        %v1954 = vadd.f32 %v1953, 0.0
        %s1955 = sld [smem:[#allocation8 + $0x7]]
        %v1956 = vstv %s1955
        %v1957 = vmul.f32 %v1942, %v1956
        %v1958 = vadd.f32 %v1957, 0.0
        %s1959 = sld [smem:[#allocation8 + $0x8]]
        %v1960 = vstv %s1959
        %v1961 = vmul.f32 %v1942, %v1960
        %v1962 = vadd.f32 %v1961, 0.0
        %s1963 = sld [smem:[#allocation8 + $0x9]]
        %v1964 = vstv %s1963
        %v1965 = vmul.f32 %v1942, %v1964
        %v1966 = vadd.f32 %v1965, 0.0
        %s1967 = sld [smem:[#allocation8 + $0xa]]
        %v1968 = vstv %s1967
        %v1969 = vmul.f32 %v1942, %v1968
        %v1970 = vadd.f32 %v1969, 0.0
        %s1971 = sld [smem:[#allocation8 + $0xb]]
        %v1972 = vstv %s1971
        %v1973 = vmul.f32 %v1942, %v1972
        %v1974 = vadd.f32 %v1973, 0.0
        %v1975 = vld [vmem:[%s454] sm:$0xff]
        %v1976 = vmul.f32 %v1927, %v1975
        %v1977 = vrot.slane %v1976, 4
        %v1978 = vadd.f32 %v1976, %v1977
        %v1979 = vrot.slane %v1978, 2
        %v1980 = vadd.f32 %v1978, %v1979
        %v1981 = vrot.slane %v1980, 1
        %v1982 = vadd.f32 %v1980, %v1981
        %s1983 = sld [smem:[#allocation8 + $0x84]]
        %v1984 = vstv %s1983
        %v1985 = vmul.f32 %v1982, %v1984
        %v1986 = vadd.f32 %v1946, %v1985
        %s1987 = sld [smem:[#allocation8 + $0x85]]
        %v1988 = vstv %s1987
        %v1989 = vmul.f32 %v1982, %v1988
        %v1990 = vadd.f32 %v1950, %v1989
        %s1991 = sld [smem:[#allocation8 + $0x86]]
        %v1992 = vstv %s1991
        %v1993 = vmul.f32 %v1982, %v1992
        %v1994 = vadd.f32 %v1954, %v1993
        %s1995 = sld [smem:[#allocation8 + $0x87]]
        %v1996 = vstv %s1995
        %v1997 = vmul.f32 %v1982, %v1996
        %v1998 = vadd.f32 %v1958, %v1997
        %s1999 = sld [smem:[#allocation8 + $0x88]]
        %v2000 = vstv %s1999
        %v2001 = vmul.f32 %v1982, %v2000
        %v2002 = vadd.f32 %v1962, %v2001
        %s2003 = sld [smem:[#allocation8 + $0x89]]
        %v2004 = vstv %s2003
        %v2005 = vmul.f32 %v1982, %v2004
        %v2006 = vadd.f32 %v1966, %v2005
        %s2007 = sld [smem:[#allocation8 + $0x8a]]
        %v2008 = vstv %s2007
        %v2009 = vmul.f32 %v1982, %v2008
        %v2010 = vadd.f32 %v1970, %v2009
        %s2011 = sld [smem:[#allocation8 + $0x8b]]
        %v2012 = vstv %s2011
        %v2013 = vmul.f32 %v1982, %v2012
        %v2014 = vadd.f32 %v1974, %v2013
        %v2015 = vld [vmem:[%s500] sm:$0xff]
        %v2016 = vmul.f32 %v1927, %v2015
        %v2017 = vrot.slane %v2016, 4
        %v2018 = vadd.f32 %v2016, %v2017
        %v2019 = vrot.slane %v2018, 2
        %v2020 = vadd.f32 %v2018, %v2019
        %v2021 = vrot.slane %v2020, 1
        %v2022 = vadd.f32 %v2020, %v2021
        %s2023 = sld [smem:[#allocation8 + $0x104]]
        %v2024 = vstv %s2023
        %v2025 = vmul.f32 %v2022, %v2024
        %v2026 = vadd.f32 %v1986, %v2025
        %s2027 = sld [smem:[#allocation8 + $0x105]]
        %v2028 = vstv %s2027
        %v2029 = vmul.f32 %v2022, %v2028
        %v2030 = vadd.f32 %v1990, %v2029
        %s2031 = sld [smem:[#allocation8 + $0x106]]
        %v2032 = vstv %s2031
        %v2033 = vmul.f32 %v2022, %v2032
        %v2034 = vadd.f32 %v1994, %v2033
        %s2035 = sld [smem:[#allocation8 + $0x107]]
        %v2036 = vstv %s2035
        %v2037 = vmul.f32 %v2022, %v2036
        %v2038 = vadd.f32 %v1998, %v2037
        %s2039 = sld [smem:[#allocation8 + $0x108]]
        %v2040 = vstv %s2039
        %v2041 = vmul.f32 %v2022, %v2040
        %v2042 = vadd.f32 %v2002, %v2041
        %s2043 = sld [smem:[#allocation8 + $0x109]]
        %v2044 = vstv %s2043
        %v2045 = vmul.f32 %v2022, %v2044
        %v2046 = vadd.f32 %v2006, %v2045
        %s2047 = sld [smem:[#allocation8 + $0x10a]]
        %v2048 = vstv %s2047
        %v2049 = vmul.f32 %v2022, %v2048
        %v2050 = vadd.f32 %v2010, %v2049
        %s2051 = sld [smem:[#allocation8 + $0x10b]]
        %v2052 = vstv %s2051
        %v2053 = vmul.f32 %v2022, %v2052
        %v2054 = vadd.f32 %v2014, %v2053
        %v2055 = vld [vmem:[%s546] sm:$0xff]
        %v2056 = vmul.f32 %v1927, %v2055
        %v2057 = vrot.slane %v2056, 4
        %v2058 = vadd.f32 %v2056, %v2057
        %v2059 = vrot.slane %v2058, 2
        %v2060 = vadd.f32 %v2058, %v2059
        %v2061 = vrot.slane %v2060, 1
        %v2062 = vadd.f32 %v2060, %v2061
        %s2063 = sld [smem:[#allocation8 + $0x184]]
        %v2064 = vstv %s2063
        %v2065 = vmul.f32 %v2062, %v2064
        %v2066 = vadd.f32 %v2026, %v2065
        %s2067 = sld [smem:[#allocation8 + $0x185]]
        %v2068 = vstv %s2067
        %v2069 = vmul.f32 %v2062, %v2068
        %v2070 = vadd.f32 %v2030, %v2069
        %s2071 = sld [smem:[#allocation8 + $0x186]]
        %v2072 = vstv %s2071
        %v2073 = vmul.f32 %v2062, %v2072
        %v2074 = vadd.f32 %v2034, %v2073
        %s2075 = sld [smem:[#allocation8 + $0x187]]
        %v2076 = vstv %s2075
        %v2077 = vmul.f32 %v2062, %v2076
        %v2078 = vadd.f32 %v2038, %v2077
        %s2079 = sld [smem:[#allocation8 + $0x188]]
        %v2080 = vstv %s2079
        %v2081 = vmul.f32 %v2062, %v2080
        %v2082 = vadd.f32 %v2042, %v2081
        %s2083 = sld [smem:[#allocation8 + $0x189]]
        %v2084 = vstv %s2083
        %v2085 = vmul.f32 %v2062, %v2084
        %v2086 = vadd.f32 %v2046, %v2085
        %s2087 = sld [smem:[#allocation8 + $0x18a]]
        %v2088 = vstv %s2087
        %v2089 = vmul.f32 %v2062, %v2088
        %v2090 = vadd.f32 %v2050, %v2089
        %s2091 = sld [smem:[#allocation8 + $0x18b]]
        %v2092 = vstv %s2091
        %v2093 = vmul.f32 %v2062, %v2092
        %v2094 = vadd.f32 %v2054, %v2093
        %v2095 = vld [vmem:[%s592] sm:$0xff]
        %v2096 = vmul.f32 %v1927, %v2095
        %v2097 = vrot.slane %v2096, 4
        %v2098 = vadd.f32 %v2096, %v2097
        %v2099 = vrot.slane %v2098, 2
        %v2100 = vadd.f32 %v2098, %v2099
        %v2101 = vrot.slane %v2100, 1
        %v2102 = vadd.f32 %v2100, %v2101
        %s2103 = sld [smem:[#allocation8 + $0x204]]
        %v2104 = vstv %s2103
        %v2105 = vmul.f32 %v2102, %v2104
        %v2106 = vadd.f32 %v2066, %v2105
        %s2107 = sld [smem:[#allocation8 + $0x205]]
        %v2108 = vstv %s2107
        %v2109 = vmul.f32 %v2102, %v2108
        %v2110 = vadd.f32 %v2070, %v2109
        %s2111 = sld [smem:[#allocation8 + $0x206]]
        %v2112 = vstv %s2111
        %v2113 = vmul.f32 %v2102, %v2112
        %v2114 = vadd.f32 %v2074, %v2113
        %s2115 = sld [smem:[#allocation8 + $0x207]]
        %v2116 = vstv %s2115
        %v2117 = vmul.f32 %v2102, %v2116
        %v2118 = vadd.f32 %v2078, %v2117
        %s2119 = sld [smem:[#allocation8 + $0x208]]
        %v2120 = vstv %s2119
        %v2121 = vmul.f32 %v2102, %v2120
        %v2122 = vadd.f32 %v2082, %v2121
        %s2123 = sld [smem:[#allocation8 + $0x209]]
        %v2124 = vstv %s2123
        %v2125 = vmul.f32 %v2102, %v2124
        %v2126 = vadd.f32 %v2086, %v2125
        %s2127 = sld [smem:[#allocation8 + $0x20a]]
        %v2128 = vstv %s2127
        %v2129 = vmul.f32 %v2102, %v2128
        %v2130 = vadd.f32 %v2090, %v2129
        %s2131 = sld [smem:[#allocation8 + $0x20b]]
        %v2132 = vstv %s2131
        %v2133 = vmul.f32 %v2102, %v2132
        %v2134 = vadd.f32 %v2094, %v2133
        %v2135 = vld [vmem:[%s638] sm:$0xff]
        %v2136 = vmul.f32 %v1927, %v2135
        %v2137 = vrot.slane %v2136, 4
        %v2138 = vadd.f32 %v2136, %v2137
        %v2139 = vrot.slane %v2138, 2
        %v2140 = vadd.f32 %v2138, %v2139
        %v2141 = vrot.slane %v2140, 1
        %v2142 = vadd.f32 %v2140, %v2141
        %s2143 = sld [smem:[#allocation8 + $0x284]]
        %v2144 = vstv %s2143
        %v2145 = vmul.f32 %v2142, %v2144
        %v2146 = vadd.f32 %v2106, %v2145
        %s2147 = sld [smem:[#allocation8 + $0x285]]
        %v2148 = vstv %s2147
        %v2149 = vmul.f32 %v2142, %v2148
        %v2150 = vadd.f32 %v2110, %v2149
        %s2151 = sld [smem:[#allocation8 + $0x286]]
        %v2152 = vstv %s2151
        %v2153 = vmul.f32 %v2142, %v2152
        %v2154 = vadd.f32 %v2114, %v2153
        %s2155 = sld [smem:[#allocation8 + $0x287]]
        %v2156 = vstv %s2155
        %v2157 = vmul.f32 %v2142, %v2156
        %v2158 = vadd.f32 %v2118, %v2157
        %s2159 = sld [smem:[#allocation8 + $0x288]]
        %v2160 = vstv %s2159
        %v2161 = vmul.f32 %v2142, %v2160
        %v2162 = vadd.f32 %v2122, %v2161
        %s2163 = sld [smem:[#allocation8 + $0x289]]
        %v2164 = vstv %s2163
        %v2165 = vmul.f32 %v2142, %v2164
        %v2166 = vadd.f32 %v2126, %v2165
        %s2167 = sld [smem:[#allocation8 + $0x28a]]
        %v2168 = vstv %s2167
        %v2169 = vmul.f32 %v2142, %v2168
        %v2170 = vadd.f32 %v2130, %v2169
        %s2171 = sld [smem:[#allocation8 + $0x28b]]
        %v2172 = vstv %s2171
        %v2173 = vmul.f32 %v2142, %v2172
        %v2174 = vadd.f32 %v2134, %v2173
        %v2175 = vld [vmem:[%s684] sm:$0xff]
        %v2176 = vmul.f32 %v1927, %v2175
        %v2177 = vrot.slane %v2176, 4
        %v2178 = vadd.f32 %v2176, %v2177
        %v2179 = vrot.slane %v2178, 2
        %v2180 = vadd.f32 %v2178, %v2179
        %v2181 = vrot.slane %v2180, 1
        %v2182 = vadd.f32 %v2180, %v2181
        %s2183 = sld [smem:[#allocation8 + $0x304]]
        %v2184 = vstv %s2183
        %v2185 = vmul.f32 %v2182, %v2184
        %v2186 = vadd.f32 %v2146, %v2185
        %s2187 = sld [smem:[#allocation8 + $0x305]]
        %v2188 = vstv %s2187
        %v2189 = vmul.f32 %v2182, %v2188
        %v2190 = vadd.f32 %v2150, %v2189
        %s2191 = sld [smem:[#allocation8 + $0x306]]
        %v2192 = vstv %s2191
        %v2193 = vmul.f32 %v2182, %v2192
        %v2194 = vadd.f32 %v2154, %v2193
        %s2195 = sld [smem:[#allocation8 + $0x307]]
        %v2196 = vstv %s2195
        %v2197 = vmul.f32 %v2182, %v2196
        %v2198 = vadd.f32 %v2158, %v2197
        %s2199 = sld [smem:[#allocation8 + $0x308]]
        %v2200 = vstv %s2199
        %v2201 = vmul.f32 %v2182, %v2200
        %v2202 = vadd.f32 %v2162, %v2201
        %s2203 = sld [smem:[#allocation8 + $0x309]]
        %v2204 = vstv %s2203
        %v2205 = vmul.f32 %v2182, %v2204
        %v2206 = vadd.f32 %v2166, %v2205
        %s2207 = sld [smem:[#allocation8 + $0x30a]]
        %v2208 = vstv %s2207
        %v2209 = vmul.f32 %v2182, %v2208
        %v2210 = vadd.f32 %v2170, %v2209
        %s2211 = sld [smem:[#allocation8 + $0x30b]]
        %v2212 = vstv %s2211
        %v2213 = vmul.f32 %v2182, %v2212
        %v2214 = vadd.f32 %v2174, %v2213
        %v2215 = vld [vmem:[%s730] sm:$0xff]
        %v2216 = vmul.f32 %v1927, %v2215
        %v2217 = vrot.slane %v2216, 4
        %v2218 = vadd.f32 %v2216, %v2217
        %v2219 = vrot.slane %v2218, 2
        %v2220 = vadd.f32 %v2218, %v2219
        %v2221 = vrot.slane %v2220, 1
        %v2222 = vadd.f32 %v2220, %v2221
        %s2223 = sld [smem:[#allocation8 + $0x384]]
        %v2224 = vstv %s2223
        %v2225 = vmul.f32 %v2222, %v2224
        %v2226 = vadd.f32 %v2186, %v2225
        %s2227 = sld [smem:[#allocation8 + $0x385]]
        %v2228 = vstv %s2227
        %v2229 = vmul.f32 %v2222, %v2228
        %v2230 = vadd.f32 %v2190, %v2229
        %s2231 = sld [smem:[#allocation8 + $0x386]]
        %v2232 = vstv %s2231
        %v2233 = vmul.f32 %v2222, %v2232
        %v2234 = vadd.f32 %v2194, %v2233
        %s2235 = sld [smem:[#allocation8 + $0x387]]
        %v2236 = vstv %s2235
        %v2237 = vmul.f32 %v2222, %v2236
        %v2238 = vadd.f32 %v2198, %v2237
        %s2239 = sld [smem:[#allocation8 + $0x388]]
        %v2240 = vstv %s2239
        %v2241 = vmul.f32 %v2222, %v2240
        %v2242 = vadd.f32 %v2202, %v2241
        %s2243 = sld [smem:[#allocation8 + $0x389]]
        %v2244 = vstv %s2243
        %v2245 = vmul.f32 %v2222, %v2244
        %v2246 = vadd.f32 %v2206, %v2245
        %s2247 = sld [smem:[#allocation8 + $0x38a]]
        %v2248 = vstv %s2247
        %v2249 = vmul.f32 %v2222, %v2248
        %v2250 = vadd.f32 %v2210, %v2249
        %s2251 = sld [smem:[#allocation8 + $0x38b]]
        %v2252 = vstv %s2251
        %v2253 = vmul.f32 %v2222, %v2252
        %v2254 = vadd.f32 %v2214, %v2253
        %v2255 = vld [vmem:[%s776] sm:$0xff]
        %v2256 = vmul.f32 %v1927, %v2255
        %v2257 = vrot.slane %v2256, 4
        %v2258 = vadd.f32 %v2256, %v2257
        %v2259 = vrot.slane %v2258, 2
        %v2260 = vadd.f32 %v2258, %v2259
        %v2261 = vrot.slane %v2260, 1
        %v2262 = vadd.f32 %v2260, %v2261
        %s2263 = sld [smem:[#allocation8 + $0x404]]
        %v2264 = vstv %s2263
        %v2265 = vmul.f32 %v2262, %v2264
        %v2266 = vadd.f32 %v2226, %v2265
        %s2267 = sld [smem:[#allocation8 + $0x405]]
        %v2268 = vstv %s2267
        %v2269 = vmul.f32 %v2262, %v2268
        %v2270 = vadd.f32 %v2230, %v2269
        %s2271 = sld [smem:[#allocation8 + $0x406]]
        %v2272 = vstv %s2271
        %v2273 = vmul.f32 %v2262, %v2272
        %v2274 = vadd.f32 %v2234, %v2273
        %s2275 = sld [smem:[#allocation8 + $0x407]]
        %v2276 = vstv %s2275
        %v2277 = vmul.f32 %v2262, %v2276
        %v2278 = vadd.f32 %v2238, %v2277
        %s2279 = sld [smem:[#allocation8 + $0x408]]
        %v2280 = vstv %s2279
        %v2281 = vmul.f32 %v2262, %v2280
        %v2282 = vadd.f32 %v2242, %v2281
        %s2283 = sld [smem:[#allocation8 + $0x409]]
        %v2284 = vstv %s2283
        %v2285 = vmul.f32 %v2262, %v2284
        %v2286 = vadd.f32 %v2246, %v2285
        %s2287 = sld [smem:[#allocation8 + $0x40a]]
        %v2288 = vstv %s2287
        %v2289 = vmul.f32 %v2262, %v2288
        %v2290 = vadd.f32 %v2250, %v2289
        %s2291 = sld [smem:[#allocation8 + $0x40b]]
        %v2292 = vstv %s2291
        %v2293 = vmul.f32 %v2262, %v2292
        %v2294 = vadd.f32 %v2254, %v2293
        %v2295 = vld [vmem:[%s822] sm:$0xff]
        %v2296 = vmul.f32 %v1927, %v2295
        %v2297 = vrot.slane %v2296, 4
        %v2298 = vadd.f32 %v2296, %v2297
        %v2299 = vrot.slane %v2298, 2
        %v2300 = vadd.f32 %v2298, %v2299
        %v2301 = vrot.slane %v2300, 1
        %v2302 = vadd.f32 %v2300, %v2301
        %s2303 = sld [smem:[#allocation8 + $0x484]]
        %v2304 = vstv %s2303
        %v2305 = vmul.f32 %v2302, %v2304
        %v2306 = vadd.f32 %v2266, %v2305
        %s2307 = sld [smem:[#allocation8 + $0x485]]
        %v2308 = vstv %s2307
        %v2309 = vmul.f32 %v2302, %v2308
        %v2310 = vadd.f32 %v2270, %v2309
        %s2311 = sld [smem:[#allocation8 + $0x486]]
        %v2312 = vstv %s2311
        %v2313 = vmul.f32 %v2302, %v2312
        %v2314 = vadd.f32 %v2274, %v2313
        %s2315 = sld [smem:[#allocation8 + $0x487]]
        %v2316 = vstv %s2315
        %v2317 = vmul.f32 %v2302, %v2316
        %v2318 = vadd.f32 %v2278, %v2317
        %s2319 = sld [smem:[#allocation8 + $0x488]]
        %v2320 = vstv %s2319
        %v2321 = vmul.f32 %v2302, %v2320
        %v2322 = vadd.f32 %v2282, %v2321
        %s2323 = sld [smem:[#allocation8 + $0x489]]
        %v2324 = vstv %s2323
        %v2325 = vmul.f32 %v2302, %v2324
        %v2326 = vadd.f32 %v2286, %v2325
        %s2327 = sld [smem:[#allocation8 + $0x48a]]
        %v2328 = vstv %s2327
        %v2329 = vmul.f32 %v2302, %v2328
        %v2330 = vadd.f32 %v2290, %v2329
        %s2331 = sld [smem:[#allocation8 + $0x48b]]
        %v2332 = vstv %s2331
        %v2333 = vmul.f32 %v2302, %v2332
        %v2334 = vadd.f32 %v2294, %v2333
        %v2335 = vld [vmem:[%s868] sm:$0xff]
        %v2336 = vmul.f32 %v1927, %v2335
        %v2337 = vrot.slane %v2336, 4
        %v2338 = vadd.f32 %v2336, %v2337
        %v2339 = vrot.slane %v2338, 2
        %v2340 = vadd.f32 %v2338, %v2339
        %v2341 = vrot.slane %v2340, 1
        %v2342 = vadd.f32 %v2340, %v2341
        %s2343 = sld [smem:[#allocation8 + $0x504]]
        %v2344 = vstv %s2343
        %v2345 = vmul.f32 %v2342, %v2344
        %v2346 = vadd.f32 %v2306, %v2345
        %s2347 = sld [smem:[#allocation8 + $0x505]]
        %v2348 = vstv %s2347
        %v2349 = vmul.f32 %v2342, %v2348
        %v2350 = vadd.f32 %v2310, %v2349
        %s2351 = sld [smem:[#allocation8 + $0x506]]
        %v2352 = vstv %s2351
        %v2353 = vmul.f32 %v2342, %v2352
        %v2354 = vadd.f32 %v2314, %v2353
        %s2355 = sld [smem:[#allocation8 + $0x507]]
        %v2356 = vstv %s2355
        %v2357 = vmul.f32 %v2342, %v2356
        %v2358 = vadd.f32 %v2318, %v2357
        %s2359 = sld [smem:[#allocation8 + $0x508]]
        %v2360 = vstv %s2359
        %v2361 = vmul.f32 %v2342, %v2360
        %v2362 = vadd.f32 %v2322, %v2361
        %s2363 = sld [smem:[#allocation8 + $0x509]]
        %v2364 = vstv %s2363
        %v2365 = vmul.f32 %v2342, %v2364
        %v2366 = vadd.f32 %v2326, %v2365
        %s2367 = sld [smem:[#allocation8 + $0x50a]]
        %v2368 = vstv %s2367
        %v2369 = vmul.f32 %v2342, %v2368
        %v2370 = vadd.f32 %v2330, %v2369
        %s2371 = sld [smem:[#allocation8 + $0x50b]]
        %v2372 = vstv %s2371
        %v2373 = vmul.f32 %v2342, %v2372
        %v2374 = vadd.f32 %v2334, %v2373
        %v2375 = vld [vmem:[%s914] sm:$0xff]
        %v2376 = vmul.f32 %v1927, %v2375
        %v2377 = vrot.slane %v2376, 4
        %v2378 = vadd.f32 %v2376, %v2377
        %v2379 = vrot.slane %v2378, 2
        %v2380 = vadd.f32 %v2378, %v2379
        %v2381 = vrot.slane %v2380, 1
        %v2382 = vadd.f32 %v2380, %v2381
        %s2383 = sld [smem:[#allocation8 + $0x584]]
        %v2384 = vstv %s2383
        %v2385 = vmul.f32 %v2382, %v2384
        %v2386 = vadd.f32 %v2346, %v2385
        %s2387 = sld [smem:[#allocation8 + $0x585]]
        %v2388 = vstv %s2387
        %v2389 = vmul.f32 %v2382, %v2388
        %v2390 = vadd.f32 %v2350, %v2389
        %s2391 = sld [smem:[#allocation8 + $0x586]]
        %v2392 = vstv %s2391
        %v2393 = vmul.f32 %v2382, %v2392
        %v2394 = vadd.f32 %v2354, %v2393
        %s2395 = sld [smem:[#allocation8 + $0x587]]
        %v2396 = vstv %s2395
        %v2397 = vmul.f32 %v2382, %v2396
        %v2398 = vadd.f32 %v2358, %v2397
        %s2399 = sld [smem:[#allocation8 + $0x588]]
        %v2400 = vstv %s2399
        %v2401 = vmul.f32 %v2382, %v2400
        %v2402 = vadd.f32 %v2362, %v2401
        %s2403 = sld [smem:[#allocation8 + $0x589]]
        %v2404 = vstv %s2403
        %v2405 = vmul.f32 %v2382, %v2404
        %v2406 = vadd.f32 %v2366, %v2405
        %s2407 = sld [smem:[#allocation8 + $0x58a]]
        %v2408 = vstv %s2407
        %v2409 = vmul.f32 %v2382, %v2408
        %v2410 = vadd.f32 %v2370, %v2409
        %s2411 = sld [smem:[#allocation8 + $0x58b]]
        %v2412 = vstv %s2411
        %v2413 = vmul.f32 %v2382, %v2412
        %v2414 = vadd.f32 %v2374, %v2413
        %v2415 = vld [vmem:[%s960] sm:$0xff]
        %v2416 = vmul.f32 %v1927, %v2415
        %v2417 = vrot.slane %v2416, 4
        %v2418 = vadd.f32 %v2416, %v2417
        %v2419 = vrot.slane %v2418, 2
        %v2420 = vadd.f32 %v2418, %v2419
        %v2421 = vrot.slane %v2420, 1
        %v2422 = vadd.f32 %v2420, %v2421
        %s2423 = sld [smem:[#allocation8 + $0x604]]
        %v2424 = vstv %s2423
        %v2425 = vmul.f32 %v2422, %v2424
        %v2426 = vadd.f32 %v2386, %v2425
        %s2427 = sld [smem:[#allocation8 + $0x605]]
        %v2428 = vstv %s2427
        %v2429 = vmul.f32 %v2422, %v2428
        %v2430 = vadd.f32 %v2390, %v2429
        %s2431 = sld [smem:[#allocation8 + $0x606]]
        %v2432 = vstv %s2431
        %v2433 = vmul.f32 %v2422, %v2432
        %v2434 = vadd.f32 %v2394, %v2433
        %s2435 = sld [smem:[#allocation8 + $0x607]]
        %v2436 = vstv %s2435
        %v2437 = vmul.f32 %v2422, %v2436
        %v2438 = vadd.f32 %v2398, %v2437
        %s2439 = sld [smem:[#allocation8 + $0x608]]
        %v2440 = vstv %s2439
        %v2441 = vmul.f32 %v2422, %v2440
        %v2442 = vadd.f32 %v2402, %v2441
        %s2443 = sld [smem:[#allocation8 + $0x609]]
        %v2444 = vstv %s2443
        %v2445 = vmul.f32 %v2422, %v2444
        %v2446 = vadd.f32 %v2406, %v2445
        %s2447 = sld [smem:[#allocation8 + $0x60a]]
        %v2448 = vstv %s2447
        %v2449 = vmul.f32 %v2422, %v2448
        %v2450 = vadd.f32 %v2410, %v2449
        %s2451 = sld [smem:[#allocation8 + $0x60b]]
        %v2452 = vstv %s2451
        %v2453 = vmul.f32 %v2422, %v2452
        %v2454 = vadd.f32 %v2414, %v2453
        %v2455 = vld [vmem:[%s1006] sm:$0xff]
        %v2456 = vmul.f32 %v1927, %v2455
        %v2457 = vrot.slane %v2456, 4
        %v2458 = vadd.f32 %v2456, %v2457
        %v2459 = vrot.slane %v2458, 2
        %v2460 = vadd.f32 %v2458, %v2459
        %v2461 = vrot.slane %v2460, 1
        %v2462 = vadd.f32 %v2460, %v2461
        %s2463 = sld [smem:[#allocation8 + $0x684]]
        %v2464 = vstv %s2463
        %v2465 = vmul.f32 %v2462, %v2464
        %v2466 = vadd.f32 %v2426, %v2465
        %s2467 = sld [smem:[#allocation8 + $0x685]]
        %v2468 = vstv %s2467
        %v2469 = vmul.f32 %v2462, %v2468
        %v2470 = vadd.f32 %v2430, %v2469
        %s2471 = sld [smem:[#allocation8 + $0x686]]
        %v2472 = vstv %s2471
        %v2473 = vmul.f32 %v2462, %v2472
        %v2474 = vadd.f32 %v2434, %v2473
        %s2475 = sld [smem:[#allocation8 + $0x687]]
        %v2476 = vstv %s2475
        %v2477 = vmul.f32 %v2462, %v2476
        %v2478 = vadd.f32 %v2438, %v2477
        %s2479 = sld [smem:[#allocation8 + $0x688]]
        %v2480 = vstv %s2479
        %v2481 = vmul.f32 %v2462, %v2480
        %v2482 = vadd.f32 %v2442, %v2481
        %s2483 = sld [smem:[#allocation8 + $0x689]]
        %v2484 = vstv %s2483
        %v2485 = vmul.f32 %v2462, %v2484
        %v2486 = vadd.f32 %v2446, %v2485
        %s2487 = sld [smem:[#allocation8 + $0x68a]]
        %v2488 = vstv %s2487
        %v2489 = vmul.f32 %v2462, %v2488
        %v2490 = vadd.f32 %v2450, %v2489
        %s2491 = sld [smem:[#allocation8 + $0x68b]]
        %v2492 = vstv %s2491
        %v2493 = vmul.f32 %v2462, %v2492
        %v2494 = vadd.f32 %v2454, %v2493
        %v2495 = vld [vmem:[%s1052] sm:$0xff]
        %v2496 = vmul.f32 %v1927, %v2495
        %v2497 = vrot.slane %v2496, 4
        %v2498 = vadd.f32 %v2496, %v2497
        %v2499 = vrot.slane %v2498, 2
        %v2500 = vadd.f32 %v2498, %v2499
        %v2501 = vrot.slane %v2500, 1
        %v2502 = vadd.f32 %v2500, %v2501
        %s2503 = sld [smem:[#allocation8 + $0x704]]
        %v2504 = vstv %s2503
        %v2505 = vmul.f32 %v2502, %v2504
        %v2506 = vadd.f32 %v2466, %v2505
        %s2507 = sld [smem:[#allocation8 + $0x705]]
        %v2508 = vstv %s2507
        %v2509 = vmul.f32 %v2502, %v2508
        %v2510 = vadd.f32 %v2470, %v2509
        %s2511 = sld [smem:[#allocation8 + $0x706]]
        %v2512 = vstv %s2511
        %v2513 = vmul.f32 %v2502, %v2512
        %v2514 = vadd.f32 %v2474, %v2513
        %s2515 = sld [smem:[#allocation8 + $0x707]]
        %v2516 = vstv %s2515
        %v2517 = vmul.f32 %v2502, %v2516
        %v2518 = vadd.f32 %v2478, %v2517
        %s2519 = sld [smem:[#allocation8 + $0x708]]
        %v2520 = vstv %s2519
        %v2521 = vmul.f32 %v2502, %v2520
        %v2522 = vadd.f32 %v2482, %v2521
        %s2523 = sld [smem:[#allocation8 + $0x709]]
        %v2524 = vstv %s2523
        %v2525 = vmul.f32 %v2502, %v2524
        %v2526 = vadd.f32 %v2486, %v2525
        %s2527 = sld [smem:[#allocation8 + $0x70a]]
        %v2528 = vstv %s2527
        %v2529 = vmul.f32 %v2502, %v2528
        %v2530 = vadd.f32 %v2490, %v2529
        %s2531 = sld [smem:[#allocation8 + $0x70b]]
        %v2532 = vstv %s2531
        %v2533 = vmul.f32 %v2502, %v2532
        %v2534 = vadd.f32 %v2494, %v2533
        %v2535 = vld [vmem:[%s1098] sm:$0xff]
        %v2536 = vmul.f32 %v1927, %v2535
        %v2537 = vrot.slane %v2536, 4
        %v2538 = vadd.f32 %v2536, %v2537
        %v2539 = vrot.slane %v2538, 2
        %v2540 = vadd.f32 %v2538, %v2539
        %v2541 = vrot.slane %v2540, 1
        %v2542 = vadd.f32 %v2540, %v2541
        %s2543 = sld [smem:[#allocation8 + $0x784]]
        %v2544 = vstv %s2543
        %v2545 = vmul.f32 %v2542, %v2544
        %v2546 = vadd.f32 %v2506, %v2545
        %s2547 = sld [smem:[#allocation8 + $0x785]]
        %v2548 = vstv %s2547
        %v2549 = vmul.f32 %v2542, %v2548
        %v2550 = vadd.f32 %v2510, %v2549
        %s2551 = sld [smem:[#allocation8 + $0x786]]
        %v2552 = vstv %s2551
        %v2553 = vmul.f32 %v2542, %v2552
        %v2554 = vadd.f32 %v2514, %v2553
        %s2555 = sld [smem:[#allocation8 + $0x787]]
        %v2556 = vstv %s2555
        %v2557 = vmul.f32 %v2542, %v2556
        %v2558 = vadd.f32 %v2518, %v2557
        %s2559 = sld [smem:[#allocation8 + $0x788]]
        %v2560 = vstv %s2559
        %v2561 = vmul.f32 %v2542, %v2560
        %v2562 = vadd.f32 %v2522, %v2561
        %s2563 = sld [smem:[#allocation8 + $0x789]]
        %v2564 = vstv %s2563
        %v2565 = vmul.f32 %v2542, %v2564
        %v2566 = vadd.f32 %v2526, %v2565
        %s2567 = sld [smem:[#allocation8 + $0x78a]]
        %v2568 = vstv %s2567
        %v2569 = vmul.f32 %v2542, %v2568
        %v2570 = vadd.f32 %v2530, %v2569
        %s2571 = sld [smem:[#allocation8 + $0x78b]]
        %v2572 = vstv %s2571
        %v2573 = vmul.f32 %v2542, %v2572
        %v2574 = vadd.f32 %v2534, %v2573
        %v2575 = vld [vmem:[%s1144] sm:$0xff]
        %v2576 = vmul.f32 %v1927, %v2575
        %v2577 = vrot.slane %v2576, 4
        %v2578 = vadd.f32 %v2576, %v2577
        %v2579 = vrot.slane %v2578, 2
        %v2580 = vadd.f32 %v2578, %v2579
        %v2581 = vrot.slane %v2580, 1
        %v2582 = vadd.f32 %v2580, %v2581
        %s2583 = sld [smem:[#allocation8 + $0x804]]
        %v2584 = vstv %s2583
        %v2585 = vmul.f32 %v2582, %v2584
        %v2586 = vadd.f32 %v2546, %v2585
        %s2587 = sld [smem:[#allocation8 + $0x805]]
        %v2588 = vstv %s2587
        %v2589 = vmul.f32 %v2582, %v2588
        %v2590 = vadd.f32 %v2550, %v2589
        %s2591 = sld [smem:[#allocation8 + $0x806]]
        %v2592 = vstv %s2591
        %v2593 = vmul.f32 %v2582, %v2592
        %v2594 = vadd.f32 %v2554, %v2593
        %s2595 = sld [smem:[#allocation8 + $0x807]]
        %v2596 = vstv %s2595
        %v2597 = vmul.f32 %v2582, %v2596
        %v2598 = vadd.f32 %v2558, %v2597
        %s2599 = sld [smem:[#allocation8 + $0x808]]
        %v2600 = vstv %s2599
        %v2601 = vmul.f32 %v2582, %v2600
        %v2602 = vadd.f32 %v2562, %v2601
        %s2603 = sld [smem:[#allocation8 + $0x809]]
        %v2604 = vstv %s2603
        %v2605 = vmul.f32 %v2582, %v2604
        %v2606 = vadd.f32 %v2566, %v2605
        %s2607 = sld [smem:[#allocation8 + $0x80a]]
        %v2608 = vstv %s2607
        %v2609 = vmul.f32 %v2582, %v2608
        %v2610 = vadd.f32 %v2570, %v2609
        %s2611 = sld [smem:[#allocation8 + $0x80b]]
        %v2612 = vstv %s2611
        %v2613 = vmul.f32 %v2582, %v2612
        %v2614 = vadd.f32 %v2574, %v2613
        %v2615 = vld [vmem:[%s1190] sm:$0xff]
        %v2616 = vmul.f32 %v1927, %v2615
        %v2617 = vrot.slane %v2616, 4
        %v2618 = vadd.f32 %v2616, %v2617
        %v2619 = vrot.slane %v2618, 2
        %v2620 = vadd.f32 %v2618, %v2619
        %v2621 = vrot.slane %v2620, 1
        %v2622 = vadd.f32 %v2620, %v2621
        %s2623 = sld [smem:[#allocation8 + $0x884]]
        %v2624 = vstv %s2623
        %v2625 = vmul.f32 %v2622, %v2624
        %v2626 = vadd.f32 %v2586, %v2625
        %s2627 = sld [smem:[#allocation8 + $0x885]]
        %v2628 = vstv %s2627
        %v2629 = vmul.f32 %v2622, %v2628
        %v2630 = vadd.f32 %v2590, %v2629
        %s2631 = sld [smem:[#allocation8 + $0x886]]
        %v2632 = vstv %s2631
        %v2633 = vmul.f32 %v2622, %v2632
        %v2634 = vadd.f32 %v2594, %v2633
        %s2635 = sld [smem:[#allocation8 + $0x887]]
        %v2636 = vstv %s2635
        %v2637 = vmul.f32 %v2622, %v2636
        %v2638 = vadd.f32 %v2598, %v2637
        %s2639 = sld [smem:[#allocation8 + $0x888]]
        %v2640 = vstv %s2639
        %v2641 = vmul.f32 %v2622, %v2640
        %v2642 = vadd.f32 %v2602, %v2641
        %s2643 = sld [smem:[#allocation8 + $0x889]]
        %v2644 = vstv %s2643
        %v2645 = vmul.f32 %v2622, %v2644
        %v2646 = vadd.f32 %v2606, %v2645
        %s2647 = sld [smem:[#allocation8 + $0x88a]]
        %v2648 = vstv %s2647
        %v2649 = vmul.f32 %v2622, %v2648
        %v2650 = vadd.f32 %v2610, %v2649
        %s2651 = sld [smem:[#allocation8 + $0x88b]]
        %v2652 = vstv %s2651
        %v2653 = vmul.f32 %v2622, %v2652
        %v2654 = vadd.f32 %v2614, %v2653
        %v2655 = vld [vmem:[%s1236] sm:$0xff]
        %v2656 = vmul.f32 %v1927, %v2655
        %v2657 = vrot.slane %v2656, 4
        %v2658 = vadd.f32 %v2656, %v2657
        %v2659 = vrot.slane %v2658, 2
        %v2660 = vadd.f32 %v2658, %v2659
        %v2661 = vrot.slane %v2660, 1
        %v2662 = vadd.f32 %v2660, %v2661
        %s2663 = sld [smem:[#allocation8 + $0x904]]
        %v2664 = vstv %s2663
        %v2665 = vmul.f32 %v2662, %v2664
        %v2666 = vadd.f32 %v2626, %v2665
        %s2667 = sld [smem:[#allocation8 + $0x905]]
        %v2668 = vstv %s2667
        %v2669 = vmul.f32 %v2662, %v2668
        %v2670 = vadd.f32 %v2630, %v2669
        %s2671 = sld [smem:[#allocation8 + $0x906]]
        %v2672 = vstv %s2671
        %v2673 = vmul.f32 %v2662, %v2672
        %v2674 = vadd.f32 %v2634, %v2673
        %s2675 = sld [smem:[#allocation8 + $0x907]]
        %v2676 = vstv %s2675
        %v2677 = vmul.f32 %v2662, %v2676
        %v2678 = vadd.f32 %v2638, %v2677
        %s2679 = sld [smem:[#allocation8 + $0x908]]
        %v2680 = vstv %s2679
        %v2681 = vmul.f32 %v2662, %v2680
        %v2682 = vadd.f32 %v2642, %v2681
        %s2683 = sld [smem:[#allocation8 + $0x909]]
        %v2684 = vstv %s2683
        %v2685 = vmul.f32 %v2662, %v2684
        %v2686 = vadd.f32 %v2646, %v2685
        %s2687 = sld [smem:[#allocation8 + $0x90a]]
        %v2688 = vstv %s2687
        %v2689 = vmul.f32 %v2662, %v2688
        %v2690 = vadd.f32 %v2650, %v2689
        %s2691 = sld [smem:[#allocation8 + $0x90b]]
        %v2692 = vstv %s2691
        %v2693 = vmul.f32 %v2662, %v2692
        %v2694 = vadd.f32 %v2654, %v2693
        %v2695 = vld [vmem:[%s1282] sm:$0xff]
        %v2696 = vmul.f32 %v1927, %v2695
        %v2697 = vrot.slane %v2696, 4
        %v2698 = vadd.f32 %v2696, %v2697
        %v2699 = vrot.slane %v2698, 2
        %v2700 = vadd.f32 %v2698, %v2699
        %v2701 = vrot.slane %v2700, 1
        %v2702 = vadd.f32 %v2700, %v2701
        %s2703 = sld [smem:[#allocation8 + $0x984]]
        %v2704 = vstv %s2703
        %v2705 = vmul.f32 %v2702, %v2704
        %v2706 = vadd.f32 %v2666, %v2705
        %s2707 = sld [smem:[#allocation8 + $0x985]]
        %v2708 = vstv %s2707
        %v2709 = vmul.f32 %v2702, %v2708
        %v2710 = vadd.f32 %v2670, %v2709
        %s2711 = sld [smem:[#allocation8 + $0x986]]
        %v2712 = vstv %s2711
        %v2713 = vmul.f32 %v2702, %v2712
        %v2714 = vadd.f32 %v2674, %v2713
        %s2715 = sld [smem:[#allocation8 + $0x987]]
        %v2716 = vstv %s2715
        %v2717 = vmul.f32 %v2702, %v2716
        %v2718 = vadd.f32 %v2678, %v2717
        %s2719 = sld [smem:[#allocation8 + $0x988]]
        %v2720 = vstv %s2719
        %v2721 = vmul.f32 %v2702, %v2720
        %v2722 = vadd.f32 %v2682, %v2721
        %s2723 = sld [smem:[#allocation8 + $0x989]]
        %v2724 = vstv %s2723
        %v2725 = vmul.f32 %v2702, %v2724
        %v2726 = vadd.f32 %v2686, %v2725
        %s2727 = sld [smem:[#allocation8 + $0x98a]]
        %v2728 = vstv %s2727
        %v2729 = vmul.f32 %v2702, %v2728
        %v2730 = vadd.f32 %v2690, %v2729
        %s2731 = sld [smem:[#allocation8 + $0x98b]]
        %v2732 = vstv %s2731
        %v2733 = vmul.f32 %v2702, %v2732
        %v2734 = vadd.f32 %v2694, %v2733
        %v2735 = vld [vmem:[%s1328] sm:$0xff]
        %v2736 = vmul.f32 %v1927, %v2735
        %v2737 = vrot.slane %v2736, 4
        %v2738 = vadd.f32 %v2736, %v2737
        %v2739 = vrot.slane %v2738, 2
        %v2740 = vadd.f32 %v2738, %v2739
        %v2741 = vrot.slane %v2740, 1
        %v2742 = vadd.f32 %v2740, %v2741
        %s2743 = sld [smem:[#allocation8 + $0xa04]]
        %v2744 = vstv %s2743
        %v2745 = vmul.f32 %v2742, %v2744
        %v2746 = vadd.f32 %v2706, %v2745
        %s2747 = sld [smem:[#allocation8 + $0xa05]]
        %v2748 = vstv %s2747
        %v2749 = vmul.f32 %v2742, %v2748
        %v2750 = vadd.f32 %v2710, %v2749
        %s2751 = sld [smem:[#allocation8 + $0xa06]]
        %v2752 = vstv %s2751
        %v2753 = vmul.f32 %v2742, %v2752
        %v2754 = vadd.f32 %v2714, %v2753
        %s2755 = sld [smem:[#allocation8 + $0xa07]]
        %v2756 = vstv %s2755
        %v2757 = vmul.f32 %v2742, %v2756
        %v2758 = vadd.f32 %v2718, %v2757
        %s2759 = sld [smem:[#allocation8 + $0xa08]]
        %v2760 = vstv %s2759
        %v2761 = vmul.f32 %v2742, %v2760
        %v2762 = vadd.f32 %v2722, %v2761
        %s2763 = sld [smem:[#allocation8 + $0xa09]]
        %v2764 = vstv %s2763
        %v2765 = vmul.f32 %v2742, %v2764
        %v2766 = vadd.f32 %v2726, %v2765
        %s2767 = sld [smem:[#allocation8 + $0xa0a]]
        %v2768 = vstv %s2767
        %v2769 = vmul.f32 %v2742, %v2768
        %v2770 = vadd.f32 %v2730, %v2769
        %s2771 = sld [smem:[#allocation8 + $0xa0b]]
        %v2772 = vstv %s2771
        %v2773 = vmul.f32 %v2742, %v2772
        %v2774 = vadd.f32 %v2734, %v2773
        %v2775 = vld [vmem:[%s1374] sm:$0xff]
        %v2776 = vmul.f32 %v1927, %v2775
        %v2777 = vrot.slane %v2776, 4
        %v2778 = vadd.f32 %v2776, %v2777
        %v2779 = vrot.slane %v2778, 2
        %v2780 = vadd.f32 %v2778, %v2779
        %v2781 = vrot.slane %v2780, 1
        %v2782 = vadd.f32 %v2780, %v2781
        %s2783 = sld [smem:[#allocation8 + $0xa84]]
        %v2784 = vstv %s2783
        %v2785 = vmul.f32 %v2782, %v2784
        %v2786 = vadd.f32 %v2746, %v2785
        %s2787 = sld [smem:[#allocation8 + $0xa85]]
        %v2788 = vstv %s2787
        %v2789 = vmul.f32 %v2782, %v2788
        %v2790 = vadd.f32 %v2750, %v2789
        %s2791 = sld [smem:[#allocation8 + $0xa86]]
        %v2792 = vstv %s2791
        %v2793 = vmul.f32 %v2782, %v2792
        %v2794 = vadd.f32 %v2754, %v2793
        %s2795 = sld [smem:[#allocation8 + $0xa87]]
        %v2796 = vstv %s2795
        %v2797 = vmul.f32 %v2782, %v2796
        %v2798 = vadd.f32 %v2758, %v2797
        %s2799 = sld [smem:[#allocation8 + $0xa88]]
        %v2800 = vstv %s2799
        %v2801 = vmul.f32 %v2782, %v2800
        %v2802 = vadd.f32 %v2762, %v2801
        %s2803 = sld [smem:[#allocation8 + $0xa89]]
        %v2804 = vstv %s2803
        %v2805 = vmul.f32 %v2782, %v2804
        %v2806 = vadd.f32 %v2766, %v2805
        %s2807 = sld [smem:[#allocation8 + $0xa8a]]
        %v2808 = vstv %s2807
        %v2809 = vmul.f32 %v2782, %v2808
        %v2810 = vadd.f32 %v2770, %v2809
        %s2811 = sld [smem:[#allocation8 + $0xa8b]]
        %v2812 = vstv %s2811
        %v2813 = vmul.f32 %v2782, %v2812
        %v2814 = vadd.f32 %v2774, %v2813
        %v2815 = vld [vmem:[%s1420] sm:$0xff]
        %v2816 = vmul.f32 %v1927, %v2815
        %v2817 = vrot.slane %v2816, 4
        %v2818 = vadd.f32 %v2816, %v2817
        %v2819 = vrot.slane %v2818, 2
        %v2820 = vadd.f32 %v2818, %v2819
        %v2821 = vrot.slane %v2820, 1
        %v2822 = vadd.f32 %v2820, %v2821
        %s2823 = sld [smem:[#allocation8 + $0xb04]]
        %v2824 = vstv %s2823
        %v2825 = vmul.f32 %v2822, %v2824
        %v2826 = vadd.f32 %v2786, %v2825
        %s2827 = sld [smem:[#allocation8 + $0xb05]]
        %v2828 = vstv %s2827
        %v2829 = vmul.f32 %v2822, %v2828
        %v2830 = vadd.f32 %v2790, %v2829
        %s2831 = sld [smem:[#allocation8 + $0xb06]]
        %v2832 = vstv %s2831
        %v2833 = vmul.f32 %v2822, %v2832
        %v2834 = vadd.f32 %v2794, %v2833
        %s2835 = sld [smem:[#allocation8 + $0xb07]]
        %v2836 = vstv %s2835
        %v2837 = vmul.f32 %v2822, %v2836
        %v2838 = vadd.f32 %v2798, %v2837
        %s2839 = sld [smem:[#allocation8 + $0xb08]]
        %v2840 = vstv %s2839
        %v2841 = vmul.f32 %v2822, %v2840
        %v2842 = vadd.f32 %v2802, %v2841
        %s2843 = sld [smem:[#allocation8 + $0xb09]]
        %v2844 = vstv %s2843
        %v2845 = vmul.f32 %v2822, %v2844
        %v2846 = vadd.f32 %v2806, %v2845
        %s2847 = sld [smem:[#allocation8 + $0xb0a]]
        %v2848 = vstv %s2847
        %v2849 = vmul.f32 %v2822, %v2848
        %v2850 = vadd.f32 %v2810, %v2849
        %s2851 = sld [smem:[#allocation8 + $0xb0b]]
        %v2852 = vstv %s2851
        %v2853 = vmul.f32 %v2822, %v2852
        %v2854 = vadd.f32 %v2814, %v2853
        %v2855 = vld [vmem:[%s1466] sm:$0xff]
        %v2856 = vmul.f32 %v1927, %v2855
        %v2857 = vrot.slane %v2856, 4
        %v2858 = vadd.f32 %v2856, %v2857
        %v2859 = vrot.slane %v2858, 2
        %v2860 = vadd.f32 %v2858, %v2859
        %v2861 = vrot.slane %v2860, 1
        %v2862 = vadd.f32 %v2860, %v2861
        %s2863 = sld [smem:[#allocation8 + $0xb84]]
        %v2864 = vstv %s2863
        %v2865 = vmul.f32 %v2862, %v2864
        %v2866 = vadd.f32 %v2826, %v2865
        %s2867 = sld [smem:[#allocation8 + $0xb85]]
        %v2868 = vstv %s2867
        %v2869 = vmul.f32 %v2862, %v2868
        %v2870 = vadd.f32 %v2830, %v2869
        %s2871 = sld [smem:[#allocation8 + $0xb86]]
        %v2872 = vstv %s2871
        %v2873 = vmul.f32 %v2862, %v2872
        %v2874 = vadd.f32 %v2834, %v2873
        %s2875 = sld [smem:[#allocation8 + $0xb87]]
        %v2876 = vstv %s2875
        %v2877 = vmul.f32 %v2862, %v2876
        %v2878 = vadd.f32 %v2838, %v2877
        %s2879 = sld [smem:[#allocation8 + $0xb88]]
        %v2880 = vstv %s2879
        %v2881 = vmul.f32 %v2862, %v2880
        %v2882 = vadd.f32 %v2842, %v2881
        %s2883 = sld [smem:[#allocation8 + $0xb89]]
        %v2884 = vstv %s2883
        %v2885 = vmul.f32 %v2862, %v2884
        %v2886 = vadd.f32 %v2846, %v2885
        %s2887 = sld [smem:[#allocation8 + $0xb8a]]
        %v2888 = vstv %s2887
        %v2889 = vmul.f32 %v2862, %v2888
        %v2890 = vadd.f32 %v2850, %v2889
        %s2891 = sld [smem:[#allocation8 + $0xb8b]]
        %v2892 = vstv %s2891
        %v2893 = vmul.f32 %v2862, %v2892
        %v2894 = vadd.f32 %v2854, %v2893
        %v2895 = vld [vmem:[%s1512] sm:$0xff]
        %v2896 = vmul.f32 %v1927, %v2895
        %v2897 = vrot.slane %v2896, 4
        %v2898 = vadd.f32 %v2896, %v2897
        %v2899 = vrot.slane %v2898, 2
        %v2900 = vadd.f32 %v2898, %v2899
        %v2901 = vrot.slane %v2900, 1
        %v2902 = vadd.f32 %v2900, %v2901
        %s2903 = sld [smem:[#allocation8 + $0xc04]]
        %v2904 = vstv %s2903
        %v2905 = vmul.f32 %v2902, %v2904
        %v2906 = vadd.f32 %v2866, %v2905
        %s2907 = sld [smem:[#allocation8 + $0xc05]]
        %v2908 = vstv %s2907
        %v2909 = vmul.f32 %v2902, %v2908
        %v2910 = vadd.f32 %v2870, %v2909
        %s2911 = sld [smem:[#allocation8 + $0xc06]]
        %v2912 = vstv %s2911
        %v2913 = vmul.f32 %v2902, %v2912
        %v2914 = vadd.f32 %v2874, %v2913
        %s2915 = sld [smem:[#allocation8 + $0xc07]]
        %v2916 = vstv %s2915
        %v2917 = vmul.f32 %v2902, %v2916
        %v2918 = vadd.f32 %v2878, %v2917
        %s2919 = sld [smem:[#allocation8 + $0xc08]]
        %v2920 = vstv %s2919
        %v2921 = vmul.f32 %v2902, %v2920
        %v2922 = vadd.f32 %v2882, %v2921
        %s2923 = sld [smem:[#allocation8 + $0xc09]]
        %v2924 = vstv %s2923
        %v2925 = vmul.f32 %v2902, %v2924
        %v2926 = vadd.f32 %v2886, %v2925
        %s2927 = sld [smem:[#allocation8 + $0xc0a]]
        %v2928 = vstv %s2927
        %v2929 = vmul.f32 %v2902, %v2928
        %v2930 = vadd.f32 %v2890, %v2929
        %s2931 = sld [smem:[#allocation8 + $0xc0b]]
        %v2932 = vstv %s2931
        %v2933 = vmul.f32 %v2902, %v2932
        %v2934 = vadd.f32 %v2894, %v2933
        %v2935 = vld [vmem:[%s1558] sm:$0xff]
        %v2936 = vmul.f32 %v1927, %v2935
        %v2937 = vrot.slane %v2936, 4
        %v2938 = vadd.f32 %v2936, %v2937
        %v2939 = vrot.slane %v2938, 2
        %v2940 = vadd.f32 %v2938, %v2939
        %v2941 = vrot.slane %v2940, 1
        %v2942 = vadd.f32 %v2940, %v2941
        %s2943 = sld [smem:[#allocation8 + $0xc84]]
        %v2944 = vstv %s2943
        %v2945 = vmul.f32 %v2942, %v2944
        %v2946 = vadd.f32 %v2906, %v2945
        %s2947 = sld [smem:[#allocation8 + $0xc85]]
        %v2948 = vstv %s2947
        %v2949 = vmul.f32 %v2942, %v2948
        %v2950 = vadd.f32 %v2910, %v2949
        %s2951 = sld [smem:[#allocation8 + $0xc86]]
        %v2952 = vstv %s2951
        %v2953 = vmul.f32 %v2942, %v2952
        %v2954 = vadd.f32 %v2914, %v2953
        %s2955 = sld [smem:[#allocation8 + $0xc87]]
        %v2956 = vstv %s2955
        %v2957 = vmul.f32 %v2942, %v2956
        %v2958 = vadd.f32 %v2918, %v2957
        %s2959 = sld [smem:[#allocation8 + $0xc88]]
        %v2960 = vstv %s2959
        %v2961 = vmul.f32 %v2942, %v2960
        %v2962 = vadd.f32 %v2922, %v2961
        %s2963 = sld [smem:[#allocation8 + $0xc89]]
        %v2964 = vstv %s2963
        %v2965 = vmul.f32 %v2942, %v2964
        %v2966 = vadd.f32 %v2926, %v2965
        %s2967 = sld [smem:[#allocation8 + $0xc8a]]
        %v2968 = vstv %s2967
        %v2969 = vmul.f32 %v2942, %v2968
        %v2970 = vadd.f32 %v2930, %v2969
        %s2971 = sld [smem:[#allocation8 + $0xc8b]]
        %v2972 = vstv %s2971
        %v2973 = vmul.f32 %v2942, %v2972
        %v2974 = vadd.f32 %v2934, %v2973
        %v2975 = vld [vmem:[%s1604] sm:$0xff]
        %v2976 = vmul.f32 %v1927, %v2975
        %v2977 = vrot.slane %v2976, 4
        %v2978 = vadd.f32 %v2976, %v2977
        %v2979 = vrot.slane %v2978, 2
        %v2980 = vadd.f32 %v2978, %v2979
        %v2981 = vrot.slane %v2980, 1
        %v2982 = vadd.f32 %v2980, %v2981
        %s2983 = sld [smem:[#allocation8 + $0xd04]]
        %v2984 = vstv %s2983
        %v2985 = vmul.f32 %v2982, %v2984
        %v2986 = vadd.f32 %v2946, %v2985
        %s2987 = sld [smem:[#allocation8 + $0xd05]]
        %v2988 = vstv %s2987
        %v2989 = vmul.f32 %v2982, %v2988
        %v2990 = vadd.f32 %v2950, %v2989
        %s2991 = sld [smem:[#allocation8 + $0xd06]]
        %v2992 = vstv %s2991
        %v2993 = vmul.f32 %v2982, %v2992
        %v2994 = vadd.f32 %v2954, %v2993
        %s2995 = sld [smem:[#allocation8 + $0xd07]]
        %v2996 = vstv %s2995
        %v2997 = vmul.f32 %v2982, %v2996
        %v2998 = vadd.f32 %v2958, %v2997
        %s2999 = sld [smem:[#allocation8 + $0xd08]]
        %v3000 = vstv %s2999
        %v3001 = vmul.f32 %v2982, %v3000
        %v3002 = vadd.f32 %v2962, %v3001
        %s3003 = sld [smem:[#allocation8 + $0xd09]]
        %v3004 = vstv %s3003
        %v3005 = vmul.f32 %v2982, %v3004
        %v3006 = vadd.f32 %v2966, %v3005
        %s3007 = sld [smem:[#allocation8 + $0xd0a]]
        %v3008 = vstv %s3007
        %v3009 = vmul.f32 %v2982, %v3008
        %v3010 = vadd.f32 %v2970, %v3009
        %s3011 = sld [smem:[#allocation8 + $0xd0b]]
        %v3012 = vstv %s3011
        %v3013 = vmul.f32 %v2982, %v3012
        %v3014 = vadd.f32 %v2974, %v3013
        %v3015 = vld [vmem:[%s1650] sm:$0xff]
        %v3016 = vmul.f32 %v1927, %v3015
        %v3017 = vrot.slane %v3016, 4
        %v3018 = vadd.f32 %v3016, %v3017
        %v3019 = vrot.slane %v3018, 2
        %v3020 = vadd.f32 %v3018, %v3019
        %v3021 = vrot.slane %v3020, 1
        %v3022 = vadd.f32 %v3020, %v3021
        %s3023 = sld [smem:[#allocation8 + $0xd84]]
        %v3024 = vstv %s3023
        %v3025 = vmul.f32 %v3022, %v3024
        %v3026 = vadd.f32 %v2986, %v3025
        %s3027 = sld [smem:[#allocation8 + $0xd85]]
        %v3028 = vstv %s3027
        %v3029 = vmul.f32 %v3022, %v3028
        %v3030 = vadd.f32 %v2990, %v3029
        %s3031 = sld [smem:[#allocation8 + $0xd86]]
        %v3032 = vstv %s3031
        %v3033 = vmul.f32 %v3022, %v3032
        %v3034 = vadd.f32 %v2994, %v3033
        %s3035 = sld [smem:[#allocation8 + $0xd87]]
        %v3036 = vstv %s3035
        %v3037 = vmul.f32 %v3022, %v3036
        %v3038 = vadd.f32 %v2998, %v3037
        %s3039 = sld [smem:[#allocation8 + $0xd88]]
        %v3040 = vstv %s3039
        %v3041 = vmul.f32 %v3022, %v3040
        %v3042 = vadd.f32 %v3002, %v3041
        %s3043 = sld [smem:[#allocation8 + $0xd89]]
        %v3044 = vstv %s3043
        %v3045 = vmul.f32 %v3022, %v3044
        %v3046 = vadd.f32 %v3006, %v3045
        %s3047 = sld [smem:[#allocation8 + $0xd8a]]
        %v3048 = vstv %s3047
        %v3049 = vmul.f32 %v3022, %v3048
        %v3050 = vadd.f32 %v3010, %v3049
        %s3051 = sld [smem:[#allocation8 + $0xd8b]]
        %v3052 = vstv %s3051
        %v3053 = vmul.f32 %v3022, %v3052
        %v3054 = vadd.f32 %v3014, %v3053
        %v3055 = vld [vmem:[%s1696] sm:$0xff]
        %v3056 = vmul.f32 %v1927, %v3055
        %v3057 = vrot.slane %v3056, 4
        %v3058 = vadd.f32 %v3056, %v3057
        %v3059 = vrot.slane %v3058, 2
        %v3060 = vadd.f32 %v3058, %v3059
        %v3061 = vrot.slane %v3060, 1
        %v3062 = vadd.f32 %v3060, %v3061
        %s3063 = sld [smem:[#allocation8 + $0xe04]]
        %v3064 = vstv %s3063
        %v3065 = vmul.f32 %v3062, %v3064
        %v3066 = vadd.f32 %v3026, %v3065
        %s3067 = sld [smem:[#allocation8 + $0xe05]]
        %v3068 = vstv %s3067
        %v3069 = vmul.f32 %v3062, %v3068
        %v3070 = vadd.f32 %v3030, %v3069
        %s3071 = sld [smem:[#allocation8 + $0xe06]]
        %v3072 = vstv %s3071
        %v3073 = vmul.f32 %v3062, %v3072
        %v3074 = vadd.f32 %v3034, %v3073
        %s3075 = sld [smem:[#allocation8 + $0xe07]]
        %v3076 = vstv %s3075
        %v3077 = vmul.f32 %v3062, %v3076
        %v3078 = vadd.f32 %v3038, %v3077
        %s3079 = sld [smem:[#allocation8 + $0xe08]]
        %v3080 = vstv %s3079
        %v3081 = vmul.f32 %v3062, %v3080
        %v3082 = vadd.f32 %v3042, %v3081
        %s3083 = sld [smem:[#allocation8 + $0xe09]]
        %v3084 = vstv %s3083
        %v3085 = vmul.f32 %v3062, %v3084
        %v3086 = vadd.f32 %v3046, %v3085
        %s3087 = sld [smem:[#allocation8 + $0xe0a]]
        %v3088 = vstv %s3087
        %v3089 = vmul.f32 %v3062, %v3088
        %v3090 = vadd.f32 %v3050, %v3089
        %s3091 = sld [smem:[#allocation8 + $0xe0b]]
        %v3092 = vstv %s3091
        %v3093 = vmul.f32 %v3062, %v3092
        %v3094 = vadd.f32 %v3054, %v3093
        %v3095 = vld [vmem:[%s1742] sm:$0xff]
        %v3096 = vmul.f32 %v1927, %v3095
        %v3097 = vrot.slane %v3096, 4
        %v3098 = vadd.f32 %v3096, %v3097
        %v3099 = vrot.slane %v3098, 2
        %v3100 = vadd.f32 %v3098, %v3099
        %v3101 = vrot.slane %v3100, 1
        %v3102 = vadd.f32 %v3100, %v3101
        %s3103 = sld [smem:[#allocation8 + $0xe84]]
        %v3104 = vstv %s3103
        %v3105 = vmul.f32 %v3102, %v3104
        %v3106 = vadd.f32 %v3066, %v3105
        %s3107 = sld [smem:[#allocation8 + $0xe85]]
        %v3108 = vstv %s3107
        %v3109 = vmul.f32 %v3102, %v3108
        %v3110 = vadd.f32 %v3070, %v3109
        %s3111 = sld [smem:[#allocation8 + $0xe86]]
        %v3112 = vstv %s3111
        %v3113 = vmul.f32 %v3102, %v3112
        %v3114 = vadd.f32 %v3074, %v3113
        %s3115 = sld [smem:[#allocation8 + $0xe87]]
        %v3116 = vstv %s3115
        %v3117 = vmul.f32 %v3102, %v3116
        %v3118 = vadd.f32 %v3078, %v3117
        %s3119 = sld [smem:[#allocation8 + $0xe88]]
        %v3120 = vstv %s3119
        %v3121 = vmul.f32 %v3102, %v3120
        %v3122 = vadd.f32 %v3082, %v3121
        %s3123 = sld [smem:[#allocation8 + $0xe89]]
        %v3124 = vstv %s3123
        %v3125 = vmul.f32 %v3102, %v3124
        %v3126 = vadd.f32 %v3086, %v3125
        %s3127 = sld [smem:[#allocation8 + $0xe8a]]
        %v3128 = vstv %s3127
        %v3129 = vmul.f32 %v3102, %v3128
        %v3130 = vadd.f32 %v3090, %v3129
        %s3131 = sld [smem:[#allocation8 + $0xe8b]]
        %v3132 = vstv %s3131
        %v3133 = vmul.f32 %v3102, %v3132
        %v3134 = vadd.f32 %v3094, %v3133
        %v3135 = vld [vmem:[%s1788] sm:$0xff]
        %v3136 = vmul.f32 %v1927, %v3135
        %v3137 = vrot.slane %v3136, 4
        %v3138 = vadd.f32 %v3136, %v3137
        %v3139 = vrot.slane %v3138, 2
        %v3140 = vadd.f32 %v3138, %v3139
        %v3141 = vrot.slane %v3140, 1
        %v3142 = vadd.f32 %v3140, %v3141
        %s3143 = sld [smem:[#allocation8 + $0xf04]]
        %v3144 = vstv %s3143
        %v3145 = vmul.f32 %v3142, %v3144
        %v3146 = vadd.f32 %v3106, %v3145
        %s3147 = sld [smem:[#allocation8 + $0xf05]]
        %v3148 = vstv %s3147
        %v3149 = vmul.f32 %v3142, %v3148
        %v3150 = vadd.f32 %v3110, %v3149
        %s3151 = sld [smem:[#allocation8 + $0xf06]]
        %v3152 = vstv %s3151
        %v3153 = vmul.f32 %v3142, %v3152
        %v3154 = vadd.f32 %v3114, %v3153
        %s3155 = sld [smem:[#allocation8 + $0xf07]]
        %v3156 = vstv %s3155
        %v3157 = vmul.f32 %v3142, %v3156
        %v3158 = vadd.f32 %v3118, %v3157
        %s3159 = sld [smem:[#allocation8 + $0xf08]]
        %v3160 = vstv %s3159
        %v3161 = vmul.f32 %v3142, %v3160
        %v3162 = vadd.f32 %v3122, %v3161
        %s3163 = sld [smem:[#allocation8 + $0xf09]]
        %v3164 = vstv %s3163
        %v3165 = vmul.f32 %v3142, %v3164
        %v3166 = vadd.f32 %v3126, %v3165
        %s3167 = sld [smem:[#allocation8 + $0xf0a]]
        %v3168 = vstv %s3167
        %v3169 = vmul.f32 %v3142, %v3168
        %v3170 = vadd.f32 %v3130, %v3169
        %s3171 = sld [smem:[#allocation8 + $0xf0b]]
        %v3172 = vstv %s3171
        %v3173 = vmul.f32 %v3142, %v3172
        %v3174 = vadd.f32 %v3134, %v3173
        %v3175 = vld [vmem:[%s1834] sm:$0xff]
        %v3176 = vmul.f32 %v1927, %v3175
        %v3177 = vrot.slane %v3176, 4
        %v3178 = vadd.f32 %v3176, %v3177
        %v3179 = vrot.slane %v3178, 2
        %v3180 = vadd.f32 %v3178, %v3179
        %v3181 = vrot.slane %v3180, 1
        %v3182 = vadd.f32 %v3180, %v3181
        %s3183 = sld [smem:[#allocation8 + $0xf84]]
        %v3184 = vstv %s3183
        %v3185 = vmul.f32 %v3182, %v3184
        %v3186 = vadd.f32 %v3146, %v3185
        %s3187 = sld [smem:[#allocation8 + $0xf85]]
        %v3188 = vstv %s3187
        %v3189 = vmul.f32 %v3182, %v3188
        %v3190 = vadd.f32 %v3150, %v3189
        %s3191 = sld [smem:[#allocation8 + $0xf86]]
        %v3192 = vstv %s3191
        %v3193 = vmul.f32 %v3182, %v3192
        %v3194 = vadd.f32 %v3154, %v3193
        %s3195 = sld [smem:[#allocation8 + $0xf87]]
        %v3196 = vstv %s3195
        %v3197 = vmul.f32 %v3182, %v3196
        %v3198 = vadd.f32 %v3158, %v3197
        %s3199 = sld [smem:[#allocation8 + $0xf88]]
        %v3200 = vstv %s3199
        %v3201 = vmul.f32 %v3182, %v3200
        %v3202 = vadd.f32 %v3162, %v3201
        %s3203 = sld [smem:[#allocation8 + $0xf89]]
        %v3204 = vstv %s3203
        %v3205 = vmul.f32 %v3182, %v3204
        %v3206 = vadd.f32 %v3166, %v3205
        %s3207 = sld [smem:[#allocation8 + $0xf8a]]
        %v3208 = vstv %s3207
        %v3209 = vmul.f32 %v3182, %v3208
        %v3210 = vadd.f32 %v3170, %v3209
        %s3211 = sld [smem:[#allocation8 + $0xf8b]]
        %v3212 = vstv %s3211
        %v3213 = vmul.f32 %v3182, %v3212
        %v3214 = vadd.f32 %v3174, %v3213
        %s3215 = sld [smem:[#allocation9 + $0x4]]
        %v3216 = vstv %s3215
        %v3217 = vmul.f32 %v3216, %v1934
        %v3218 = vadd.f32 %v3186, %v3217
        %s3219 = sld [smem:[#allocation9 + $0x5]]
        %v3220 = vstv %s3219
        %v3221 = vmul.f32 %v3220, %v1934
        %v3222 = vadd.f32 %v3190, %v3221
        %s3223 = sld [smem:[#allocation9 + $0x6]]
        %v3224 = vstv %s3223
        %v3225 = vmul.f32 %v3224, %v1934
        %v3226 = vadd.f32 %v3194, %v3225
        %s3227 = sld [smem:[#allocation9 + $0x7]]
        %v3228 = vstv %s3227
        %v3229 = vmul.f32 %v3228, %v1934
        %v3230 = vadd.f32 %v3198, %v3229
        %s3231 = sld [smem:[#allocation9 + $0x8]]
        %v3232 = vstv %s3231
        %v3233 = vmul.f32 %v3232, %v1934
        %v3234 = vadd.f32 %v3202, %v3233
        %s3235 = sld [smem:[#allocation9 + $0x9]]
        %v3236 = vstv %s3235
        %v3237 = vmul.f32 %v3236, %v1934
        %v3238 = vadd.f32 %v3206, %v3237
        %s3239 = sld [smem:[#allocation9 + $0xa]]
        %v3240 = vstv %s3239
        %v3241 = vmul.f32 %v3240, %v1934
        %v3242 = vadd.f32 %v3210, %v3241
        %s3243 = sld [smem:[#allocation9 + $0xb]]
        %v3244 = vstv %s3243
        %v3245 = vmul.f32 %v3244, %v1934
        %v3246 = vadd.f32 %v3214, %v3245
        %v3247 = vxor.u32 %v1854, 2147483648
        %v3248 = vmul.f32 %v3247, 1.442695
        %v3249 = vpow.pop %v3248
        %v3250 = vadd.f32 %v3249, 1.0
        %v3251 = vrcp.pop %v3250
        %v3252 = vmul.f32 %v3250, %v3251
        %v3253 = vsub.f32 1.0, %v3252
        %v3254 = vmul.f32 %v3251, %v3253
        %v3255 = vadd.f32 %v3251, %v3254
        %vm3256 = vweird.f32 %v3250
        %vm3257 = vweird.f32 %v3251
        %vm3258 = vmor %vm3256, %vm3257
        %v3259 = vsel %vm3258, %v3251, %v3255
        %v3260 = vand.u32 2147483647, %v3250
        %vm3261 = vcmp.eq.f32.partialorder %v3260, 8.507059e+37
        %v3262 = vand.u32 %v3250, 2147483648
        %v3263 = vor.u32 1.1754944e-38, %v3262
        %v3264 = vsel %vm3261, %v3263, %v3259
        %v3265 = vmul.f32 1.0, %v3264
        %v3266 = vmul.f32 %v1927, %v3265
        %v3267 = vrot.slane %v3266, 4
        %v3268 = vadd.f32 %v3266, %v3267
        %v3269 = vrot.slane %v3268, 2
        %v3270 = vadd.f32 %v3268, %v3269
        %v3271 = vrot.slane %v3270, 1
        %v3272 = vadd.f32 %v3270, %v3271
        %v3273 = vxor.u32 %v1857, 2147483648
        %v3274 = vmul.f32 %v3273, 1.442695
        %v3275 = vpow.pop %v3274
        %v3276 = vadd.f32 %v3275, 1.0
        %v3277 = vrcp.pop %v3276
        %v3278 = vmul.f32 %v3276, %v3277
        %v3279 = vsub.f32 1.0, %v3278
        %v3280 = vmul.f32 %v3277, %v3279
        %v3281 = vadd.f32 %v3277, %v3280
        %vm3282 = vweird.f32 %v3276
        %vm3283 = vweird.f32 %v3277
        %vm3284 = vmor %vm3282, %vm3283
        %v3285 = vsel %vm3284, %v3277, %v3281
        %v3286 = vand.u32 2147483647, %v3276
        %vm3287 = vcmp.eq.f32.partialorder %v3286, 8.507059e+37
        %v3288 = vand.u32 %v3276, 2147483648
        %v3289 = vor.u32 1.1754944e-38, %v3288
        %v3290 = vsel %vm3287, %v3289, %v3285
        %v3291 = vmul.f32 1.0, %v3290
        %v3292 = vmul.f32 %v1927, %v3291
        %v3293 = vrot.slane %v3292, 4
        %v3294 = vadd.f32 %v3292, %v3293
        %v3295 = vrot.slane %v3294, 2
        %v3296 = vadd.f32 %v3294, %v3295
        %v3297 = vrot.slane %v3296, 1
        %v3298 = vadd.f32 %v3296, %v3297
        %v3299 = vxor.u32 %v1860, 2147483648
        %v3300 = vmul.f32 %v3299, 1.442695
        %v3301 = vpow.pop %v3300
        %v3302 = vadd.f32 %v3301, 1.0
        %v3303 = vrcp.pop %v3302
        %v3304 = vmul.f32 %v3302, %v3303
        %v3305 = vsub.f32 1.0, %v3304
        %v3306 = vmul.f32 %v3303, %v3305
        %v3307 = vadd.f32 %v3303, %v3306
        %vm3308 = vweird.f32 %v3302
        %vm3309 = vweird.f32 %v3303
        %vm3310 = vmor %vm3308, %vm3309
        %v3311 = vsel %vm3310, %v3303, %v3307
        %v3312 = vand.u32 2147483647, %v3302
        %vm3313 = vcmp.eq.f32.partialorder %v3312, 8.507059e+37
        %v3314 = vand.u32 %v3302, 2147483648
        %v3315 = vor.u32 1.1754944e-38, %v3314
        %v3316 = vsel %vm3313, %v3315, %v3311
        %v3317 = vmul.f32 1.0, %v3316
        %v3318 = vmul.f32 %v1927, %v3317
        %v3319 = vrot.slane %v3318, 4
        %v3320 = vadd.f32 %v3318, %v3319
        %v3321 = vrot.slane %v3320, 2
        %v3322 = vadd.f32 %v3320, %v3321
        %v3323 = vrot.slane %v3322, 1
        %v3324 = vadd.f32 %v3322, %v3323
        %v3325 = vmul.f32 %v1927, %v356
        %v3326 = vrot.slane %v3325, 4
        %v3327 = vadd.f32 %v3325, %v3326
        %v3328 = vrot.slane %v3327, 2
        %v3329 = vadd.f32 %v3327, %v3328
        %v3330 = vrot.slane %v3329, 1
        %v3331 = vadd.f32 %v3329, %v3330
        %v3332 = vsel %vm1911, %v3272, %v3298
        %v3333 = vsel %vm1913, %v3332, %v3324
        %v3334 = vsel %vm1915, %v3333, %v3331
        %v3335 = vsel %vm1917, %v3334, %v3218
        %v3336 = vsel %vm1919, %v3335, %v3222
        %v3337 = vsel %vm1921, %v3336, %v3226
        %v3338 = vsel %vm364, %v3337, %v3230
        %v3339 = vsel %vm1911, %v3234, %v3238
        %v3340 = vsel %vm1913, %v3339, %v3242
        %v3341 = vsel %vm1915, %v3340, %v3246
        %v3342 = vsel %vm1917, %v3341, %v1934
        %v3343 = vsel %vm1919, %v3342, 0.0
        %v3344 = vsel %vm1921, %v3343, 0.0
        %v3345 = vsel %vm364, %v3344, 0.0
        %3346 = vst [vmem:[%s347] sm:$0xff] %v3338
        %3347 = vst [vmem:[%s347 + $0x8] sm:$0xff] %v3345
        %s3348 = sand.u32 %s172, 1
        %s3349 = scalar_lea.sflag [#allocation4], %s3348
        %s3350 = sand.u32 %s172, 1
        %s3351 = smul.addr %s3350, 8
        %s3352 = scalar_lea.vmem [#allocation11], %s3351
        %s3353 = sand.u32 %s198, 1
        %s3354 = scalar_lea.sflag [#allocation13], %s3353
        %s3355 = sand.u32 %s198, 1
        %s3356 = smul.addr %s3355, 16
        %s3357 = scalar_lea.vmem [#allocation12], %s3356
        // Predicated region
        $region61: #{tpu_custom_call.1} parent=43 // pred_check
          %p3358 = pneg %p182
        $region62: #{tpu_custom_call.1} parent=43 // pred_check_branch
          %3360 = sbr.rel (%p3358) target = $region64
        $region63: #{tpu_custom_call.1} parent=43 // pred_region
          %3362 = vsyncadd %s3349, 0
          %s3363 = smul.addr %s28, 8
          %s3364 = scalar_lea.hbm %s6, %s3363
          %s3366 = sshll.u32 %s3352, 4
          %s3367 = int_to_ptr.vmem [resolvable:$true] %s3366
          %s3368 = sshll.u32 %s3364, 4
          %s3369 = int_to_ptr.hbm [resolvable:$true] %s3368
          %3371 = dma.vmem_to_hbm [thread:$0]  %s3367, 128, %s3369, %s3349
        $region64: #{tpu_custom_call.1} parent=43 // pred_fallthru
          _
        // Predicated region
        $region65: #{tpu_custom_call.1} parent=43 // pred_check
          %p3372 = pneg %p208
        $region66: #{tpu_custom_call.1} parent=43 // pred_check_branch
          %3374 = sbr.rel (%p3372) target = $region68
        $region67: #{tpu_custom_call.1} parent=43 // pred_region
          %3376 = vsyncadd %s3354, 0
          %s3377 = smul.addr %s28, 8
          %s3378 = scalar_lea.hbm %s7, %s3377
          %s3379 = sshll.u32 %s3357, 4
          %s3380 = int_to_ptr.vmem [resolvable:$true] %s3379
          %s3381 = sshll.u32 %s3378, 4
          %s3382 = int_to_ptr.hbm [resolvable:$true] %s3381
          %3387 = dma.vmem_to_hbm [thread:$0]  %s3380, 256, %s3382, %s3354, 128, 256, 8
        $region68: #{tpu_custom_call.1} parent=43 // pred_fallthru
          _
      $region44: #{tpu_custom_call.1} parent=5 // pred_fallthru
        _
      %p3388 = scmp.le.s32.totalorder 2, %s23
      // Predicated region
      $region69: #{tpu_custom_call.1} parent=5 // pred_check
        %p3389 = pneg %p3388
      $region70: #{tpu_custom_call.1} parent=5 // pred_check_branch
        %3391 = sbr.rel (%p3389) target = $region72
      $region71: #{tpu_custom_call.1} parent=5 // pred_region
        %s3392 = ssub.s32 %s23, 2
        // Predicated region
        $region73: #{tpu_custom_call.1} parent=71 // pred_check
          %p3393 = pneg %p188
        $region74: #{tpu_custom_call.1} parent=71 // pred_check_branch
          %3395 = sbr.rel (%p3393) target = $region76
        $region75: #{tpu_custom_call.1} parent=71 // pred_region
          %s3396 = sand.u32 %s173, 1
          %s3397 = scalar_lea.sflag [#allocation4], %s3396
          %s3398 = sand.u32 %s173, 1
          %s3399 = smul.addr %s3398, 8
          %s3400 = scalar_lea.vmem [#allocation11], %s3399
          %3402 = dma.done %s3397, 128
        $region76: #{tpu_custom_call.1} parent=71 // pred_fallthru
          _
        // Predicated region
        $region77: #{tpu_custom_call.1} parent=71 // pred_check
          %p3403 = pneg %p214
        $region78: #{tpu_custom_call.1} parent=71 // pred_check_branch
          %3405 = sbr.rel (%p3403) target = $region80
        $region79: #{tpu_custom_call.1} parent=71 // pred_region
          %s3406 = sand.u32 %s199, 1
          %s3407 = scalar_lea.sflag [#allocation13], %s3406
          %s3408 = sand.u32 %s199, 1
          %s3409 = smul.addr %s3408, 16
          %s3410 = scalar_lea.vmem [#allocation12], %s3409
          %3412 = dma.done %s3407, 256
        $region80: #{tpu_custom_call.1} parent=71 // pred_fallthru
          _
      $region72: #{tpu_custom_call.1} parent=5 // pred_fallthru
        _
    $region6: #{tpu_custom_call.1} parent=1 // loop_footer
      %s27 = sadd.s32 1, %s23
    $region7: #{tpu_custom_call.1} parent=1 // loop_footer_branch
      %22 = sbr.rel target = $region3
    $region8: #{tpu_custom_call.1} parent=1 // loop_exit
      _
    %3413 = vsyncpa [#allocation4], 1
    %s3414 = scalar_lea.sflag [#allocation4], 1
    %3415 = vsyncpa %s3414, 1
    %3416 = vsyncpa [#allocation13], 1
    %s3417 = scalar_lea.sflag [#allocation13], 1
    %3418 = vsyncpa %s3417, 1
    %3419 = vsyncpa [#allocation5], 1
    %s3420 = scalar_lea.sflag [#allocation5], 1
    %3421 = vsyncpa %s3420, 1
    %3422 = vsyncpa [#allocation7], 1
    %3423 = vsyncpa [#allocation10], 1

</llo_original>
